<compile_context>
chip_gen: v7x
topology: tpu7x:2x2x1
jax: 0.10.0
libtpu: 0.0.40
codegen_flags: <defaults>
</compile_context>

<pallas_src>
import functools

import jax
import jax.numpy as jnp
from jax.experimental import pallas as pl
from jax.experimental.pallas import tpu as pltpu


# --------------------------- tile-size selection ---------------------------

def _pick_conv_tile(mfull, span, cin_eff, cout):
    """Lane-tile for the conv kernel: must cover the largest tap shift,
    aim for ~half the flat problem (>=2 grid blocks), cap by a VMEM budget."""
    need = 128 * (-(-max(span, 1) // 128))            # cover tap span
    half = 128 * max(1, mfull // 256)                 # ~mfull/2, 128-aligned
    # rough per-lane VMEM bytes: 2 bf16 inputs double-buffered + in-kernel
    # xcat temp + f32 acc/out double-buffered
    per_lane = 2 * 2 * cin_eff * 2 + 2 * cin_eff * 2 + 3 * cout * 4
    cap = max(128, 128 * ((6 * 1024 * 1024 // per_lane) // 128))
    return max(min(1024, half, cap), need)


def _pick_bn_tile(m):
    """Lane-tile for the BN-apply kernel (m is a multiple of 128)."""
    for c in (1024, 512, 256, 128):
        if m % c == 0 and m // c >= 2:
            return c
    return 128 if m % 128 == 0 else m


# ------------------- kernel 1: conv + BN partial statistics -----------------

def _make_conv_stats_kernel(taps, cin, cout, tm):
    def kernel(xl_ref, xr_ref, w_ref, mask_ref, y_ref, stats_ref):
        # Two adjacent TM-wide blocks of the flat activation; every tap is a
        # static lane-offset slice of the concatenation (all offsets <= tm).
        xcat = jnp.concatenate([xl_ref[...], xr_ref[...]], axis=1)  # (Cin_eff, 2*tm) bf16
        acc = jnp.zeros((cout, tm), jnp.float32)
        for t, (c0, s) in enumerate(taps):
            w_t = w_ref[t * cout:(t + 1) * cout, :]                 # (cout, cin) bf16
            x_t = xcat[c0:c0 + cin, s:s + tm]                       # (cin, tm)  bf16
            acc = acc + jnp.dot(w_t, x_t, preferred_element_type=jnp.float32)
        y_ref[...] = acc
        # masked per-channel partial sums for training-mode BatchNorm
        # (the flat-shift trick produces garbage at the right/bottom padding
        #  columns; the mask excludes them from the statistics)
        m = mask_ref[...]                                           # (1, tm) f32
        ym = acc * m
        s1 = jnp.sum(ym, axis=1, keepdims=True)                     # (cout, 1)
        s2 = jnp.sum(ym * acc, axis=1, keepdims=True)               # (cout, 1)
        stats_ref[...] = jnp.concatenate([s1, s2], axis=1)[None, :, :]
    return kernel


def _conv_stats_call(xflat, w2d, mask, cin, cout, taps, tm, mtiles):
    cin_eff = xflat.shape[0]
    kernel = _make_conv_stats_kernel(taps, cin, cout, tm)
    return pl.pallas_call(
        kernel,
        out_shape=(jax.ShapeDtypeStruct((cout, mtiles * tm), jnp.float32),
                   jax.ShapeDtypeStruct((mtiles, cout, 2), jnp.float32)),
        grid=(mtiles,),
        in_specs=[
            pl.BlockSpec((cin_eff, tm), lambda i: (0, i)),        # current block
            pl.BlockSpec((cin_eff, tm), lambda i: (0, i + 1)),    # right neighbour
            pl.BlockSpec(w2d.shape, lambda i: (0, 0)),            # full weight (resident)
            pl.BlockSpec((1, tm), lambda i: (0, i)),              # validity mask
        ],
        out_specs=(
            pl.BlockSpec((cout, tm), lambda i: (0, i)),           # lane-dense conv out
            pl.BlockSpec((1, cout, 2), lambda i: (i, 0, 0)),      # per-tile stats
        ),
        compiler_params=pltpu.CompilerParams(
            dimension_semantics=("parallel",)),
    )(xflat, xflat, w2d, mask)


# ---------------- kernel 2: BN apply + activation (+ residual) --------------

def _make_bn_act_kernel(act, has_res):
    def kernel(y_ref, s_ref, b_ref, *rest):
        if has_res:
            r_ref, o_ref = rest
        else:
            (o_ref,) = rest
        o = y_ref[...] * s_ref[...] + b_ref[...]          # (C, tm) * (C, 1) + (C, 1)
        if act == "leaky":
            o = jnp.where(o >= 0, o, 0.01 * o)            # LeakyReLU default slope
        elif act == "relu":
            o = jnp.maximum(o, 0.0)
        if has_res:
            o = o + r_ref[...]
        o_ref[...] = o.astype(o_ref.dtype)
    return kernel


def _bn_act_call(y, scale, bias, act, residual=None):
    cout, m = y.shape
    tm = _pick_bn_tile(m)
    ntiles = m // tm
    kernel = _make_bn_act_kernel(act, residual is not None)
    args = [y, scale, bias]
    in_specs = [pl.BlockSpec((cout, tm), lambda i: (0, i)),
                pl.BlockSpec((cout, 1), lambda i: (0, 0)),
                pl.BlockSpec((cout, 1), lambda i: (0, 0))]
    if residual is not None:
        args.append(residual)
        in_specs.append(pl.BlockSpec((cout, tm), lambda i: (0, i)))
    return pl.pallas_call(
        kernel,
        out_shape=jax.ShapeDtypeStruct((cout, m), jnp.float32),
        grid=(ntiles,),
        in_specs=in_specs,
        out_specs=pl.BlockSpec((cout, tm), lambda i: (0, i)),
        compiler_params=pltpu.CompilerParams(
            dimension_semantics=("parallel",)),
    )(*args)


# --------------------------- per-layer wrapper ------------------------------

def _conv_bn_act_layer(h, w, *, stride, pad, pad_mode, gamma, beta, act,
                       residual=None, eps=1e-5):
    """h: (Cin, N, H, W) f32; w: (Cout, Cin, K, K). Returns (Cout, N, Ho, Wo)."""
    cout, cin, K, _ = w.shape
    _, N, H, W = h.shape

    # align the contraction (channel) dim to the sublane tile with zero rows
    cin_pad = 8 * (-(-cin // 8))
    if cin_pad != cin:
        h = jnp.pad(h, ((0, cin_pad - cin), (0, 0), (0, 0), (0, 0)))
        w = jnp.pad(w, ((0, 0), (0, cin_pad - cin), (0, 0), (0, 0)))
        cin = cin_pad

    hp = jnp.pad(h, ((0, 0), (0, 0), (pad, pad), (pad, pad)), mode=pad_mode)
    Hp, Wp = H + 2 * pad, W + 2 * pad

    if stride == 1:
        Ho, Wo = Hp - K + 1, Wp - K + 1
        Hg, Wg = Hp, Wp
        xg = hp.reshape(cin, N * Hg * Wg)
        taps = [(0, ky * Wg + kx) for ky in range(K) for kx in range(K)]
    else:
        # stride-2 3x3 downsample: space-to-depth the padded input so every
        # tap becomes a stride-1 shift on the half-resolution phase grid.
        Ho, Wo = (Hp - K) // 2 + 1, (Wp - K) // 2 + 1
        He, We = Hp + (Hp % 2), Wp + (Wp % 2)
        hp = jnp.pad(hp, ((0, 0), (0, 0), (0, He - Hp), (0, We - Wp)))
        Hg, Wg = He // 2, We // 2
        xg = hp.reshape(cin, N, Hg, 2, Wg, 2).transpose(3, 5, 0, 1, 2, 4)
        xg = xg.reshape(4 * cin, N * Hg * Wg)
        taps = [(((ky % 2) * 2 + (kx % 2)) * cin, (ky // 2) * Wg + (kx // 2))
                for ky in range(K) for kx in range(K)]

    mfull = N * Hg * Wg
    span = max(s for _, s in taps)
    cin_eff = xg.shape[0]
    tm = _pick_conv_tile(mfull, span, cin_eff, cout)
    mtiles = -(-mfull // tm)

    # flat bf16 activation, padded with one ghost tile of zeros so the
    # "right neighbour" block of the last tile is always in range
    xg = jnp.pad(xg, ((0, 0), (0, (mtiles + 1) * tm - mfull))).astype(jnp.bfloat16)

    # validity mask over the padded flat output grid
    iy = jnp.arange(mtiles * tm, dtype=jnp.int32)
    pos = iy % (Hg * Wg)
    valid = (iy < mfull) & ((pos // Wg) < Ho) & ((pos % Wg) < Wo)
    mask = valid.astype(jnp.float32)[None, :]

    # per-tap weights, taps stacked along rows: (K*K*Cout, Cin) bf16
    w2d = jnp.transpose(w, (2, 3, 0, 1)).reshape(K * K * cout, cin)
    w2d = w2d.astype(jnp.bfloat16)

    yfull, stats = _conv_stats_call(xg, w2d, mask, cin, cout, taps, tm, mtiles)

    # training-mode BatchNorm statistics (biased variance) over valid outputs
    # TODO(synk): running_mean/var buffer updates (momentum) are not modelled;
    # forward uses batch statistics exactly like PyTorch .train() mode.
    count = N * Ho * Wo
    mean = jnp.sum(stats[:, :, 0], axis=0) / count
    var = jnp.maximum(jnp.sum(stats[:, :, 1], axis=0) / count - mean * mean, 0.0)
    scale = (gamma * jax.lax.rsqrt(var + eps)).astype(jnp.float32)
    bias = (beta - mean * scale).astype(jnp.float32)

    # crop the garbage columns/rows of the padded flat grid -> (Cout, N*Ho*Wo)
    y = yfull[:, :mfull].reshape(cout, N, Hg, Wg)[:, :, :Ho, :Wo]
    mv = N * Ho * Wo
    mvp = 128 * (-(-mv // 128))
    y = jnp.pad(y.reshape(cout, mv), ((0, 0), (0, mvp - mv)))
    res = None
    if residual is not None:
        res = jnp.pad(residual.reshape(cout, mv), ((0, 0), (0, mvp - mv)))

    out = _bn_act_call(y, scale.reshape(cout, 1), bias.reshape(cout, 1), act, res)
    return out[:, :mv].reshape(cout, N, Ho, Wo)


# ------------------------------ Encoder model -------------------------------

def init_encoder_params(key, input_nc, nef, n_blocks=3):
    def conv_w(k, co, ci, ksz):
        return 0.02 * jax.random.normal(k, (co, ci, ksz, ksz), jnp.float32)

    def bn_p(k, c):
        return (1.0 + 0.02 * jax.random.normal(k, (c,), jnp.float32),
                jnp.zeros((c,), jnp.float32))

    keys = jax.random.split(key, 32)
    ki = iter(range(32))
    params = {}
    params["conv0"] = conv_w(keys[next(ki)], nef, input_nc, 7)
    params["bn0"] = bn_p(keys[next(ki)], nef)
    for i in range(2):
        m = 2 ** i
        params[f"ds{i}_w"] = conv_w(keys[next(ki)], nef * m * 2, nef * m, 3)
        params[f"ds{i}_bn"] = bn_p(keys[next(ki)], nef * m * 2)
    c = nef * 4
    for b in range(n_blocks):
        params[f"blk{b}_w1"] = conv_w(keys[next(ki)], c, c, 3)
        params[f"blk{b}_bn1"] = bn_p(keys[next(ki)], c)
        params[f"blk{b}_w2"] = conv_w(keys[next(ki)], c, c, 3)
        params[f"blk{b}_bn2"] = bn_p(keys[next(ki)], c)
    return params


def encoder_forward(params, x_nchw, n_blocks=3):
    # channel-major (C, N, H, W) layout keeps activations lane-dense for the
    # (Cout, M) Pallas matmuls; transpose only at the module boundaries.
    h = jnp.transpose(x_nchw, (1, 0, 2, 3)).astype(jnp.float32)

    # stem: ReflectionPad(3) -> Conv7x7 -> BN -> LeakyReLU
    g, b = params["bn0"]
    h = _conv_bn_act_layer(h, params["conv0"], stride=1, pad=3,
                           pad_mode="reflect", gamma=g, beta=b, act="leaky")

    # two downsamples: Conv3x3 s2 p1 (zero pad) -> BN -> LeakyReLU
    for i in range(2):
        g, b = params[f"ds{i}_bn"]
        h = _conv_bn_act_layer(h, params[f"ds{i}_w"], stride=2, pad=1,
                               pad_mode="constant", gamma=g, beta=b, act="leaky")

    # ResnetBlocks: ReflectPad1/Conv3x3/BN/ReLU/ReflectPad1/Conv3x3/BN + skip
    for blk in range(n_blocks):
        res = h
        g1, b1 = params[f"blk{blk}_bn1"]
        t = _conv_bn_act_layer(h, params[f"blk{blk}_w1"], stride=1, pad=1,
                               pad_mode="reflect", gamma=g1, beta=b1, act="relu")
        g2, b2 = params[f"blk{blk}_bn2"]
        h = _conv_bn_act_layer(t, params[f"blk{blk}_w2"], stride=1, pad=1,
                               pad_mode="reflect", gamma=g2, beta=b2, act=None,
                               residual=res)

    return jnp.transpose(h, (1, 0, 2, 3))                 # (C,N,H,W) -> NCHW


if __name__ == "__main__":
    key = jax.random.PRNGKey(0)
    pkey, xkey = jax.random.split(key)

    input_nc, nef, n_blocks = 3, 8, 3
    params = init_encoder_params(pkey, input_nc, nef, n_blocks)

    # PyTorch-style NCHW input
    x = jax.random.normal(xkey, (2, input_nc, 16, 16), dtype=jnp.float32)

    fwd = jax.jit(functools.partial(encoder_forward, n_blocks=n_blocks))
    out = jax.block_until_ready(fwd(params, x))

    # 16x16 -> stem keeps 16 -> two stride-2 convs -> 4x4 spatial, 4*nef chans
    assert out.shape == (2, nef * 4, 4, 4), out.shape
    assert bool(jnp.all(jnp.isfinite(out)))
    print("KERNEL_OK")
</pallas_src>

<mosaic_0001>
module attributes {stable_mosaic.version = 11 : i64} {
  func.func @kernel(%arg0: i32, %arg1: memref<8x384xbf16, #tpu.memory_space<vmem>>, %arg2: memref<8x384xbf16, #tpu.memory_space<vmem>>, %arg3: memref<392x8xbf16, #tpu.memory_space<vmem>>, %arg4: memref<1x384xf32, #tpu.memory_space<vmem>>, %arg5: memref<8x384xf32, #tpu.memory_space<vmem>>, %arg6: memref<1x8x2xf32, #tpu.memory_space<vmem>>) attributes {dimension_semantics = [#tpu.dimension_semantics<parallel>], iteration_bounds = array<i64: 3>, scalar_prefetch = 0 : i64, scratch_operands = 0 : i64, tpu.core_type = #tpu.core_type<tc>, window_params = [{transform_indices = @transform_0, window_bounds = array<i64: 8, 384>}, {transform_indices = @transform_1, window_bounds = array<i64: 8, 384>}, {pipeline_mode = #tpu.pipeline_mode<synchronous>, transform_indices = @transform_2, window_bounds = array<i64: 392, 8>}, {transform_indices = @transform_3, window_bounds = array<i64: 1, 384>}, {transform_indices = @transform_4, window_bounds = array<i64: 8, 384>}, {transform_indices = @transform_5, window_bounds = array<i64: 1, 8, 2>}]} {
    %c0 = arith.constant 0 : index
    %c0_0 = arith.constant 0 : index
    %0 = vector.load %arg1[%c0, %c0_0] : memref<8x384xbf16, #tpu.memory_space<vmem>>, vector<8x384xbf16>
    %c0_1 = arith.constant 0 : index
    %c0_2 = arith.constant 0 : index
    %1 = vector.load %arg2[%c0_1, %c0_2] : memref<8x384xbf16, #tpu.memory_space<vmem>>, vector<8x384xbf16>
    %2 = tpu.concatenate %0, %1 in 1 : vector<8x384xbf16>, vector<8x384xbf16> -> vector<8x768xbf16>
    %cst = arith.constant 0.000000e+00 : f32
    %3 = vector.broadcast %cst : f32 to vector<8x384xf32>
    %c0_3 = arith.constant 0 : index
    %c0_4 = arith.constant 0 : index
    %4 = vector.load %arg3[%c0_3, %c0_4] : memref<392x8xbf16, #tpu.memory_space<vmem>>, vector<8x8xbf16>
    %5 = vector.extract_strided_slice %2 {offsets = [0, 0], sizes = [8, 384], strides = [1, 1]} : vector<8x768xbf16> to vector<8x384xbf16>
    %cst_5 = arith.constant dense<0.000000e+00> : vector<8x384xf32>
    %6 = tpu.matmul %4, %5, %cst_5 {dimension_numbers = #tpu.dot_dimension_numbers<[1], [0], [0], [1], [0, 0, 1, 1], [], []>} : vector<8x8xbf16>, vector<8x384xbf16>, vector<8x384xf32> -> vector<8x384xf32>
    %7 = arith.addf %3, %6 : vector<8x384xf32>
    %c8 = arith.constant 8 : index
    %c0_6 = arith.constant 0 : index
    %8 = vector.load %arg3[%c8, %c0_6] : memref<392x8xbf16, #tpu.memory_space<vmem>>, vector<8x8xbf16>
    %9 = vector.extract_strided_slice %2 {offsets = [0, 1], sizes = [8, 384], strides = [1, 1]} : vector<8x768xbf16> to vector<8x384xbf16>
    %cst_7 = arith.constant dense<0.000000e+00> : vector<8x384xf32>
    %10 = tpu.matmul %8, %9, %cst_7 {dimension_numbers = #tpu.dot_dimension_numbers<[1], [0], [0], [1], [0, 0, 1, 1], [], []>} : vector<8x8xbf16>, vector<8x384xbf16>, vector<8x384xf32> -> vector<8x384xf32>
    %11 = arith.addf %7, %10 : vector<8x384xf32>
    %c16 = arith.constant 16 : index
    %c0_8 = arith.constant 0 : index
    %12 = vector.load %arg3[%c16, %c0_8] : memref<392x8xbf16, #tpu.memory_space<vmem>>, vector<8x8xbf16>
    %13 = vector.extract_strided_slice %2 {offsets = [0, 2], sizes = [8, 384], strides = [1, 1]} : vector<8x768xbf16> to vector<8x384xbf16>
    %cst_9 = arith.constant dense<0.000000e+00> : vector<8x384xf32>
    %14 = tpu.matmul %12, %13, %cst_9 {dimension_numbers = #tpu.dot_dimension_numbers<[1], [0], [0], [1], [0, 0, 1, 1], [], []>} : vector<8x8xbf16>, vector<8x384xbf16>, vector<8x384xf32> -> vector<8x384xf32>
    %15 = arith.addf %11, %14 : vector<8x384xf32>
    %c24 = arith.constant 24 : index
    %c0_10 = arith.constant 0 : index
    %16 = vector.load %arg3[%c24, %c0_10] : memref<392x8xbf16, #tpu.memory_space<vmem>>, vector<8x8xbf16>
    %17 = vector.extract_strided_slice %2 {offsets = [0, 3], sizes = [8, 384], strides = [1, 1]} : vector<8x768xbf16> to vector<8x384xbf16>
    %cst_11 = arith.constant dense<0.000000e+00> : vector<8x384xf32>
    %18 = tpu.matmul %16, %17, %cst_11 {dimension_numbers = #tpu.dot_dimension_numbers<[1], [0], [0], [1], [0, 0, 1, 1], [], []>} : vector<8x8xbf16>, vector<8x384xbf16>, vector<8x384xf32> -> vector<8x384xf32>
    %19 = arith.addf %15, %18 : vector<8x384xf32>
    %c32 = arith.constant 32 : index
    %c0_12 = arith.constant 0 : index
    %20 = vector.load %arg3[%c32, %c0_12] : memref<392x8xbf16, #tpu.memory_space<vmem>>, vector<8x8xbf16>
    %21 = vector.extract_strided_slice %2 {offsets = [0, 4], sizes = [8, 384], strides = [1, 1]} : vector<8x768xbf16> to vector<8x384xbf16>
    %cst_13 = arith.constant dense<0.000000e+00> : vector<8x384xf32>
    %22 = tpu.matmul %20, %21, %cst_13 {dimension_numbers = #tpu.dot_dimension_numbers<[1], [0], [0], [1], [0, 0, 1, 1], [], []>} : vector<8x8xbf16>, vector<8x384xbf16>, vector<8x384xf32> -> vector<8x384xf32>
    %23 = arith.addf %19, %22 : vector<8x384xf32>
    %c40 = arith.constant 40 : index
    %c0_14 = arith.constant 0 : index
    %24 = vector.load %arg3[%c40, %c0_14] : memref<392x8xbf16, #tpu.memory_space<vmem>>, vector<8x8xbf16>
    %25 = vector.extract_strided_slice %2 {offsets = [0, 5], sizes = [8, 384], strides = [1, 1]} : vector<8x768xbf16> to vector<8x384xbf16>
    %cst_15 = arith.constant dense<0.000000e+00> : vector<8x384xf32>
    %26 = tpu.matmul %24, %25, %cst_15 {dimension_numbers = #tpu.dot_dimension_numbers<[1], [0], [0], [1], [0, 0, 1, 1], [], []>} : vector<8x8xbf16>, vector<8x384xbf16>, vector<8x384xf32> -> vector<8x384xf32>
    %27 = arith.addf %23, %26 : vector<8x384xf32>
    %c48 = arith.constant 48 : index
    %c0_16 = arith.constant 0 : index
    %28 = vector.load %arg3[%c48, %c0_16] : memref<392x8xbf16, #tpu.memory_space<vmem>>, vector<8x8xbf16>
    %29 = vector.extract_strided_slice %2 {offsets = [0, 6], sizes = [8, 384], strides = [1, 1]} : vector<8x768xbf16> to vector<8x384xbf16>
    %cst_17 = arith.constant dense<0.000000e+00> : vector<8x384xf32>
    %30 = tpu.matmul %28, %29, %cst_17 {dimension_numbers = #tpu.dot_dimension_numbers<[1], [0], [0], [1], [0, 0, 1, 1], [], []>} : vector<8x8xbf16>, vector<8x384xbf16>, vector<8x384xf32> -> vector<8x384xf32>
    %31 = arith.addf %27, %30 : vector<8x384xf32>
    %c56 = arith.constant 56 : index
    %c0_18 = arith.constant 0 : index
    %32 = vector.load %arg3[%c56, %c0_18] : memref<392x8xbf16, #tpu.memory_space<vmem>>, vector<8x8xbf16>
    %33 = vector.extract_strided_slice %2 {offsets = [0, 22], sizes = [8, 384], strides = [1, 1]} : vector<8x768xbf16> to vector<8x384xbf16>
    %cst_19 = arith.constant dense<0.000000e+00> : vector<8x384xf32>
    %34 = tpu.matmul %32, %33, %cst_19 {dimension_numbers = #tpu.dot_dimension_numbers<[1], [0], [0], [1], [0, 0, 1, 1], [], []>} : vector<8x8xbf16>, vector<8x384xbf16>, vector<8x384xf32> -> vector<8x384xf32>
    %35 = arith.addf %31, %34 : vector<8x384xf32>
    %c64 = arith.constant 64 : index
    %c0_20 = arith.constant 0 : index
    %36 = vector.load %arg3[%c64, %c0_20] : memref<392x8xbf16, #tpu.memory_space<vmem>>, vector<8x8xbf16>
    %37 = vector.extract_strided_slice %2 {offsets = [0, 23], sizes = [8, 384], strides = [1, 1]} : vector<8x768xbf16> to vector<8x384xbf16>
    %cst_21 = arith.constant dense<0.000000e+00> : vector<8x384xf32>
    %38 = tpu.matmul %36, %37, %cst_21 {dimension_numbers = #tpu.dot_dimension_numbers<[1], [0], [0], [1], [0, 0, 1, 1], [], []>} : vector<8x8xbf16>, vector<8x384xbf16>, vector<8x384xf32> -> vector<8x384xf32>
    %39 = arith.addf %35, %38 : vector<8x384xf32>
    %c72 = arith.constant 72 : index
    %c0_22 = arith.constant 0 : index
    %40 = vector.load %arg3[%c72, %c0_22] : memref<392x8xbf16, #tpu.memory_space<vmem>>, vector<8x8xbf16>
    %41 = vector.extract_strided_slice %2 {offsets = [0, 24], sizes = [8, 384], strides = [1, 1]} : vector<8x768xbf16> to vector<8x384xbf16>
    %cst_23 = arith.constant dense<0.000000e+00> : vector<8x384xf32>
    %42 = tpu.matmul %40, %41, %cst_23 {dimension_numbers = #tpu.dot_dimension_numbers<[1], [0], [0], [1], [0, 0, 1, 1], [], []>} : vector<8x8xbf16>, vector<8x384xbf16>, vector<8x384xf32> -> vector<8x384xf32>
    %43 = arith.addf %39, %42 : vector<8x384xf32>
    %c80 = arith.constant 80 : index
    %c0_24 = arith.constant 0 : index
    %44 = vector.load %arg3[%c80, %c0_24] : memref<392x8xbf16, #tpu.memory_space<vmem>>, vector<8x8xbf16>
    %45 = vector.extract_strided_slice %2 {offsets = [0, 25], sizes = [8, 384], strides = [1, 1]} : vector<8x768xbf16> to vector<8x384xbf16>
    %cst_25 = arith.constant dense<0.000000e+00> : vector<8x384xf32>
    %46 = tpu.matmul %44, %45, %cst_25 {dimension_numbers = #tpu.dot_dimension_numbers<[1], [0], [0], [1], [0, 0, 1, 1], [], []>} : vector<8x8xbf16>, vector<8x384xbf16>, vector<8x384xf32> -> vector<8x384xf32>
    %47 = arith.addf %43, %46 : vector<8x384xf32>
    %c88 = arith.constant 88 : index
    %c0_26 = arith.constant 0 : index
    %48 = vector.load %arg3[%c88, %c0_26] : memref<392x8xbf16, #tpu.memory_space<vmem>>, vector<8x8xbf16>
    %49 = vector.extract_strided_slice %2 {offsets = [0, 26], sizes = [8, 384], strides = [1, 1]} : vector<8x768xbf16> to vector<8x384xbf16>
    %cst_27 = arith.constant dense<0.000000e+00> : vector<8x384xf32>
    %50 = tpu.matmul %48, %49, %cst_27 {dimension_numbers = #tpu.dot_dimension_numbers<[1], [0], [0], [1], [0, 0, 1, 1], [], []>} : vector<8x8xbf16>, vector<8x384xbf16>, vector<8x384xf32> -> vector<8x384xf32>
    %51 = arith.addf %47, %50 : vector<8x384xf32>
    %c96 = arith.constant 96 : index
    %c0_28 = arith.constant 0 : index
    %52 = vector.load %arg3[%c96, %c0_28] : memref<392x8xbf16, #tpu.memory_space<vmem>>, vector<8x8xbf16>
    %53 = vector.extract_strided_slice %2 {offsets = [0, 27], sizes = [8, 384], strides = [1, 1]} : vector<8x768xbf16> to vector<8x384xbf16>
    %cst_29 = arith.constant dense<0.000000e+00> : vector<8x384xf32>
    %54 = tpu.matmul %52, %53, %cst_29 {dimension_numbers = #tpu.dot_dimension_numbers<[1], [0], [0], [1], [0, 0, 1, 1], [], []>} : vector<8x8xbf16>, vector<8x384xbf16>, vector<8x384xf32> -> vector<8x384xf32>
    %55 = arith.addf %51, %54 : vector<8x384xf32>
    %c104 = arith.constant 104 : index
    %c0_30 = arith.constant 0 : index
    %56 = vector.load %arg3[%c104, %c0_30] : memref<392x8xbf16, #tpu.memory_space<vmem>>, vector<8x8xbf16>
    %57 = vector.extract_strided_slice %2 {offsets = [0, 28], sizes = [8, 384], strides = [1, 1]} : vector<8x768xbf16> to vector<8x384xbf16>
    %cst_31 = arith.constant dense<0.000000e+00> : vector<8x384xf32>
    %58 = tpu.matmul %56, %57, %cst_31 {dimension_numbers = #tpu.dot_dimension_numbers<[1], [0], [0], [1], [0, 0, 1, 1], [], []>} : vector<8x8xbf16>, vector<8x384xbf16>, vector<8x384xf32> -> vector<8x384xf32>
    %59 = arith.addf %55, %58 : vector<8x384xf32>
    %c112 = arith.constant 112 : index
    %c0_32 = arith.constant 0 : index
    %60 = vector.load %arg3[%c112, %c0_32] : memref<392x8xbf16, #tpu.memory_space<vmem>>, vector<8x8xbf16>
    %61 = vector.extract_strided_slice %2 {offsets = [0, 44], sizes = [8, 384], strides = [1, 1]} : vector<8x768xbf16> to vector<8x384xbf16>
    %cst_33 = arith.constant dense<0.000000e+00> : vector<8x384xf32>
    %62 = tpu.matmul %60, %61, %cst_33 {dimension_numbers = #tpu.dot_dimension_numbers<[1], [0], [0], [1], [0, 0, 1, 1], [], []>} : vector<8x8xbf16>, vector<8x384xbf16>, vector<8x384xf32> -> vector<8x384xf32>
    %63 = arith.addf %59, %62 : vector<8x384xf32>
    %c120 = arith.constant 120 : index
    %c0_34 = arith.constant 0 : index
    %64 = vector.load %arg3[%c120, %c0_34] : memref<392x8xbf16, #tpu.memory_space<vmem>>, vector<8x8xbf16>
    %65 = vector.extract_strided_slice %2 {offsets = [0, 45], sizes = [8, 384], strides = [1, 1]} : vector<8x768xbf16> to vector<8x384xbf16>
    %cst_35 = arith.constant dense<0.000000e+00> : vector<8x384xf32>
    %66 = tpu.matmul %64, %65, %cst_35 {dimension_numbers = #tpu.dot_dimension_numbers<[1], [0], [0], [1], [0, 0, 1, 1], [], []>} : vector<8x8xbf16>, vector<8x384xbf16>, vector<8x384xf32> -> vector<8x384xf32>
    %67 = arith.addf %63, %66 : vector<8x384xf32>
    %c128 = arith.constant 128 : index
    %c0_36 = arith.constant 0 : index
    %68 = vector.load %arg3[%c128, %c0_36] : memref<392x8xbf16, #tpu.memory_space<vmem>>, vector<8x8xbf16>
    %69 = vector.extract_strided_slice %2 {offsets = [0, 46], sizes = [8, 384], strides = [1, 1]} : vector<8x768xbf16> to vector<8x384xbf16>
    %cst_37 = arith.constant dense<0.000000e+00> : vector<8x384xf32>
    %70 = tpu.matmul %68, %69, %cst_37 {dimension_numbers = #tpu.dot_dimension_numbers<[1], [0], [0], [1], [0, 0, 1, 1], [], []>} : vector<8x8xbf16>, vector<8x384xbf16>, vector<8x384xf32> -> vector<8x384xf32>
    %71 = arith.addf %67, %70 : vector<8x384xf32>
    %c136 = arith.constant 136 : index
    %c0_38 = arith.constant 0 : index
    %72 = vector.load %arg3[%c136, %c0_38] : memref<392x8xbf16, #tpu.memory_space<vmem>>, vector<8x8xbf16>
    %73 = vector.extract_strided_slice %2 {offsets = [0, 47], sizes = [8, 384], strides = [1, 1]} : vector<8x768xbf16> to vector<8x384xbf16>
    %cst_39 = arith.constant dense<0.000000e+00> : vector<8x384xf32>
    %74 = tpu.matmul %72, %73, %cst_39 {dimension_numbers = #tpu.dot_dimension_numbers<[1], [0], [0], [1], [0, 0, 1, 1], [], []>} : vector<8x8xbf16>, vector<8x384xbf16>, vector<8x384xf32> -> vector<8x384xf32>
    %75 = arith.addf %71, %74 : vector<8x384xf32>
    %c144 = arith.constant 144 : index
    %c0_40 = arith.constant 0 : index
    %76 = vector.load %arg3[%c144, %c0_40] : memref<392x8xbf16, #tpu.memory_space<vmem>>, vector<8x8xbf16>
    %77 = vector.extract_strided_slice %2 {offsets = [0, 48], sizes = [8, 384], strides = [1, 1]} : vector<8x768xbf16> to vector<8x384xbf16>
    %cst_41 = arith.constant dense<0.000000e+00> : vector<8x384xf32>
    %78 = tpu.matmul %76, %77, %cst_41 {dimension_numbers = #tpu.dot_dimension_numbers<[1], [0], [0], [1], [0, 0, 1, 1], [], []>} : vector<8x8xbf16>, vector<8x384xbf16>, vector<8x384xf32> -> vector<8x384xf32>
    %79 = arith.addf %75, %78 : vector<8x384xf32>
    %c152 = arith.constant 152 : index
    %c0_42 = arith.constant 0 : index
    %80 = vector.load %arg3[%c152, %c0_42] : memref<392x8xbf16, #tpu.memory_space<vmem>>, vector<8x8xbf16>
    %81 = vector.extract_strided_slice %2 {offsets = [0, 49], sizes = [8, 384], strides = [1, 1]} : vector<8x768xbf16> to vector<8x384xbf16>
    %cst_43 = arith.constant dense<0.000000e+00> : vector<8x384xf32>
    %82 = tpu.matmul %80, %81, %cst_43 {dimension_numbers = #tpu.dot_dimension_numbers<[1], [0], [0], [1], [0, 0, 1, 1], [], []>} : vector<8x8xbf16>, vector<8x384xbf16>, vector<8x384xf32> -> vector<8x384xf32>
    %83 = arith.addf %79, %82 : vector<8x384xf32>
    %c160 = arith.constant 160 : index
    %c0_44 = arith.constant 0 : index
    %84 = vector.load %arg3[%c160, %c0_44] : memref<392x8xbf16, #tpu.memory_space<vmem>>, vector<8x8xbf16>
    %85 = vector.extract_strided_slice %2 {offsets = [0, 50], sizes = [8, 384], strides = [1, 1]} : vector<8x768xbf16> to vector<8x384xbf16>
    %cst_45 = arith.constant dense<0.000000e+00> : vector<8x384xf32>
    %86 = tpu.matmul %84, %85, %cst_45 {dimension_numbers = #tpu.dot_dimension_numbers<[1], [0], [0], [1], [0, 0, 1, 1], [], []>} : vector<8x8xbf16>, vector<8x384xbf16>, vector<8x384xf32> -> vector<8x384xf32>
    %87 = arith.addf %83, %86 : vector<8x384xf32>
    %c168 = arith.constant 168 : index
    %c0_46 = arith.constant 0 : index
    %88 = vector.load %arg3[%c168, %c0_46] : memref<392x8xbf16, #tpu.memory_space<vmem>>, vector<8x8xbf16>
    %89 = vector.extract_strided_slice %2 {offsets = [0, 66], sizes = [8, 384], strides = [1, 1]} : vector<8x768xbf16> to vector<8x384xbf16>
    %cst_47 = arith.constant dense<0.000000e+00> : vector<8x384xf32>
    %90 = tpu.matmul %88, %89, %cst_47 {dimension_numbers = #tpu.dot_dimension_numbers<[1], [0], [0], [1], [0, 0, 1, 1], [], []>} : vector<8x8xbf16>, vector<8x384xbf16>, vector<8x384xf32> -> vector<8x384xf32>
    %91 = arith.addf %87, %90 : vector<8x384xf32>
    %c176 = arith.constant 176 : index
    %c0_48 = arith.constant 0 : index
    %92 = vector.load %arg3[%c176, %c0_48] : memref<392x8xbf16, #tpu.memory_space<vmem>>, vector<8x8xbf16>
    %93 = vector.extract_strided_slice %2 {offsets = [0, 67], sizes = [8, 384], strides = [1, 1]} : vector<8x768xbf16> to vector<8x384xbf16>
    %cst_49 = arith.constant dense<0.000000e+00> : vector<8x384xf32>
    %94 = tpu.matmul %92, %93, %cst_49 {dimension_numbers = #tpu.dot_dimension_numbers<[1], [0], [0], [1], [0, 0, 1, 1], [], []>} : vector<8x8xbf16>, vector<8x384xbf16>, vector<8x384xf32> -> vector<8x384xf32>
    %95 = arith.addf %91, %94 : vector<8x384xf32>
    %c184 = arith.constant 184 : index
    %c0_50 = arith.constant 0 : index
    %96 = vector.load %arg3[%c184, %c0_50] : memref<392x8xbf16, #tpu.memory_space<vmem>>, vector<8x8xbf16>
    %97 = vector.extract_strided_slice %2 {offsets = [0, 68], sizes = [8, 384], strides = [1, 1]} : vector<8x768xbf16> to vector<8x384xbf16>
    %cst_51 = arith.constant dense<0.000000e+00> : vector<8x384xf32>
    %98 = tpu.matmul %96, %97, %cst_51 {dimension_numbers = #tpu.dot_dimension_numbers<[1], [0], [0], [1], [0, 0, 1, 1], [], []>} : vector<8x8xbf16>, vector<8x384xbf16>, vector<8x384xf32> -> vector<8x384xf32>
    %99 = arith.addf %95, %98 : vector<8x384xf32>
    %c192 = arith.constant 192 : index
    %c0_52 = arith.constant 0 : index
    %100 = vector.load %arg3[%c192, %c0_52] : memref<392x8xbf16, #tpu.memory_space<vmem>>, vector<8x8xbf16>
    %101 = vector.extract_strided_slice %2 {offsets = [0, 69], sizes = [8, 384], strides = [1, 1]} : vector<8x768xbf16> to vector<8x384xbf16>
    %cst_53 = arith.constant dense<0.000000e+00> : vector<8x384xf32>
    %102 = tpu.matmul %100, %101, %cst_53 {dimension_numbers = #tpu.dot_dimension_numbers<[1], [0], [0], [1], [0, 0, 1, 1], [], []>} : vector<8x8xbf16>, vector<8x384xbf16>, vector<8x384xf32> -> vector<8x384xf32>
    %103 = arith.addf %99, %102 : vector<8x384xf32>
    %c200 = arith.constant 200 : index
    %c0_54 = arith.constant 0 : index
    %104 = vector.load %arg3[%c200, %c0_54] : memref<392x8xbf16, #tpu.memory_space<vmem>>, vector<8x8xbf16>
    %105 = vector.extract_strided_slice %2 {offsets = [0, 70], sizes = [8, 384], strides = [1, 1]} : vector<8x768xbf16> to vector<8x384xbf16>
    %cst_55 = arith.constant dense<0.000000e+00> : vector<8x384xf32>
    %106 = tpu.matmul %104, %105, %cst_55 {dimension_numbers = #tpu.dot_dimension_numbers<[1], [0], [0], [1], [0, 0, 1, 1], [], []>} : vector<8x8xbf16>, vector<8x384xbf16>, vector<8x384xf32> -> vector<8x384xf32>
    %107 = arith.addf %103, %106 : vector<8x384xf32>
    %c208 = arith.constant 208 : index
    %c0_56 = arith.constant 0 : index
    %108 = vector.load %arg3[%c208, %c0_56] : memref<392x8xbf16, #tpu.memory_space<vmem>>, vector<8x8xbf16>
    %109 = vector.extract_strided_slice %2 {offsets = [0, 71], sizes = [8, 384], strides = [1, 1]} : vector<8x768xbf16> to vector<8x384xbf16>
    %cst_57 = arith.constant dense<0.000000e+00> : vector<8x384xf32>
    %110 = tpu.matmul %108, %109, %cst_57 {dimension_numbers = #tpu.dot_dimension_numbers<[1], [0], [0], [1], [0, 0, 1, 1], [], []>} : vector<8x8xbf16>, vector<8x384xbf16>, vector<8x384xf32> -> vector<8x384xf32>
    %111 = arith.addf %107, %110 : vector<8x384xf32>
    %c216 = arith.constant 216 : index
    %c0_58 = arith.constant 0 : index
    %112 = vector.load %arg3[%c216, %c0_58] : memref<392x8xbf16, #tpu.memory_space<vmem>>, vector<8x8xbf16>
    %113 = vector.extract_strided_slice %2 {offsets = [0, 72], sizes = [8, 384], strides = [1, 1]} : vector<8x768xbf16> to vector<8x384xbf16>
    %cst_59 = arith.constant dense<0.000000e+00> : vector<8x384xf32>
    %114 = tpu.matmul %112, %113, %cst_59 {dimension_numbers = #tpu.dot_dimension_numbers<[1], [0], [0], [1], [0, 0, 1, 1], [], []>} : vector<8x8xbf16>, vector<8x384xbf16>, vector<8x384xf32> -> vector<8x384xf32>
    %115 = arith.addf %111, %114 : vector<8x384xf32>
    %c224 = arith.constant 224 : index
    %c0_60 = arith.constant 0 : index
    %116 = vector.load %arg3[%c224, %c0_60] : memref<392x8xbf16, #tpu.memory_space<vmem>>, vector<8x8xbf16>
    %117 = vector.extract_strided_slice %2 {offsets = [0, 88], sizes = [8, 384], strides = [1, 1]} : vector<8x768xbf16> to vector<8x384xbf16>
    %cst_61 = arith.constant dense<0.000000e+00> : vector<8x384xf32>
    %118 = tpu.matmul %116, %117, %cst_61 {dimension_numbers = #tpu.dot_dimension_numbers<[1], [0], [0], [1], [0, 0, 1, 1], [], []>} : vector<8x8xbf16>, vector<8x384xbf16>, vector<8x384xf32> -> vector<8x384xf32>
    %119 = arith.addf %115, %118 : vector<8x384xf32>
    %c232 = arith.constant 232 : index
    %c0_62 = arith.constant 0 : index
    %120 = vector.load %arg3[%c232, %c0_62] : memref<392x8xbf16, #tpu.memory_space<vmem>>, vector<8x8xbf16>
    %121 = vector.extract_strided_slice %2 {offsets = [0, 89], sizes = [8, 384], strides = [1, 1]} : vector<8x768xbf16> to vector<8x384xbf16>
    %cst_63 = arith.constant dense<0.000000e+00> : vector<8x384xf32>
    %122 = tpu.matmul %120, %121, %cst_63 {dimension_numbers = #tpu.dot_dimension_numbers<[1], [0], [0], [1], [0, 0, 1, 1], [], []>} : vector<8x8xbf16>, vector<8x384xbf16>, vector<8x384xf32> -> vector<8x384xf32>
    %123 = arith.addf %119, %122 : vector<8x384xf32>
    %c240 = arith.constant 240 : index
    %c0_64 = arith.constant 0 : index
    %124 = vector.load %arg3[%c240, %c0_64] : memref<392x8xbf16, #tpu.memory_space<vmem>>, vector<8x8xbf16>
    %125 = vector.extract_strided_slice %2 {offsets = [0, 90], sizes = [8, 384], strides = [1, 1]} : vector<8x768xbf16> to vector<8x384xbf16>
    %cst_65 = arith.constant dense<0.000000e+00> : vector<8x384xf32>
    %126 = tpu.matmul %124, %125, %cst_65 {dimension_numbers = #tpu.dot_dimension_numbers<[1], [0], [0], [1], [0, 0, 1, 1], [], []>} : vector<8x8xbf16>, vector<8x384xbf16>, vector<8x384xf32> -> vector<8x384xf32>
    %127 = arith.addf %123, %126 : vector<8x384xf32>
    %c248 = arith.constant 248 : index
    %c0_66 = arith.constant 0 : index
    %128 = vector.load %arg3[%c248, %c0_66] : memref<392x8xbf16, #tpu.memory_space<vmem>>, vector<8x8xbf16>
    %129 = vector.extract_strided_slice %2 {offsets = [0, 91], sizes = [8, 384], strides = [1, 1]} : vector<8x768xbf16> to vector<8x384xbf16>
    %cst_67 = arith.constant dense<0.000000e+00> : vector<8x384xf32>
    %130 = tpu.matmul %128, %129, %cst_67 {dimension_numbers = #tpu.dot_dimension_numbers<[1], [0], [0], [1], [0, 0, 1, 1], [], []>} : vector<8x8xbf16>, vector<8x384xbf16>, vector<8x384xf32> -> vector<8x384xf32>
    %131 = arith.addf %127, %130 : vector<8x384xf32>
    %c256 = arith.constant 256 : index
    %c0_68 = arith.constant 0 : index
    %132 = vector.load %arg3[%c256, %c0_68] : memref<392x8xbf16, #tpu.memory_space<vmem>>, vector<8x8xbf16>
    %133 = vector.extract_strided_slice %2 {offsets = [0, 92], sizes = [8, 384], strides = [1, 1]} : vector<8x768xbf16> to vector<8x384xbf16>
    %cst_69 = arith.constant dense<0.000000e+00> : vector<8x384xf32>
    %134 = tpu.matmul %132, %133, %cst_69 {dimension_numbers = #tpu.dot_dimension_numbers<[1], [0], [0], [1], [0, 0, 1, 1], [], []>} : vector<8x8xbf16>, vector<8x384xbf16>, vector<8x384xf32> -> vector<8x384xf32>
    %135 = arith.addf %131, %134 : vector<8x384xf32>
    %c264 = arith.constant 264 : index
    %c0_70 = arith.constant 0 : index
    %136 = vector.load %arg3[%c264, %c0_70] : memref<392x8xbf16, #tpu.memory_space<vmem>>, vector<8x8xbf16>
    %137 = vector.extract_strided_slice %2 {offsets = [0, 93], sizes = [8, 384], strides = [1, 1]} : vector<8x768xbf16> to vector<8x384xbf16>
    %cst_71 = arith.constant dense<0.000000e+00> : vector<8x384xf32>
    %138 = tpu.matmul %136, %137, %cst_71 {dimension_numbers = #tpu.dot_dimension_numbers<[1], [0], [0], [1], [0, 0, 1, 1], [], []>} : vector<8x8xbf16>, vector<8x384xbf16>, vector<8x384xf32> -> vector<8x384xf32>
    %139 = arith.addf %135, %138 : vector<8x384xf32>
    %c272 = arith.constant 272 : index
    %c0_72 = arith.constant 0 : index
    %140 = vector.load %arg3[%c272, %c0_72] : memref<392x8xbf16, #tpu.memory_space<vmem>>, vector<8x8xbf16>
    %141 = vector.extract_strided_slice %2 {offsets = [0, 94], sizes = [8, 384], strides = [1, 1]} : vector<8x768xbf16> to vector<8x384xbf16>
    %cst_73 = arith.constant dense<0.000000e+00> : vector<8x384xf32>
    %142 = tpu.matmul %140, %141, %cst_73 {dimension_numbers = #tpu.dot_dimension_numbers<[1], [0], [0], [1], [0, 0, 1, 1], [], []>} : vector<8x8xbf16>, vector<8x384xbf16>, vector<8x384xf32> -> vector<8x384xf32>
    %143 = arith.addf %139, %142 : vector<8x384xf32>
    %c280 = arith.constant 280 : index
    %c0_74 = arith.constant 0 : index
    %144 = vector.load %arg3[%c280, %c0_74] : memref<392x8xbf16, #tpu.memory_space<vmem>>, vector<8x8xbf16>
    %145 = vector.extract_strided_slice %2 {offsets = [0, 110], sizes = [8, 384], strides = [1, 1]} : vector<8x768xbf16> to vector<8x384xbf16>
    %cst_75 = arith.constant dense<0.000000e+00> : vector<8x384xf32>
    %146 = tpu.matmul %144, %145, %cst_75 {dimension_numbers = #tpu.dot_dimension_numbers<[1], [0], [0], [1], [0, 0, 1, 1], [], []>} : vector<8x8xbf16>, vector<8x384xbf16>, vector<8x384xf32> -> vector<8x384xf32>
    %147 = arith.addf %143, %146 : vector<8x384xf32>
    %c288 = arith.constant 288 : index
    %c0_76 = arith.constant 0 : index
    %148 = vector.load %arg3[%c288, %c0_76] : memref<392x8xbf16, #tpu.memory_space<vmem>>, vector<8x8xbf16>
    %149 = vector.extract_strided_slice %2 {offsets = [0, 111], sizes = [8, 384], strides = [1, 1]} : vector<8x768xbf16> to vector<8x384xbf16>
    %cst_77 = arith.constant dense<0.000000e+00> : vector<8x384xf32>
    %150 = tpu.matmul %148, %149, %cst_77 {dimension_numbers = #tpu.dot_dimension_numbers<[1], [0], [0], [1], [0, 0, 1, 1], [], []>} : vector<8x8xbf16>, vector<8x384xbf16>, vector<8x384xf32> -> vector<8x384xf32>
    %151 = arith.addf %147, %150 : vector<8x384xf32>
    %c296 = arith.constant 296 : index
    %c0_78 = arith.constant 0 : index
    %152 = vector.load %arg3[%c296, %c0_78] : memref<392x8xbf16, #tpu.memory_space<vmem>>, vector<8x8xbf16>
    %153 = vector.extract_strided_slice %2 {offsets = [0, 112], sizes = [8, 384], strides = [1, 1]} : vector<8x768xbf16> to vector<8x384xbf16>
    %cst_79 = arith.constant dense<0.000000e+00> : vector<8x384xf32>
    %154 = tpu.matmul %152, %153, %cst_79 {dimension_numbers = #tpu.dot_dimension_numbers<[1], [0], [0], [1], [0, 0, 1, 1], [], []>} : vector<8x8xbf16>, vector<8x384xbf16>, vector<8x384xf32> -> vector<8x384xf32>
    %155 = arith.addf %151, %154 : vector<8x384xf32>
    %c304 = arith.constant 304 : index
    %c0_80 = arith.constant 0 : index
    %156 = vector.load %arg3[%c304, %c0_80] : memref<392x8xbf16, #tpu.memory_space<vmem>>, vector<8x8xbf16>
    %157 = vector.extract_strided_slice %2 {offsets = [0, 113], sizes = [8, 384], strides = [1, 1]} : vector<8x768xbf16> to vector<8x384xbf16>
    %cst_81 = arith.constant dense<0.000000e+00> : vector<8x384xf32>
    %158 = tpu.matmul %156, %157, %cst_81 {dimension_numbers = #tpu.dot_dimension_numbers<[1], [0], [0], [1], [0, 0, 1, 1], [], []>} : vector<8x8xbf16>, vector<8x384xbf16>, vector<8x384xf32> -> vector<8x384xf32>
    %159 = arith.addf %155, %158 : vector<8x384xf32>
    %c312 = arith.constant 312 : index
    %c0_82 = arith.constant 0 : index
    %160 = vector.load %arg3[%c312, %c0_82] : memref<392x8xbf16, #tpu.memory_space<vmem>>, vector<8x8xbf16>
    %161 = vector.extract_strided_slice %2 {offsets = [0, 114], sizes = [8, 384], strides = [1, 1]} : vector<8x768xbf16> to vector<8x384xbf16>
    %cst_83 = arith.constant dense<0.000000e+00> : vector<8x384xf32>
    %162 = tpu.matmul %160, %161, %cst_83 {dimension_numbers = #tpu.dot_dimension_numbers<[1], [0], [0], [1], [0, 0, 1, 1], [], []>} : vector<8x8xbf16>, vector<8x384xbf16>, vector<8x384xf32> -> vector<8x384xf32>
    %163 = arith.addf %159, %162 : vector<8x384xf32>
    %c320 = arith.constant 320 : index
    %c0_84 = arith.constant 0 : index
    %164 = vector.load %arg3[%c320, %c0_84] : memref<392x8xbf16, #tpu.memory_space<vmem>>, vector<8x8xbf16>
    %165 = vector.extract_strided_slice %2 {offsets = [0, 115], sizes = [8, 384], strides = [1, 1]} : vector<8x768xbf16> to vector<8x384xbf16>
    %cst_85 = arith.constant dense<0.000000e+00> : vector<8x384xf32>
    %166 = tpu.matmul %164, %165, %cst_85 {dimension_numbers = #tpu.dot_dimension_numbers<[1], [0], [0], [1], [0, 0, 1, 1], [], []>} : vector<8x8xbf16>, vector<8x384xbf16>, vector<8x384xf32> -> vector<8x384xf32>
    %167 = arith.addf %163, %166 : vector<8x384xf32>
    %c328 = arith.constant 328 : index
    %c0_86 = arith.constant 0 : index
    %168 = vector.load %arg3[%c328, %c0_86] : memref<392x8xbf16, #tpu.memory_space<vmem>>, vector<8x8xbf16>
    %169 = vector.extract_strided_slice %2 {offsets = [0, 116], sizes = [8, 384], strides = [1, 1]} : vector<8x768xbf16> to vector<8x384xbf16>
    %cst_87 = arith.constant dense<0.000000e+00> : vector<8x384xf32>
    %170 = tpu.matmul %168, %169, %cst_87 {dimension_numbers = #tpu.dot_dimension_numbers<[1], [0], [0], [1], [0, 0, 1, 1], [], []>} : vector<8x8xbf16>, vector<8x384xbf16>, vector<8x384xf32> -> vector<8x384xf32>
    %171 = arith.addf %167, %170 : vector<8x384xf32>
    %c336 = arith.constant 336 : index
    %c0_88 = arith.constant 0 : index
    %172 = vector.load %arg3[%c336, %c0_88] : memref<392x8xbf16, #tpu.memory_space<vmem>>, vector<8x8xbf16>
    %173 = vector.extract_strided_slice %2 {offsets = [0, 132], sizes = [8, 384], strides = [1, 1]} : vector<8x768xbf16> to vector<8x384xbf16>
    %cst_89 = arith.constant dense<0.000000e+00> : vector<8x384xf32>
    %174 = tpu.matmul %172, %173, %cst_89 {dimension_numbers = #tpu.dot_dimension_numbers<[1], [0], [0], [1], [0, 0, 1, 1], [], []>} : vector<8x8xbf16>, vector<8x384xbf16>, vector<8x384xf32> -> vector<8x384xf32>
    %175 = arith.addf %171, %174 : vector<8x384xf32>
    %c344 = arith.constant 344 : index
    %c0_90 = arith.constant 0 : index
    %176 = vector.load %arg3[%c344, %c0_90] : memref<392x8xbf16, #tpu.memory_space<vmem>>, vector<8x8xbf16>
    %177 = vector.extract_strided_slice %2 {offsets = [0, 133], sizes = [8, 384], strides = [1, 1]} : vector<8x768xbf16> to vector<8x384xbf16>
    %cst_91 = arith.constant dense<0.000000e+00> : vector<8x384xf32>
    %178 = tpu.matmul %176, %177, %cst_91 {dimension_numbers = #tpu.dot_dimension_numbers<[1], [0], [0], [1], [0, 0, 1, 1], [], []>} : vector<8x8xbf16>, vector<8x384xbf16>, vector<8x384xf32> -> vector<8x384xf32>
    %179 = arith.addf %175, %178 : vector<8x384xf32>
    %c352 = arith.constant 352 : index
    %c0_92 = arith.constant 0 : index
    %180 = vector.load %arg3[%c352, %c0_92] : memref<392x8xbf16, #tpu.memory_space<vmem>>, vector<8x8xbf16>
    %181 = vector.extract_strided_slice %2 {offsets = [0, 134], sizes = [8, 384], strides = [1, 1]} : vector<8x768xbf16> to vector<8x384xbf16>
    %cst_93 = arith.constant dense<0.000000e+00> : vector<8x384xf32>
    %182 = tpu.matmul %180, %181, %cst_93 {dimension_numbers = #tpu.dot_dimension_numbers<[1], [0], [0], [1], [0, 0, 1, 1], [], []>} : vector<8x8xbf16>, vector<8x384xbf16>, vector<8x384xf32> -> vector<8x384xf32>
    %183 = arith.addf %179, %182 : vector<8x384xf32>
    %c360 = arith.constant 360 : index
    %c0_94 = arith.constant 0 : index
    %184 = vector.load %arg3[%c360, %c0_94] : memref<392x8xbf16, #tpu.memory_space<vmem>>, vector<8x8xbf16>
    %185 = vector.extract_strided_slice %2 {offsets = [0, 135], sizes = [8, 384], strides = [1, 1]} : vector<8x768xbf16> to vector<8x384xbf16>
    %cst_95 = arith.constant dense<0.000000e+00> : vector<8x384xf32>
    %186 = tpu.matmul %184, %185, %cst_95 {dimension_numbers = #tpu.dot_dimension_numbers<[1], [0], [0], [1], [0, 0, 1, 1], [], []>} : vector<8x8xbf16>, vector<8x384xbf16>, vector<8x384xf32> -> vector<8x384xf32>
    %187 = arith.addf %183, %186 : vector<8x384xf32>
    %c368 = arith.constant 368 : index
    %c0_96 = arith.constant 0 : index
    %188 = vector.load %arg3[%c368, %c0_96] : memref<392x8xbf16, #tpu.memory_space<vmem>>, vector<8x8xbf16>
    %189 = vector.extract_strided_slice %2 {offsets = [0, 136], sizes = [8, 384], strides = [1, 1]} : vector<8x768xbf16> to vector<8x384xbf16>
    %cst_97 = arith.constant dense<0.000000e+00> : vector<8x384xf32>
    %190 = tpu.matmul %188, %189, %cst_97 {dimension_numbers = #tpu.dot_dimension_numbers<[1], [0], [0], [1], [0, 0, 1, 1], [], []>} : vector<8x8xbf16>, vector<8x384xbf16>, vector<8x384xf32> -> vector<8x384xf32>
    %191 = arith.addf %187, %190 : vector<8x384xf32>
    %c376 = arith.constant 376 : index
    %c0_98 = arith.constant 0 : index
    %192 = vector.load %arg3[%c376, %c0_98] : memref<392x8xbf16, #tpu.memory_space<vmem>>, vector<8x8xbf16>
    %193 = vector.extract_strided_slice %2 {offsets = [0, 137], sizes = [8, 384], strides = [1, 1]} : vector<8x768xbf16> to vector<8x384xbf16>
    %cst_99 = arith.constant dense<0.000000e+00> : vector<8x384xf32>
    %194 = tpu.matmul %192, %193, %cst_99 {dimension_numbers = #tpu.dot_dimension_numbers<[1], [0], [0], [1], [0, 0, 1, 1], [], []>} : vector<8x8xbf16>, vector<8x384xbf16>, vector<8x384xf32> -> vector<8x384xf32>
    %195 = arith.addf %191, %194 : vector<8x384xf32>
    %c384 = arith.constant 384 : index
    %c0_100 = arith.constant 0 : index
    %196 = vector.load %arg3[%c384, %c0_100] : memref<392x8xbf16, #tpu.memory_space<vmem>>, vector<8x8xbf16>
    %197 = vector.extract_strided_slice %2 {offsets = [0, 138], sizes = [8, 384], strides = [1, 1]} : vector<8x768xbf16> to vector<8x384xbf16>
    %cst_101 = arith.constant dense<0.000000e+00> : vector<8x384xf32>
    %198 = tpu.matmul %196, %197, %cst_101 {dimension_numbers = #tpu.dot_dimension_numbers<[1], [0], [0], [1], [0, 0, 1, 1], [], []>} : vector<8x8xbf16>, vector<8x384xbf16>, vector<8x384xf32> -> vector<8x384xf32>
    %199 = arith.addf %195, %198 : vector<8x384xf32>
    %c0_102 = arith.constant 0 : index
    %c0_103 = arith.constant 0 : index
    %200 = vector.load %arg5[%c0_102, %c0_103] : memref<8x384xf32, #tpu.memory_space<vmem>>, vector<8x384xf32>
    tpu.vector_store %arg5[%c0_102, %c0_103], %199 {strides = array<i32>} : memref<8x384xf32, #tpu.memory_space<vmem>>, vector<8x384xf32>,
    %c0_104 = arith.constant 0 : index
    %c0_105 = arith.constant 0 : index
    %201 = vector.load %arg4[%c0_104, %c0_105] : memref<1x384xf32, #tpu.memory_space<vmem>>, vector<1x384xf32>
    %202 = vector.broadcast %201 : vector<1x384xf32> to vector<8x384xf32>
    %203 = arith.mulf %199, %202 : vector<8x384xf32>
    %cst_106 = arith.constant dense<0.000000e+00> : vector<8xf32>
    %204 = vector.multi_reduction <add>, %203, %cst_106 [1] : vector<8x384xf32> to vector<8xf32>
    %205 = vector.shape_cast %204 : vector<8xf32> to vector<8x1xf32>
    %206 = arith.mulf %203, %199 : vector<8x384xf32>
    %cst_107 = arith.constant dense<0.000000e+00> : vector<8xf32>
    %207 = vector.multi_reduction <add>, %206, %cst_107 [1] : vector<8x384xf32> to vector<8xf32>
    %208 = vector.shape_cast %207 : vector<8xf32> to vector<8x1xf32>
    %209 = tpu.concatenate %205, %208 in 1 : vector<8x1xf32>, vector<8x1xf32> -> vector<8x2xf32>
    %210 = vector.shape_cast %209 : vector<8x2xf32> to vector<1x8x2xf32>
    %c0_108 = arith.constant 0 : index
    %c0_109 = arith.constant 0 : index
    %c0_110 = arith.constant 0 : index
    %211 = vector.load %arg6[%c0_108, %c0_109, %c0_110] : memref<1x8x2xf32, #tpu.memory_space<vmem>>, vector<1x8x2xf32>
    tpu.vector_store %arg6[%c0_108, %c0_109, %c0_110], %210 {strides = array<i32>} : memref<1x8x2xf32, #tpu.memory_space<vmem>>, vector<1x8x2xf32>,
    return
  }
  func.func @transform_0(%arg0: i32) -> (i32, i32) {
    %c0_i32 = arith.constant 0 : i32
    %c0_i32_0 = arith.constant 0 : i32
    return %c0_i32, %arg0 : i32, i32
  }
  func.func @transform_1(%arg0: i32) -> (i32, i32) {
    %c1_i32 = arith.constant 1 : i32
    %0 = arith.addi %arg0, %c1_i32 : i32
    %c0_i32 = arith.constant 0 : i32
    %c0_i32_0 = arith.constant 0 : i32
    return %c0_i32, %0 : i32, i32
  }
  func.func @transform_2(%arg0: i32) -> (i32, i32) {
    %c0_i32 = arith.constant 0 : i32
    %c0_i32_0 = arith.constant 0 : i32
    %c0_i32_1 = arith.constant 0 : i32
    return %c0_i32, %c0_i32_0 : i32, i32
  }
  func.func @transform_3(%arg0: i32) -> (i32, i32) {
    %c0_i32 = arith.constant 0 : i32
    %c0_i32_0 = arith.constant 0 : i32
    return %c0_i32, %arg0 : i32, i32
  }
  func.func @transform_4(%arg0: i32) -> (i32, i32) {
    %c0_i32 = arith.constant 0 : i32
    %c0_i32_0 = arith.constant 0 : i32
    return %c0_i32, %arg0 : i32, i32
  }
  func.func @transform_5(%arg0: i32) -> (i32, i32, i32) {
    %c0_i32 = arith.constant 0 : i32
    %c0_i32_0 = arith.constant 0 : i32
    %c0_i32_1 = arith.constant 0 : i32
    return %arg0, %c0_i32, %c0_i32_0 : i32, i32, i32
  }
}

module attributes {stable_mosaic.version = 11 : i64} {
  func.func @kernel(%arg0: i32, %arg1: memref<8x256xf32, #tpu.memory_space<vmem>>, %arg2: memref<8x1xf32, #tpu.memory_space<vmem>>, %arg3: memref<8x1xf32, #tpu.memory_space<vmem>>, %arg4: memref<8x256xf32, #tpu.memory_space<vmem>>) attributes {dimension_semantics = [#tpu.dimension_semantics<parallel>], iteration_bounds = array<i64: 2>, scalar_prefetch = 0 : i64, scratch_operands = 0 : i64, tpu.core_type = #tpu.core_type<tc>, window_params = [{transform_indices = @transform_0, window_bounds = array<i64: 8, 256>}, {pipeline_mode = #tpu.pipeline_mode<synchronous>, transform_indices = @transform_1, window_bounds = array<i64: 8, 1>}, {pipeline_mode = #tpu.pipeline_mode<synchronous>, transform_indices = @transform_2, window_bounds = array<i64: 8, 1>}, {transform_indices = @transform_3, window_bounds = array<i64: 8, 256>}]} {
    %c0 = arith.constant 0 : index
    %c0_0 = arith.constant 0 : index
    %0 = vector.load %arg1[%c0, %c0_0] : memref<8x256xf32, #tpu.memory_space<vmem>>, vector<8x256xf32>
    %c0_1 = arith.constant 0 : index
    %c0_2 = arith.constant 0 : index
    %1 = vector.load %arg2[%c0_1, %c0_2] : memref<8x1xf32, #tpu.memory_space<vmem>>, vector<8x1xf32>
    %2 = vector.broadcast %1 : vector<8x1xf32> to vector<8x256xf32>
    %3 = arith.mulf %0, %2 : vector<8x256xf32>
    %c0_3 = arith.constant 0 : index
    %c0_4 = arith.constant 0 : index
    %4 = vector.load %arg3[%c0_3, %c0_4] : memref<8x1xf32, #tpu.memory_space<vmem>>, vector<8x1xf32>
    %5 = vector.broadcast %4 : vector<8x1xf32> to vector<8x256xf32>
    %6 = arith.addf %3, %5 : vector<8x256xf32>
    %cst = arith.constant 0.000000e+00 : f32
    %7 = vector.broadcast %cst : f32 to vector<8x256xf32>
    %8 = arith.cmpf oge, %6, %7 : vector<8x256xf32>
    %cst_5 = arith.constant 0.00999999977 : f32
    %9 = vector.broadcast %cst_5 : f32 to vector<8x256xf32>
    %10 = arith.mulf %9, %6 : vector<8x256xf32>
    %11 = arith.select %8, %6, %10 : vector<8x256xi1>, vector<8x256xf32>
    %c0_6 = arith.constant 0 : index
    %c0_7 = arith.constant 0 : index
    %12 = vector.load %arg4[%c0_6, %c0_7] : memref<8x256xf32, #tpu.memory_space<vmem>>, vector<8x256xf32>
    tpu.vector_store %arg4[%c0_6, %c0_7], %11 {strides = array<i32>} : memref<8x256xf32, #tpu.memory_space<vmem>>, vector<8x256xf32>,
    return
  }
  func.func @transform_0(%arg0: i32) -> (i32, i32) {
    %c0_i32 = arith.constant 0 : i32
    %c0_i32_0 = arith.constant 0 : i32
    return %c0_i32, %arg0 : i32, i32
  }
  func.func @transform_1(%arg0: i32) -> (i32, i32) {
    %c0_i32 = arith.constant 0 : i32
    %c0_i32_0 = arith.constant 0 : i32
    %c0_i32_1 = arith.constant 0 : i32
    return %c0_i32, %c0_i32_0 : i32, i32
  }
  func.func @transform_2(%arg0: i32) -> (i32, i32) {
    %c0_i32 = arith.constant 0 : i32
    %c0_i32_0 = arith.constant 0 : i32
    %c0_i32_1 = arith.constant 0 : i32
    return %c0_i32, %c0_i32_0 : i32, i32
  }
  func.func @transform_3(%arg0: i32) -> (i32, i32) {
    %c0_i32 = arith.constant 0 : i32
    %c0_i32_0 = arith.constant 0 : i32
    return %c0_i32, %arg0 : i32, i32
  }
}

module attributes {stable_mosaic.version = 11 : i64} {
  func.func @kernel(%arg0: i32, %arg1: memref<32x128xbf16, #tpu.memory_space<vmem>>, %arg2: memref<32x128xbf16, #tpu.memory_space<vmem>>, %arg3: memref<144x8xbf16, #tpu.memory_space<vmem>>, %arg4: memref<1x128xf32, #tpu.memory_space<vmem>>, %arg5: memref<16x128xf32, #tpu.memory_space<vmem>>, %arg6: memref<1x16x2xf32, #tpu.memory_space<vmem>>) attributes {dimension_semantics = [#tpu.dimension_semantics<parallel>], iteration_bounds = array<i64: 2>, scalar_prefetch = 0 : i64, scratch_operands = 0 : i64, tpu.core_type = #tpu.core_type<tc>, window_params = [{transform_indices = @transform_0, window_bounds = array<i64: 32, 128>}, {transform_indices = @transform_1, window_bounds = array<i64: 32, 128>}, {pipeline_mode = #tpu.pipeline_mode<synchronous>, transform_indices = @transform_2, window_bounds = array<i64: 144, 8>}, {transform_indices = @transform_3, window_bounds = array<i64: 1, 128>}, {transform_indices = @transform_4, window_bounds = array<i64: 16, 128>}, {transform_indices = @transform_5, window_bounds = array<i64: 1, 16, 2>}]} {
    %c0 = arith.constant 0 : index
    %c0_0 = arith.constant 0 : index
    %0 = vector.load %arg1[%c0, %c0_0] : memref<32x128xbf16, #tpu.memory_space<vmem>>, vector<32x128xbf16>
    %c0_1 = arith.constant 0 : index
    %c0_2 = arith.constant 0 : index
    %1 = vector.load %arg2[%c0_1, %c0_2] : memref<32x128xbf16, #tpu.memory_space<vmem>>, vector<32x128xbf16>
    %2 = tpu.concatenate %0, %1 in 1 : vector<32x128xbf16>, vector<32x128xbf16> -> vector<32x256xbf16>
    %cst = arith.constant 0.000000e+00 : f32
    %3 = vector.broadcast %cst : f32 to vector<16x128xf32>
    %c0_3 = arith.constant 0 : index
    %c0_4 = arith.constant 0 : index
    %4 = vector.load %arg3[%c0_3, %c0_4] : memref<144x8xbf16, #tpu.memory_space<vmem>>, vector<16x8xbf16>
    %5 = vector.extract_strided_slice %2 {offsets = [0, 0], sizes = [8, 128], strides = [1, 1]} : vector<32x256xbf16> to vector<8x128xbf16>
    %cst_5 = arith.constant dense<0.000000e+00> : vector<16x128xf32>
    %6 = tpu.matmul %4, %5, %cst_5 {dimension_numbers = #tpu.dot_dimension_numbers<[1], [0], [0], [1], [0, 0, 1, 1], [], []>} : vector<16x8xbf16>, vector<8x128xbf16>, vector<16x128xf32> -> vector<16x128xf32>
    %7 = arith.addf %3, %6 : vector<16x128xf32>
    %c16 = arith.constant 16 : index
    %c0_6 = arith.constant 0 : index
    %8 = vector.load %arg3[%c16, %c0_6] : memref<144x8xbf16, #tpu.memory_space<vmem>>, vector<16x8xbf16>
    %9 = vector.extract_strided_slice %2 {offsets = [8, 0], sizes = [8, 128], strides = [1, 1]} : vector<32x256xbf16> to vector<8x128xbf16>
    %cst_7 = arith.constant dense<0.000000e+00> : vector<16x128xf32>
    %10 = tpu.matmul %8, %9, %cst_7 {dimension_numbers = #tpu.dot_dimension_numbers<[1], [0], [0], [1], [0, 0, 1, 1], [], []>} : vector<16x8xbf16>, vector<8x128xbf16>, vector<16x128xf32> -> vector<16x128xf32>
    %11 = arith.addf %7, %10 : vector<16x128xf32>
    %c32 = arith.constant 32 : index
    %c0_8 = arith.constant 0 : index
    %12 = vector.load %arg3[%c32, %c0_8] : memref<144x8xbf16, #tpu.memory_space<vmem>>, vector<16x8xbf16>
    %13 = vector.extract_strided_slice %2 {offsets = [0, 1], sizes = [8, 128], strides = [1, 1]} : vector<32x256xbf16> to vector<8x128xbf16>
    %cst_9 = arith.constant dense<0.000000e+00> : vector<16x128xf32>
    %14 = tpu.matmul %12, %13, %cst_9 {dimension_numbers = #tpu.dot_dimension_numbers<[1], [0], [0], [1], [0, 0, 1, 1], [], []>} : vector<16x8xbf16>, vector<8x128xbf16>, vector<16x128xf32> -> vector<16x128xf32>
    %15 = arith.addf %11, %14 : vector<16x128xf32>
    %c48 = arith.constant 48 : index
    %c0_10 = arith.constant 0 : index
    %16 = vector.load %arg3[%c48, %c0_10] : memref<144x8xbf16, #tpu.memory_space<vmem>>, vector<16x8xbf16>
    %17 = vector.extract_strided_slice %2 {offsets = [16, 0], sizes = [8, 128], strides = [1, 1]} : vector<32x256xbf16> to vector<8x128xbf16>
    %cst_11 = arith.constant dense<0.000000e+00> : vector<16x128xf32>
    %18 = tpu.matmul %16, %17, %cst_11 {dimension_numbers = #tpu.dot_dimension_numbers<[1], [0], [0], [1], [0, 0, 1, 1], [], []>} : vector<16x8xbf16>, vector<8x128xbf16>, vector<16x128xf32> -> vector<16x128xf32>
    %19 = arith.addf %15, %18 : vector<16x128xf32>
    %c64 = arith.constant 64 : index
    %c0_12 = arith.constant 0 : index
    %20 = vector.load %arg3[%c64, %c0_12] : memref<144x8xbf16, #tpu.memory_space<vmem>>, vector<16x8xbf16>
    %21 = vector.extract_strided_slice %2 {offsets = [24, 0], sizes = [8, 128], strides = [1, 1]} : vector<32x256xbf16> to vector<8x128xbf16>
    %cst_13 = arith.constant dense<0.000000e+00> : vector<16x128xf32>
    %22 = tpu.matmul %20, %21, %cst_13 {dimension_numbers = #tpu.dot_dimension_numbers<[1], [0], [0], [1], [0, 0, 1, 1], [], []>} : vector<16x8xbf16>, vector<8x128xbf16>, vector<16x128xf32> -> vector<16x128xf32>
    %23 = arith.addf %19, %22 : vector<16x128xf32>
    %c80 = arith.constant 80 : index
    %c0_14 = arith.constant 0 : index
    %24 = vector.load %arg3[%c80, %c0_14] : memref<144x8xbf16, #tpu.memory_space<vmem>>, vector<16x8xbf16>
    %25 = vector.extract_strided_slice %2 {offsets = [16, 1], sizes = [8, 128], strides = [1, 1]} : vector<32x256xbf16> to vector<8x128xbf16>
    %cst_15 = arith.constant dense<0.000000e+00> : vector<16x128xf32>
    %26 = tpu.matmul %24, %25, %cst_15 {dimension_numbers = #tpu.dot_dimension_numbers<[1], [0], [0], [1], [0, 0, 1, 1], [], []>} : vector<16x8xbf16>, vector<8x128xbf16>, vector<16x128xf32> -> vector<16x128xf32>
    %27 = arith.addf %23, %26 : vector<16x128xf32>
    %c96 = arith.constant 96 : index
    %c0_16 = arith.constant 0 : index
    %28 = vector.load %arg3[%c96, %c0_16] : memref<144x8xbf16, #tpu.memory_space<vmem>>, vector<16x8xbf16>
    %29 = vector.extract_strided_slice %2 {offsets = [0, 9], sizes = [8, 128], strides = [1, 1]} : vector<32x256xbf16> to vector<8x128xbf16>
    %cst_17 = arith.constant dense<0.000000e+00> : vector<16x128xf32>
    %30 = tpu.matmul %28, %29, %cst_17 {dimension_numbers = #tpu.dot_dimension_numbers<[1], [0], [0], [1], [0, 0, 1, 1], [], []>} : vector<16x8xbf16>, vector<8x128xbf16>, vector<16x128xf32> -> vector<16x128xf32>
    %31 = arith.addf %27, %30 : vector<16x128xf32>
    %c112 = arith.constant 112 : index
    %c0_18 = arith.constant 0 : index
    %32 = vector.load %arg3[%c112, %c0_18] : memref<144x8xbf16, #tpu.memory_space<vmem>>, vector<16x8xbf16>
    %33 = vector.extract_strided_slice %2 {offsets = [8, 9], sizes = [8, 128], strides = [1, 1]} : vector<32x256xbf16> to vector<8x128xbf16>
    %cst_19 = arith.constant dense<0.000000e+00> : vector<16x128xf32>
    %34 = tpu.matmul %32, %33, %cst_19 {dimension_numbers = #tpu.dot_dimension_numbers<[1], [0], [0], [1], [0, 0, 1, 1], [], []>} : vector<16x8xbf16>, vector<8x128xbf16>, vector<16x128xf32> -> vector<16x128xf32>
    %35 = arith.addf %31, %34 : vector<16x128xf32>
    %c128 = arith.constant 128 : index
    %c0_20 = arith.constant 0 : index
    %36 = vector.load %arg3[%c128, %c0_20] : memref<144x8xbf16, #tpu.memory_space<vmem>>, vector<16x8xbf16>
    %37 = vector.extract_strided_slice %2 {offsets = [0, 10], sizes = [8, 128], strides = [1, 1]} : vector<32x256xbf16> to vector<8x128xbf16>
    %cst_21 = arith.constant dense<0.000000e+00> : vector<16x128xf32>
    %38 = tpu.matmul %36, %37, %cst_21 {dimension_numbers = #tpu.dot_dimension_numbers<[1], [0], [0], [1], [0, 0, 1, 1], [], []>} : vector<16x8xbf16>, vector<8x128xbf16>, vector<16x128xf32> -> vector<16x128xf32>
    %39 = arith.addf %35, %38 : vector<16x128xf32>
    %c0_22 = arith.constant 0 : index
    %c0_23 = arith.constant 0 : index
    %40 = vector.load %arg5[%c0_22, %c0_23] : memref<16x128xf32, #tpu.memory_space<vmem>>, vector<16x128xf32>
    tpu.vector_store %arg5[%c0_22, %c0_23], %39 {strides = array<i32>} : memref<16x128xf32, #tpu.memory_space<vmem>>, vector<16x128xf32>,
    %c0_24 = arith.constant 0 : index
    %c0_25 = arith.constant 0 : index
    %41 = vector.load %arg4[%c0_24, %c0_25] : memref<1x128xf32, #tpu.memory_space<vmem>>, vector<1x128xf32>
    %42 = vector.broadcast %41 : vector<1x128xf32> to vector<16x128xf32>
    %43 = arith.mulf %39, %42 : vector<16x128xf32>
    %cst_26 = arith.constant dense<0.000000e+00> : vector<16xf32>
    %44 = vector.multi_reduction <add>, %43, %cst_26 [1] : vector<16x128xf32> to vector<16xf32>
    %45 = vector.shape_cast %44 : vector<16xf32> to vector<16x1xf32>
    %46 = arith.mulf %43, %39 : vector<16x128xf32>
    %cst_27 = arith.constant dense<0.000000e+00> : vector<16xf32>
    %47 = vector.multi_reduction <add>, %46, %cst_27 [1] : vector<16x128xf32> to vector<16xf32>
    %48 = vector.shape_cast %47 : vector<16xf32> to vector<16x1xf32>
    %49 = tpu.concatenate %45, %48 in 1 : vector<16x1xf32>, vector<16x1xf32> -> vector<16x2xf32>
    %50 = vector.shape_cast %49 : vector<16x2xf32> to vector<1x16x2xf32>
    %c0_28 = arith.constant 0 : index
    %c0_29 = arith.constant 0 : index
    %c0_30 = arith.constant 0 : index
    %51 = vector.load %arg6[%c0_28, %c0_29, %c0_30] : memref<1x16x2xf32, #tpu.memory_space<vmem>>, vector<1x16x2xf32>
    tpu.vector_store %arg6[%c0_28, %c0_29, %c0_30], %50 {strides = array<i32>} : memref<1x16x2xf32, #tpu.memory_space<vmem>>, vector<1x16x2xf32>,
    return
  }
  func.func @transform_0(%arg0: i32) -> (i32, i32) {
    %c0_i32 = arith.constant 0 : i32
    %c0_i32_0 = arith.constant 0 : i32
    return %c0_i32, %arg0 : i32, i32
  }
  func.func @transform_1(%arg0: i32) -> (i32, i32) {
    %c1_i32 = arith.constant 1 : i32
    %0 = arith.addi %arg0, %c1_i32 : i32
    %c0_i32 = arith.constant 0 : i32
    %c0_i32_0 = arith.constant 0 : i32
    return %c0_i32, %0 : i32, i32
  }
  func.func @transform_2(%arg0: i32) -> (i32, i32) {
    %c0_i32 = arith.constant 0 : i32
    %c0_i32_0 = arith.constant 0 : i32
    %c0_i32_1 = arith.constant 0 : i32
    return %c0_i32, %c0_i32_0 : i32, i32
  }
  func.func @transform_3(%arg0: i32) -> (i32, i32) {
    %c0_i32 = arith.constant 0 : i32
    %c0_i32_0 = arith.constant 0 : i32
    return %c0_i32, %arg0 : i32, i32
  }
  func.func @transform_4(%arg0: i32) -> (i32, i32) {
    %c0_i32 = arith.constant 0 : i32
    %c0_i32_0 = arith.constant 0 : i32
    return %c0_i32, %arg0 : i32, i32
  }
  func.func @transform_5(%arg0: i32) -> (i32, i32, i32) {
    %c0_i32 = arith.constant 0 : i32
    %c0_i32_0 = arith.constant 0 : i32
    %c0_i32_1 = arith.constant 0 : i32
    return %arg0, %c0_i32, %c0_i32_0 : i32, i32, i32
  }
}

module attributes {stable_mosaic.version = 11 : i64} {
  func.func @kernel(%arg0: i32, %arg1: memref<16x128xf32, #tpu.memory_space<vmem>>, %arg2: memref<16x1xf32, #tpu.memory_space<vmem>>, %arg3: memref<16x1xf32, #tpu.memory_space<vmem>>, %arg4: memref<16x128xf32, #tpu.memory_space<vmem>>) attributes {dimension_semantics = [#tpu.dimension_semantics<parallel>], iteration_bounds = array<i64: 1>, scalar_prefetch = 0 : i64, scratch_operands = 0 : i64, tpu.core_type = #tpu.core_type<tc>, window_params = [{transform_indices = @transform_0, window_bounds = array<i64: 16, 128>}, {pipeline_mode = #tpu.pipeline_mode<synchronous>, transform_indices = @transform_1, window_bounds = array<i64: 16, 1>}, {pipeline_mode = #tpu.pipeline_mode<synchronous>, transform_indices = @transform_2, window_bounds = array<i64: 16, 1>}, {transform_indices = @transform_3, window_bounds = array<i64: 16, 128>}]} {
    %c0 = arith.constant 0 : index
    %c0_0 = arith.constant 0 : index
    %0 = vector.load %arg1[%c0, %c0_0] : memref<16x128xf32, #tpu.memory_space<vmem>>, vector<16x128xf32>
    %c0_1 = arith.constant 0 : index
    %c0_2 = arith.constant 0 : index
    %1 = vector.load %arg2[%c0_1, %c0_2] : memref<16x1xf32, #tpu.memory_space<vmem>>, vector<16x1xf32>
    %2 = vector.broadcast %1 : vector<16x1xf32> to vector<16x128xf32>
    %3 = arith.mulf %0, %2 : vector<16x128xf32>
    %c0_3 = arith.constant 0 : index
    %c0_4 = arith.constant 0 : index
    %4 = vector.load %arg3[%c0_3, %c0_4] : memref<16x1xf32, #tpu.memory_space<vmem>>, vector<16x1xf32>
    %5 = vector.broadcast %4 : vector<16x1xf32> to vector<16x128xf32>
    %6 = arith.addf %3, %5 : vector<16x128xf32>
    %cst = arith.constant 0.000000e+00 : f32
    %7 = vector.broadcast %cst : f32 to vector<16x128xf32>
    %8 = arith.cmpf oge, %6, %7 : vector<16x128xf32>
    %cst_5 = arith.constant 0.00999999977 : f32
    %9 = vector.broadcast %cst_5 : f32 to vector<16x128xf32>
    %10 = arith.mulf %9, %6 : vector<16x128xf32>
    %11 = arith.select %8, %6, %10 : vector<16x128xi1>, vector<16x128xf32>
    %c0_6 = arith.constant 0 : index
    %c0_7 = arith.constant 0 : index
    %12 = vector.load %arg4[%c0_6, %c0_7] : memref<16x128xf32, #tpu.memory_space<vmem>>, vector<16x128xf32>
    tpu.vector_store %arg4[%c0_6, %c0_7], %11 {strides = array<i32>} : memref<16x128xf32, #tpu.memory_space<vmem>>, vector<16x128xf32>,
    return
  }
  func.func @transform_0(%arg0: i32) -> (i32, i32) {
    %c0_i32 = arith.constant 0 : i32
    %c0_i32_0 = arith.constant 0 : i32
    return %c0_i32, %arg0 : i32, i32
  }
  func.func @transform_1(%arg0: i32) -> (i32, i32) {
    %c0_i32 = arith.constant 0 : i32
    %c0_i32_0 = arith.constant 0 : i32
    %c0_i32_1 = arith.constant 0 : i32
    return %c0_i32, %c0_i32_0 : i32, i32
  }
  func.func @transform_2(%arg0: i32) -> (i32, i32) {
    %c0_i32 = arith.constant 0 : i32
    %c0_i32_0 = arith.constant 0 : i32
    %c0_i32_1 = arith.constant 0 : i32
    return %c0_i32, %c0_i32_0 : i32, i32
  }
  func.func @transform_3(%arg0: i32) -> (i32, i32) {
    %c0_i32 = arith.constant 0 : i32
    %c0_i32_0 = arith.constant 0 : i32
    return %c0_i32, %arg0 : i32, i32
  }
}

module attributes {stable_mosaic.version = 11 : i64} {
  func.func @kernel(%arg0: i32, %arg1: memref<64x128xbf16, #tpu.memory_space<vmem>>, %arg2: memref<64x128xbf16, #tpu.memory_space<vmem>>, %arg3: memref<288x16xbf16, #tpu.memory_space<vmem>>, %arg4: memref<1x128xf32, #tpu.memory_space<vmem>>, %arg5: memref<32x128xf32, #tpu.memory_space<vmem>>, %arg6: memref<1x32x2xf32, #tpu.memory_space<vmem>>) attributes {dimension_semantics = [#tpu.dimension_semantics<parallel>], iteration_bounds = array<i64: 1>, scalar_prefetch = 0 : i64, scratch_operands = 0 : i64, tpu.core_type = #tpu.core_type<tc>, window_params = [{transform_indices = @transform_0, window_bounds = array<i64: 64, 128>}, {transform_indices = @transform_1, window_bounds = array<i64: 64, 128>}, {pipeline_mode = #tpu.pipeline_mode<synchronous>, transform_indices = @transform_2, window_bounds = array<i64: 288, 16>}, {transform_indices = @transform_3, window_bounds = array<i64: 1, 128>}, {transform_indices = @transform_4, window_bounds = array<i64: 32, 128>}, {transform_indices = @transform_5, window_bounds = array<i64: 1, 32, 2>}]} {
    %c0 = arith.constant 0 : index
    %c0_0 = arith.constant 0 : index
    %0 = vector.load %arg1[%c0, %c0_0] : memref<64x128xbf16, #tpu.memory_space<vmem>>, vector<64x128xbf16>
    %c0_1 = arith.constant 0 : index
    %c0_2 = arith.constant 0 : index
    %1 = vector.load %arg2[%c0_1, %c0_2] : memref<64x128xbf16, #tpu.memory_space<vmem>>, vector<64x128xbf16>
    %2 = tpu.concatenate %0, %1 in 1 : vector<64x128xbf16>, vector<64x128xbf16> -> vector<64x256xbf16>
    %cst = arith.constant 0.000000e+00 : f32
    %3 = vector.broadcast %cst : f32 to vector<32x128xf32>
    %c0_3 = arith.constant 0 : index
    %c0_4 = arith.constant 0 : index
    %4 = vector.load %arg3[%c0_3, %c0_4] : memref<288x16xbf16, #tpu.memory_space<vmem>>, vector<32x16xbf16>
    %5 = vector.extract_strided_slice %2 {offsets = [0, 0], sizes = [16, 128], strides = [1, 1]} : vector<64x256xbf16> to vector<16x128xbf16>
    %cst_5 = arith.constant dense<0.000000e+00> : vector<32x128xf32>
    %6 = tpu.matmul %4, %5, %cst_5 {dimension_numbers = #tpu.dot_dimension_numbers<[1], [0], [0], [1], [0, 0, 1, 1], [], []>} : vector<32x16xbf16>, vector<16x128xbf16>, vector<32x128xf32> -> vector<32x128xf32>
    %7 = arith.addf %3, %6 : vector<32x128xf32>
    %c32 = arith.constant 32 : index
    %c0_6 = arith.constant 0 : index
    %8 = vector.load %arg3[%c32, %c0_6] : memref<288x16xbf16, #tpu.memory_space<vmem>>, vector<32x16xbf16>
    %9 = vector.extract_strided_slice %2 {offsets = [16, 0], sizes = [16, 128], strides = [1, 1]} : vector<64x256xbf16> to vector<16x128xbf16>
    %cst_7 = arith.constant dense<0.000000e+00> : vector<32x128xf32>
    %10 = tpu.matmul %8, %9, %cst_7 {dimension_numbers = #tpu.dot_dimension_numbers<[1], [0], [0], [1], [0, 0, 1, 1], [], []>} : vector<32x16xbf16>, vector<16x128xbf16>, vector<32x128xf32> -> vector<32x128xf32>
    %11 = arith.addf %7, %10 : vector<32x128xf32>
    %c64 = arith.constant 64 : index
    %c0_8 = arith.constant 0 : index
    %12 = vector.load %arg3[%c64, %c0_8] : memref<288x16xbf16, #tpu.memory_space<vmem>>, vector<32x16xbf16>
    %13 = vector.extract_strided_slice %2 {offsets = [0, 1], sizes = [16, 128], strides = [1, 1]} : vector<64x256xbf16> to vector<16x128xbf16>
    %cst_9 = arith.constant dense<0.000000e+00> : vector<32x128xf32>
    %14 = tpu.matmul %12, %13, %cst_9 {dimension_numbers = #tpu.dot_dimension_numbers<[1], [0], [0], [1], [0, 0, 1, 1], [], []>} : vector<32x16xbf16>, vector<16x128xbf16>, vector<32x128xf32> -> vector<32x128xf32>
    %15 = arith.addf %11, %14 : vector<32x128xf32>
    %c96 = arith.constant 96 : index
    %c0_10 = arith.constant 0 : index
    %16 = vector.load %arg3[%c96, %c0_10] : memref<288x16xbf16, #tpu.memory_space<vmem>>, vector<32x16xbf16>
    %17 = vector.extract_strided_slice %2 {offsets = [32, 0], sizes = [16, 128], strides = [1, 1]} : vector<64x256xbf16> to vector<16x128xbf16>
    %cst_11 = arith.constant dense<0.000000e+00> : vector<32x128xf32>
    %18 = tpu.matmul %16, %17, %cst_11 {dimension_numbers = #tpu.dot_dimension_numbers<[1], [0], [0], [1], [0, 0, 1, 1], [], []>} : vector<32x16xbf16>, vector<16x128xbf16>, vector<32x128xf32> -> vector<32x128xf32>
    %19 = arith.addf %15, %18 : vector<32x128xf32>
    %c128 = arith.constant 128 : index
    %c0_12 = arith.constant 0 : index
    %20 = vector.load %arg3[%c128, %c0_12] : memref<288x16xbf16, #tpu.memory_space<vmem>>, vector<32x16xbf16>
    %21 = vector.extract_strided_slice %2 {offsets = [48, 0], sizes = [16, 128], strides = [1, 1]} : vector<64x256xbf16> to vector<16x128xbf16>
    %cst_13 = arith.constant dense<0.000000e+00> : vector<32x128xf32>
    %22 = tpu.matmul %20, %21, %cst_13 {dimension_numbers = #tpu.dot_dimension_numbers<[1], [0], [0], [1], [0, 0, 1, 1], [], []>} : vector<32x16xbf16>, vector<16x128xbf16>, vector<32x128xf32> -> vector<32x128xf32>
    %23 = arith.addf %19, %22 : vector<32x128xf32>
    %c160 = arith.constant 160 : index
    %c0_14 = arith.constant 0 : index
    %24 = vector.load %arg3[%c160, %c0_14] : memref<288x16xbf16, #tpu.memory_space<vmem>>, vector<32x16xbf16>
    %25 = vector.extract_strided_slice %2 {offsets = [32, 1], sizes = [16, 128], strides = [1, 1]} : vector<64x256xbf16> to vector<16x128xbf16>
    %cst_15 = arith.constant dense<0.000000e+00> : vector<32x128xf32>
    %26 = tpu.matmul %24, %25, %cst_15 {dimension_numbers = #tpu.dot_dimension_numbers<[1], [0], [0], [1], [0, 0, 1, 1], [], []>} : vector<32x16xbf16>, vector<16x128xbf16>, vector<32x128xf32> -> vector<32x128xf32>
    %27 = arith.addf %23, %26 : vector<32x128xf32>
    %c192 = arith.constant 192 : index
    %c0_16 = arith.constant 0 : index
    %28 = vector.load %arg3[%c192, %c0_16] : memref<288x16xbf16, #tpu.memory_space<vmem>>, vector<32x16xbf16>
    %29 = vector.extract_strided_slice %2 {offsets = [0, 5], sizes = [16, 128], strides = [1, 1]} : vector<64x256xbf16> to vector<16x128xbf16>
    %cst_17 = arith.constant dense<0.000000e+00> : vector<32x128xf32>
    %30 = tpu.matmul %28, %29, %cst_17 {dimension_numbers = #tpu.dot_dimension_numbers<[1], [0], [0], [1], [0, 0, 1, 1], [], []>} : vector<32x16xbf16>, vector<16x128xbf16>, vector<32x128xf32> -> vector<32x128xf32>
    %31 = arith.addf %27, %30 : vector<32x128xf32>
    %c224 = arith.constant 224 : index
    %c0_18 = arith.constant 0 : index
    %32 = vector.load %arg3[%c224, %c0_18] : memref<288x16xbf16, #tpu.memory_space<vmem>>, vector<32x16xbf16>
    %33 = vector.extract_strided_slice %2 {offsets = [16, 5], sizes = [16, 128], strides = [1, 1]} : vector<64x256xbf16> to vector<16x128xbf16>
    %cst_19 = arith.constant dense<0.000000e+00> : vector<32x128xf32>
    %34 = tpu.matmul %32, %33, %cst_19 {dimension_numbers = #tpu.dot_dimension_numbers<[1], [0], [0], [1], [0, 0, 1, 1], [], []>} : vector<32x16xbf16>, vector<16x128xbf16>, vector<32x128xf32> -> vector<32x128xf32>
    %35 = arith.addf %31, %34 : vector<32x128xf32>
    %c256 = arith.constant 256 : index
    %c0_20 = arith.constant 0 : index
    %36 = vector.load %arg3[%c256, %c0_20] : memref<288x16xbf16, #tpu.memory_space<vmem>>, vector<32x16xbf16>
    %37 = vector.extract_strided_slice %2 {offsets = [0, 6], sizes = [16, 128], strides = [1, 1]} : vector<64x256xbf16> to vector<16x128xbf16>
    %cst_21 = arith.constant dense<0.000000e+00> : vector<32x128xf32>
    %38 = tpu.matmul %36, %37, %cst_21 {dimension_numbers = #tpu.dot_dimension_numbers<[1], [0], [0], [1], [0, 0, 1, 1], [], []>} : vector<32x16xbf16>, vector<16x128xbf16>, vector<32x128xf32> -> vector<32x128xf32>
    %39 = arith.addf %35, %38 : vector<32x128xf32>
    %c0_22 = arith.constant 0 : index
    %c0_23 = arith.constant 0 : index
    %40 = vector.load %arg5[%c0_22, %c0_23] : memref<32x128xf32, #tpu.memory_space<vmem>>, vector<32x128xf32>
    tpu.vector_store %arg5[%c0_22, %c0_23], %39 {strides = array<i32>} : memref<32x128xf32, #tpu.memory_space<vmem>>, vector<32x128xf32>,
    %c0_24 = arith.constant 0 : index
    %c0_25 = arith.constant 0 : index
    %41 = vector.load %arg4[%c0_24, %c0_25] : memref<1x128xf32, #tpu.memory_space<vmem>>, vector<1x128xf32>
    %42 = vector.broadcast %41 : vector<1x128xf32> to vector<32x128xf32>
    %43 = arith.mulf %39, %42 : vector<32x128xf32>
    %cst_26 = arith.constant dense<0.000000e+00> : vector<32xf32>
    %44 = vector.multi_reduction <add>, %43, %cst_26 [1] : vector<32x128xf32> to vector<32xf32>
    %45 = vector.shape_cast %44 : vector<32xf32> to vector<32x1xf32>
    %46 = arith.mulf %43, %39 : vector<32x128xf32>
    %cst_27 = arith.constant dense<0.000000e+00> : vector<32xf32>
    %47 = vector.multi_reduction <add>, %46, %cst_27 [1] : vector<32x128xf32> to vector<32xf32>
    %48 = vector.shape_cast %47 : vector<32xf32> to vector<32x1xf32>
    %49 = tpu.concatenate %45, %48 in 1 : vector<32x1xf32>, vector<32x1xf32> -> vector<32x2xf32>
    %50 = vector.shape_cast %49 : vector<32x2xf32> to vector<1x32x2xf32>
    %c0_28 = arith.constant 0 : index
    %c0_29 = arith.constant 0 : index
    %c0_30 = arith.constant 0 : index
    %51 = vector.load %arg6[%c0_28, %c0_29, %c0_30] : memref<1x32x2xf32, #tpu.memory_space<vmem>>, vector<1x32x2xf32>
    tpu.vector_store %arg6[%c0_28, %c0_29, %c0_30], %50 {strides = array<i32>} : memref<1x32x2xf32, #tpu.memory_space<vmem>>, vector<1x32x2xf32>,
    return
  }
  func.func @transform_0(%arg0: i32) -> (i32, i32) {
    %c0_i32 = arith.constant 0 : i32
    %c0_i32_0 = arith.constant 0 : i32
    return %c0_i32, %arg0 : i32, i32
  }
  func.func @transform_1(%arg0: i32) -> (i32, i32) {
    %c1_i32 = arith.constant 1 : i32
    %0 = arith.addi %arg0, %c1_i32 : i32
    %c0_i32 = arith.constant 0 : i32
    %c0_i32_0 = arith.constant 0 : i32
    return %c0_i32, %0 : i32, i32
  }
  func.func @transform_2(%arg0: i32) -> (i32, i32) {
    %c0_i32 = arith.constant 0 : i32
    %c0_i32_0 = arith.constant 0 : i32
    %c0_i32_1 = arith.constant 0 : i32
    return %c0_i32, %c0_i32_0 : i32, i32
  }
  func.func @transform_3(%arg0: i32) -> (i32, i32) {
    %c0_i32 = arith.constant 0 : i32
    %c0_i32_0 = arith.constant 0 : i32
    return %c0_i32, %arg0 : i32, i32
  }
  func.func @transform_4(%arg0: i32) -> (i32, i32) {
    %c0_i32 = arith.constant 0 : i32
    %c0_i32_0 = arith.constant 0 : i32
    return %c0_i32, %arg0 : i32, i32
  }
  func.func @transform_5(%arg0: i32) -> (i32, i32, i32) {
    %c0_i32 = arith.constant 0 : i32
    %c0_i32_0 = arith.constant 0 : i32
    %c0_i32_1 = arith.constant 0 : i32
    return %arg0, %c0_i32, %c0_i32_0 : i32, i32, i32
  }
}

module attributes {stable_mosaic.version = 11 : i64} {
  func.func @kernel(%arg0: i32, %arg1: memref<32x128xf32, #tpu.memory_space<vmem>>, %arg2: memref<32x1xf32, #tpu.memory_space<vmem>>, %arg3: memref<32x1xf32, #tpu.memory_space<vmem>>, %arg4: memref<32x128xf32, #tpu.memory_space<vmem>>) attributes {dimension_semantics = [#tpu.dimension_semantics<parallel>], iteration_bounds = array<i64: 1>, scalar_prefetch = 0 : i64, scratch_operands = 0 : i64, tpu.core_type = #tpu.core_type<tc>, window_params = [{transform_indices = @transform_0, window_bounds = array<i64: 32, 128>}, {pipeline_mode = #tpu.pipeline_mode<synchronous>, transform_indices = @transform_1, window_bounds = array<i64: 32, 1>}, {pipeline_mode = #tpu.pipeline_mode<synchronous>, transform_indices = @transform_2, window_bounds = array<i64: 32, 1>}, {transform_indices = @transform_3, window_bounds = array<i64: 32, 128>}]} {
    %c0 = arith.constant 0 : index
    %c0_0 = arith.constant 0 : index
    %0 = vector.load %arg1[%c0, %c0_0] : memref<32x128xf32, #tpu.memory_space<vmem>>, vector<32x128xf32>
    %c0_1 = arith.constant 0 : index
    %c0_2 = arith.constant 0 : index
    %1 = vector.load %arg2[%c0_1, %c0_2] : memref<32x1xf32, #tpu.memory_space<vmem>>, vector<32x1xf32>
    %2 = vector.broadcast %1 : vector<32x1xf32> to vector<32x128xf32>
    %3 = arith.mulf %0, %2 : vector<32x128xf32>
    %c0_3 = arith.constant 0 : index
    %c0_4 = arith.constant 0 : index
    %4 = vector.load %arg3[%c0_3, %c0_4] : memref<32x1xf32, #tpu.memory_space<vmem>>, vector<32x1xf32>
    %5 = vector.broadcast %4 : vector<32x1xf32> to vector<32x128xf32>
    %6 = arith.addf %3, %5 : vector<32x128xf32>
    %cst = arith.constant 0.000000e+00 : f32
    %7 = vector.broadcast %cst : f32 to vector<32x128xf32>
    %8 = arith.cmpf oge, %6, %7 : vector<32x128xf32>
    %cst_5 = arith.constant 0.00999999977 : f32
    %9 = vector.broadcast %cst_5 : f32 to vector<32x128xf32>
    %10 = arith.mulf %9, %6 : vector<32x128xf32>
    %11 = arith.select %8, %6, %10 : vector<32x128xi1>, vector<32x128xf32>
    %c0_6 = arith.constant 0 : index
    %c0_7 = arith.constant 0 : index
    %12 = vector.load %arg4[%c0_6, %c0_7] : memref<32x128xf32, #tpu.memory_space<vmem>>, vector<32x128xf32>
    tpu.vector_store %arg4[%c0_6, %c0_7], %11 {strides = array<i32>} : memref<32x128xf32, #tpu.memory_space<vmem>>, vector<32x128xf32>,
    return
  }
  func.func @transform_0(%arg0: i32) -> (i32, i32) {
    %c0_i32 = arith.constant 0 : i32
    %c0_i32_0 = arith.constant 0 : i32
    return %c0_i32, %arg0 : i32, i32
  }
  func.func @transform_1(%arg0: i32) -> (i32, i32) {
    %c0_i32 = arith.constant 0 : i32
    %c0_i32_0 = arith.constant 0 : i32
    %c0_i32_1 = arith.constant 0 : i32
    return %c0_i32, %c0_i32_0 : i32, i32
  }
  func.func @transform_2(%arg0: i32) -> (i32, i32) {
    %c0_i32 = arith.constant 0 : i32
    %c0_i32_0 = arith.constant 0 : i32
    %c0_i32_1 = arith.constant 0 : i32
    return %c0_i32, %c0_i32_0 : i32, i32
  }
  func.func @transform_3(%arg0: i32) -> (i32, i32) {
    %c0_i32 = arith.constant 0 : i32
    %c0_i32_0 = arith.constant 0 : i32
    return %c0_i32, %arg0 : i32, i32
  }
}

module attributes {stable_mosaic.version = 11 : i64} {
  func.func @kernel(%arg0: i32, %arg1: memref<32x128xf32, #tpu.memory_space<vmem>>, %arg2: memref<32x1xf32, #tpu.memory_space<vmem>>, %arg3: memref<32x1xf32, #tpu.memory_space<vmem>>, %arg4: memref<32x128xf32, #tpu.memory_space<vmem>>, %arg5: memref<32x128xf32, #tpu.memory_space<vmem>>) attributes {dimension_semantics = [#tpu.dimension_semantics<parallel>], iteration_bounds = array<i64: 1>, scalar_prefetch = 0 : i64, scratch_operands = 0 : i64, tpu.core_type = #tpu.core_type<tc>, window_params = [{transform_indices = @transform_0, window_bounds = array<i64: 32, 128>}, {pipeline_mode = #tpu.pipeline_mode<synchronous>, transform_indices = @transform_1, window_bounds = array<i64: 32, 1>}, {pipeline_mode = #tpu.pipeline_mode<synchronous>, transform_indices = @transform_2, window_bounds = array<i64: 32, 1>}, {transform_indices = @transform_3, window_bounds = array<i64: 32, 128>}, {transform_indices = @transform_4, window_bounds = array<i64: 32, 128>}]} {
    %c0 = arith.constant 0 : index
    %c0_0 = arith.constant 0 : index
    %0 = vector.load %arg1[%c0, %c0_0] : memref<32x128xf32, #tpu.memory_space<vmem>>, vector<32x128xf32>
    %c0_1 = arith.constant 0 : index
    %c0_2 = arith.constant 0 : index
    %1 = vector.load %arg2[%c0_1, %c0_2] : memref<32x1xf32, #tpu.memory_space<vmem>>, vector<32x1xf32>
    %2 = vector.broadcast %1 : vector<32x1xf32> to vector<32x128xf32>
    %3 = arith.mulf %0, %2 : vector<32x128xf32>
    %c0_3 = arith.constant 0 : index
    %c0_4 = arith.constant 0 : index
    %4 = vector.load %arg3[%c0_3, %c0_4] : memref<32x1xf32, #tpu.memory_space<vmem>>, vector<32x1xf32>
    %5 = vector.broadcast %4 : vector<32x1xf32> to vector<32x128xf32>
    %6 = arith.addf %3, %5 : vector<32x128xf32>
    %c0_5 = arith.constant 0 : index
    %c0_6 = arith.constant 0 : index
    %7 = vector.load %arg4[%c0_5, %c0_6] : memref<32x128xf32, #tpu.memory_space<vmem>>, vector<32x128xf32>
    %8 = arith.addf %6, %7 : vector<32x128xf32>
    %c0_7 = arith.constant 0 : index
    %c0_8 = arith.constant 0 : index
    %9 = vector.load %arg5[%c0_7, %c0_8] : memref<32x128xf32, #tpu.memory_space<vmem>>, vector<32x128xf32>
    tpu.vector_store %arg5[%c0_7, %c0_8], %8 {strides = array<i32>} : memref<32x128xf32, #tpu.memory_space<vmem>>, vector<32x128xf32>,
    return
  }
  func.func @transform_0(%arg0: i32) -> (i32, i32) {
    %c0_i32 = arith.constant 0 : i32
    %c0_i32_0 = arith.constant 0 : i32
    return %c0_i32, %arg0 : i32, i32
  }
  func.func @transform_1(%arg0: i32) -> (i32, i32) {
    %c0_i32 = arith.constant 0 : i32
    %c0_i32_0 = arith.constant 0 : i32
    %c0_i32_1 = arith.constant 0 : i32
    return %c0_i32, %c0_i32_0 : i32, i32
  }
  func.func @transform_2(%arg0: i32) -> (i32, i32) {
    %c0_i32 = arith.constant 0 : i32
    %c0_i32_0 = arith.constant 0 : i32
    %c0_i32_1 = arith.constant 0 : i32
    return %c0_i32, %c0_i32_0 : i32, i32
  }
  func.func @transform_3(%arg0: i32) -> (i32, i32) {
    %c0_i32 = arith.constant 0 : i32
    %c0_i32_0 = arith.constant 0 : i32
    return %c0_i32, %arg0 : i32, i32
  }
  func.func @transform_4(%arg0: i32) -> (i32, i32) {
    %c0_i32 = arith.constant 0 : i32
    %c0_i32_0 = arith.constant 0 : i32
    return %c0_i32, %arg0 : i32, i32
  }
}

module attributes {stable_mosaic.version = 11 : i64} {
  func.func @kernel(%arg0: i32, %arg1: memref<32x128xf32, #tpu.memory_space<vmem>>, %arg2: memref<32x1xf32, #tpu.memory_space<vmem>>, %arg3: memref<32x1xf32, #tpu.memory_space<vmem>>, %arg4: memref<32x128xf32, #tpu.memory_space<vmem>>) attributes {dimension_semantics = [#tpu.dimension_semantics<parallel>], iteration_bounds = array<i64: 1>, scalar_prefetch = 0 : i64, scratch_operands = 0 : i64, tpu.core_type = #tpu.core_type<tc>, window_params = [{transform_indices = @transform_0, window_bounds = array<i64: 32, 128>}, {pipeline_mode = #tpu.pipeline_mode<synchronous>, transform_indices = @transform_1, window_bounds = array<i64: 32, 1>}, {pipeline_mode = #tpu.pipeline_mode<synchronous>, transform_indices = @transform_2, window_bounds = array<i64: 32, 1>}, {transform_indices = @transform_3, window_bounds = array<i64: 32, 128>}]} {
    %c0 = arith.constant 0 : index
    %c0_0 = arith.constant 0 : index
    %0 = vector.load %arg1[%c0, %c0_0] : memref<32x128xf32, #tpu.memory_space<vmem>>, vector<32x128xf32>
    %c0_1 = arith.constant 0 : index
    %c0_2 = arith.constant 0 : index
    %1 = vector.load %arg2[%c0_1, %c0_2] : memref<32x1xf32, #tpu.memory_space<vmem>>, vector<32x1xf32>
    %2 = vector.broadcast %1 : vector<32x1xf32> to vector<32x128xf32>
    %3 = arith.mulf %0, %2 : vector<32x128xf32>
    %c0_3 = arith.constant 0 : index
    %c0_4 = arith.constant 0 : index
    %4 = vector.load %arg3[%c0_3, %c0_4] : memref<32x1xf32, #tpu.memory_space<vmem>>, vector<32x1xf32>
    %5 = vector.broadcast %4 : vector<32x1xf32> to vector<32x128xf32>
    %6 = arith.addf %3, %5 : vector<32x128xf32>
    %cst = arith.constant 0.000000e+00 : f32
    %7 = vector.broadcast %cst : f32 to vector<32x128xf32>
    %8 = arith.maximumf %6, %7 : vector<32x128xf32>
    %c0_5 = arith.constant 0 : index
    %c0_6 = arith.constant 0 : index
    %9 = vector.load %arg4[%c0_5, %c0_6] : memref<32x128xf32, #tpu.memory_space<vmem>>, vector<32x128xf32>
    tpu.vector_store %arg4[%c0_5, %c0_6], %8 {strides = array<i32>} : memref<32x128xf32, #tpu.memory_space<vmem>>, vector<32x128xf32>,
    return
  }
  func.func @transform_0(%arg0: i32) -> (i32, i32) {
    %c0_i32 = arith.constant 0 : i32
    %c0_i32_0 = arith.constant 0 : i32
    return %c0_i32, %arg0 : i32, i32
  }
  func.func @transform_1(%arg0: i32) -> (i32, i32) {
    %c0_i32 = arith.constant 0 : i32
    %c0_i32_0 = arith.constant 0 : i32
    %c0_i32_1 = arith.constant 0 : i32
    return %c0_i32, %c0_i32_0 : i32, i32
  }
  func.func @transform_2(%arg0: i32) -> (i32, i32) {
    %c0_i32 = arith.constant 0 : i32
    %c0_i32_0 = arith.constant 0 : i32
    %c0_i32_1 = arith.constant 0 : i32
    return %c0_i32, %c0_i32_0 : i32, i32
  }
  func.func @transform_3(%arg0: i32) -> (i32, i32) {
    %c0_i32 = arith.constant 0 : i32
    %c0_i32_0 = arith.constant 0 : i32
    return %c0_i32, %arg0 : i32, i32
  }
}

module attributes {stable_mosaic.version = 11 : i64} {
  func.func @kernel(%arg0: i32, %arg1: memref<32x128xbf16, #tpu.memory_space<vmem>>, %arg2: memref<32x128xbf16, #tpu.memory_space<vmem>>, %arg3: memref<288x32xbf16, #tpu.memory_space<vmem>>, %arg4: memref<1x128xf32, #tpu.memory_space<vmem>>, %arg5: memref<32x128xf32, #tpu.memory_space<vmem>>, %arg6: memref<1x32x2xf32, #tpu.memory_space<vmem>>) attributes {dimension_semantics = [#tpu.dimension_semantics<parallel>], iteration_bounds = array<i64: 1>, scalar_prefetch = 0 : i64, scratch_operands = 0 : i64, tpu.core_type = #tpu.core_type<tc>, window_params = [{transform_indices = @transform_0, window_bounds = array<i64: 32, 128>}, {transform_indices = @transform_1, window_bounds = array<i64: 32, 128>}, {pipeline_mode = #tpu.pipeline_mode<synchronous>, transform_indices = @transform_2, window_bounds = array<i64: 288, 32>}, {transform_indices = @transform_3, window_bounds = array<i64: 1, 128>}, {transform_indices = @transform_4, window_bounds = array<i64: 32, 128>}, {transform_indices = @transform_5, window_bounds = array<i64: 1, 32, 2>}]} {
    %c0 = arith.constant 0 : index
    %c0_0 = arith.constant 0 : index
    %0 = vector.load %arg1[%c0, %c0_0] : memref<32x128xbf16, #tpu.memory_space<vmem>>, vector<32x128xbf16>
    %c0_1 = arith.constant 0 : index
    %c0_2 = arith.constant 0 : index
    %1 = vector.load %arg2[%c0_1, %c0_2] : memref<32x128xbf16, #tpu.memory_space<vmem>>, vector<32x128xbf16>
    %2 = tpu.concatenate %0, %1 in 1 : vector<32x128xbf16>, vector<32x128xbf16> -> vector<32x256xbf16>
    %cst = arith.constant 0.000000e+00 : f32
    %3 = vector.broadcast %cst : f32 to vector<32x128xf32>
    %c0_3 = arith.constant 0 : index
    %c0_4 = arith.constant 0 : index
    %4 = vector.load %arg3[%c0_3, %c0_4] : memref<288x32xbf16, #tpu.memory_space<vmem>>, vector<32x32xbf16>
    %5 = vector.extract_strided_slice %2 {offsets = [0, 0], sizes = [32, 128], strides = [1, 1]} : vector<32x256xbf16> to vector<32x128xbf16>
    %cst_5 = arith.constant dense<0.000000e+00> : vector<32x128xf32>
    %6 = tpu.matmul %4, %5, %cst_5 {dimension_numbers = #tpu.dot_dimension_numbers<[1], [0], [0], [1], [0, 0, 1, 1], [], []>} : vector<32x32xbf16>, vector<32x128xbf16>, vector<32x128xf32> -> vector<32x128xf32>
    %7 = arith.addf %3, %6 : vector<32x128xf32>
    %c32 = arith.constant 32 : index
    %c0_6 = arith.constant 0 : index
    %8 = vector.load %arg3[%c32, %c0_6] : memref<288x32xbf16, #tpu.memory_space<vmem>>, vector<32x32xbf16>
    %9 = vector.extract_strided_slice %2 {offsets = [0, 1], sizes = [32, 128], strides = [1, 1]} : vector<32x256xbf16> to vector<32x128xbf16>
    %cst_7 = arith.constant dense<0.000000e+00> : vector<32x128xf32>
    %10 = tpu.matmul %8, %9, %cst_7 {dimension_numbers = #tpu.dot_dimension_numbers<[1], [0], [0], [1], [0, 0, 1, 1], [], []>} : vector<32x32xbf16>, vector<32x128xbf16>, vector<32x128xf32> -> vector<32x128xf32>
    %11 = arith.addf %7, %10 : vector<32x128xf32>
    %c64 = arith.constant 64 : index
    %c0_8 = arith.constant 0 : index
    %12 = vector.load %arg3[%c64, %c0_8] : memref<288x32xbf16, #tpu.memory_space<vmem>>, vector<32x32xbf16>
    %13 = vector.extract_strided_slice %2 {offsets = [0, 2], sizes = [32, 128], strides = [1, 1]} : vector<32x256xbf16> to vector<32x128xbf16>
    %cst_9 = arith.constant dense<0.000000e+00> : vector<32x128xf32>
    %14 = tpu.matmul %12, %13, %cst_9 {dimension_numbers = #tpu.dot_dimension_numbers<[1], [0], [0], [1], [0, 0, 1, 1], [], []>} : vector<32x32xbf16>, vector<32x128xbf16>, vector<32x128xf32> -> vector<32x128xf32>
    %15 = arith.addf %11, %14 : vector<32x128xf32>
    %c96 = arith.constant 96 : index
    %c0_10 = arith.constant 0 : index
    %16 = vector.load %arg3[%c96, %c0_10] : memref<288x32xbf16, #tpu.memory_space<vmem>>, vector<32x32xbf16>
    %17 = vector.extract_strided_slice %2 {offsets = [0, 6], sizes = [32, 128], strides = [1, 1]} : vector<32x256xbf16> to vector<32x128xbf16>
    %cst_11 = arith.constant dense<0.000000e+00> : vector<32x128xf32>
    %18 = tpu.matmul %16, %17, %cst_11 {dimension_numbers = #tpu.dot_dimension_numbers<[1], [0], [0], [1], [0, 0, 1, 1], [], []>} : vector<32x32xbf16>, vector<32x128xbf16>, vector<32x128xf32> -> vector<32x128xf32>
    %19 = arith.addf %15, %18 : vector<32x128xf32>
    %c128 = arith.constant 128 : index
    %c0_12 = arith.constant 0 : index
    %20 = vector.load %arg3[%c128, %c0_12] : memref<288x32xbf16, #tpu.memory_space<vmem>>, vector<32x32xbf16>
    %21 = vector.extract_strided_slice %2 {offsets = [0, 7], sizes = [32, 128], strides = [1, 1]} : vector<32x256xbf16> to vector<32x128xbf16>
    %cst_13 = arith.constant dense<0.000000e+00> : vector<32x128xf32>
    %22 = tpu.matmul %20, %21, %cst_13 {dimension_numbers = #tpu.dot_dimension_numbers<[1], [0], [0], [1], [0, 0, 1, 1], [], []>} : vector<32x32xbf16>, vector<32x128xbf16>, vector<32x128xf32> -> vector<32x128xf32>
    %23 = arith.addf %19, %22 : vector<32x128xf32>
    %c160 = arith.constant 160 : index
    %c0_14 = arith.constant 0 : index
    %24 = vector.load %arg3[%c160, %c0_14] : memref<288x32xbf16, #tpu.memory_space<vmem>>, vector<32x32xbf16>
    %25 = vector.extract_strided_slice %2 {offsets = [0, 8], sizes = [32, 128], strides = [1, 1]} : vector<32x256xbf16> to vector<32x128xbf16>
    %cst_15 = arith.constant dense<0.000000e+00> : vector<32x128xf32>
    %26 = tpu.matmul %24, %25, %cst_15 {dimension_numbers = #tpu.dot_dimension_numbers<[1], [0], [0], [1], [0, 0, 1, 1], [], []>} : vector<32x32xbf16>, vector<32x128xbf16>, vector<32x128xf32> -> vector<32x128xf32>
    %27 = arith.addf %23, %26 : vector<32x128xf32>
    %c192 = arith.constant 192 : index
    %c0_16 = arith.constant 0 : index
    %28 = vector.load %arg3[%c192, %c0_16] : memref<288x32xbf16, #tpu.memory_space<vmem>>, vector<32x32xbf16>
    %29 = vector.extract_strided_slice %2 {offsets = [0, 12], sizes = [32, 128], strides = [1, 1]} : vector<32x256xbf16> to vector<32x128xbf16>
    %cst_17 = arith.constant dense<0.000000e+00> : vector<32x128xf32>
    %30 = tpu.matmul %28, %29, %cst_17 {dimension_numbers = #tpu.dot_dimension_numbers<[1], [0], [0], [1], [0, 0, 1, 1], [], []>} : vector<32x32xbf16>, vector<32x128xbf16>, vector<32x128xf32> -> vector<32x128xf32>
    %31 = arith.addf %27, %30 : vector<32x128xf32>
    %c224 = arith.constant 224 : index
    %c0_18 = arith.constant 0 : index
    %32 = vector.load %arg3[%c224, %c0_18] : memref<288x32xbf16, #tpu.memory_space<vmem>>, vector<32x32xbf16>
    %33 = vector.extract_strided_slice %2 {offsets = [0, 13], sizes = [32, 128], strides = [1, 1]} : vector<32x256xbf16> to vector<32x128xbf16>
    %cst_19 = arith.constant dense<0.000000e+00> : vector<32x128xf32>
    %34 = tpu.matmul %32, %33, %cst_19 {dimension_numbers = #tpu.dot_dimension_numbers<[1], [0], [0], [1], [0, 0, 1, 1], [], []>} : vector<32x32xbf16>, vector<32x128xbf16>, vector<32x128xf32> -> vector<32x128xf32>
    %35 = arith.addf %31, %34 : vector<32x128xf32>
    %c256 = arith.constant 256 : index
    %c0_20 = arith.constant 0 : index
    %36 = vector.load %arg3[%c256, %c0_20] : memref<288x32xbf16, #tpu.memory_space<vmem>>, vector<32x32xbf16>
    %37 = vector.extract_strided_slice %2 {offsets = [0, 14], sizes = [32, 128], strides = [1, 1]} : vector<32x256xbf16> to vector<32x128xbf16>
    %cst_21 = arith.constant dense<0.000000e+00> : vector<32x128xf32>
    %38 = tpu.matmul %36, %37, %cst_21 {dimension_numbers = #tpu.dot_dimension_numbers<[1], [0], [0], [1], [0, 0, 1, 1], [], []>} : vector<32x32xbf16>, vector<32x128xbf16>, vector<32x128xf32> -> vector<32x128xf32>
    %39 = arith.addf %35, %38 : vector<32x128xf32>
    %c0_22 = arith.constant 0 : index
    %c0_23 = arith.constant 0 : index
    %40 = vector.load %arg5[%c0_22, %c0_23] : memref<32x128xf32, #tpu.memory_space<vmem>>, vector<32x128xf32>
    tpu.vector_store %arg5[%c0_22, %c0_23], %39 {strides = array<i32>} : memref<32x128xf32, #tpu.memory_space<vmem>>, vector<32x128xf32>,
    %c0_24 = arith.constant 0 : index
    %c0_25 = arith.constant 0 : index
    %41 = vector.load %arg4[%c0_24, %c0_25] : memref<1x128xf32, #tpu.memory_space<vmem>>, vector<1x128xf32>
    %42 = vector.broadcast %41 : vector<1x128xf32> to vector<32x128xf32>
    %43 = arith.mulf %39, %42 : vector<32x128xf32>
    %cst_26 = arith.constant dense<0.000000e+00> : vector<32xf32>
    %44 = vector.multi_reduction <add>, %43, %cst_26 [1] : vector<32x128xf32> to vector<32xf32>
    %45 = vector.shape_cast %44 : vector<32xf32> to vector<32x1xf32>
    %46 = arith.mulf %43, %39 : vector<32x128xf32>
    %cst_27 = arith.constant dense<0.000000e+00> : vector<32xf32>
    %47 = vector.multi_reduction <add>, %46, %cst_27 [1] : vector<32x128xf32> to vector<32xf32>
    %48 = vector.shape_cast %47 : vector<32xf32> to vector<32x1xf32>
    %49 = tpu.concatenate %45, %48 in 1 : vector<32x1xf32>, vector<32x1xf32> -> vector<32x2xf32>
    %50 = vector.shape_cast %49 : vector<32x2xf32> to vector<1x32x2xf32>
    %c0_28 = arith.constant 0 : index
    %c0_29 = arith.constant 0 : index
    %c0_30 = arith.constant 0 : index
    %51 = vector.load %arg6[%c0_28, %c0_29, %c0_30] : memref<1x32x2xf32, #tpu.memory_space<vmem>>, vector<1x32x2xf32>
    tpu.vector_store %arg6[%c0_28, %c0_29, %c0_30], %50 {strides = array<i32>} : memref<1x32x2xf32, #tpu.memory_space<vmem>>, vector<1x32x2xf32>,
    return
  }
  func.func @transform_0(%arg0: i32) -> (i32, i32) {
    %c0_i32 = arith.constant 0 : i32
    %c0_i32_0 = arith.constant 0 : i32
    return %c0_i32, %arg0 : i32, i32
  }
  func.func @transform_1(%arg0: i32) -> (i32, i32) {
    %c1_i32 = arith.constant 1 : i32
    %0 = arith.addi %arg0, %c1_i32 : i32
    %c0_i32 = arith.constant 0 : i32
    %c0_i32_0 = arith.constant 0 : i32
    return %c0_i32, %0 : i32, i32
  }
  func.func @transform_2(%arg0: i32) -> (i32, i32) {
    %c0_i32 = arith.constant 0 : i32
    %c0_i32_0 = arith.constant 0 : i32
    %c0_i32_1 = arith.constant 0 : i32
    return %c0_i32, %c0_i32_0 : i32, i32
  }
  func.func @transform_3(%arg0: i32) -> (i32, i32) {
    %c0_i32 = arith.constant 0 : i32
    %c0_i32_0 = arith.constant 0 : i32
    return %c0_i32, %arg0 : i32, i32
  }
  func.func @transform_4(%arg0: i32) -> (i32, i32) {
    %c0_i32 = arith.constant 0 : i32
    %c0_i32_0 = arith.constant 0 : i32
    return %c0_i32, %arg0 : i32, i32
  }
  func.func @transform_5(%arg0: i32) -> (i32, i32, i32) {
    %c0_i32 = arith.constant 0 : i32
    %c0_i32_0 = arith.constant 0 : i32
    %c0_i32_1 = arith.constant 0 : i32
    return %arg0, %c0_i32, %c0_i32_0 : i32, i32, i32
  }
}

</mosaic_0001>

<llo_original>
// kernel: encoder_forward.19
$region0: #{encoder_forward.19}
  #allocation0 [shape = 'u32[]', space=smem, size = 0x4, offset = 0x4, fixed_abs, tag = 'smem constant byte address 0x4 - core index']
  #allocation1 [shape = 'u32[144,128]{1,0:T(1,128)}', space=vmem, size = 0x12000, scoped, tag = 'internal scratch']
  %s0 = inlined_call_operand.vmem [shape: f32[8,512], index: 0, kind: input, shape index: {}]
  %s1 = inlined_call_operand.vmem [shape: f32[8,1], index: 1, kind: input, shape index: {}]
  %s2 = inlined_call_operand.vmem [shape: f32[8,1], index: 2, kind: input, shape index: {}]
  %s3 = inlined_call_operand.vmem [shape: f32[8,512], index: 3, kind: output, shape index: {}]
  %s4 = sld [smem:[#allocation0]]
  $region45: #{encoder_forward.19} parent=0
    _
  %s6 = ssub.s32 1, %s4
  %s7 = scalar_select 0, %s6, %s4
  loop: start=0, step=1, limit=4
  $region2: #{encoder_forward.19} parent=0 // loop_pre_header
    _
  $region3: #{encoder_forward.19} parent=0 // loop_header
    %s9 = sphi 0, %s13
    %p10 = scmp.ge.s32.totalorder %s9, 4
    %s19 = sphi 0, %s21
    %s22 = sphi 0, %s19
    %s23 = sphi 0, %s22
    %s39 = sphi 0, %s23
    %s43 = sphi 0, %s43
    %s45 = sphi 0, %s43
    %s46 = sphi 0, %s45
    %s60 = sphi 0, %s46
    %s64 = sphi 0, %s64
    %s66 = sphi 0, %s64
    %s67 = sphi 0, %s66
    %s81 = sphi 0, %s67
    %s87 = sphi 0, %s89
    %s90 = sphi 0, %s87
    %s91 = sphi 0, %s90
    %s107 = sphi 0, %s91
  $region4: #{encoder_forward.19} parent=0 // loop_header_branch
    %12 = sbr.rel (%p10) target = $region8
  $region5: #{encoder_forward.19} parent=0 // loop_body
    %s14 = ssub.s32 %s9, 1
    %s15 = ssub.s32 %s9, 2
    %s16 = sadd.s32 %s9, 1
    %s17 = ssub.s32 %s9, %s16
    %p18 = scmp.eq.s32.totalorder %s17, 0
    %s20 = sadd.s32 %s19, 1
    %s21 = scalar_select %p18, %s19, %s20
    %p24 = pneg %p18
    %p25 = scmp.eq.s32.totalorder %s9, 1
    %p26 = por %p24, %p25
    %p27 = scmp.ne.s32.totalorder %s19, %s22
    %p28 = scmp.eq.s32.totalorder %s9, 0
    %p29 = por %p27, %p28
    %p30 = scmp.ne.s32.totalorder %s19, %s22
    %p31 = scmp.eq.s32.totalorder %s14, 1
    %p32 = por %p30, %p31
    %p33 = scmp.ne.s32.totalorder %s22, %s23
    %p34 = scmp.eq.s32.totalorder %s14, 0
    %p35 = por %p33, %p34
    %p36 = scmp.ne.s32.totalorder %s22, %s23
    %p37 = scmp.eq.s32.totalorder %s15, 1
    %p38 = por %p36, %p37
    %p40 = scmp.ne.s32.totalorder %s23, %s39
    %p41 = scmp.eq.s32.totalorder %s15, 0
    %p42 = por %p40, %p41
    %s44 = sadd.s32 %s43, 1
    %p47 = scmp.eq.s32.totalorder %s9, 1
    %p48 = scmp.ne.s32.totalorder %s43, %s45
    %p49 = scmp.eq.s32.totalorder %s9, 0
    %p50 = por %p48, %p49
    %p51 = scmp.ne.s32.totalorder %s43, %s45
    %p52 = scmp.eq.s32.totalorder %s14, 1
    %p53 = por %p51, %p52
    %p54 = scmp.ne.s32.totalorder %s45, %s46
    %p55 = scmp.eq.s32.totalorder %s14, 0
    %p56 = por %p54, %p55
    %p57 = scmp.ne.s32.totalorder %s45, %s46
    %p58 = scmp.eq.s32.totalorder %s15, 1
    %p59 = por %p57, %p58
    %p61 = scmp.ne.s32.totalorder %s46, %s60
    %p62 = scmp.eq.s32.totalorder %s15, 0
    %p63 = por %p61, %p62
    %s65 = sadd.s32 %s64, 1
    %p68 = scmp.eq.s32.totalorder %s9, 1
    %p69 = scmp.ne.s32.totalorder %s64, %s66
    %p70 = scmp.eq.s32.totalorder %s9, 0
    %p71 = por %p69, %p70
    %p72 = scmp.ne.s32.totalorder %s64, %s66
    %p73 = scmp.eq.s32.totalorder %s14, 1
    %p74 = por %p72, %p73
    %p75 = scmp.ne.s32.totalorder %s66, %s67
    %p76 = scmp.eq.s32.totalorder %s14, 0
    %p77 = por %p75, %p76
    %p78 = scmp.ne.s32.totalorder %s66, %s67
    %p79 = scmp.eq.s32.totalorder %s15, 1
    %p80 = por %p78, %p79
    %p82 = scmp.ne.s32.totalorder %s67, %s81
    %p83 = scmp.eq.s32.totalorder %s15, 0
    %p84 = por %p82, %p83
    %s85 = ssub.s32 %s9, %s16
    %p86 = scmp.eq.s32.totalorder %s85, 0
    %s88 = sadd.s32 %s87, 1
    %s89 = scalar_select %p86, %s87, %s88
    %p92 = pneg %p86
    %p93 = scmp.eq.s32.totalorder %s9, 1
    %p94 = por %p92, %p93
    %p95 = scmp.ne.s32.totalorder %s87, %s90
    %p96 = scmp.eq.s32.totalorder %s9, 0
    %p97 = por %p95, %p96
    %p98 = scmp.ne.s32.totalorder %s87, %s90
    %p99 = scmp.eq.s32.totalorder %s14, 1
    %p100 = por %p98, %p99
    %p101 = scmp.ne.s32.totalorder %s90, %s91
    %p102 = scmp.eq.s32.totalorder %s14, 0
    %p103 = por %p101, %p102
    %p104 = scmp.ne.s32.totalorder %s90, %s91
    %p105 = scmp.eq.s32.totalorder %s15, 1
    %p106 = por %p104, %p105
    %p108 = scmp.ne.s32.totalorder %s91, %s107
    %p109 = scmp.eq.s32.totalorder %s15, 0
    %p110 = por %p108, %p109
    %p111 = scmp.le.s32.totalorder 1, %s9
    %p112 = scmp.lt.s32.totalorder %s9, 3
    %p113 = pnand %p111, %p112
    %p114 = pneg %p113
    // Predicated region
    $region9: #{encoder_forward.19} parent=5 // pred_check
      _
    $region10: #{encoder_forward.19} parent=5 // pred_check_branch
      %116 = sbr.rel (%p113) target = $region12
    $region11: #{encoder_forward.19} parent=5 // pred_region
      %s117 = ssub.s32 %s9, 1
      // Predicated region
      $region13: #{encoder_forward.19} parent=11 // pred_check
        %p118 = pneg %p56
      $region14: #{encoder_forward.19} parent=11 // pred_check_branch
        %120 = sbr.rel (%p118) target = $region16
      $region15: #{encoder_forward.19} parent=11 // pred_region
        _
      $region16: #{encoder_forward.19} parent=11 // pred_fallthru
        _
      // Predicated region
      $region17: #{encoder_forward.19} parent=11 // pred_check
        %p121 = pneg %p77
      $region18: #{encoder_forward.19} parent=11 // pred_check_branch
        %123 = sbr.rel (%p121) target = $region20
      $region19: #{encoder_forward.19} parent=11 // pred_region
        _
      $region20: #{encoder_forward.19} parent=11 // pred_fallthru
        _
    $region12: #{encoder_forward.19} parent=5 // pred_fallthru
      _
    %p124 = scmp.lt.s32.totalorder %s9, 2
    // Predicated region
    $region21: #{encoder_forward.19} parent=5 // pred_check
      %p125 = pneg %p124
    $region22: #{encoder_forward.19} parent=5 // pred_check_branch
      %127 = sbr.rel (%p125) target = $region24
    $region23: #{encoder_forward.19} parent=5 // pred_region
      // Predicated region
      $region25: #{encoder_forward.19} parent=23 // pred_check
        %p128 = pneg %p29
      $region26: #{encoder_forward.19} parent=23 // pred_check_branch
        %130 = sbr.rel (%p128) target = $region28
      $region27: #{encoder_forward.19} parent=23 // pred_region
        %s131 = smul.u32 2, %s9
        %p132 = scmp.lt.s32.totalorder %s131, 3
        %s133 = scalar_select %p132, %s131, 3
        %s134 = smul.addr %s133, 8
        %s135 = scalar_lea.vmem %s0, %s134
        %s136 = smul.u32 2, %s9
      $region28: #{encoder_forward.19} parent=23 // pred_fallthru
        _
    $region24: #{encoder_forward.19} parent=5 // pred_fallthru
      _
    %p137 = scmp.le.s32.totalorder 1, %s9
    %p138 = scmp.lt.s32.totalorder %s9, 3
    %p139 = pnand %p137, %p138
    %p140 = pneg %p139
    // Predicated region
    $region29: #{encoder_forward.19} parent=5 // pred_check
      _
    $region30: #{encoder_forward.19} parent=5 // pred_check_branch
      %142 = sbr.rel (%p139) target = $region32
    $region31: #{encoder_forward.19} parent=5 // pred_region
      %s143 = ssub.s32 %s9, 1
      %s144 = smul.u32 2, %s14
      %p145 = scmp.lt.s32.totalorder %s144, 3
      %s146 = scalar_select %p145, %s144, 3
      %s147 = smul.addr %s146, 8
      %s148 = scalar_lea.vmem %s0, %s147
      %p149 = pneg %p35
      %p150 = pneg %p32
      %p151 = pneg %p56
      %p152 = pneg %p53
      %p153 = pneg %p77
      %p154 = pneg %p74
      %p155 = pneg %p103
      %p156 = pneg %p100
      %s157 = smul.u32 2, %s14
      %p158 = scmp.lt.s32.totalorder %s157, 3
      %s159 = scalar_select %p158, %s157, 3
      %s160 = smul.addr %s159, 8
      %s161 = scalar_lea.vmem %s3, %s160
      %s162 = smul.u32 2, %s14
      %p163 = scmp.lt.s32.totalorder %s162, 3
      %s164 = scalar_select %p163, %s162, 3
      %s165 = smul.addr %s164, 8
      %s166 = scalar_lea.vmem %s0, %s165
      %s167 = smul.u32 2, %s14
      %s168 = smul.u32 2, %s14
      %p169 = scmp.lt.s32.totalorder %s168, 3
      %s170 = scalar_select %p169, %s168, 3
      %s171 = smul.addr %s170, 8
      %s172 = scalar_lea.vmem %s3, %s171
      %s173 = smul.u32 2, %s14
      %v174 = vld [vmem:[%s166] sm:$0xff]
      %v175 = vld [vmem:[%s166 + $0x8] sm:$0xff]
      %v176 = vld [vmem:[%s1] sm:$0xff]
      %178 = vset.pattern.permute.xlu0 0
      %179 = vperm.xlu0 %178, %v176
      %v180 = vpop.permute.xlu0 %179
      %v182 = vmul.f32 %v174, %v180
      %v183 = vmul.f32 %v175, %v180
      %v184 = vld [vmem:[%s2] sm:$0xff]
      %186 = vset.pattern.permute.xlu0 0
      %187 = vperm.xlu0 %186, %v184
      %v188 = vpop.permute.xlu0 %187
      %v190 = vadd.f32 %v182, %v188
      %v191 = vadd.f32 %v183, %v188
      %vm192 = vcmp.ge.f32.partialorder %v190, 0.0
      %vm193 = vcmp.ge.f32.partialorder %v191, 0.0
      %v194 = vmul.f32 %v190, 0.01
      %v195 = vmul.f32 %v191, 0.01
      %v196 = vsel %vm192, %v190, %v194
      %v197 = vsel %vm193, %v191, %v195
      %198 = vst [vmem:[%s172] sm:$0xff] %v196
      %199 = vst [vmem:[%s172 + $0x8] sm:$0xff] %v197
      %s200 = smul.u32 2, %s14
      %p201 = scmp.lt.s32.totalorder %s200, 3
      %s202 = scalar_select %p201, %s200, 3
      %s203 = smul.addr %s202, 8
      %s204 = scalar_lea.vmem %s3, %s203
      // Predicated region
      $region33: #{encoder_forward.19} parent=31 // pred_check
        %p205 = pneg %p100
      $region34: #{encoder_forward.19} parent=31 // pred_check_branch
        %207 = sbr.rel (%p205) target = $region36
      $region35: #{encoder_forward.19} parent=31 // pred_region
        %s208 = smul.u32 2, %s14
      $region36: #{encoder_forward.19} parent=31 // pred_fallthru
        _
    $region32: #{encoder_forward.19} parent=5 // pred_fallthru
      _
    %p209 = scmp.le.s32.totalorder 2, %s9
    // Predicated region
    $region37: #{encoder_forward.19} parent=5 // pred_check
      %p210 = pneg %p209
    $region38: #{encoder_forward.19} parent=5 // pred_check_branch
      %212 = sbr.rel (%p210) target = $region40
    $region39: #{encoder_forward.19} parent=5 // pred_region
      %s213 = ssub.s32 %s9, 2
      // Predicated region
      $region41: #{encoder_forward.19} parent=39 // pred_check
        %p214 = pneg %p106
      $region42: #{encoder_forward.19} parent=39 // pred_check_branch
        %216 = sbr.rel (%p214) target = $region44
      $region43: #{encoder_forward.19} parent=39 // pred_region
        %s217 = smul.u32 2, %s15
        %p218 = scmp.lt.s32.totalorder %s217, 3
        %s219 = scalar_select %p218, %s217, 3
        %s220 = smul.addr %s219, 8
        %s221 = scalar_lea.vmem %s3, %s220
      $region44: #{encoder_forward.19} parent=39 // pred_fallthru
        _
    $region40: #{encoder_forward.19} parent=5 // pred_fallthru
      _
  $region6: #{encoder_forward.19} parent=0 // loop_footer
    %s13 = sadd.s32 1, %s9
  $region7: #{encoder_forward.19} parent=0 // loop_footer_branch
    %8 = sbr.rel target = $region3
  $region8: #{encoder_forward.19} parent=0 // loop_exit
    _

// kernel: encoder_forward.18
$region0: #{encoder_forward.18}
  #allocation0 [shape = 'u32[]', space=smem, size = 0x4, offset = 0x4, fixed_abs, tag = 'smem constant byte address 0x4 - core index']
  #allocation1 [shape = 'u32[144,128]{1,0:T(1,128)}', space=vmem, size = 0x12000, scoped, tag = 'internal scratch']
  %s0 = inlined_call_operand.vmem [shape: bf16[8,1536], index: 0, kind: input, shape index: {}, may-alias: {0,1}]
  %s1 = inlined_call_operand.vmem [shape: bf16[8,1536], index: 1, kind: input, shape index: {}, may-alias: {0,1}]
  %s2 = inlined_call_operand.vmem [shape: bf16[392,8], index: 2, kind: input, shape index: {}]
  %s3 = inlined_call_operand.vmem [shape: f32[1,1152], index: 3, kind: input, shape index: {}]
  %s4 = inlined_call_operand.vmem [shape: f32[8,1152], index: 4, kind: output, shape index: {0}]
  %s5 = inlined_call_operand.vmem [shape: f32[3,8,2], index: 5, kind: output, shape index: {1}]
  %6 = xla_tuple %s4, %s5
  %s7 = sld [smem:[#allocation0]]
  $region57: #{encoder_forward.18} parent=0
    _
  %s9 = ssub.s32 1, %s7
  %s10 = scalar_select 0, %s9, %s7
  loop: start=0, step=1, limit=5
  $region2: #{encoder_forward.18} parent=0 // loop_pre_header
    _
  $region3: #{encoder_forward.18} parent=0 // loop_header
    %s12 = sphi 0, %s16
    %p13 = scmp.ge.s32.totalorder %s12, 5
    %s22 = sphi 0, %s24
    %s25 = sphi 0, %s22
    %s26 = sphi 0, %s25
    %s42 = sphi 0, %s26
    %s50 = sphi 0, %s52
    %s53 = sphi 0, %s50
    %s54 = sphi 0, %s53
    %s70 = sphi 0, %s54
    %s74 = sphi 0, %s74
    %s76 = sphi 0, %s74
    %s77 = sphi 0, %s76
    %s91 = sphi 0, %s77
    %s97 = sphi 0, %s99
    %s100 = sphi 0, %s97
    %s101 = sphi 0, %s100
    %s117 = sphi 0, %s101
    %s123 = sphi 0, %s125
    %s126 = sphi 0, %s123
    %s127 = sphi 0, %s126
    %s143 = sphi 0, %s127
    %s149 = sphi 0, %s151
    %s152 = sphi 0, %s149
    %s153 = sphi 0, %s152
    %s169 = sphi 0, %s153
  $region4: #{encoder_forward.18} parent=0 // loop_header_branch
    %15 = sbr.rel (%p13) target = $region8
  $region5: #{encoder_forward.18} parent=0 // loop_body
    %s17 = ssub.s32 %s12, 1
    %s18 = ssub.s32 %s12, 2
    %s19 = sadd.s32 %s12, 1
    %s20 = ssub.s32 %s12, %s19
    %p21 = scmp.eq.s32.totalorder %s20, 0
    %s23 = sadd.s32 %s22, 1
    %s24 = scalar_select %p21, %s22, %s23
    %p27 = pneg %p21
    %p28 = scmp.eq.s32.totalorder %s12, 2
    %p29 = por %p27, %p28
    %p30 = scmp.ne.s32.totalorder %s22, %s25
    %p31 = scmp.eq.s32.totalorder %s12, 0
    %p32 = por %p30, %p31
    %p33 = scmp.ne.s32.totalorder %s22, %s25
    %p34 = scmp.eq.s32.totalorder %s17, 2
    %p35 = por %p33, %p34
    %p36 = scmp.ne.s32.totalorder %s25, %s26
    %p37 = scmp.eq.s32.totalorder %s17, 0
    %p38 = por %p36, %p37
    %p39 = scmp.ne.s32.totalorder %s25, %s26
    %p40 = scmp.eq.s32.totalorder %s18, 2
    %p41 = por %p39, %p40
    %p43 = scmp.ne.s32.totalorder %s26, %s42
    %p44 = scmp.eq.s32.totalorder %s18, 0
    %p45 = por %p43, %p44
    %s46 = sadd.s32 %s12, 1
    %s47 = sadd.s32 %s19, 1
    %s48 = ssub.s32 %s46, %s47
    %p49 = scmp.eq.s32.totalorder %s48, 0
    %s51 = sadd.s32 %s50, 1
    %s52 = scalar_select %p49, %s50, %s51
    %p55 = pneg %p49
    %p56 = scmp.eq.s32.totalorder %s12, 2
    %p57 = por %p55, %p56
    %p58 = scmp.ne.s32.totalorder %s50, %s53
    %p59 = scmp.eq.s32.totalorder %s12, 0
    %p60 = por %p58, %p59
    %p61 = scmp.ne.s32.totalorder %s50, %s53
    %p62 = scmp.eq.s32.totalorder %s17, 2
    %p63 = por %p61, %p62
    %p64 = scmp.ne.s32.totalorder %s53, %s54
    %p65 = scmp.eq.s32.totalorder %s17, 0
    %p66 = por %p64, %p65
    %p67 = scmp.ne.s32.totalorder %s53, %s54
    %p68 = scmp.eq.s32.totalorder %s18, 2
    %p69 = por %p67, %p68
    %p71 = scmp.ne.s32.totalorder %s54, %s70
    %p72 = scmp.eq.s32.totalorder %s18, 0
    %p73 = por %p71, %p72
    %s75 = sadd.s32 %s74, 1
    %p78 = scmp.eq.s32.totalorder %s12, 2
    %p79 = scmp.ne.s32.totalorder %s74, %s76
    %p80 = scmp.eq.s32.totalorder %s12, 0
    %p81 = por %p79, %p80
    %p82 = scmp.ne.s32.totalorder %s74, %s76
    %p83 = scmp.eq.s32.totalorder %s17, 2
    %p84 = por %p82, %p83
    %p85 = scmp.ne.s32.totalorder %s76, %s77
    %p86 = scmp.eq.s32.totalorder %s17, 0
    %p87 = por %p85, %p86
    %p88 = scmp.ne.s32.totalorder %s76, %s77
    %p89 = scmp.eq.s32.totalorder %s18, 2
    %p90 = por %p88, %p89
    %p92 = scmp.ne.s32.totalorder %s77, %s91
    %p93 = scmp.eq.s32.totalorder %s18, 0
    %p94 = por %p92, %p93
    %s95 = ssub.s32 %s12, %s19
    %p96 = scmp.eq.s32.totalorder %s95, 0
    %s98 = sadd.s32 %s97, 1
    %s99 = scalar_select %p96, %s97, %s98
    %p102 = pneg %p96
    %p103 = scmp.eq.s32.totalorder %s12, 2
    %p104 = por %p102, %p103
    %p105 = scmp.ne.s32.totalorder %s97, %s100
    %p106 = scmp.eq.s32.totalorder %s12, 0
    %p107 = por %p105, %p106
    %p108 = scmp.ne.s32.totalorder %s97, %s100
    %p109 = scmp.eq.s32.totalorder %s17, 2
    %p110 = por %p108, %p109
    %p111 = scmp.ne.s32.totalorder %s100, %s101
    %p112 = scmp.eq.s32.totalorder %s17, 0
    %p113 = por %p111, %p112
    %p114 = scmp.ne.s32.totalorder %s100, %s101
    %p115 = scmp.eq.s32.totalorder %s18, 2
    %p116 = por %p114, %p115
    %p118 = scmp.ne.s32.totalorder %s101, %s117
    %p119 = scmp.eq.s32.totalorder %s18, 0
    %p120 = por %p118, %p119
    %s121 = ssub.s32 %s12, %s19
    %p122 = scmp.eq.s32.totalorder %s121, 0
    %s124 = sadd.s32 %s123, 1
    %s125 = scalar_select %p122, %s123, %s124
    %p128 = pneg %p122
    %p129 = scmp.eq.s32.totalorder %s12, 2
    %p130 = por %p128, %p129
    %p131 = scmp.ne.s32.totalorder %s123, %s126
    %p132 = scmp.eq.s32.totalorder %s12, 0
    %p133 = por %p131, %p132
    %p134 = scmp.ne.s32.totalorder %s123, %s126
    %p135 = scmp.eq.s32.totalorder %s17, 2
    %p136 = por %p134, %p135
    %p137 = scmp.ne.s32.totalorder %s126, %s127
    %p138 = scmp.eq.s32.totalorder %s17, 0
    %p139 = por %p137, %p138
    %p140 = scmp.ne.s32.totalorder %s126, %s127
    %p141 = scmp.eq.s32.totalorder %s18, 2
    %p142 = por %p140, %p141
    %p144 = scmp.ne.s32.totalorder %s127, %s143
    %p145 = scmp.eq.s32.totalorder %s18, 0
    %p146 = por %p144, %p145
    %s147 = ssub.s32 %s12, %s19
    %p148 = scmp.eq.s32.totalorder %s147, 0
    %s150 = sadd.s32 %s149, 1
    %s151 = scalar_select %p148, %s149, %s150
    %p154 = pneg %p148
    %p155 = scmp.eq.s32.totalorder %s12, 2
    %p156 = por %p154, %p155
    %p157 = scmp.ne.s32.totalorder %s149, %s152
    %p158 = scmp.eq.s32.totalorder %s12, 0
    %p159 = por %p157, %p158
    %p160 = scmp.ne.s32.totalorder %s149, %s152
    %p161 = scmp.eq.s32.totalorder %s17, 2
    %p162 = por %p160, %p161
    %p163 = scmp.ne.s32.totalorder %s152, %s153
    %p164 = scmp.eq.s32.totalorder %s17, 0
    %p165 = por %p163, %p164
    %p166 = scmp.ne.s32.totalorder %s152, %s153
    %p167 = scmp.eq.s32.totalorder %s18, 2
    %p168 = por %p166, %p167
    %p170 = scmp.ne.s32.totalorder %s153, %s169
    %p171 = scmp.eq.s32.totalorder %s18, 0
    %p172 = por %p170, %p171
    %p173 = scmp.le.s32.totalorder 1, %s12
    %p174 = scmp.lt.s32.totalorder %s12, 4
    %p175 = pnand %p173, %p174
    %p176 = pneg %p175
    // Predicated region
    $region9: #{encoder_forward.18} parent=5 // pred_check
      _
    $region10: #{encoder_forward.18} parent=5 // pred_check_branch
      %178 = sbr.rel (%p175) target = $region12
    $region11: #{encoder_forward.18} parent=5 // pred_region
      %s179 = ssub.s32 %s12, 1
      // Predicated region
      $region13: #{encoder_forward.18} parent=11 // pred_check
        %p180 = pneg %p87
      $region14: #{encoder_forward.18} parent=11 // pred_check_branch
        %182 = sbr.rel (%p180) target = $region16
      $region15: #{encoder_forward.18} parent=11 // pred_region
        _
      $region16: #{encoder_forward.18} parent=11 // pred_fallthru
        _
    $region12: #{encoder_forward.18} parent=5 // pred_fallthru
      _
    %p183 = scmp.lt.s32.totalorder %s12, 3
    // Predicated region
    $region17: #{encoder_forward.18} parent=5 // pred_check
      %p184 = pneg %p183
    $region18: #{encoder_forward.18} parent=5 // pred_check_branch
      %186 = sbr.rel (%p184) target = $region20
    $region19: #{encoder_forward.18} parent=5 // pred_region
      // Predicated region
      $region21: #{encoder_forward.18} parent=19 // pred_check
        %p187 = pneg %p32
      $region22: #{encoder_forward.18} parent=19 // pred_check_branch
        %189 = sbr.rel (%p187) target = $region24
      $region23: #{encoder_forward.18} parent=19 // pred_region
        %s190 = smul.u32 3, %s12
        %p191 = scmp.lt.s32.totalorder %s190, 11
        %s192 = scalar_select %p191, %s190, 11
        %s193 = smul.addr %s192, 4
        %s194 = scalar_lea.vmem %s0, %s193
        %s195 = smul.u32 3, %s12
      $region24: #{encoder_forward.18} parent=19 // pred_fallthru
        _
      // Predicated region
      $region25: #{encoder_forward.18} parent=19 // pred_check
        %p196 = pneg %p60
      $region26: #{encoder_forward.18} parent=19 // pred_check_branch
        %198 = sbr.rel (%p196) target = $region28
      $region27: #{encoder_forward.18} parent=19 // pred_region
        %s199 = sadd.s32 %s12, 1
        %s200 = smul.u32 3, %s199
        %p201 = scmp.lt.s32.totalorder %s200, 11
        %s202 = scalar_select %p201, %s200, 11
        %s203 = smul.addr %s202, 4
        %s204 = scalar_lea.vmem %s1, %s203
        %s205 = sadd.s32 %s12, 1
        %s206 = smul.u32 3, %s205
      $region28: #{encoder_forward.18} parent=19 // pred_fallthru
        _
      // Predicated region
      $region29: #{encoder_forward.18} parent=19 // pred_check
        %p207 = pneg %p107
      $region30: #{encoder_forward.18} parent=19 // pred_check_branch
        %209 = sbr.rel (%p207) target = $region32
      $region31: #{encoder_forward.18} parent=19 // pred_region
        %s210 = smul.u32 3, %s12
        %p211 = scmp.lt.s32.totalorder %s210, 8
        %s212 = scalar_select %p211, %s210, 8
        %s213 = scalar_lea.vmem %s3, %s212
        %s214 = smul.u32 3, %s12
      $region32: #{encoder_forward.18} parent=19 // pred_fallthru
        _
    $region20: #{encoder_forward.18} parent=5 // pred_fallthru
      _
    %p215 = scmp.le.s32.totalorder 1, %s12
    %p216 = scmp.lt.s32.totalorder %s12, 4
    %p217 = pnand %p215, %p216
    %p218 = pneg %p217
    // Predicated region
    $region33: #{encoder_forward.18} parent=5 // pred_check
      _
    $region34: #{encoder_forward.18} parent=5 // pred_check_branch
      %220 = sbr.rel (%p217) target = $region36
    $region35: #{encoder_forward.18} parent=5 // pred_region
      %s221 = ssub.s32 %s12, 1
      %s222 = smul.u32 3, %s17
      %p223 = scmp.lt.s32.totalorder %s222, 11
      %s224 = scalar_select %p223, %s222, 11
      %s225 = smul.addr %s224, 4
      %s226 = scalar_lea.vmem %s0, %s225
      %p227 = pneg %p38
      %p228 = pneg %p35
      %s229 = sadd.s32 %s17, 1
      %s230 = smul.u32 3, %s229
      %p231 = scmp.lt.s32.totalorder %s230, 11
      %s232 = scalar_select %p231, %s230, 11
      %s233 = smul.addr %s232, 4
      %s234 = scalar_lea.vmem %s1, %s233
      %p235 = pneg %p66
      %p236 = pneg %p63
      %p237 = pneg %p87
      %p238 = pneg %p84
      %s239 = smul.u32 3, %s17
      %p240 = scmp.lt.s32.totalorder %s239, 8
      %s241 = scalar_select %p240, %s239, 8
      %s242 = scalar_lea.vmem %s3, %s241
      %p243 = pneg %p113
      %p244 = pneg %p110
      %p245 = pneg %p139
      %p246 = pneg %p136
      %s247 = smul.u32 3, %s17
      %p248 = scmp.lt.s32.totalorder %s247, 8
      %s249 = scalar_select %p248, %s247, 8
      %s250 = smul.addr %s249, 8
      %s251 = scalar_lea.vmem %s4, %s250
      %p252 = pneg %p165
      %p253 = pneg %p162
      %p254 = scmp.lt.s32.totalorder %s17, 2
      %s255 = scalar_select %p254, %s17, 2
      %s256 = smul.addr %s255, 8
      %s257 = scalar_lea.vmem %s5, %s256
      %s258 = smul.u32 3, %s17
      %p259 = scmp.lt.s32.totalorder %s258, 11
      %s260 = scalar_select %p259, %s258, 11
      %s261 = smul.addr %s260, 4
      %s262 = scalar_lea.vmem %s0, %s261
      %s263 = smul.u32 3, %s17
      %s264 = sadd.s32 %s17, 1
      %s265 = smul.u32 3, %s264
      %p266 = scmp.lt.s32.totalorder %s265, 11
      %s267 = scalar_select %p266, %s265, 11
      %s268 = smul.addr %s267, 4
      %s269 = scalar_lea.vmem %s1, %s268
      %s270 = sadd.s32 %s17, 1
      %s271 = smul.u32 3, %s270
      %s272 = smul.u32 3, %s17
      %p273 = scmp.lt.s32.totalorder %s272, 8
      %s274 = scalar_select %p273, %s272, 8
      %s275 = scalar_lea.vmem %s3, %s274
      %s276 = smul.u32 3, %s17
      %s277 = smul.u32 3, %s17
      %p278 = scmp.lt.s32.totalorder %s277, 8
      %s279 = scalar_select %p278, %s277, 8
      %s280 = smul.addr %s279, 8
      %s281 = scalar_lea.vmem %s4, %s280
      %s282 = smul.u32 3, %s17
      %p283 = scmp.lt.s32.totalorder %s17, 2
      %s284 = scalar_select %p283, %s17, 2
      %s285 = smul.addr %s284, 8
      %s286 = scalar_lea.vmem %s5, %s285
      %v288 = vld [vmem:[%s262] sm:$0xff]
      %v289 = vld [vmem:[%s262 + $0x8] sm:$0xf]
      %v290 = vld [vmem:[%s269] sm:$0xff]
      %v293 = vunpack.c.l.b16 %v288
      %v294 = vunpack.c.h.b16 %v288
      %v295 = vunpack.c.l.b16 %v289
      %v296 = vpack.c.b16 %v293, %v293
      %v297 = vpack.c.b16 %v294, %v294
      %v298 = vpack.c.b16 %v295, %v295
      %v300 = vunpack.c.l.b16 %v290
      %v301 = vunpack.c.h.b16 %v290
      %v302 = vpack.c.b16 %v300, %v300
      %v303 = vpack.c.b16 %v301, %v301
      %v304 = vld [vmem:[%s2] sm:$0xf]
      %v305 = vld [vmem:[%s2 + $0x4] sm:$0xf]
      %306 = vrot.lane.b32.xlu0 %v296, 127
      %v307 = vpop.permute.xlu0 %306
      %308 = vrot.lane.b32.xlu0 %v297, 127
      %v309 = vpop.permute.xlu0 %308
      %310 = vrot.lane.b32.xlu0 %v298, 127
      %v311 = vpop.permute.xlu0 %310
      %312 = vrot.lane.b32.xlu0 %v302, 127
      %v313 = vpop.permute.xlu0 %312
      %vm314 = vcmask 1039360
      %v315 = vsel %vm314, %v307, %v309
      %v316 = vsel %vm314, %v309, %v311
      %v317 = vsel %vm314, %v311, %v313
      %vm318 = vcmask 64512
      %v320 = vsel %vm318, %v305, 0
      %vm322 = vcmask 1043456
      %v324 = vsel %vm322, %v315, 0
      %v327 = vsel %vm322, %v316, 0
      %v330 = vsel %vm322, %v317, 0
      %332 = vmatprep.subr.bf16.mxu0 %v327
      %333 = vmatpush1.bf16.msra.mxu0 %v324
      %334 = vmatprep.subr.bf16.mxu0 0
      %335 = vmatpush1.bf16.msra.mxu0 0
      %336 = vmatprep.subr.bf16.mxu0 0
      %337 = vmatpush1.bf16.msra.mxu0 0
      %338 = vmatprep.subr.bf16.mxu0 0
      %339 = vmatpush1.bf16.msra.mxu0 0
      %340 = vmatprep.subr.bf16.mxu0 0
      %341 = vmatpush1.bf16.msra.mxu0 0
      %342 = vmatprep.subr.bf16.mxu0 0
      %343 = vmatpush1.bf16.msra.mxu0 0
      %344 = vmatprep.subr.bf16.mxu0 0
      %345 = vmatpush1.bf16.msra.mxu0 0
      %346 = vmatprep.subr.bf16.mxu0 0
      %347 = vmatpush1.bf16.msra.mxu0 0
      %348 = vmatprep.subr.bf16.mxu0 0
      %349 = vmatpush1.bf16.msra.mxu0 0
      %350 = vmatprep.subr.bf16.mxu0 0
      %351 = vmatpush1.bf16.msra.mxu0 0
      %352 = vmatprep.subr.bf16.mxu0 0
      %353 = vmatpush1.bf16.msra.mxu0 0
      %354 = vmatprep.subr.bf16.mxu0 0
      %355 = vmatpush1.bf16.msra.mxu0 0
      %356 = vmatprep.subr.bf16.mxu0 0
      %357 = vmatpush1.bf16.msra.mxu0 0
      %358 = vmatprep.subr.bf16.mxu0 0
      %359 = vmatpush1.bf16.msra.mxu0 0
      %360 = vmatprep.subr.bf16.mxu0 0
      %361 = vmatpush1.bf16.msra.mxu0 0
      %362 = vmatprep.subr.bf16.mxu0 0
      %363 = vmatpush1.bf16.msra.mxu0 0
      %364 = vmatprep.mubr.bf16.mxu0 0
      %365 = vmatmul.mubr.bf16.gmra.mrb[0].mxu0 %v320
      %v366 = vpop.f32.mrb[0].mxu0
      %v367 = vadd.f32 0.0, %v366
      %v368 = vpop.f32.mrb[0].mxu0
      %v369 = vadd.f32 0.0, %v368
      %v370 = vpop.f32.mrb[0].mxu0
      %v371 = vpop.f32.mrb[0].mxu0
      %372 = vdwg.mxu0
      %373 = vmatprep.subr.bf16.mxu0 0
      %374 = vmatpush1.bf16.msra.mxu0 %v330
      %375 = vmatprep.subr.bf16.mxu0 0
      %376 = vmatpush1.bf16.msra.mxu0 0
      %377 = vmatprep.subr.bf16.mxu0 0
      %378 = vmatpush1.bf16.msra.mxu0 0
      %379 = vmatprep.subr.bf16.mxu0 0
      %380 = vmatpush1.bf16.msra.mxu0 0
      %381 = vmatprep.subr.bf16.mxu0 0
      %382 = vmatpush1.bf16.msra.mxu0 0
      %383 = vmatprep.subr.bf16.mxu0 0
      %384 = vmatpush1.bf16.msra.mxu0 0
      %385 = vmatprep.subr.bf16.mxu0 0
      %386 = vmatpush1.bf16.msra.mxu0 0
      %387 = vmatprep.subr.bf16.mxu0 0
      %388 = vmatpush1.bf16.msra.mxu0 0
      %389 = vmatprep.subr.bf16.mxu0 0
      %390 = vmatpush1.bf16.msra.mxu0 0
      %391 = vmatprep.subr.bf16.mxu0 0
      %392 = vmatpush1.bf16.msra.mxu0 0
      %393 = vmatprep.subr.bf16.mxu0 0
      %394 = vmatpush1.bf16.msra.mxu0 0
      %395 = vmatprep.subr.bf16.mxu0 0
      %396 = vmatpush1.bf16.msra.mxu0 0
      %397 = vmatprep.subr.bf16.mxu0 0
      %398 = vmatpush1.bf16.msra.mxu0 0
      %399 = vmatprep.subr.bf16.mxu0 0
      %400 = vmatpush1.bf16.msra.mxu0 0
      %401 = vmatprep.subr.bf16.mxu0 0
      %402 = vmatpush1.bf16.msra.mxu0 0
      %403 = vmatprep.subr.bf16.mxu0 0
      %404 = vmatpush1.bf16.msra.mxu0 0
      %405 = vmatprep.mubr.bf16.mxu0 0
      %406 = vmatmul.mubr.bf16.gmra.mrb[0].mxu0 %v320
      %v407 = vpop.f32.mrb[0].mxu0
      %v408 = vadd.f32 0.0, %v407
      %v409 = vpop.f32.mrb[0].mxu0
      %v410 = vpop.f32.mrb[0].mxu0
      %v411 = vpop.f32.mrb[0].mxu0
      %412 = vdwg.mxu0
      %v414 = vsel %vm318, %v304, 0
      %v417 = vsel %vm322, %v296, 0
      %v420 = vsel %vm322, %v297, 0
      %v423 = vsel %vm322, %v298, 0
      %425 = vmatprep.subr.bf16.mxu0 %v420
      %426 = vmatpush1.bf16.msra.mxu0 %v417
      %427 = vmatprep.subr.bf16.mxu0 0
      %428 = vmatpush1.bf16.msra.mxu0 0
      %429 = vmatprep.subr.bf16.mxu0 0
      %430 = vmatpush1.bf16.msra.mxu0 0
      %431 = vmatprep.subr.bf16.mxu0 0
      %432 = vmatpush1.bf16.msra.mxu0 0
      %433 = vmatprep.subr.bf16.mxu0 0
      %434 = vmatpush1.bf16.msra.mxu0 0
      %435 = vmatprep.subr.bf16.mxu0 0
      %436 = vmatpush1.bf16.msra.mxu0 0
      %437 = vmatprep.subr.bf16.mxu0 0
      %438 = vmatpush1.bf16.msra.mxu0 0
      %439 = vmatprep.subr.bf16.mxu0 0
      %440 = vmatpush1.bf16.msra.mxu0 0
      %441 = vmatprep.subr.bf16.mxu0 0
      %442 = vmatpush1.bf16.msra.mxu0 0
      %443 = vmatprep.subr.bf16.mxu0 0
      %444 = vmatpush1.bf16.msra.mxu0 0
      %445 = vmatprep.subr.bf16.mxu0 0
      %446 = vmatpush1.bf16.msra.mxu0 0
      %447 = vmatprep.subr.bf16.mxu0 0
      %448 = vmatpush1.bf16.msra.mxu0 0
      %449 = vmatprep.subr.bf16.mxu0 0
      %450 = vmatpush1.bf16.msra.mxu0 0
      %451 = vmatprep.subr.bf16.mxu0 0
      %452 = vmatpush1.bf16.msra.mxu0 0
      %453 = vmatprep.subr.bf16.mxu0 0
      %454 = vmatpush1.bf16.msra.mxu0 0
      %455 = vmatprep.subr.bf16.mxu0 0
      %456 = vmatpush1.bf16.msra.mxu0 0
      %457 = vmatprep.mubr.bf16.mxu0 0
      %458 = vmatmul.mubr.bf16.gmra.mrb[0].mxu0 %v414
      %v459 = vpop.f32.mrb[0].mxu0
      %v460 = vadd.f32 %v367, %v459
      %v461 = vpop.f32.mrb[0].mxu0
      %v462 = vadd.f32 %v369, %v461
      %v463 = vpop.f32.mrb[0].mxu0
      %v464 = vpop.f32.mrb[0].mxu0
      %465 = vdwg.mxu0
      %466 = vmatprep.subr.bf16.mxu0 0
      %467 = vmatpush1.bf16.msra.mxu0 %v423
      %468 = vmatprep.subr.bf16.mxu0 0
      %469 = vmatpush1.bf16.msra.mxu0 0
      %470 = vmatprep.subr.bf16.mxu0 0
      %471 = vmatpush1.bf16.msra.mxu0 0
      %472 = vmatprep.subr.bf16.mxu0 0
      %473 = vmatpush1.bf16.msra.mxu0 0
      %474 = vmatprep.subr.bf16.mxu0 0
      %475 = vmatpush1.bf16.msra.mxu0 0
      %476 = vmatprep.subr.bf16.mxu0 0
      %477 = vmatpush1.bf16.msra.mxu0 0
      %478 = vmatprep.subr.bf16.mxu0 0
      %479 = vmatpush1.bf16.msra.mxu0 0
      %480 = vmatprep.subr.bf16.mxu0 0
      %481 = vmatpush1.bf16.msra.mxu0 0
      %482 = vmatprep.subr.bf16.mxu0 0
      %483 = vmatpush1.bf16.msra.mxu0 0
      %484 = vmatprep.subr.bf16.mxu0 0
      %485 = vmatpush1.bf16.msra.mxu0 0
      %486 = vmatprep.subr.bf16.mxu0 0
      %487 = vmatpush1.bf16.msra.mxu0 0
      %488 = vmatprep.subr.bf16.mxu0 0
      %489 = vmatpush1.bf16.msra.mxu0 0
      %490 = vmatprep.subr.bf16.mxu0 0
      %491 = vmatpush1.bf16.msra.mxu0 0
      %492 = vmatprep.subr.bf16.mxu0 0
      %493 = vmatpush1.bf16.msra.mxu0 0
      %494 = vmatprep.subr.bf16.mxu0 0
      %495 = vmatpush1.bf16.msra.mxu0 0
      %496 = vmatprep.subr.bf16.mxu0 0
      %497 = vmatpush1.bf16.msra.mxu0 0
      %498 = vmatprep.mubr.bf16.mxu0 0
      %499 = vmatmul.mubr.bf16.gmra.mrb[0].mxu0 %v414
      %v500 = vpop.f32.mrb[0].mxu0
      %v501 = vadd.f32 %v408, %v500
      %v502 = vpop.f32.mrb[0].mxu0
      %v503 = vpop.f32.mrb[0].mxu0
      %v504 = vpop.f32.mrb[0].mxu0
      %505 = vdwg.mxu0
      %v506 = vld [vmem:[%s2 + $0x8] sm:$0xf]
      %507 = vrot.lane.b32.xlu0 %v296, 126
      %v508 = vpop.permute.xlu0 %507
      %509 = vrot.lane.b32.xlu0 %v297, 126
      %v510 = vpop.permute.xlu0 %509
      %511 = vrot.lane.b32.xlu0 %v298, 126
      %v512 = vpop.permute.xlu0 %511
      %513 = vrot.lane.b32.xlu0 %v302, 126
      %v514 = vpop.permute.xlu0 %513
      %vm515 = vcmask 1031168
      %v516 = vsel %vm515, %v508, %v510
      %v517 = vsel %vm515, %v510, %v512
      %v518 = vsel %vm515, %v512, %v514
      %v520 = vsel %vm318, %v506, 0
      %v523 = vsel %vm322, %v516, 0
      %v526 = vsel %vm322, %v517, 0
      %v529 = vsel %vm322, %v518, 0
      %531 = vmatprep.subr.bf16.mxu0 %v526
      %532 = vmatpush1.bf16.msra.mxu0 %v523
      %533 = vmatprep.subr.bf16.mxu0 0
      %534 = vmatpush1.bf16.msra.mxu0 0
      %535 = vmatprep.subr.bf16.mxu0 0
      %536 = vmatpush1.bf16.msra.mxu0 0
      %537 = vmatprep.subr.bf16.mxu0 0
      %538 = vmatpush1.bf16.msra.mxu0 0
      %539 = vmatprep.subr.bf16.mxu0 0
      %540 = vmatpush1.bf16.msra.mxu0 0
      %541 = vmatprep.subr.bf16.mxu0 0
      %542 = vmatpush1.bf16.msra.mxu0 0
      %543 = vmatprep.subr.bf16.mxu0 0
      %544 = vmatpush1.bf16.msra.mxu0 0
      %545 = vmatprep.subr.bf16.mxu0 0
      %546 = vmatpush1.bf16.msra.mxu0 0
      %547 = vmatprep.subr.bf16.mxu0 0
      %548 = vmatpush1.bf16.msra.mxu0 0
      %549 = vmatprep.subr.bf16.mxu0 0
      %550 = vmatpush1.bf16.msra.mxu0 0
      %551 = vmatprep.subr.bf16.mxu0 0
      %552 = vmatpush1.bf16.msra.mxu0 0
      %553 = vmatprep.subr.bf16.mxu0 0
      %554 = vmatpush1.bf16.msra.mxu0 0
      %555 = vmatprep.subr.bf16.mxu0 0
      %556 = vmatpush1.bf16.msra.mxu0 0
      %557 = vmatprep.subr.bf16.mxu0 0
      %558 = vmatpush1.bf16.msra.mxu0 0
      %559 = vmatprep.subr.bf16.mxu0 0
      %560 = vmatpush1.bf16.msra.mxu0 0
      %561 = vmatprep.subr.bf16.mxu0 0
      %562 = vmatpush1.bf16.msra.mxu0 0
      %563 = vmatprep.mubr.bf16.mxu0 0
      %564 = vmatmul.mubr.bf16.gmra.mrb[0].mxu0 %v520
      %v565 = vpop.f32.mrb[0].mxu0
      %v566 = vadd.f32 0.0, %v565
      %v567 = vpop.f32.mrb[0].mxu0
      %v568 = vadd.f32 0.0, %v567
      %v569 = vpop.f32.mrb[0].mxu0
      %v570 = vpop.f32.mrb[0].mxu0
      %571 = vdwg.mxu0
      %572 = vmatprep.subr.bf16.mxu0 0
      %573 = vmatpush1.bf16.msra.mxu0 %v529
      %574 = vmatprep.subr.bf16.mxu0 0
      %575 = vmatpush1.bf16.msra.mxu0 0
      %576 = vmatprep.subr.bf16.mxu0 0
      %577 = vmatpush1.bf16.msra.mxu0 0
      %578 = vmatprep.subr.bf16.mxu0 0
      %579 = vmatpush1.bf16.msra.mxu0 0
      %580 = vmatprep.subr.bf16.mxu0 0
      %581 = vmatpush1.bf16.msra.mxu0 0
      %582 = vmatprep.subr.bf16.mxu0 0
      %583 = vmatpush1.bf16.msra.mxu0 0
      %584 = vmatprep.subr.bf16.mxu0 0
      %585 = vmatpush1.bf16.msra.mxu0 0
      %586 = vmatprep.subr.bf16.mxu0 0
      %587 = vmatpush1.bf16.msra.mxu0 0
      %588 = vmatprep.subr.bf16.mxu0 0
      %589 = vmatpush1.bf16.msra.mxu0 0
      %590 = vmatprep.subr.bf16.mxu0 0
      %591 = vmatpush1.bf16.msra.mxu0 0
      %592 = vmatprep.subr.bf16.mxu0 0
      %593 = vmatpush1.bf16.msra.mxu0 0
      %594 = vmatprep.subr.bf16.mxu0 0
      %595 = vmatpush1.bf16.msra.mxu0 0
      %596 = vmatprep.subr.bf16.mxu0 0
      %597 = vmatpush1.bf16.msra.mxu0 0
      %598 = vmatprep.subr.bf16.mxu0 0
      %599 = vmatpush1.bf16.msra.mxu0 0
      %600 = vmatprep.subr.bf16.mxu0 0
      %601 = vmatpush1.bf16.msra.mxu0 0
      %602 = vmatprep.subr.bf16.mxu0 0
      %603 = vmatpush1.bf16.msra.mxu0 0
      %604 = vmatprep.mubr.bf16.mxu0 0
      %605 = vmatmul.mubr.bf16.gmra.mrb[0].mxu0 %v520
      %v606 = vpop.f32.mrb[0].mxu0
      %v607 = vadd.f32 0.0, %v606
      %v608 = vpop.f32.mrb[0].mxu0
      %v609 = vpop.f32.mrb[0].mxu0
      %v610 = vpop.f32.mrb[0].mxu0
      %611 = vdwg.mxu0
      %v612 = vadd.f32 %v460, %v566
      %v613 = vadd.f32 %v462, %v568
      %v614 = vadd.f32 %v501, %v607
      %v615 = vld [vmem:[%s2 + $0xc] sm:$0xf]
      %616 = vrot.lane.b32.xlu0 %v296, 125
      %v617 = vpop.permute.xlu0 %616
      %618 = vrot.lane.b32.xlu0 %v297, 125
      %v619 = vpop.permute.xlu0 %618
      %620 = vrot.lane.b32.xlu0 %v298, 125
      %v621 = vpop.permute.xlu0 %620
      %622 = vrot.lane.b32.xlu0 %v302, 125
      %v623 = vpop.permute.xlu0 %622
      %vm624 = vcmask 1022976
      %v625 = vsel %vm624, %v617, %v619
      %v626 = vsel %vm624, %v619, %v621
      %v627 = vsel %vm624, %v621, %v623
      %v629 = vsel %vm318, %v615, 0
      %v632 = vsel %vm322, %v625, 0
      %v635 = vsel %vm322, %v626, 0
      %v638 = vsel %vm322, %v627, 0
      %640 = vmatprep.subr.bf16.mxu0 %v635
      %641 = vmatpush1.bf16.msra.mxu0 %v632
      %642 = vmatprep.subr.bf16.mxu0 0
      %643 = vmatpush1.bf16.msra.mxu0 0
      %644 = vmatprep.subr.bf16.mxu0 0
      %645 = vmatpush1.bf16.msra.mxu0 0
      %646 = vmatprep.subr.bf16.mxu0 0
      %647 = vmatpush1.bf16.msra.mxu0 0
      %648 = vmatprep.subr.bf16.mxu0 0
      %649 = vmatpush1.bf16.msra.mxu0 0
      %650 = vmatprep.subr.bf16.mxu0 0
      %651 = vmatpush1.bf16.msra.mxu0 0
      %652 = vmatprep.subr.bf16.mxu0 0
      %653 = vmatpush1.bf16.msra.mxu0 0
      %654 = vmatprep.subr.bf16.mxu0 0
      %655 = vmatpush1.bf16.msra.mxu0 0
      %656 = vmatprep.subr.bf16.mxu0 0
      %657 = vmatpush1.bf16.msra.mxu0 0
      %658 = vmatprep.subr.bf16.mxu0 0
      %659 = vmatpush1.bf16.msra.mxu0 0
      %660 = vmatprep.subr.bf16.mxu0 0
      %661 = vmatpush1.bf16.msra.mxu0 0
      %662 = vmatprep.subr.bf16.mxu0 0
      %663 = vmatpush1.bf16.msra.mxu0 0
      %664 = vmatprep.subr.bf16.mxu0 0
      %665 = vmatpush1.bf16.msra.mxu0 0
      %666 = vmatprep.subr.bf16.mxu0 0
      %667 = vmatpush1.bf16.msra.mxu0 0
      %668 = vmatprep.subr.bf16.mxu0 0
      %669 = vmatpush1.bf16.msra.mxu0 0
      %670 = vmatprep.subr.bf16.mxu0 0
      %671 = vmatpush1.bf16.msra.mxu0 0
      %672 = vmatprep.mubr.bf16.mxu0 0
      %673 = vmatmul.mubr.bf16.gmra.mrb[0].mxu0 %v629
      %v674 = vpop.f32.mrb[0].mxu0
      %v675 = vadd.f32 0.0, %v674
      %v676 = vpop.f32.mrb[0].mxu0
      %v677 = vadd.f32 0.0, %v676
      %v678 = vpop.f32.mrb[0].mxu0
      %v679 = vpop.f32.mrb[0].mxu0
      %680 = vdwg.mxu0
      %681 = vmatprep.subr.bf16.mxu0 0
      %682 = vmatpush1.bf16.msra.mxu0 %v638
      %683 = vmatprep.subr.bf16.mxu0 0
      %684 = vmatpush1.bf16.msra.mxu0 0
      %685 = vmatprep.subr.bf16.mxu0 0
      %686 = vmatpush1.bf16.msra.mxu0 0
      %687 = vmatprep.subr.bf16.mxu0 0
      %688 = vmatpush1.bf16.msra.mxu0 0
      %689 = vmatprep.subr.bf16.mxu0 0
      %690 = vmatpush1.bf16.msra.mxu0 0
      %691 = vmatprep.subr.bf16.mxu0 0
      %692 = vmatpush1.bf16.msra.mxu0 0
      %693 = vmatprep.subr.bf16.mxu0 0
      %694 = vmatpush1.bf16.msra.mxu0 0
      %695 = vmatprep.subr.bf16.mxu0 0
      %696 = vmatpush1.bf16.msra.mxu0 0
      %697 = vmatprep.subr.bf16.mxu0 0
      %698 = vmatpush1.bf16.msra.mxu0 0
      %699 = vmatprep.subr.bf16.mxu0 0
      %700 = vmatpush1.bf16.msra.mxu0 0
      %701 = vmatprep.subr.bf16.mxu0 0
      %702 = vmatpush1.bf16.msra.mxu0 0
      %703 = vmatprep.subr.bf16.mxu0 0
      %704 = vmatpush1.bf16.msra.mxu0 0
      %705 = vmatprep.subr.bf16.mxu0 0
      %706 = vmatpush1.bf16.msra.mxu0 0
      %707 = vmatprep.subr.bf16.mxu0 0
      %708 = vmatpush1.bf16.msra.mxu0 0
      %709 = vmatprep.subr.bf16.mxu0 0
      %710 = vmatpush1.bf16.msra.mxu0 0
      %711 = vmatprep.subr.bf16.mxu0 0
      %712 = vmatpush1.bf16.msra.mxu0 0
      %713 = vmatprep.mubr.bf16.mxu0 0
      %714 = vmatmul.mubr.bf16.gmra.mrb[0].mxu0 %v629
      %v715 = vpop.f32.mrb[0].mxu0
      %v716 = vadd.f32 0.0, %v715
      %v717 = vpop.f32.mrb[0].mxu0
      %v718 = vpop.f32.mrb[0].mxu0
      %v719 = vpop.f32.mrb[0].mxu0
      %720 = vdwg.mxu0
      %v721 = vadd.f32 %v612, %v675
      %v722 = vadd.f32 %v613, %v677
      %v723 = vadd.f32 %v614, %v716
      %v724 = vld [vmem:[%s2 + $0x10] sm:$0xf]
      %725 = vrot.lane.b32.xlu0 %v296, 124
      %v726 = vpop.permute.xlu0 %725
      %727 = vrot.lane.b32.xlu0 %v297, 124
      %v728 = vpop.permute.xlu0 %727
      %729 = vrot.lane.b32.xlu0 %v298, 124
      %v730 = vpop.permute.xlu0 %729
      %731 = vrot.lane.b32.xlu0 %v302, 124
      %v732 = vpop.permute.xlu0 %731
      %vm733 = vcmask 1014784
      %v734 = vsel %vm733, %v726, %v728
      %v735 = vsel %vm733, %v728, %v730
      %v736 = vsel %vm733, %v730, %v732
      %v738 = vsel %vm318, %v724, 0
      %v741 = vsel %vm322, %v734, 0
      %v744 = vsel %vm322, %v735, 0
      %v747 = vsel %vm322, %v736, 0
      %749 = vmatprep.subr.bf16.mxu0 %v744
      %750 = vmatpush1.bf16.msra.mxu0 %v741
      %751 = vmatprep.subr.bf16.mxu0 0
      %752 = vmatpush1.bf16.msra.mxu0 0
      %753 = vmatprep.subr.bf16.mxu0 0
      %754 = vmatpush1.bf16.msra.mxu0 0
      %755 = vmatprep.subr.bf16.mxu0 0
      %756 = vmatpush1.bf16.msra.mxu0 0
      %757 = vmatprep.subr.bf16.mxu0 0
      %758 = vmatpush1.bf16.msra.mxu0 0
      %759 = vmatprep.subr.bf16.mxu0 0
      %760 = vmatpush1.bf16.msra.mxu0 0
      %761 = vmatprep.subr.bf16.mxu0 0
      %762 = vmatpush1.bf16.msra.mxu0 0
      %763 = vmatprep.subr.bf16.mxu0 0
      %764 = vmatpush1.bf16.msra.mxu0 0
      %765 = vmatprep.subr.bf16.mxu0 0
      %766 = vmatpush1.bf16.msra.mxu0 0
      %767 = vmatprep.subr.bf16.mxu0 0
      %768 = vmatpush1.bf16.msra.mxu0 0
      %769 = vmatprep.subr.bf16.mxu0 0
      %770 = vmatpush1.bf16.msra.mxu0 0
      %771 = vmatprep.subr.bf16.mxu0 0
      %772 = vmatpush1.bf16.msra.mxu0 0
      %773 = vmatprep.subr.bf16.mxu0 0
      %774 = vmatpush1.bf16.msra.mxu0 0
      %775 = vmatprep.subr.bf16.mxu0 0
      %776 = vmatpush1.bf16.msra.mxu0 0
      %777 = vmatprep.subr.bf16.mxu0 0
      %778 = vmatpush1.bf16.msra.mxu0 0
      %779 = vmatprep.subr.bf16.mxu0 0
      %780 = vmatpush1.bf16.msra.mxu0 0
      %781 = vmatprep.mubr.bf16.mxu0 0
      %782 = vmatmul.mubr.bf16.gmra.mrb[0].mxu0 %v738
      %v783 = vpop.f32.mrb[0].mxu0
      %v784 = vadd.f32 0.0, %v783
      %v785 = vpop.f32.mrb[0].mxu0
      %v786 = vadd.f32 0.0, %v785
      %v787 = vpop.f32.mrb[0].mxu0
      %v788 = vpop.f32.mrb[0].mxu0
      %789 = vdwg.mxu0
      %790 = vmatprep.subr.bf16.mxu0 0
      %791 = vmatpush1.bf16.msra.mxu0 %v747
      %792 = vmatprep.subr.bf16.mxu0 0
      %793 = vmatpush1.bf16.msra.mxu0 0
      %794 = vmatprep.subr.bf16.mxu0 0
      %795 = vmatpush1.bf16.msra.mxu0 0
      %796 = vmatprep.subr.bf16.mxu0 0
      %797 = vmatpush1.bf16.msra.mxu0 0
      %798 = vmatprep.subr.bf16.mxu0 0
      %799 = vmatpush1.bf16.msra.mxu0 0
      %800 = vmatprep.subr.bf16.mxu0 0
      %801 = vmatpush1.bf16.msra.mxu0 0
      %802 = vmatprep.subr.bf16.mxu0 0
      %803 = vmatpush1.bf16.msra.mxu0 0
      %804 = vmatprep.subr.bf16.mxu0 0
      %805 = vmatpush1.bf16.msra.mxu0 0
      %806 = vmatprep.subr.bf16.mxu0 0
      %807 = vmatpush1.bf16.msra.mxu0 0
      %808 = vmatprep.subr.bf16.mxu0 0
      %809 = vmatpush1.bf16.msra.mxu0 0
      %810 = vmatprep.subr.bf16.mxu0 0
      %811 = vmatpush1.bf16.msra.mxu0 0
      %812 = vmatprep.subr.bf16.mxu0 0
      %813 = vmatpush1.bf16.msra.mxu0 0
      %814 = vmatprep.subr.bf16.mxu0 0
      %815 = vmatpush1.bf16.msra.mxu0 0
      %816 = vmatprep.subr.bf16.mxu0 0
      %817 = vmatpush1.bf16.msra.mxu0 0
      %818 = vmatprep.subr.bf16.mxu0 0
      %819 = vmatpush1.bf16.msra.mxu0 0
      %820 = vmatprep.subr.bf16.mxu0 0
      %821 = vmatpush1.bf16.msra.mxu0 0
      %822 = vmatprep.mubr.bf16.mxu0 0
      %823 = vmatmul.mubr.bf16.gmra.mrb[0].mxu0 %v738
      %v824 = vpop.f32.mrb[0].mxu0
      %v825 = vadd.f32 0.0, %v824
      %v826 = vpop.f32.mrb[0].mxu0
      %v827 = vpop.f32.mrb[0].mxu0
      %v828 = vpop.f32.mrb[0].mxu0
      %829 = vdwg.mxu0
      %v830 = vadd.f32 %v721, %v784
      %v831 = vadd.f32 %v722, %v786
      %v832 = vadd.f32 %v723, %v825
      %v833 = vld [vmem:[%s2 + $0x14] sm:$0xf]
      %834 = vrot.lane.b32.xlu0 %v296, 123
      %v835 = vpop.permute.xlu0 %834
      %836 = vrot.lane.b32.xlu0 %v297, 123
      %v837 = vpop.permute.xlu0 %836
      %838 = vrot.lane.b32.xlu0 %v298, 123
      %v839 = vpop.permute.xlu0 %838
      %840 = vrot.lane.b32.xlu0 %v302, 123
      %v841 = vpop.permute.xlu0 %840
      %vm842 = vcmask 1006592
      %v843 = vsel %vm842, %v835, %v837
      %v844 = vsel %vm842, %v837, %v839
      %v845 = vsel %vm842, %v839, %v841
      %v847 = vsel %vm318, %v833, 0
      %v850 = vsel %vm322, %v843, 0
      %v853 = vsel %vm322, %v844, 0
      %v856 = vsel %vm322, %v845, 0
      %858 = vmatprep.subr.bf16.mxu0 %v853
      %859 = vmatpush1.bf16.msra.mxu0 %v850
      %860 = vmatprep.subr.bf16.mxu0 0
      %861 = vmatpush1.bf16.msra.mxu0 0
      %862 = vmatprep.subr.bf16.mxu0 0
      %863 = vmatpush1.bf16.msra.mxu0 0
      %864 = vmatprep.subr.bf16.mxu0 0
      %865 = vmatpush1.bf16.msra.mxu0 0
      %866 = vmatprep.subr.bf16.mxu0 0
      %867 = vmatpush1.bf16.msra.mxu0 0
      %868 = vmatprep.subr.bf16.mxu0 0
      %869 = vmatpush1.bf16.msra.mxu0 0
      %870 = vmatprep.subr.bf16.mxu0 0
      %871 = vmatpush1.bf16.msra.mxu0 0
      %872 = vmatprep.subr.bf16.mxu0 0
      %873 = vmatpush1.bf16.msra.mxu0 0
      %874 = vmatprep.subr.bf16.mxu0 0
      %875 = vmatpush1.bf16.msra.mxu0 0
      %876 = vmatprep.subr.bf16.mxu0 0
      %877 = vmatpush1.bf16.msra.mxu0 0
      %878 = vmatprep.subr.bf16.mxu0 0
      %879 = vmatpush1.bf16.msra.mxu0 0
      %880 = vmatprep.subr.bf16.mxu0 0
      %881 = vmatpush1.bf16.msra.mxu0 0
      %882 = vmatprep.subr.bf16.mxu0 0
      %883 = vmatpush1.bf16.msra.mxu0 0
      %884 = vmatprep.subr.bf16.mxu0 0
      %885 = vmatpush1.bf16.msra.mxu0 0
      %886 = vmatprep.subr.bf16.mxu0 0
      %887 = vmatpush1.bf16.msra.mxu0 0
      %888 = vmatprep.subr.bf16.mxu0 0
      %889 = vmatpush1.bf16.msra.mxu0 0
      %890 = vmatprep.mubr.bf16.mxu0 0
      %891 = vmatmul.mubr.bf16.gmra.mrb[0].mxu0 %v847
      %v892 = vpop.f32.mrb[0].mxu0
      %v893 = vadd.f32 0.0, %v892
      %v894 = vpop.f32.mrb[0].mxu0
      %v895 = vadd.f32 0.0, %v894
      %v896 = vpop.f32.mrb[0].mxu0
      %v897 = vpop.f32.mrb[0].mxu0
      %898 = vdwg.mxu0
      %899 = vmatprep.subr.bf16.mxu0 0
      %900 = vmatpush1.bf16.msra.mxu0 %v856
      %901 = vmatprep.subr.bf16.mxu0 0
      %902 = vmatpush1.bf16.msra.mxu0 0
      %903 = vmatprep.subr.bf16.mxu0 0
      %904 = vmatpush1.bf16.msra.mxu0 0
      %905 = vmatprep.subr.bf16.mxu0 0
      %906 = vmatpush1.bf16.msra.mxu0 0
      %907 = vmatprep.subr.bf16.mxu0 0
      %908 = vmatpush1.bf16.msra.mxu0 0
      %909 = vmatprep.subr.bf16.mxu0 0
      %910 = vmatpush1.bf16.msra.mxu0 0
      %911 = vmatprep.subr.bf16.mxu0 0
      %912 = vmatpush1.bf16.msra.mxu0 0
      %913 = vmatprep.subr.bf16.mxu0 0
      %914 = vmatpush1.bf16.msra.mxu0 0
      %915 = vmatprep.subr.bf16.mxu0 0
      %916 = vmatpush1.bf16.msra.mxu0 0
      %917 = vmatprep.subr.bf16.mxu0 0
      %918 = vmatpush1.bf16.msra.mxu0 0
      %919 = vmatprep.subr.bf16.mxu0 0
      %920 = vmatpush1.bf16.msra.mxu0 0
      %921 = vmatprep.subr.bf16.mxu0 0
      %922 = vmatpush1.bf16.msra.mxu0 0
      %923 = vmatprep.subr.bf16.mxu0 0
      %924 = vmatpush1.bf16.msra.mxu0 0
      %925 = vmatprep.subr.bf16.mxu0 0
      %926 = vmatpush1.bf16.msra.mxu0 0
      %927 = vmatprep.subr.bf16.mxu0 0
      %928 = vmatpush1.bf16.msra.mxu0 0
      %929 = vmatprep.subr.bf16.mxu0 0
      %930 = vmatpush1.bf16.msra.mxu0 0
      %931 = vmatprep.mubr.bf16.mxu0 0
      %932 = vmatmul.mubr.bf16.gmra.mrb[0].mxu0 %v847
      %v933 = vpop.f32.mrb[0].mxu0
      %v934 = vadd.f32 0.0, %v933
      %v935 = vpop.f32.mrb[0].mxu0
      %v936 = vpop.f32.mrb[0].mxu0
      %v937 = vpop.f32.mrb[0].mxu0
      %938 = vdwg.mxu0
      %v939 = vadd.f32 %v830, %v893
      %v940 = vadd.f32 %v831, %v895
      %v941 = vadd.f32 %v832, %v934
      %v942 = vld [vmem:[%s2 + $0x18] sm:$0xf]
      %943 = vrot.lane.b32.xlu0 %v296, 122
      %v944 = vpop.permute.xlu0 %943
      %945 = vrot.lane.b32.xlu0 %v297, 122
      %v946 = vpop.permute.xlu0 %945
      %947 = vrot.lane.b32.xlu0 %v298, 122
      %v948 = vpop.permute.xlu0 %947
      %949 = vrot.lane.b32.xlu0 %v302, 122
      %v950 = vpop.permute.xlu0 %949
      %vm951 = vcmask 998400
      %v952 = vsel %vm951, %v944, %v946
      %v953 = vsel %vm951, %v946, %v948
      %v954 = vsel %vm951, %v948, %v950
      %v956 = vsel %vm318, %v942, 0
      %v959 = vsel %vm322, %v952, 0
      %v962 = vsel %vm322, %v953, 0
      %v965 = vsel %vm322, %v954, 0
      %967 = vmatprep.subr.bf16.mxu0 %v962
      %968 = vmatpush1.bf16.msra.mxu0 %v959
      %969 = vmatprep.subr.bf16.mxu0 0
      %970 = vmatpush1.bf16.msra.mxu0 0
      %971 = vmatprep.subr.bf16.mxu0 0
      %972 = vmatpush1.bf16.msra.mxu0 0
      %973 = vmatprep.subr.bf16.mxu0 0
      %974 = vmatpush1.bf16.msra.mxu0 0
      %975 = vmatprep.subr.bf16.mxu0 0
      %976 = vmatpush1.bf16.msra.mxu0 0
      %977 = vmatprep.subr.bf16.mxu0 0
      %978 = vmatpush1.bf16.msra.mxu0 0
      %979 = vmatprep.subr.bf16.mxu0 0
      %980 = vmatpush1.bf16.msra.mxu0 0
      %981 = vmatprep.subr.bf16.mxu0 0
      %982 = vmatpush1.bf16.msra.mxu0 0
      %983 = vmatprep.subr.bf16.mxu0 0
      %984 = vmatpush1.bf16.msra.mxu0 0
      %985 = vmatprep.subr.bf16.mxu0 0
      %986 = vmatpush1.bf16.msra.mxu0 0
      %987 = vmatprep.subr.bf16.mxu0 0
      %988 = vmatpush1.bf16.msra.mxu0 0
      %989 = vmatprep.subr.bf16.mxu0 0
      %990 = vmatpush1.bf16.msra.mxu0 0
      %991 = vmatprep.subr.bf16.mxu0 0
      %992 = vmatpush1.bf16.msra.mxu0 0
      %993 = vmatprep.subr.bf16.mxu0 0
      %994 = vmatpush1.bf16.msra.mxu0 0
      %995 = vmatprep.subr.bf16.mxu0 0
      %996 = vmatpush1.bf16.msra.mxu0 0
      %997 = vmatprep.subr.bf16.mxu0 0
      %998 = vmatpush1.bf16.msra.mxu0 0
      %999 = vmatprep.mubr.bf16.mxu0 0
      %1000 = vmatmul.mubr.bf16.gmra.mrb[0].mxu0 %v956
      %v1001 = vpop.f32.mrb[0].mxu0
      %v1002 = vadd.f32 0.0, %v1001
      %v1003 = vpop.f32.mrb[0].mxu0
      %v1004 = vadd.f32 0.0, %v1003
      %v1005 = vpop.f32.mrb[0].mxu0
      %v1006 = vpop.f32.mrb[0].mxu0
      %1007 = vdwg.mxu0
      %1008 = vmatprep.subr.bf16.mxu0 0
      %1009 = vmatpush1.bf16.msra.mxu0 %v965
      %1010 = vmatprep.subr.bf16.mxu0 0
      %1011 = vmatpush1.bf16.msra.mxu0 0
      %1012 = vmatprep.subr.bf16.mxu0 0
      %1013 = vmatpush1.bf16.msra.mxu0 0
      %1014 = vmatprep.subr.bf16.mxu0 0
      %1015 = vmatpush1.bf16.msra.mxu0 0
      %1016 = vmatprep.subr.bf16.mxu0 0
      %1017 = vmatpush1.bf16.msra.mxu0 0
      %1018 = vmatprep.subr.bf16.mxu0 0
      %1019 = vmatpush1.bf16.msra.mxu0 0
      %1020 = vmatprep.subr.bf16.mxu0 0
      %1021 = vmatpush1.bf16.msra.mxu0 0
      %1022 = vmatprep.subr.bf16.mxu0 0
      %1023 = vmatpush1.bf16.msra.mxu0 0
      %1024 = vmatprep.subr.bf16.mxu0 0
      %1025 = vmatpush1.bf16.msra.mxu0 0
      %1026 = vmatprep.subr.bf16.mxu0 0
      %1027 = vmatpush1.bf16.msra.mxu0 0
      %1028 = vmatprep.subr.bf16.mxu0 0
      %1029 = vmatpush1.bf16.msra.mxu0 0
      %1030 = vmatprep.subr.bf16.mxu0 0
      %1031 = vmatpush1.bf16.msra.mxu0 0
      %1032 = vmatprep.subr.bf16.mxu0 0
      %1033 = vmatpush1.bf16.msra.mxu0 0
      %1034 = vmatprep.subr.bf16.mxu0 0
      %1035 = vmatpush1.bf16.msra.mxu0 0
      %1036 = vmatprep.subr.bf16.mxu0 0
      %1037 = vmatpush1.bf16.msra.mxu0 0
      %1038 = vmatprep.subr.bf16.mxu0 0
      %1039 = vmatpush1.bf16.msra.mxu0 0
      %1040 = vmatprep.mubr.bf16.mxu0 0
      %1041 = vmatmul.mubr.bf16.gmra.mrb[0].mxu0 %v956
      %v1042 = vpop.f32.mrb[0].mxu0
      %v1043 = vadd.f32 0.0, %v1042
      %v1044 = vpop.f32.mrb[0].mxu0
      %v1045 = vpop.f32.mrb[0].mxu0
      %v1046 = vpop.f32.mrb[0].mxu0
      %1047 = vdwg.mxu0
      %v1048 = vadd.f32 %v939, %v1002
      %v1049 = vadd.f32 %v940, %v1004
      %v1050 = vadd.f32 %v941, %v1043
      %v1051 = vld [vmem:[%s2 + $0x1c] sm:$0xf]
      %1052 = vrot.lane.b32.xlu0 %v296, 106
      %v1053 = vpop.permute.xlu0 %1052
      %1054 = vrot.lane.b32.xlu0 %v297, 106
      %v1055 = vpop.permute.xlu0 %1054
      %1056 = vrot.lane.b32.xlu0 %v298, 106
      %v1057 = vpop.permute.xlu0 %1056
      %1058 = vrot.lane.b32.xlu0 %v302, 106
      %v1059 = vpop.permute.xlu0 %1058
      %vm1060 = vcmask 867328
      %v1061 = vsel %vm1060, %v1053, %v1055
      %v1062 = vsel %vm1060, %v1055, %v1057
      %v1063 = vsel %vm1060, %v1057, %v1059
      %v1065 = vsel %vm318, %v1051, 0
      %v1068 = vsel %vm322, %v1061, 0
      %v1071 = vsel %vm322, %v1062, 0
      %v1074 = vsel %vm322, %v1063, 0
      %1076 = vmatprep.subr.bf16.mxu0 %v1071
      %1077 = vmatpush1.bf16.msra.mxu0 %v1068
      %1078 = vmatprep.subr.bf16.mxu0 0
      %1079 = vmatpush1.bf16.msra.mxu0 0
      %1080 = vmatprep.subr.bf16.mxu0 0
      %1081 = vmatpush1.bf16.msra.mxu0 0
      %1082 = vmatprep.subr.bf16.mxu0 0
      %1083 = vmatpush1.bf16.msra.mxu0 0
      %1084 = vmatprep.subr.bf16.mxu0 0
      %1085 = vmatpush1.bf16.msra.mxu0 0
      %1086 = vmatprep.subr.bf16.mxu0 0
      %1087 = vmatpush1.bf16.msra.mxu0 0
      %1088 = vmatprep.subr.bf16.mxu0 0
      %1089 = vmatpush1.bf16.msra.mxu0 0
      %1090 = vmatprep.subr.bf16.mxu0 0
      %1091 = vmatpush1.bf16.msra.mxu0 0
      %1092 = vmatprep.subr.bf16.mxu0 0
      %1093 = vmatpush1.bf16.msra.mxu0 0
      %1094 = vmatprep.subr.bf16.mxu0 0
      %1095 = vmatpush1.bf16.msra.mxu0 0
      %1096 = vmatprep.subr.bf16.mxu0 0
      %1097 = vmatpush1.bf16.msra.mxu0 0
      %1098 = vmatprep.subr.bf16.mxu0 0
      %1099 = vmatpush1.bf16.msra.mxu0 0
      %1100 = vmatprep.subr.bf16.mxu0 0
      %1101 = vmatpush1.bf16.msra.mxu0 0
      %1102 = vmatprep.subr.bf16.mxu0 0
      %1103 = vmatpush1.bf16.msra.mxu0 0
      %1104 = vmatprep.subr.bf16.mxu0 0
      %1105 = vmatpush1.bf16.msra.mxu0 0
      %1106 = vmatprep.subr.bf16.mxu0 0
      %1107 = vmatpush1.bf16.msra.mxu0 0
      %1108 = vmatprep.mubr.bf16.mxu0 0
      %1109 = vmatmul.mubr.bf16.gmra.mrb[0].mxu0 %v1065
      %v1110 = vpop.f32.mrb[0].mxu0
      %v1111 = vadd.f32 0.0, %v1110
      %v1112 = vpop.f32.mrb[0].mxu0
      %v1113 = vadd.f32 0.0, %v1112
      %v1114 = vpop.f32.mrb[0].mxu0
      %v1115 = vpop.f32.mrb[0].mxu0
      %1116 = vdwg.mxu0
      %1117 = vmatprep.subr.bf16.mxu0 0
      %1118 = vmatpush1.bf16.msra.mxu0 %v1074
      %1119 = vmatprep.subr.bf16.mxu0 0
      %1120 = vmatpush1.bf16.msra.mxu0 0
      %1121 = vmatprep.subr.bf16.mxu0 0
      %1122 = vmatpush1.bf16.msra.mxu0 0
      %1123 = vmatprep.subr.bf16.mxu0 0
      %1124 = vmatpush1.bf16.msra.mxu0 0
      %1125 = vmatprep.subr.bf16.mxu0 0
      %1126 = vmatpush1.bf16.msra.mxu0 0
      %1127 = vmatprep.subr.bf16.mxu0 0
      %1128 = vmatpush1.bf16.msra.mxu0 0
      %1129 = vmatprep.subr.bf16.mxu0 0
      %1130 = vmatpush1.bf16.msra.mxu0 0
      %1131 = vmatprep.subr.bf16.mxu0 0
      %1132 = vmatpush1.bf16.msra.mxu0 0
      %1133 = vmatprep.subr.bf16.mxu0 0
      %1134 = vmatpush1.bf16.msra.mxu0 0
      %1135 = vmatprep.subr.bf16.mxu0 0
      %1136 = vmatpush1.bf16.msra.mxu0 0
      %1137 = vmatprep.subr.bf16.mxu0 0
      %1138 = vmatpush1.bf16.msra.mxu0 0
      %1139 = vmatprep.subr.bf16.mxu0 0
      %1140 = vmatpush1.bf16.msra.mxu0 0
      %1141 = vmatprep.subr.bf16.mxu0 0
      %1142 = vmatpush1.bf16.msra.mxu0 0
      %1143 = vmatprep.subr.bf16.mxu0 0
      %1144 = vmatpush1.bf16.msra.mxu0 0
      %1145 = vmatprep.subr.bf16.mxu0 0
      %1146 = vmatpush1.bf16.msra.mxu0 0
      %1147 = vmatprep.subr.bf16.mxu0 0
      %1148 = vmatpush1.bf16.msra.mxu0 0
      %1149 = vmatprep.mubr.bf16.mxu0 0
      %1150 = vmatmul.mubr.bf16.gmra.mrb[0].mxu0 %v1065
      %v1151 = vpop.f32.mrb[0].mxu0
      %v1152 = vadd.f32 0.0, %v1151
      %v1153 = vpop.f32.mrb[0].mxu0
      %v1154 = vpop.f32.mrb[0].mxu0
      %v1155 = vpop.f32.mrb[0].mxu0
      %1156 = vdwg.mxu0
      %v1157 = vadd.f32 %v1048, %v1111
      %v1158 = vadd.f32 %v1049, %v1113
      %v1159 = vadd.f32 %v1050, %v1152
      %v1160 = vld [vmem:[%s2 + $0x20] sm:$0xf]
      %1161 = vrot.lane.b32.xlu0 %v296, 105
      %v1162 = vpop.permute.xlu0 %1161
      %1163 = vrot.lane.b32.xlu0 %v297, 105
      %v1164 = vpop.permute.xlu0 %1163
      %1165 = vrot.lane.b32.xlu0 %v298, 105
      %v1166 = vpop.permute.xlu0 %1165
      %1167 = vrot.lane.b32.xlu0 %v302, 105
      %v1168 = vpop.permute.xlu0 %1167
      %vm1169 = vcmask 859136
      %v1170 = vsel %vm1169, %v1162, %v1164
      %v1171 = vsel %vm1169, %v1164, %v1166
      %v1172 = vsel %vm1169, %v1166, %v1168
      %v1174 = vsel %vm318, %v1160, 0
      %v1177 = vsel %vm322, %v1170, 0
      %v1180 = vsel %vm322, %v1171, 0
      %v1183 = vsel %vm322, %v1172, 0
      %1185 = vmatprep.subr.bf16.mxu0 %v1180
      %1186 = vmatpush1.bf16.msra.mxu0 %v1177
      %1187 = vmatprep.subr.bf16.mxu0 0
      %1188 = vmatpush1.bf16.msra.mxu0 0
      %1189 = vmatprep.subr.bf16.mxu0 0
      %1190 = vmatpush1.bf16.msra.mxu0 0
      %1191 = vmatprep.subr.bf16.mxu0 0
      %1192 = vmatpush1.bf16.msra.mxu0 0
      %1193 = vmatprep.subr.bf16.mxu0 0
      %1194 = vmatpush1.bf16.msra.mxu0 0
      %1195 = vmatprep.subr.bf16.mxu0 0
      %1196 = vmatpush1.bf16.msra.mxu0 0
      %1197 = vmatprep.subr.bf16.mxu0 0
      %1198 = vmatpush1.bf16.msra.mxu0 0
      %1199 = vmatprep.subr.bf16.mxu0 0
      %1200 = vmatpush1.bf16.msra.mxu0 0
      %1201 = vmatprep.subr.bf16.mxu0 0
      %1202 = vmatpush1.bf16.msra.mxu0 0
      %1203 = vmatprep.subr.bf16.mxu0 0
      %1204 = vmatpush1.bf16.msra.mxu0 0
      %1205 = vmatprep.subr.bf16.mxu0 0
      %1206 = vmatpush1.bf16.msra.mxu0 0
      %1207 = vmatprep.subr.bf16.mxu0 0
      %1208 = vmatpush1.bf16.msra.mxu0 0
      %1209 = vmatprep.subr.bf16.mxu0 0
      %1210 = vmatpush1.bf16.msra.mxu0 0
      %1211 = vmatprep.subr.bf16.mxu0 0
      %1212 = vmatpush1.bf16.msra.mxu0 0
      %1213 = vmatprep.subr.bf16.mxu0 0
      %1214 = vmatpush1.bf16.msra.mxu0 0
      %1215 = vmatprep.subr.bf16.mxu0 0
      %1216 = vmatpush1.bf16.msra.mxu0 0
      %1217 = vmatprep.mubr.bf16.mxu0 0
      %1218 = vmatmul.mubr.bf16.gmra.mrb[0].mxu0 %v1174
      %v1219 = vpop.f32.mrb[0].mxu0
      %v1220 = vadd.f32 0.0, %v1219
      %v1221 = vpop.f32.mrb[0].mxu0
      %v1222 = vadd.f32 0.0, %v1221
      %v1223 = vpop.f32.mrb[0].mxu0
      %v1224 = vpop.f32.mrb[0].mxu0
      %1225 = vdwg.mxu0
      %1226 = vmatprep.subr.bf16.mxu0 0
      %1227 = vmatpush1.bf16.msra.mxu0 %v1183
      %1228 = vmatprep.subr.bf16.mxu0 0
      %1229 = vmatpush1.bf16.msra.mxu0 0
      %1230 = vmatprep.subr.bf16.mxu0 0
      %1231 = vmatpush1.bf16.msra.mxu0 0
      %1232 = vmatprep.subr.bf16.mxu0 0
      %1233 = vmatpush1.bf16.msra.mxu0 0
      %1234 = vmatprep.subr.bf16.mxu0 0
      %1235 = vmatpush1.bf16.msra.mxu0 0
      %1236 = vmatprep.subr.bf16.mxu0 0
      %1237 = vmatpush1.bf16.msra.mxu0 0
      %1238 = vmatprep.subr.bf16.mxu0 0
      %1239 = vmatpush1.bf16.msra.mxu0 0
      %1240 = vmatprep.subr.bf16.mxu0 0
      %1241 = vmatpush1.bf16.msra.mxu0 0
      %1242 = vmatprep.subr.bf16.mxu0 0
      %1243 = vmatpush1.bf16.msra.mxu0 0
      %1244 = vmatprep.subr.bf16.mxu0 0
      %1245 = vmatpush1.bf16.msra.mxu0 0
      %1246 = vmatprep.subr.bf16.mxu0 0
      %1247 = vmatpush1.bf16.msra.mxu0 0
      %1248 = vmatprep.subr.bf16.mxu0 0
      %1249 = vmatpush1.bf16.msra.mxu0 0
      %1250 = vmatprep.subr.bf16.mxu0 0
      %1251 = vmatpush1.bf16.msra.mxu0 0
      %1252 = vmatprep.subr.bf16.mxu0 0
      %1253 = vmatpush1.bf16.msra.mxu0 0
      %1254 = vmatprep.subr.bf16.mxu0 0
      %1255 = vmatpush1.bf16.msra.mxu0 0
      %1256 = vmatprep.subr.bf16.mxu0 0
      %1257 = vmatpush1.bf16.msra.mxu0 0
      %1258 = vmatprep.mubr.bf16.mxu0 0
      %1259 = vmatmul.mubr.bf16.gmra.mrb[0].mxu0 %v1174
      %v1260 = vpop.f32.mrb[0].mxu0
      %v1261 = vadd.f32 0.0, %v1260
      %v1262 = vpop.f32.mrb[0].mxu0
      %v1263 = vpop.f32.mrb[0].mxu0
      %v1264 = vpop.f32.mrb[0].mxu0
      %1265 = vdwg.mxu0
      %v1266 = vadd.f32 %v1157, %v1220
      %v1267 = vadd.f32 %v1158, %v1222
      %v1268 = vadd.f32 %v1159, %v1261
      %v1269 = vld [vmem:[%s2 + $0x24] sm:$0xf]
      %1270 = vrot.lane.b32.xlu0 %v296, 104
      %v1271 = vpop.permute.xlu0 %1270
      %1272 = vrot.lane.b32.xlu0 %v297, 104
      %v1273 = vpop.permute.xlu0 %1272
      %1274 = vrot.lane.b32.xlu0 %v298, 104
      %v1275 = vpop.permute.xlu0 %1274
      %1276 = vrot.lane.b32.xlu0 %v302, 104
      %v1277 = vpop.permute.xlu0 %1276
      %vm1278 = vcmask 850944
      %v1279 = vsel %vm1278, %v1271, %v1273
      %v1280 = vsel %vm1278, %v1273, %v1275
      %v1281 = vsel %vm1278, %v1275, %v1277
      %v1283 = vsel %vm318, %v1269, 0
      %v1286 = vsel %vm322, %v1279, 0
      %v1289 = vsel %vm322, %v1280, 0
      %v1292 = vsel %vm322, %v1281, 0
      %1294 = vmatprep.subr.bf16.mxu0 %v1289
      %1295 = vmatpush1.bf16.msra.mxu0 %v1286
      %1296 = vmatprep.subr.bf16.mxu0 0
      %1297 = vmatpush1.bf16.msra.mxu0 0
      %1298 = vmatprep.subr.bf16.mxu0 0
      %1299 = vmatpush1.bf16.msra.mxu0 0
      %1300 = vmatprep.subr.bf16.mxu0 0
      %1301 = vmatpush1.bf16.msra.mxu0 0
      %1302 = vmatprep.subr.bf16.mxu0 0
      %1303 = vmatpush1.bf16.msra.mxu0 0
      %1304 = vmatprep.subr.bf16.mxu0 0
      %1305 = vmatpush1.bf16.msra.mxu0 0
      %1306 = vmatprep.subr.bf16.mxu0 0
      %1307 = vmatpush1.bf16.msra.mxu0 0
      %1308 = vmatprep.subr.bf16.mxu0 0
      %1309 = vmatpush1.bf16.msra.mxu0 0
      %1310 = vmatprep.subr.bf16.mxu0 0
      %1311 = vmatpush1.bf16.msra.mxu0 0
      %1312 = vmatprep.subr.bf16.mxu0 0
      %1313 = vmatpush1.bf16.msra.mxu0 0
      %1314 = vmatprep.subr.bf16.mxu0 0
      %1315 = vmatpush1.bf16.msra.mxu0 0
      %1316 = vmatprep.subr.bf16.mxu0 0
      %1317 = vmatpush1.bf16.msra.mxu0 0
      %1318 = vmatprep.subr.bf16.mxu0 0
      %1319 = vmatpush1.bf16.msra.mxu0 0
      %1320 = vmatprep.subr.bf16.mxu0 0
      %1321 = vmatpush1.bf16.msra.mxu0 0
      %1322 = vmatprep.subr.bf16.mxu0 0
      %1323 = vmatpush1.bf16.msra.mxu0 0
      %1324 = vmatprep.subr.bf16.mxu0 0
      %1325 = vmatpush1.bf16.msra.mxu0 0
      %1326 = vmatprep.mubr.bf16.mxu0 0
      %1327 = vmatmul.mubr.bf16.gmra.mrb[0].mxu0 %v1283
      %v1328 = vpop.f32.mrb[0].mxu0
      %v1329 = vadd.f32 0.0, %v1328
      %v1330 = vpop.f32.mrb[0].mxu0
      %v1331 = vadd.f32 0.0, %v1330
      %v1332 = vpop.f32.mrb[0].mxu0
      %v1333 = vpop.f32.mrb[0].mxu0
      %1334 = vdwg.mxu0
      %1335 = vmatprep.subr.bf16.mxu0 0
      %1336 = vmatpush1.bf16.msra.mxu0 %v1292
      %1337 = vmatprep.subr.bf16.mxu0 0
      %1338 = vmatpush1.bf16.msra.mxu0 0
      %1339 = vmatprep.subr.bf16.mxu0 0
      %1340 = vmatpush1.bf16.msra.mxu0 0
      %1341 = vmatprep.subr.bf16.mxu0 0
      %1342 = vmatpush1.bf16.msra.mxu0 0
      %1343 = vmatprep.subr.bf16.mxu0 0
      %1344 = vmatpush1.bf16.msra.mxu0 0
      %1345 = vmatprep.subr.bf16.mxu0 0
      %1346 = vmatpush1.bf16.msra.mxu0 0
      %1347 = vmatprep.subr.bf16.mxu0 0
      %1348 = vmatpush1.bf16.msra.mxu0 0
      %1349 = vmatprep.subr.bf16.mxu0 0
      %1350 = vmatpush1.bf16.msra.mxu0 0
      %1351 = vmatprep.subr.bf16.mxu0 0
      %1352 = vmatpush1.bf16.msra.mxu0 0
      %1353 = vmatprep.subr.bf16.mxu0 0
      %1354 = vmatpush1.bf16.msra.mxu0 0
      %1355 = vmatprep.subr.bf16.mxu0 0
      %1356 = vmatpush1.bf16.msra.mxu0 0
      %1357 = vmatprep.subr.bf16.mxu0 0
      %1358 = vmatpush1.bf16.msra.mxu0 0
      %1359 = vmatprep.subr.bf16.mxu0 0
      %1360 = vmatpush1.bf16.msra.mxu0 0
      %1361 = vmatprep.subr.bf16.mxu0 0
      %1362 = vmatpush1.bf16.msra.mxu0 0
      %1363 = vmatprep.subr.bf16.mxu0 0
      %1364 = vmatpush1.bf16.msra.mxu0 0
      %1365 = vmatprep.subr.bf16.mxu0 0
      %1366 = vmatpush1.bf16.msra.mxu0 0
      %1367 = vmatprep.mubr.bf16.mxu0 0
      %1368 = vmatmul.mubr.bf16.gmra.mrb[0].mxu0 %v1283
      %v1369 = vpop.f32.mrb[0].mxu0
      %v1370 = vadd.f32 0.0, %v1369
      %v1371 = vpop.f32.mrb[0].mxu0
      %v1372 = vpop.f32.mrb[0].mxu0
      %v1373 = vpop.f32.mrb[0].mxu0
      %1374 = vdwg.mxu0
      %v1375 = vadd.f32 %v1266, %v1329
      %v1376 = vadd.f32 %v1267, %v1331
      %v1377 = vadd.f32 %v1268, %v1370
      %v1378 = vld [vmem:[%s2 + $0x28] sm:$0xf]
      %1379 = vrot.lane.b32.xlu0 %v296, 103
      %v1380 = vpop.permute.xlu0 %1379
      %1381 = vrot.lane.b32.xlu0 %v297, 103
      %v1382 = vpop.permute.xlu0 %1381
      %1383 = vrot.lane.b32.xlu0 %v298, 103
      %v1384 = vpop.permute.xlu0 %1383
      %1385 = vrot.lane.b32.xlu0 %v302, 103
      %v1386 = vpop.permute.xlu0 %1385
      %vm1387 = vcmask 842752
      %v1388 = vsel %vm1387, %v1380, %v1382
      %v1389 = vsel %vm1387, %v1382, %v1384
      %v1390 = vsel %vm1387, %v1384, %v1386
      %v1392 = vsel %vm318, %v1378, 0
      %v1395 = vsel %vm322, %v1388, 0
      %v1398 = vsel %vm322, %v1389, 0
      %v1401 = vsel %vm322, %v1390, 0
      %1403 = vmatprep.subr.bf16.mxu0 %v1398
      %1404 = vmatpush1.bf16.msra.mxu0 %v1395
      %1405 = vmatprep.subr.bf16.mxu0 0
      %1406 = vmatpush1.bf16.msra.mxu0 0
      %1407 = vmatprep.subr.bf16.mxu0 0
      %1408 = vmatpush1.bf16.msra.mxu0 0
      %1409 = vmatprep.subr.bf16.mxu0 0
      %1410 = vmatpush1.bf16.msra.mxu0 0
      %1411 = vmatprep.subr.bf16.mxu0 0
      %1412 = vmatpush1.bf16.msra.mxu0 0
      %1413 = vmatprep.subr.bf16.mxu0 0
      %1414 = vmatpush1.bf16.msra.mxu0 0
      %1415 = vmatprep.subr.bf16.mxu0 0
      %1416 = vmatpush1.bf16.msra.mxu0 0
      %1417 = vmatprep.subr.bf16.mxu0 0
      %1418 = vmatpush1.bf16.msra.mxu0 0
      %1419 = vmatprep.subr.bf16.mxu0 0
      %1420 = vmatpush1.bf16.msra.mxu0 0
      %1421 = vmatprep.subr.bf16.mxu0 0
      %1422 = vmatpush1.bf16.msra.mxu0 0
      %1423 = vmatprep.subr.bf16.mxu0 0
      %1424 = vmatpush1.bf16.msra.mxu0 0
      %1425 = vmatprep.subr.bf16.mxu0 0
      %1426 = vmatpush1.bf16.msra.mxu0 0
      %1427 = vmatprep.subr.bf16.mxu0 0
      %1428 = vmatpush1.bf16.msra.mxu0 0
      %1429 = vmatprep.subr.bf16.mxu0 0
      %1430 = vmatpush1.bf16.msra.mxu0 0
      %1431 = vmatprep.subr.bf16.mxu0 0
      %1432 = vmatpush1.bf16.msra.mxu0 0
      %1433 = vmatprep.subr.bf16.mxu0 0
      %1434 = vmatpush1.bf16.msra.mxu0 0
      %1435 = vmatprep.mubr.bf16.mxu0 0
      %1436 = vmatmul.mubr.bf16.gmra.mrb[0].mxu0 %v1392
      %v1437 = vpop.f32.mrb[0].mxu0
      %v1438 = vadd.f32 0.0, %v1437
      %v1439 = vpop.f32.mrb[0].mxu0
      %v1440 = vadd.f32 0.0, %v1439
      %v1441 = vpop.f32.mrb[0].mxu0
      %v1442 = vpop.f32.mrb[0].mxu0
      %1443 = vdwg.mxu0
      %1444 = vmatprep.subr.bf16.mxu0 0
      %1445 = vmatpush1.bf16.msra.mxu0 %v1401
      %1446 = vmatprep.subr.bf16.mxu0 0
      %1447 = vmatpush1.bf16.msra.mxu0 0
      %1448 = vmatprep.subr.bf16.mxu0 0
      %1449 = vmatpush1.bf16.msra.mxu0 0
      %1450 = vmatprep.subr.bf16.mxu0 0
      %1451 = vmatpush1.bf16.msra.mxu0 0
      %1452 = vmatprep.subr.bf16.mxu0 0
      %1453 = vmatpush1.bf16.msra.mxu0 0
      %1454 = vmatprep.subr.bf16.mxu0 0
      %1455 = vmatpush1.bf16.msra.mxu0 0
      %1456 = vmatprep.subr.bf16.mxu0 0
      %1457 = vmatpush1.bf16.msra.mxu0 0
      %1458 = vmatprep.subr.bf16.mxu0 0
      %1459 = vmatpush1.bf16.msra.mxu0 0
      %1460 = vmatprep.subr.bf16.mxu0 0
      %1461 = vmatpush1.bf16.msra.mxu0 0
      %1462 = vmatprep.subr.bf16.mxu0 0
      %1463 = vmatpush1.bf16.msra.mxu0 0
      %1464 = vmatprep.subr.bf16.mxu0 0
      %1465 = vmatpush1.bf16.msra.mxu0 0
      %1466 = vmatprep.subr.bf16.mxu0 0
      %1467 = vmatpush1.bf16.msra.mxu0 0
      %1468 = vmatprep.subr.bf16.mxu0 0
      %1469 = vmatpush1.bf16.msra.mxu0 0
      %1470 = vmatprep.subr.bf16.mxu0 0
      %1471 = vmatpush1.bf16.msra.mxu0 0
      %1472 = vmatprep.subr.bf16.mxu0 0
      %1473 = vmatpush1.bf16.msra.mxu0 0
      %1474 = vmatprep.subr.bf16.mxu0 0
      %1475 = vmatpush1.bf16.msra.mxu0 0
      %1476 = vmatprep.mubr.bf16.mxu0 0
      %1477 = vmatmul.mubr.bf16.gmra.mrb[0].mxu0 %v1392
      %v1478 = vpop.f32.mrb[0].mxu0
      %v1479 = vadd.f32 0.0, %v1478
      %v1480 = vpop.f32.mrb[0].mxu0
      %v1481 = vpop.f32.mrb[0].mxu0
      %v1482 = vpop.f32.mrb[0].mxu0
      %1483 = vdwg.mxu0
      %v1484 = vadd.f32 %v1375, %v1438
      %v1485 = vadd.f32 %v1376, %v1440
      %v1486 = vadd.f32 %v1377, %v1479
      %v1487 = vld [vmem:[%s2 + $0x2c] sm:$0xf]
      %1488 = vrot.lane.b32.xlu0 %v296, 102
      %v1489 = vpop.permute.xlu0 %1488
      %1490 = vrot.lane.b32.xlu0 %v297, 102
      %v1491 = vpop.permute.xlu0 %1490
      %1492 = vrot.lane.b32.xlu0 %v298, 102
      %v1493 = vpop.permute.xlu0 %1492
      %1494 = vrot.lane.b32.xlu0 %v302, 102
      %v1495 = vpop.permute.xlu0 %1494
      %vm1496 = vcmask 834560
      %v1497 = vsel %vm1496, %v1489, %v1491
      %v1498 = vsel %vm1496, %v1491, %v1493
      %v1499 = vsel %vm1496, %v1493, %v1495
      %v1501 = vsel %vm318, %v1487, 0
      %v1504 = vsel %vm322, %v1497, 0
      %v1507 = vsel %vm322, %v1498, 0
      %v1510 = vsel %vm322, %v1499, 0
      %1512 = vmatprep.subr.bf16.mxu0 %v1507
      %1513 = vmatpush1.bf16.msra.mxu0 %v1504
      %1514 = vmatprep.subr.bf16.mxu0 0
      %1515 = vmatpush1.bf16.msra.mxu0 0
      %1516 = vmatprep.subr.bf16.mxu0 0
      %1517 = vmatpush1.bf16.msra.mxu0 0
      %1518 = vmatprep.subr.bf16.mxu0 0
      %1519 = vmatpush1.bf16.msra.mxu0 0
      %1520 = vmatprep.subr.bf16.mxu0 0
      %1521 = vmatpush1.bf16.msra.mxu0 0
      %1522 = vmatprep.subr.bf16.mxu0 0
      %1523 = vmatpush1.bf16.msra.mxu0 0
      %1524 = vmatprep.subr.bf16.mxu0 0
      %1525 = vmatpush1.bf16.msra.mxu0 0
      %1526 = vmatprep.subr.bf16.mxu0 0
      %1527 = vmatpush1.bf16.msra.mxu0 0
      %1528 = vmatprep.subr.bf16.mxu0 0
      %1529 = vmatpush1.bf16.msra.mxu0 0
      %1530 = vmatprep.subr.bf16.mxu0 0
      %1531 = vmatpush1.bf16.msra.mxu0 0
      %1532 = vmatprep.subr.bf16.mxu0 0
      %1533 = vmatpush1.bf16.msra.mxu0 0
      %1534 = vmatprep.subr.bf16.mxu0 0
      %1535 = vmatpush1.bf16.msra.mxu0 0
      %1536 = vmatprep.subr.bf16.mxu0 0
      %1537 = vmatpush1.bf16.msra.mxu0 0
      %1538 = vmatprep.subr.bf16.mxu0 0
      %1539 = vmatpush1.bf16.msra.mxu0 0
      %1540 = vmatprep.subr.bf16.mxu0 0
      %1541 = vmatpush1.bf16.msra.mxu0 0
      %1542 = vmatprep.subr.bf16.mxu0 0
      %1543 = vmatpush1.bf16.msra.mxu0 0
      %1544 = vmatprep.mubr.bf16.mxu0 0
      %1545 = vmatmul.mubr.bf16.gmra.mrb[0].mxu0 %v1501
      %v1546 = vpop.f32.mrb[0].mxu0
      %v1547 = vadd.f32 0.0, %v1546
      %v1548 = vpop.f32.mrb[0].mxu0
      %v1549 = vadd.f32 0.0, %v1548
      %v1550 = vpop.f32.mrb[0].mxu0
      %v1551 = vpop.f32.mrb[0].mxu0
      %1552 = vdwg.mxu0
      %1553 = vmatprep.subr.bf16.mxu0 0
      %1554 = vmatpush1.bf16.msra.mxu0 %v1510
      %1555 = vmatprep.subr.bf16.mxu0 0
      %1556 = vmatpush1.bf16.msra.mxu0 0
      %1557 = vmatprep.subr.bf16.mxu0 0
      %1558 = vmatpush1.bf16.msra.mxu0 0
      %1559 = vmatprep.subr.bf16.mxu0 0
      %1560 = vmatpush1.bf16.msra.mxu0 0
      %1561 = vmatprep.subr.bf16.mxu0 0
      %1562 = vmatpush1.bf16.msra.mxu0 0
      %1563 = vmatprep.subr.bf16.mxu0 0
      %1564 = vmatpush1.bf16.msra.mxu0 0
      %1565 = vmatprep.subr.bf16.mxu0 0
      %1566 = vmatpush1.bf16.msra.mxu0 0
      %1567 = vmatprep.subr.bf16.mxu0 0
      %1568 = vmatpush1.bf16.msra.mxu0 0
      %1569 = vmatprep.subr.bf16.mxu0 0
      %1570 = vmatpush1.bf16.msra.mxu0 0
      %1571 = vmatprep.subr.bf16.mxu0 0
      %1572 = vmatpush1.bf16.msra.mxu0 0
      %1573 = vmatprep.subr.bf16.mxu0 0
      %1574 = vmatpush1.bf16.msra.mxu0 0
      %1575 = vmatprep.subr.bf16.mxu0 0
      %1576 = vmatpush1.bf16.msra.mxu0 0
      %1577 = vmatprep.subr.bf16.mxu0 0
      %1578 = vmatpush1.bf16.msra.mxu0 0
      %1579 = vmatprep.subr.bf16.mxu0 0
      %1580 = vmatpush1.bf16.msra.mxu0 0
      %1581 = vmatprep.subr.bf16.mxu0 0
      %1582 = vmatpush1.bf16.msra.mxu0 0
      %1583 = vmatprep.subr.bf16.mxu0 0
      %1584 = vmatpush1.bf16.msra.mxu0 0
      %1585 = vmatprep.mubr.bf16.mxu0 0
      %1586 = vmatmul.mubr.bf16.gmra.mrb[0].mxu0 %v1501
      %v1587 = vpop.f32.mrb[0].mxu0
      %v1588 = vadd.f32 0.0, %v1587
      %v1589 = vpop.f32.mrb[0].mxu0
      %v1590 = vpop.f32.mrb[0].mxu0
      %v1591 = vpop.f32.mrb[0].mxu0
      %1592 = vdwg.mxu0
      %v1593 = vadd.f32 %v1484, %v1547
      %v1594 = vadd.f32 %v1485, %v1549
      %v1595 = vadd.f32 %v1486, %v1588
      %v1596 = vld [vmem:[%s2 + $0x30] sm:$0xf]
      %1597 = vrot.lane.b32.xlu0 %v296, 101
      %v1598 = vpop.permute.xlu0 %1597
      %1599 = vrot.lane.b32.xlu0 %v297, 101
      %v1600 = vpop.permute.xlu0 %1599
      %1601 = vrot.lane.b32.xlu0 %v298, 101
      %v1602 = vpop.permute.xlu0 %1601
      %1603 = vrot.lane.b32.xlu0 %v302, 101
      %v1604 = vpop.permute.xlu0 %1603
      %vm1605 = vcmask 826368
      %v1606 = vsel %vm1605, %v1598, %v1600
      %v1607 = vsel %vm1605, %v1600, %v1602
      %v1608 = vsel %vm1605, %v1602, %v1604
      %v1610 = vsel %vm318, %v1596, 0
      %v1613 = vsel %vm322, %v1606, 0
      %v1616 = vsel %vm322, %v1607, 0
      %v1619 = vsel %vm322, %v1608, 0
      %1621 = vmatprep.subr.bf16.mxu0 %v1616
      %1622 = vmatpush1.bf16.msra.mxu0 %v1613
      %1623 = vmatprep.subr.bf16.mxu0 0
      %1624 = vmatpush1.bf16.msra.mxu0 0
      %1625 = vmatprep.subr.bf16.mxu0 0
      %1626 = vmatpush1.bf16.msra.mxu0 0
      %1627 = vmatprep.subr.bf16.mxu0 0
      %1628 = vmatpush1.bf16.msra.mxu0 0
      %1629 = vmatprep.subr.bf16.mxu0 0
      %1630 = vmatpush1.bf16.msra.mxu0 0
      %1631 = vmatprep.subr.bf16.mxu0 0
      %1632 = vmatpush1.bf16.msra.mxu0 0
      %1633 = vmatprep.subr.bf16.mxu0 0
      %1634 = vmatpush1.bf16.msra.mxu0 0
      %1635 = vmatprep.subr.bf16.mxu0 0
      %1636 = vmatpush1.bf16.msra.mxu0 0
      %1637 = vmatprep.subr.bf16.mxu0 0
      %1638 = vmatpush1.bf16.msra.mxu0 0
      %1639 = vmatprep.subr.bf16.mxu0 0
      %1640 = vmatpush1.bf16.msra.mxu0 0
      %1641 = vmatprep.subr.bf16.mxu0 0
      %1642 = vmatpush1.bf16.msra.mxu0 0
      %1643 = vmatprep.subr.bf16.mxu0 0
      %1644 = vmatpush1.bf16.msra.mxu0 0
      %1645 = vmatprep.subr.bf16.mxu0 0
      %1646 = vmatpush1.bf16.msra.mxu0 0
      %1647 = vmatprep.subr.bf16.mxu0 0
      %1648 = vmatpush1.bf16.msra.mxu0 0
      %1649 = vmatprep.subr.bf16.mxu0 0
      %1650 = vmatpush1.bf16.msra.mxu0 0
      %1651 = vmatprep.subr.bf16.mxu0 0
      %1652 = vmatpush1.bf16.msra.mxu0 0
      %1653 = vmatprep.mubr.bf16.mxu0 0
      %1654 = vmatmul.mubr.bf16.gmra.mrb[0].mxu0 %v1610
      %v1655 = vpop.f32.mrb[0].mxu0
      %v1656 = vadd.f32 0.0, %v1655
      %v1657 = vpop.f32.mrb[0].mxu0
      %v1658 = vadd.f32 0.0, %v1657
      %v1659 = vpop.f32.mrb[0].mxu0
      %v1660 = vpop.f32.mrb[0].mxu0
      %1661 = vdwg.mxu0
      %1662 = vmatprep.subr.bf16.mxu0 0
      %1663 = vmatpush1.bf16.msra.mxu0 %v1619
      %1664 = vmatprep.subr.bf16.mxu0 0
      %1665 = vmatpush1.bf16.msra.mxu0 0
      %1666 = vmatprep.subr.bf16.mxu0 0
      %1667 = vmatpush1.bf16.msra.mxu0 0
      %1668 = vmatprep.subr.bf16.mxu0 0
      %1669 = vmatpush1.bf16.msra.mxu0 0
      %1670 = vmatprep.subr.bf16.mxu0 0
      %1671 = vmatpush1.bf16.msra.mxu0 0
      %1672 = vmatprep.subr.bf16.mxu0 0
      %1673 = vmatpush1.bf16.msra.mxu0 0
      %1674 = vmatprep.subr.bf16.mxu0 0
      %1675 = vmatpush1.bf16.msra.mxu0 0
      %1676 = vmatprep.subr.bf16.mxu0 0
      %1677 = vmatpush1.bf16.msra.mxu0 0
      %1678 = vmatprep.subr.bf16.mxu0 0
      %1679 = vmatpush1.bf16.msra.mxu0 0
      %1680 = vmatprep.subr.bf16.mxu0 0
      %1681 = vmatpush1.bf16.msra.mxu0 0
      %1682 = vmatprep.subr.bf16.mxu0 0
      %1683 = vmatpush1.bf16.msra.mxu0 0
      %1684 = vmatprep.subr.bf16.mxu0 0
      %1685 = vmatpush1.bf16.msra.mxu0 0
      %1686 = vmatprep.subr.bf16.mxu0 0
      %1687 = vmatpush1.bf16.msra.mxu0 0
      %1688 = vmatprep.subr.bf16.mxu0 0
      %1689 = vmatpush1.bf16.msra.mxu0 0
      %1690 = vmatprep.subr.bf16.mxu0 0
      %1691 = vmatpush1.bf16.msra.mxu0 0
      %1692 = vmatprep.subr.bf16.mxu0 0
      %1693 = vmatpush1.bf16.msra.mxu0 0
      %1694 = vmatprep.mubr.bf16.mxu0 0
      %1695 = vmatmul.mubr.bf16.gmra.mrb[0].mxu0 %v1610
      %v1696 = vpop.f32.mrb[0].mxu0
      %v1697 = vadd.f32 0.0, %v1696
      %v1698 = vpop.f32.mrb[0].mxu0
      %v1699 = vpop.f32.mrb[0].mxu0
      %v1700 = vpop.f32.mrb[0].mxu0
      %1701 = vdwg.mxu0
      %v1702 = vadd.f32 %v1593, %v1656
      %v1703 = vadd.f32 %v1594, %v1658
      %v1704 = vadd.f32 %v1595, %v1697
      %v1705 = vld [vmem:[%s2 + $0x34] sm:$0xf]
      %1706 = vrot.lane.b32.xlu0 %v296, 100
      %v1707 = vpop.permute.xlu0 %1706
      %1708 = vrot.lane.b32.xlu0 %v297, 100
      %v1709 = vpop.permute.xlu0 %1708
      %1710 = vrot.lane.b32.xlu0 %v298, 100
      %v1711 = vpop.permute.xlu0 %1710
      %1712 = vrot.lane.b32.xlu0 %v302, 100
      %v1713 = vpop.permute.xlu0 %1712
      %vm1714 = vcmask 818176
      %v1715 = vsel %vm1714, %v1707, %v1709
      %v1716 = vsel %vm1714, %v1709, %v1711
      %v1717 = vsel %vm1714, %v1711, %v1713
      %v1719 = vsel %vm318, %v1705, 0
      %v1722 = vsel %vm322, %v1715, 0
      %v1725 = vsel %vm322, %v1716, 0
      %v1728 = vsel %vm322, %v1717, 0
      %1730 = vmatprep.subr.bf16.mxu0 %v1725
      %1731 = vmatpush1.bf16.msra.mxu0 %v1722
      %1732 = vmatprep.subr.bf16.mxu0 0
      %1733 = vmatpush1.bf16.msra.mxu0 0
      %1734 = vmatprep.subr.bf16.mxu0 0
      %1735 = vmatpush1.bf16.msra.mxu0 0
      %1736 = vmatprep.subr.bf16.mxu0 0
      %1737 = vmatpush1.bf16.msra.mxu0 0
      %1738 = vmatprep.subr.bf16.mxu0 0
      %1739 = vmatpush1.bf16.msra.mxu0 0
      %1740 = vmatprep.subr.bf16.mxu0 0
      %1741 = vmatpush1.bf16.msra.mxu0 0
      %1742 = vmatprep.subr.bf16.mxu0 0
      %1743 = vmatpush1.bf16.msra.mxu0 0
      %1744 = vmatprep.subr.bf16.mxu0 0
      %1745 = vmatpush1.bf16.msra.mxu0 0
      %1746 = vmatprep.subr.bf16.mxu0 0
      %1747 = vmatpush1.bf16.msra.mxu0 0
      %1748 = vmatprep.subr.bf16.mxu0 0
      %1749 = vmatpush1.bf16.msra.mxu0 0
      %1750 = vmatprep.subr.bf16.mxu0 0
      %1751 = vmatpush1.bf16.msra.mxu0 0
      %1752 = vmatprep.subr.bf16.mxu0 0
      %1753 = vmatpush1.bf16.msra.mxu0 0
      %1754 = vmatprep.subr.bf16.mxu0 0
      %1755 = vmatpush1.bf16.msra.mxu0 0
      %1756 = vmatprep.subr.bf16.mxu0 0
      %1757 = vmatpush1.bf16.msra.mxu0 0
      %1758 = vmatprep.subr.bf16.mxu0 0
      %1759 = vmatpush1.bf16.msra.mxu0 0
      %1760 = vmatprep.subr.bf16.mxu0 0
      %1761 = vmatpush1.bf16.msra.mxu0 0
      %1762 = vmatprep.mubr.bf16.mxu0 0
      %1763 = vmatmul.mubr.bf16.gmra.mrb[0].mxu0 %v1719
      %v1764 = vpop.f32.mrb[0].mxu0
      %v1765 = vadd.f32 0.0, %v1764
      %v1766 = vpop.f32.mrb[0].mxu0
      %v1767 = vadd.f32 0.0, %v1766
      %v1768 = vpop.f32.mrb[0].mxu0
      %v1769 = vpop.f32.mrb[0].mxu0
      %1770 = vdwg.mxu0
      %1771 = vmatprep.subr.bf16.mxu0 0
      %1772 = vmatpush1.bf16.msra.mxu0 %v1728
      %1773 = vmatprep.subr.bf16.mxu0 0
      %1774 = vmatpush1.bf16.msra.mxu0 0
      %1775 = vmatprep.subr.bf16.mxu0 0
      %1776 = vmatpush1.bf16.msra.mxu0 0
      %1777 = vmatprep.subr.bf16.mxu0 0
      %1778 = vmatpush1.bf16.msra.mxu0 0
      %1779 = vmatprep.subr.bf16.mxu0 0
      %1780 = vmatpush1.bf16.msra.mxu0 0
      %1781 = vmatprep.subr.bf16.mxu0 0
      %1782 = vmatpush1.bf16.msra.mxu0 0
      %1783 = vmatprep.subr.bf16.mxu0 0
      %1784 = vmatpush1.bf16.msra.mxu0 0
      %1785 = vmatprep.subr.bf16.mxu0 0
      %1786 = vmatpush1.bf16.msra.mxu0 0
      %1787 = vmatprep.subr.bf16.mxu0 0
      %1788 = vmatpush1.bf16.msra.mxu0 0
      %1789 = vmatprep.subr.bf16.mxu0 0
      %1790 = vmatpush1.bf16.msra.mxu0 0
      %1791 = vmatprep.subr.bf16.mxu0 0
      %1792 = vmatpush1.bf16.msra.mxu0 0
      %1793 = vmatprep.subr.bf16.mxu0 0
      %1794 = vmatpush1.bf16.msra.mxu0 0
      %1795 = vmatprep.subr.bf16.mxu0 0
      %1796 = vmatpush1.bf16.msra.mxu0 0
      %1797 = vmatprep.subr.bf16.mxu0 0
      %1798 = vmatpush1.bf16.msra.mxu0 0
      %1799 = vmatprep.subr.bf16.mxu0 0
      %1800 = vmatpush1.bf16.msra.mxu0 0
      %1801 = vmatprep.subr.bf16.mxu0 0
      %1802 = vmatpush1.bf16.msra.mxu0 0
      %1803 = vmatprep.mubr.bf16.mxu0 0
      %1804 = vmatmul.mubr.bf16.gmra.mrb[0].mxu0 %v1719
      %v1805 = vpop.f32.mrb[0].mxu0
      %v1806 = vadd.f32 0.0, %v1805
      %v1807 = vpop.f32.mrb[0].mxu0
      %v1808 = vpop.f32.mrb[0].mxu0
      %v1809 = vpop.f32.mrb[0].mxu0
      %1810 = vdwg.mxu0
      %v1811 = vadd.f32 %v1702, %v1765
      %v1812 = vadd.f32 %v1703, %v1767
      %v1813 = vadd.f32 %v1704, %v1806
      %v1814 = vld [vmem:[%s2 + $0x38] sm:$0xf]
      %1815 = vrot.lane.b32.xlu0 %v296, 84
      %v1816 = vpop.permute.xlu0 %1815
      %1817 = vrot.lane.b32.xlu0 %v297, 84
      %v1818 = vpop.permute.xlu0 %1817
      %1819 = vrot.lane.b32.xlu0 %v298, 84
      %v1820 = vpop.permute.xlu0 %1819
      %1821 = vrot.lane.b32.xlu0 %v302, 84
      %v1822 = vpop.permute.xlu0 %1821
      %vm1823 = vcmask 687104
      %v1824 = vsel %vm1823, %v1816, %v1818
      %v1825 = vsel %vm1823, %v1818, %v1820
      %v1826 = vsel %vm1823, %v1820, %v1822
      %v1828 = vsel %vm318, %v1814, 0
      %v1831 = vsel %vm322, %v1824, 0
      %v1834 = vsel %vm322, %v1825, 0
      %v1837 = vsel %vm322, %v1826, 0
      %1839 = vmatprep.subr.bf16.mxu0 %v1834
      %1840 = vmatpush1.bf16.msra.mxu0 %v1831
      %1841 = vmatprep.subr.bf16.mxu0 0
      %1842 = vmatpush1.bf16.msra.mxu0 0
      %1843 = vmatprep.subr.bf16.mxu0 0
      %1844 = vmatpush1.bf16.msra.mxu0 0
      %1845 = vmatprep.subr.bf16.mxu0 0
      %1846 = vmatpush1.bf16.msra.mxu0 0
      %1847 = vmatprep.subr.bf16.mxu0 0
      %1848 = vmatpush1.bf16.msra.mxu0 0
      %1849 = vmatprep.subr.bf16.mxu0 0
      %1850 = vmatpush1.bf16.msra.mxu0 0
      %1851 = vmatprep.subr.bf16.mxu0 0
      %1852 = vmatpush1.bf16.msra.mxu0 0
      %1853 = vmatprep.subr.bf16.mxu0 0
      %1854 = vmatpush1.bf16.msra.mxu0 0
      %1855 = vmatprep.subr.bf16.mxu0 0
      %1856 = vmatpush1.bf16.msra.mxu0 0
      %1857 = vmatprep.subr.bf16.mxu0 0
      %1858 = vmatpush1.bf16.msra.mxu0 0
      %1859 = vmatprep.subr.bf16.mxu0 0
      %1860 = vmatpush1.bf16.msra.mxu0 0
      %1861 = vmatprep.subr.bf16.mxu0 0
      %1862 = vmatpush1.bf16.msra.mxu0 0
      %1863 = vmatprep.subr.bf16.mxu0 0
      %1864 = vmatpush1.bf16.msra.mxu0 0
      %1865 = vmatprep.subr.bf16.mxu0 0
      %1866 = vmatpush1.bf16.msra.mxu0 0
      %1867 = vmatprep.subr.bf16.mxu0 0
      %1868 = vmatpush1.bf16.msra.mxu0 0
      %1869 = vmatprep.subr.bf16.mxu0 0
      %1870 = vmatpush1.bf16.msra.mxu0 0
      %1871 = vmatprep.mubr.bf16.mxu0 0
      %1872 = vmatmul.mubr.bf16.gmra.mrb[0].mxu0 %v1828
      %v1873 = vpop.f32.mrb[0].mxu0
      %v1874 = vadd.f32 0.0, %v1873
      %v1875 = vpop.f32.mrb[0].mxu0
      %v1876 = vadd.f32 0.0, %v1875
      %v1877 = vpop.f32.mrb[0].mxu0
      %v1878 = vpop.f32.mrb[0].mxu0
      %1879 = vdwg.mxu0
      %1880 = vmatprep.subr.bf16.mxu0 0
      %1881 = vmatpush1.bf16.msra.mxu0 %v1837
      %1882 = vmatprep.subr.bf16.mxu0 0
      %1883 = vmatpush1.bf16.msra.mxu0 0
      %1884 = vmatprep.subr.bf16.mxu0 0
      %1885 = vmatpush1.bf16.msra.mxu0 0
      %1886 = vmatprep.subr.bf16.mxu0 0
      %1887 = vmatpush1.bf16.msra.mxu0 0
      %1888 = vmatprep.subr.bf16.mxu0 0
      %1889 = vmatpush1.bf16.msra.mxu0 0
      %1890 = vmatprep.subr.bf16.mxu0 0
      %1891 = vmatpush1.bf16.msra.mxu0 0
      %1892 = vmatprep.subr.bf16.mxu0 0
      %1893 = vmatpush1.bf16.msra.mxu0 0
      %1894 = vmatprep.subr.bf16.mxu0 0
      %1895 = vmatpush1.bf16.msra.mxu0 0
      %1896 = vmatprep.subr.bf16.mxu0 0
      %1897 = vmatpush1.bf16.msra.mxu0 0
      %1898 = vmatprep.subr.bf16.mxu0 0
      %1899 = vmatpush1.bf16.msra.mxu0 0
      %1900 = vmatprep.subr.bf16.mxu0 0
      %1901 = vmatpush1.bf16.msra.mxu0 0
      %1902 = vmatprep.subr.bf16.mxu0 0
      %1903 = vmatpush1.bf16.msra.mxu0 0
      %1904 = vmatprep.subr.bf16.mxu0 0
      %1905 = vmatpush1.bf16.msra.mxu0 0
      %1906 = vmatprep.subr.bf16.mxu0 0
      %1907 = vmatpush1.bf16.msra.mxu0 0
      %1908 = vmatprep.subr.bf16.mxu0 0
      %1909 = vmatpush1.bf16.msra.mxu0 0
      %1910 = vmatprep.subr.bf16.mxu0 0
      %1911 = vmatpush1.bf16.msra.mxu0 0
      %1912 = vmatprep.mubr.bf16.mxu0 0
      %1913 = vmatmul.mubr.bf16.gmra.mrb[0].mxu0 %v1828
      %v1914 = vpop.f32.mrb[0].mxu0
      %v1915 = vadd.f32 0.0, %v1914
      %v1916 = vpop.f32.mrb[0].mxu0
      %v1917 = vpop.f32.mrb[0].mxu0
      %v1918 = vpop.f32.mrb[0].mxu0
      %1919 = vdwg.mxu0
      %v1920 = vadd.f32 %v1811, %v1874
      %v1921 = vadd.f32 %v1812, %v1876
      %v1922 = vadd.f32 %v1813, %v1915
      %v1923 = vld [vmem:[%s2 + $0x3c] sm:$0xf]
      %1924 = vrot.lane.b32.xlu0 %v296, 83
      %v1925 = vpop.permute.xlu0 %1924
      %1926 = vrot.lane.b32.xlu0 %v297, 83
      %v1927 = vpop.permute.xlu0 %1926
      %1928 = vrot.lane.b32.xlu0 %v298, 83
      %v1929 = vpop.permute.xlu0 %1928
      %1930 = vrot.lane.b32.xlu0 %v302, 83
      %v1931 = vpop.permute.xlu0 %1930
      %vm1932 = vcmask 678912
      %v1933 = vsel %vm1932, %v1925, %v1927
      %v1934 = vsel %vm1932, %v1927, %v1929
      %v1935 = vsel %vm1932, %v1929, %v1931
      %v1937 = vsel %vm318, %v1923, 0
      %v1940 = vsel %vm322, %v1933, 0
      %v1943 = vsel %vm322, %v1934, 0
      %v1946 = vsel %vm322, %v1935, 0
      %1948 = vmatprep.subr.bf16.mxu0 %v1943
      %1949 = vmatpush1.bf16.msra.mxu0 %v1940
      %1950 = vmatprep.subr.bf16.mxu0 0
      %1951 = vmatpush1.bf16.msra.mxu0 0
      %1952 = vmatprep.subr.bf16.mxu0 0
      %1953 = vmatpush1.bf16.msra.mxu0 0
      %1954 = vmatprep.subr.bf16.mxu0 0
      %1955 = vmatpush1.bf16.msra.mxu0 0
      %1956 = vmatprep.subr.bf16.mxu0 0
      %1957 = vmatpush1.bf16.msra.mxu0 0
      %1958 = vmatprep.subr.bf16.mxu0 0
      %1959 = vmatpush1.bf16.msra.mxu0 0
      %1960 = vmatprep.subr.bf16.mxu0 0
      %1961 = vmatpush1.bf16.msra.mxu0 0
      %1962 = vmatprep.subr.bf16.mxu0 0
      %1963 = vmatpush1.bf16.msra.mxu0 0
      %1964 = vmatprep.subr.bf16.mxu0 0
      %1965 = vmatpush1.bf16.msra.mxu0 0
      %1966 = vmatprep.subr.bf16.mxu0 0
      %1967 = vmatpush1.bf16.msra.mxu0 0
      %1968 = vmatprep.subr.bf16.mxu0 0
      %1969 = vmatpush1.bf16.msra.mxu0 0
      %1970 = vmatprep.subr.bf16.mxu0 0
      %1971 = vmatpush1.bf16.msra.mxu0 0
      %1972 = vmatprep.subr.bf16.mxu0 0
      %1973 = vmatpush1.bf16.msra.mxu0 0
      %1974 = vmatprep.subr.bf16.mxu0 0
      %1975 = vmatpush1.bf16.msra.mxu0 0
      %1976 = vmatprep.subr.bf16.mxu0 0
      %1977 = vmatpush1.bf16.msra.mxu0 0
      %1978 = vmatprep.subr.bf16.mxu0 0
      %1979 = vmatpush1.bf16.msra.mxu0 0
      %1980 = vmatprep.mubr.bf16.mxu0 0
      %1981 = vmatmul.mubr.bf16.gmra.mrb[0].mxu0 %v1937
      %v1982 = vpop.f32.mrb[0].mxu0
      %v1983 = vadd.f32 0.0, %v1982
      %v1984 = vpop.f32.mrb[0].mxu0
      %v1985 = vadd.f32 0.0, %v1984
      %v1986 = vpop.f32.mrb[0].mxu0
      %v1987 = vpop.f32.mrb[0].mxu0
      %1988 = vdwg.mxu0
      %1989 = vmatprep.subr.bf16.mxu0 0
      %1990 = vmatpush1.bf16.msra.mxu0 %v1946
      %1991 = vmatprep.subr.bf16.mxu0 0
      %1992 = vmatpush1.bf16.msra.mxu0 0
      %1993 = vmatprep.subr.bf16.mxu0 0
      %1994 = vmatpush1.bf16.msra.mxu0 0
      %1995 = vmatprep.subr.bf16.mxu0 0
      %1996 = vmatpush1.bf16.msra.mxu0 0
      %1997 = vmatprep.subr.bf16.mxu0 0
      %1998 = vmatpush1.bf16.msra.mxu0 0
      %1999 = vmatprep.subr.bf16.mxu0 0
      %2000 = vmatpush1.bf16.msra.mxu0 0
      %2001 = vmatprep.subr.bf16.mxu0 0
      %2002 = vmatpush1.bf16.msra.mxu0 0
      %2003 = vmatprep.subr.bf16.mxu0 0
      %2004 = vmatpush1.bf16.msra.mxu0 0
      %2005 = vmatprep.subr.bf16.mxu0 0
      %2006 = vmatpush1.bf16.msra.mxu0 0
      %2007 = vmatprep.subr.bf16.mxu0 0
      %2008 = vmatpush1.bf16.msra.mxu0 0
      %2009 = vmatprep.subr.bf16.mxu0 0
      %2010 = vmatpush1.bf16.msra.mxu0 0
      %2011 = vmatprep.subr.bf16.mxu0 0
      %2012 = vmatpush1.bf16.msra.mxu0 0
      %2013 = vmatprep.subr.bf16.mxu0 0
      %2014 = vmatpush1.bf16.msra.mxu0 0
      %2015 = vmatprep.subr.bf16.mxu0 0
      %2016 = vmatpush1.bf16.msra.mxu0 0
      %2017 = vmatprep.subr.bf16.mxu0 0
      %2018 = vmatpush1.bf16.msra.mxu0 0
      %2019 = vmatprep.subr.bf16.mxu0 0
      %2020 = vmatpush1.bf16.msra.mxu0 0
      %2021 = vmatprep.mubr.bf16.mxu0 0
      %2022 = vmatmul.mubr.bf16.gmra.mrb[0].mxu0 %v1937
      %v2023 = vpop.f32.mrb[0].mxu0
      %v2024 = vadd.f32 0.0, %v2023
      %v2025 = vpop.f32.mrb[0].mxu0
      %v2026 = vpop.f32.mrb[0].mxu0
      %v2027 = vpop.f32.mrb[0].mxu0
      %2028 = vdwg.mxu0
      %v2029 = vadd.f32 %v1920, %v1983
      %v2030 = vadd.f32 %v1921, %v1985
      %v2031 = vadd.f32 %v1922, %v2024
      %v2032 = vld [vmem:[%s2 + $0x40] sm:$0xf]
      %2033 = vrot.lane.b32.xlu0 %v296, 82
      %v2034 = vpop.permute.xlu0 %2033
      %2035 = vrot.lane.b32.xlu0 %v297, 82
      %v2036 = vpop.permute.xlu0 %2035
      %2037 = vrot.lane.b32.xlu0 %v298, 82
      %v2038 = vpop.permute.xlu0 %2037
      %2039 = vrot.lane.b32.xlu0 %v302, 82
      %v2040 = vpop.permute.xlu0 %2039
      %vm2041 = vcmask 670720
      %v2042 = vsel %vm2041, %v2034, %v2036
      %v2043 = vsel %vm2041, %v2036, %v2038
      %v2044 = vsel %vm2041, %v2038, %v2040
      %v2046 = vsel %vm318, %v2032, 0
      %v2049 = vsel %vm322, %v2042, 0
      %v2052 = vsel %vm322, %v2043, 0
      %v2055 = vsel %vm322, %v2044, 0
      %2057 = vmatprep.subr.bf16.mxu0 %v2052
      %2058 = vmatpush1.bf16.msra.mxu0 %v2049
      %2059 = vmatprep.subr.bf16.mxu0 0
      %2060 = vmatpush1.bf16.msra.mxu0 0
      %2061 = vmatprep.subr.bf16.mxu0 0
      %2062 = vmatpush1.bf16.msra.mxu0 0
      %2063 = vmatprep.subr.bf16.mxu0 0
      %2064 = vmatpush1.bf16.msra.mxu0 0
      %2065 = vmatprep.subr.bf16.mxu0 0
      %2066 = vmatpush1.bf16.msra.mxu0 0
      %2067 = vmatprep.subr.bf16.mxu0 0
      %2068 = vmatpush1.bf16.msra.mxu0 0
      %2069 = vmatprep.subr.bf16.mxu0 0
      %2070 = vmatpush1.bf16.msra.mxu0 0
      %2071 = vmatprep.subr.bf16.mxu0 0
      %2072 = vmatpush1.bf16.msra.mxu0 0
      %2073 = vmatprep.subr.bf16.mxu0 0
      %2074 = vmatpush1.bf16.msra.mxu0 0
      %2075 = vmatprep.subr.bf16.mxu0 0
      %2076 = vmatpush1.bf16.msra.mxu0 0
      %2077 = vmatprep.subr.bf16.mxu0 0
      %2078 = vmatpush1.bf16.msra.mxu0 0
      %2079 = vmatprep.subr.bf16.mxu0 0
      %2080 = vmatpush1.bf16.msra.mxu0 0
      %2081 = vmatprep.subr.bf16.mxu0 0
      %2082 = vmatpush1.bf16.msra.mxu0 0
      %2083 = vmatprep.subr.bf16.mxu0 0
      %2084 = vmatpush1.bf16.msra.mxu0 0
      %2085 = vmatprep.subr.bf16.mxu0 0
      %2086 = vmatpush1.bf16.msra.mxu0 0
      %2087 = vmatprep.subr.bf16.mxu0 0
      %2088 = vmatpush1.bf16.msra.mxu0 0
      %2089 = vmatprep.mubr.bf16.mxu0 0
      %2090 = vmatmul.mubr.bf16.gmra.mrb[0].mxu0 %v2046
      %v2091 = vpop.f32.mrb[0].mxu0
      %v2092 = vadd.f32 0.0, %v2091
      %v2093 = vpop.f32.mrb[0].mxu0
      %v2094 = vadd.f32 0.0, %v2093
      %v2095 = vpop.f32.mrb[0].mxu0
      %v2096 = vpop.f32.mrb[0].mxu0
      %2097 = vdwg.mxu0
      %2098 = vmatprep.subr.bf16.mxu0 0
      %2099 = vmatpush1.bf16.msra.mxu0 %v2055
      %2100 = vmatprep.subr.bf16.mxu0 0
      %2101 = vmatpush1.bf16.msra.mxu0 0
      %2102 = vmatprep.subr.bf16.mxu0 0
      %2103 = vmatpush1.bf16.msra.mxu0 0
      %2104 = vmatprep.subr.bf16.mxu0 0
      %2105 = vmatpush1.bf16.msra.mxu0 0
      %2106 = vmatprep.subr.bf16.mxu0 0
      %2107 = vmatpush1.bf16.msra.mxu0 0
      %2108 = vmatprep.subr.bf16.mxu0 0
      %2109 = vmatpush1.bf16.msra.mxu0 0
      %2110 = vmatprep.subr.bf16.mxu0 0
      %2111 = vmatpush1.bf16.msra.mxu0 0
      %2112 = vmatprep.subr.bf16.mxu0 0
      %2113 = vmatpush1.bf16.msra.mxu0 0
      %2114 = vmatprep.subr.bf16.mxu0 0
      %2115 = vmatpush1.bf16.msra.mxu0 0
      %2116 = vmatprep.subr.bf16.mxu0 0
      %2117 = vmatpush1.bf16.msra.mxu0 0
      %2118 = vmatprep.subr.bf16.mxu0 0
      %2119 = vmatpush1.bf16.msra.mxu0 0
      %2120 = vmatprep.subr.bf16.mxu0 0
      %2121 = vmatpush1.bf16.msra.mxu0 0
      %2122 = vmatprep.subr.bf16.mxu0 0
      %2123 = vmatpush1.bf16.msra.mxu0 0
      %2124 = vmatprep.subr.bf16.mxu0 0
      %2125 = vmatpush1.bf16.msra.mxu0 0
      %2126 = vmatprep.subr.bf16.mxu0 0
      %2127 = vmatpush1.bf16.msra.mxu0 0
      %2128 = vmatprep.subr.bf16.mxu0 0
      %2129 = vmatpush1.bf16.msra.mxu0 0
      %2130 = vmatprep.mubr.bf16.mxu0 0
      %2131 = vmatmul.mubr.bf16.gmra.mrb[0].mxu0 %v2046
      %v2132 = vpop.f32.mrb[0].mxu0
      %v2133 = vadd.f32 0.0, %v2132
      %v2134 = vpop.f32.mrb[0].mxu0
      %v2135 = vpop.f32.mrb[0].mxu0
      %v2136 = vpop.f32.mrb[0].mxu0
      %2137 = vdwg.mxu0
      %v2138 = vadd.f32 %v2029, %v2092
      %v2139 = vadd.f32 %v2030, %v2094
      %v2140 = vadd.f32 %v2031, %v2133
      %v2141 = vld [vmem:[%s2 + $0x44] sm:$0xf]
      %2142 = vrot.lane.b32.xlu0 %v296, 81
      %v2143 = vpop.permute.xlu0 %2142
      %2144 = vrot.lane.b32.xlu0 %v297, 81
      %v2145 = vpop.permute.xlu0 %2144
      %2146 = vrot.lane.b32.xlu0 %v298, 81
      %v2147 = vpop.permute.xlu0 %2146
      %2148 = vrot.lane.b32.xlu0 %v302, 81
      %v2149 = vpop.permute.xlu0 %2148
      %vm2150 = vcmask 662528
      %v2151 = vsel %vm2150, %v2143, %v2145
      %v2152 = vsel %vm2150, %v2145, %v2147
      %v2153 = vsel %vm2150, %v2147, %v2149
      %v2155 = vsel %vm318, %v2141, 0
      %v2158 = vsel %vm322, %v2151, 0
      %v2161 = vsel %vm322, %v2152, 0
      %v2164 = vsel %vm322, %v2153, 0
      %2166 = vmatprep.subr.bf16.mxu0 %v2161
      %2167 = vmatpush1.bf16.msra.mxu0 %v2158
      %2168 = vmatprep.subr.bf16.mxu0 0
      %2169 = vmatpush1.bf16.msra.mxu0 0
      %2170 = vmatprep.subr.bf16.mxu0 0
      %2171 = vmatpush1.bf16.msra.mxu0 0
      %2172 = vmatprep.subr.bf16.mxu0 0
      %2173 = vmatpush1.bf16.msra.mxu0 0
      %2174 = vmatprep.subr.bf16.mxu0 0
      %2175 = vmatpush1.bf16.msra.mxu0 0
      %2176 = vmatprep.subr.bf16.mxu0 0
      %2177 = vmatpush1.bf16.msra.mxu0 0
      %2178 = vmatprep.subr.bf16.mxu0 0
      %2179 = vmatpush1.bf16.msra.mxu0 0
      %2180 = vmatprep.subr.bf16.mxu0 0
      %2181 = vmatpush1.bf16.msra.mxu0 0
      %2182 = vmatprep.subr.bf16.mxu0 0
      %2183 = vmatpush1.bf16.msra.mxu0 0
      %2184 = vmatprep.subr.bf16.mxu0 0
      %2185 = vmatpush1.bf16.msra.mxu0 0
      %2186 = vmatprep.subr.bf16.mxu0 0
      %2187 = vmatpush1.bf16.msra.mxu0 0
      %2188 = vmatprep.subr.bf16.mxu0 0
      %2189 = vmatpush1.bf16.msra.mxu0 0
      %2190 = vmatprep.subr.bf16.mxu0 0
      %2191 = vmatpush1.bf16.msra.mxu0 0
      %2192 = vmatprep.subr.bf16.mxu0 0
      %2193 = vmatpush1.bf16.msra.mxu0 0
      %2194 = vmatprep.subr.bf16.mxu0 0
      %2195 = vmatpush1.bf16.msra.mxu0 0
      %2196 = vmatprep.subr.bf16.mxu0 0
      %2197 = vmatpush1.bf16.msra.mxu0 0
      %2198 = vmatprep.mubr.bf16.mxu0 0
      %2199 = vmatmul.mubr.bf16.gmra.mrb[0].mxu0 %v2155
      %v2200 = vpop.f32.mrb[0].mxu0
      %v2201 = vadd.f32 0.0, %v2200
      %v2202 = vpop.f32.mrb[0].mxu0
      %v2203 = vadd.f32 0.0, %v2202
      %v2204 = vpop.f32.mrb[0].mxu0
      %v2205 = vpop.f32.mrb[0].mxu0
      %2206 = vdwg.mxu0
      %2207 = vmatprep.subr.bf16.mxu0 0
      %2208 = vmatpush1.bf16.msra.mxu0 %v2164
      %2209 = vmatprep.subr.bf16.mxu0 0
      %2210 = vmatpush1.bf16.msra.mxu0 0
      %2211 = vmatprep.subr.bf16.mxu0 0
      %2212 = vmatpush1.bf16.msra.mxu0 0
      %2213 = vmatprep.subr.bf16.mxu0 0
      %2214 = vmatpush1.bf16.msra.mxu0 0
      %2215 = vmatprep.subr.bf16.mxu0 0
      %2216 = vmatpush1.bf16.msra.mxu0 0
      %2217 = vmatprep.subr.bf16.mxu0 0
      %2218 = vmatpush1.bf16.msra.mxu0 0
      %2219 = vmatprep.subr.bf16.mxu0 0
      %2220 = vmatpush1.bf16.msra.mxu0 0
      %2221 = vmatprep.subr.bf16.mxu0 0
      %2222 = vmatpush1.bf16.msra.mxu0 0
      %2223 = vmatprep.subr.bf16.mxu0 0
      %2224 = vmatpush1.bf16.msra.mxu0 0
      %2225 = vmatprep.subr.bf16.mxu0 0
      %2226 = vmatpush1.bf16.msra.mxu0 0
      %2227 = vmatprep.subr.bf16.mxu0 0
      %2228 = vmatpush1.bf16.msra.mxu0 0
      %2229 = vmatprep.subr.bf16.mxu0 0
      %2230 = vmatpush1.bf16.msra.mxu0 0
      %2231 = vmatprep.subr.bf16.mxu0 0
      %2232 = vmatpush1.bf16.msra.mxu0 0
      %2233 = vmatprep.subr.bf16.mxu0 0
      %2234 = vmatpush1.bf16.msra.mxu0 0
      %2235 = vmatprep.subr.bf16.mxu0 0
      %2236 = vmatpush1.bf16.msra.mxu0 0
      %2237 = vmatprep.subr.bf16.mxu0 0
      %2238 = vmatpush1.bf16.msra.mxu0 0
      %2239 = vmatprep.mubr.bf16.mxu0 0
      %2240 = vmatmul.mubr.bf16.gmra.mrb[0].mxu0 %v2155
      %v2241 = vpop.f32.mrb[0].mxu0
      %v2242 = vadd.f32 0.0, %v2241
      %v2243 = vpop.f32.mrb[0].mxu0
      %v2244 = vpop.f32.mrb[0].mxu0
      %v2245 = vpop.f32.mrb[0].mxu0
      %2246 = vdwg.mxu0
      %v2247 = vadd.f32 %v2138, %v2201
      %v2248 = vadd.f32 %v2139, %v2203
      %v2249 = vadd.f32 %v2140, %v2242
      %v2250 = vld [vmem:[%s2 + $0x48] sm:$0xf]
      %2251 = vrot.lane.b32.xlu0 %v296, 80
      %v2252 = vpop.permute.xlu0 %2251
      %2253 = vrot.lane.b32.xlu0 %v297, 80
      %v2254 = vpop.permute.xlu0 %2253
      %2255 = vrot.lane.b32.xlu0 %v298, 80
      %v2256 = vpop.permute.xlu0 %2255
      %2257 = vrot.lane.b32.xlu0 %v302, 80
      %v2258 = vpop.permute.xlu0 %2257
      %vm2259 = vcmask 654336
      %v2260 = vsel %vm2259, %v2252, %v2254
      %v2261 = vsel %vm2259, %v2254, %v2256
      %v2262 = vsel %vm2259, %v2256, %v2258
      %v2264 = vsel %vm318, %v2250, 0
      %v2267 = vsel %vm322, %v2260, 0
      %v2270 = vsel %vm322, %v2261, 0
      %v2273 = vsel %vm322, %v2262, 0
      %2275 = vmatprep.subr.bf16.mxu0 %v2270
      %2276 = vmatpush1.bf16.msra.mxu0 %v2267
      %2277 = vmatprep.subr.bf16.mxu0 0
      %2278 = vmatpush1.bf16.msra.mxu0 0
      %2279 = vmatprep.subr.bf16.mxu0 0
      %2280 = vmatpush1.bf16.msra.mxu0 0
      %2281 = vmatprep.subr.bf16.mxu0 0
      %2282 = vmatpush1.bf16.msra.mxu0 0
      %2283 = vmatprep.subr.bf16.mxu0 0
      %2284 = vmatpush1.bf16.msra.mxu0 0
      %2285 = vmatprep.subr.bf16.mxu0 0
      %2286 = vmatpush1.bf16.msra.mxu0 0
      %2287 = vmatprep.subr.bf16.mxu0 0
      %2288 = vmatpush1.bf16.msra.mxu0 0
      %2289 = vmatprep.subr.bf16.mxu0 0
      %2290 = vmatpush1.bf16.msra.mxu0 0
      %2291 = vmatprep.subr.bf16.mxu0 0
      %2292 = vmatpush1.bf16.msra.mxu0 0
      %2293 = vmatprep.subr.bf16.mxu0 0
      %2294 = vmatpush1.bf16.msra.mxu0 0
      %2295 = vmatprep.subr.bf16.mxu0 0
      %2296 = vmatpush1.bf16.msra.mxu0 0
      %2297 = vmatprep.subr.bf16.mxu0 0
      %2298 = vmatpush1.bf16.msra.mxu0 0
      %2299 = vmatprep.subr.bf16.mxu0 0
      %2300 = vmatpush1.bf16.msra.mxu0 0
      %2301 = vmatprep.subr.bf16.mxu0 0
      %2302 = vmatpush1.bf16.msra.mxu0 0
      %2303 = vmatprep.subr.bf16.mxu0 0
      %2304 = vmatpush1.bf16.msra.mxu0 0
      %2305 = vmatprep.subr.bf16.mxu0 0
      %2306 = vmatpush1.bf16.msra.mxu0 0
      %2307 = vmatprep.mubr.bf16.mxu0 0
      %2308 = vmatmul.mubr.bf16.gmra.mrb[0].mxu0 %v2264
      %v2309 = vpop.f32.mrb[0].mxu0
      %v2310 = vadd.f32 0.0, %v2309
      %v2311 = vpop.f32.mrb[0].mxu0
      %v2312 = vadd.f32 0.0, %v2311
      %v2313 = vpop.f32.mrb[0].mxu0
      %v2314 = vpop.f32.mrb[0].mxu0
      %2315 = vdwg.mxu0
      %2316 = vmatprep.subr.bf16.mxu0 0
      %2317 = vmatpush1.bf16.msra.mxu0 %v2273
      %2318 = vmatprep.subr.bf16.mxu0 0
      %2319 = vmatpush1.bf16.msra.mxu0 0
      %2320 = vmatprep.subr.bf16.mxu0 0
      %2321 = vmatpush1.bf16.msra.mxu0 0
      %2322 = vmatprep.subr.bf16.mxu0 0
      %2323 = vmatpush1.bf16.msra.mxu0 0
      %2324 = vmatprep.subr.bf16.mxu0 0
      %2325 = vmatpush1.bf16.msra.mxu0 0
      %2326 = vmatprep.subr.bf16.mxu0 0
      %2327 = vmatpush1.bf16.msra.mxu0 0
      %2328 = vmatprep.subr.bf16.mxu0 0
      %2329 = vmatpush1.bf16.msra.mxu0 0
      %2330 = vmatprep.subr.bf16.mxu0 0
      %2331 = vmatpush1.bf16.msra.mxu0 0
      %2332 = vmatprep.subr.bf16.mxu0 0
      %2333 = vmatpush1.bf16.msra.mxu0 0
      %2334 = vmatprep.subr.bf16.mxu0 0
      %2335 = vmatpush1.bf16.msra.mxu0 0
      %2336 = vmatprep.subr.bf16.mxu0 0
      %2337 = vmatpush1.bf16.msra.mxu0 0
      %2338 = vmatprep.subr.bf16.mxu0 0
      %2339 = vmatpush1.bf16.msra.mxu0 0
      %2340 = vmatprep.subr.bf16.mxu0 0
      %2341 = vmatpush1.bf16.msra.mxu0 0
      %2342 = vmatprep.subr.bf16.mxu0 0
      %2343 = vmatpush1.bf16.msra.mxu0 0
      %2344 = vmatprep.subr.bf16.mxu0 0
      %2345 = vmatpush1.bf16.msra.mxu0 0
      %2346 = vmatprep.subr.bf16.mxu0 0
      %2347 = vmatpush1.bf16.msra.mxu0 0
      %2348 = vmatprep.mubr.bf16.mxu0 0
      %2349 = vmatmul.mubr.bf16.gmra.mrb[0].mxu0 %v2264
      %v2350 = vpop.f32.mrb[0].mxu0
      %v2351 = vadd.f32 0.0, %v2350
      %v2352 = vpop.f32.mrb[0].mxu0
      %v2353 = vpop.f32.mrb[0].mxu0
      %v2354 = vpop.f32.mrb[0].mxu0
      %2355 = vdwg.mxu0
      %v2356 = vadd.f32 %v2247, %v2310
      %v2357 = vadd.f32 %v2248, %v2312
      %v2358 = vadd.f32 %v2249, %v2351
      %v2359 = vld [vmem:[%s2 + $0x4c] sm:$0xf]
      %2360 = vrot.lane.b32.xlu0 %v296, 79
      %v2361 = vpop.permute.xlu0 %2360
      %2362 = vrot.lane.b32.xlu0 %v297, 79
      %v2363 = vpop.permute.xlu0 %2362
      %2364 = vrot.lane.b32.xlu0 %v298, 79
      %v2365 = vpop.permute.xlu0 %2364
      %2366 = vrot.lane.b32.xlu0 %v302, 79
      %v2367 = vpop.permute.xlu0 %2366
      %vm2368 = vcmask 646144
      %v2369 = vsel %vm2368, %v2361, %v2363
      %v2370 = vsel %vm2368, %v2363, %v2365
      %v2371 = vsel %vm2368, %v2365, %v2367
      %v2373 = vsel %vm318, %v2359, 0
      %v2376 = vsel %vm322, %v2369, 0
      %v2379 = vsel %vm322, %v2370, 0
      %v2382 = vsel %vm322, %v2371, 0
      %2384 = vmatprep.subr.bf16.mxu0 %v2379
      %2385 = vmatpush1.bf16.msra.mxu0 %v2376
      %2386 = vmatprep.subr.bf16.mxu0 0
      %2387 = vmatpush1.bf16.msra.mxu0 0
      %2388 = vmatprep.subr.bf16.mxu0 0
      %2389 = vmatpush1.bf16.msra.mxu0 0
      %2390 = vmatprep.subr.bf16.mxu0 0
      %2391 = vmatpush1.bf16.msra.mxu0 0
      %2392 = vmatprep.subr.bf16.mxu0 0
      %2393 = vmatpush1.bf16.msra.mxu0 0
      %2394 = vmatprep.subr.bf16.mxu0 0
      %2395 = vmatpush1.bf16.msra.mxu0 0
      %2396 = vmatprep.subr.bf16.mxu0 0
      %2397 = vmatpush1.bf16.msra.mxu0 0
      %2398 = vmatprep.subr.bf16.mxu0 0
      %2399 = vmatpush1.bf16.msra.mxu0 0
      %2400 = vmatprep.subr.bf16.mxu0 0
      %2401 = vmatpush1.bf16.msra.mxu0 0
      %2402 = vmatprep.subr.bf16.mxu0 0
      %2403 = vmatpush1.bf16.msra.mxu0 0
      %2404 = vmatprep.subr.bf16.mxu0 0
      %2405 = vmatpush1.bf16.msra.mxu0 0
      %2406 = vmatprep.subr.bf16.mxu0 0
      %2407 = vmatpush1.bf16.msra.mxu0 0
      %2408 = vmatprep.subr.bf16.mxu0 0
      %2409 = vmatpush1.bf16.msra.mxu0 0
      %2410 = vmatprep.subr.bf16.mxu0 0
      %2411 = vmatpush1.bf16.msra.mxu0 0
      %2412 = vmatprep.subr.bf16.mxu0 0
      %2413 = vmatpush1.bf16.msra.mxu0 0
      %2414 = vmatprep.subr.bf16.mxu0 0
      %2415 = vmatpush1.bf16.msra.mxu0 0
      %2416 = vmatprep.mubr.bf16.mxu0 0
      %2417 = vmatmul.mubr.bf16.gmra.mrb[0].mxu0 %v2373
      %v2418 = vpop.f32.mrb[0].mxu0
      %v2419 = vadd.f32 0.0, %v2418
      %v2420 = vpop.f32.mrb[0].mxu0
      %v2421 = vadd.f32 0.0, %v2420
      %v2422 = vpop.f32.mrb[0].mxu0
      %v2423 = vpop.f32.mrb[0].mxu0
      %2424 = vdwg.mxu0
      %2425 = vmatprep.subr.bf16.mxu0 0
      %2426 = vmatpush1.bf16.msra.mxu0 %v2382
      %2427 = vmatprep.subr.bf16.mxu0 0
      %2428 = vmatpush1.bf16.msra.mxu0 0
      %2429 = vmatprep.subr.bf16.mxu0 0
      %2430 = vmatpush1.bf16.msra.mxu0 0
      %2431 = vmatprep.subr.bf16.mxu0 0
      %2432 = vmatpush1.bf16.msra.mxu0 0
      %2433 = vmatprep.subr.bf16.mxu0 0
      %2434 = vmatpush1.bf16.msra.mxu0 0
      %2435 = vmatprep.subr.bf16.mxu0 0
      %2436 = vmatpush1.bf16.msra.mxu0 0
      %2437 = vmatprep.subr.bf16.mxu0 0
      %2438 = vmatpush1.bf16.msra.mxu0 0
      %2439 = vmatprep.subr.bf16.mxu0 0
      %2440 = vmatpush1.bf16.msra.mxu0 0
      %2441 = vmatprep.subr.bf16.mxu0 0
      %2442 = vmatpush1.bf16.msra.mxu0 0
      %2443 = vmatprep.subr.bf16.mxu0 0
      %2444 = vmatpush1.bf16.msra.mxu0 0
      %2445 = vmatprep.subr.bf16.mxu0 0
      %2446 = vmatpush1.bf16.msra.mxu0 0
      %2447 = vmatprep.subr.bf16.mxu0 0
      %2448 = vmatpush1.bf16.msra.mxu0 0
      %2449 = vmatprep.subr.bf16.mxu0 0
      %2450 = vmatpush1.bf16.msra.mxu0 0
      %2451 = vmatprep.subr.bf16.mxu0 0
      %2452 = vmatpush1.bf16.msra.mxu0 0
      %2453 = vmatprep.subr.bf16.mxu0 0
      %2454 = vmatpush1.bf16.msra.mxu0 0
      %2455 = vmatprep.subr.bf16.mxu0 0
      %2456 = vmatpush1.bf16.msra.mxu0 0
      %2457 = vmatprep.mubr.bf16.mxu0 0
      %2458 = vmatmul.mubr.bf16.gmra.mrb[0].mxu0 %v2373
      %v2459 = vpop.f32.mrb[0].mxu0
      %v2460 = vadd.f32 0.0, %v2459
      %v2461 = vpop.f32.mrb[0].mxu0
      %v2462 = vpop.f32.mrb[0].mxu0
      %v2463 = vpop.f32.mrb[0].mxu0
      %2464 = vdwg.mxu0
      %v2465 = vadd.f32 %v2356, %v2419
      %v2466 = vadd.f32 %v2357, %v2421
      %v2467 = vadd.f32 %v2358, %v2460
      %v2468 = vld [vmem:[%s2 + $0x50] sm:$0xf]
      %2469 = vrot.lane.b32.xlu0 %v296, 78
      %v2470 = vpop.permute.xlu0 %2469
      %2471 = vrot.lane.b32.xlu0 %v297, 78
      %v2472 = vpop.permute.xlu0 %2471
      %2473 = vrot.lane.b32.xlu0 %v298, 78
      %v2474 = vpop.permute.xlu0 %2473
      %2475 = vrot.lane.b32.xlu0 %v302, 78
      %v2476 = vpop.permute.xlu0 %2475
      %vm2477 = vcmask 637952
      %v2478 = vsel %vm2477, %v2470, %v2472
      %v2479 = vsel %vm2477, %v2472, %v2474
      %v2480 = vsel %vm2477, %v2474, %v2476
      %v2482 = vsel %vm318, %v2468, 0
      %v2485 = vsel %vm322, %v2478, 0
      %v2488 = vsel %vm322, %v2479, 0
      %v2491 = vsel %vm322, %v2480, 0
      %2493 = vmatprep.subr.bf16.mxu0 %v2488
      %2494 = vmatpush1.bf16.msra.mxu0 %v2485
      %2495 = vmatprep.subr.bf16.mxu0 0
      %2496 = vmatpush1.bf16.msra.mxu0 0
      %2497 = vmatprep.subr.bf16.mxu0 0
      %2498 = vmatpush1.bf16.msra.mxu0 0
      %2499 = vmatprep.subr.bf16.mxu0 0
      %2500 = vmatpush1.bf16.msra.mxu0 0
      %2501 = vmatprep.subr.bf16.mxu0 0
      %2502 = vmatpush1.bf16.msra.mxu0 0
      %2503 = vmatprep.subr.bf16.mxu0 0
      %2504 = vmatpush1.bf16.msra.mxu0 0
      %2505 = vmatprep.subr.bf16.mxu0 0
      %2506 = vmatpush1.bf16.msra.mxu0 0
      %2507 = vmatprep.subr.bf16.mxu0 0
      %2508 = vmatpush1.bf16.msra.mxu0 0
      %2509 = vmatprep.subr.bf16.mxu0 0
      %2510 = vmatpush1.bf16.msra.mxu0 0
      %2511 = vmatprep.subr.bf16.mxu0 0
      %2512 = vmatpush1.bf16.msra.mxu0 0
      %2513 = vmatprep.subr.bf16.mxu0 0
      %2514 = vmatpush1.bf16.msra.mxu0 0
      %2515 = vmatprep.subr.bf16.mxu0 0
      %2516 = vmatpush1.bf16.msra.mxu0 0
      %2517 = vmatprep.subr.bf16.mxu0 0
      %2518 = vmatpush1.bf16.msra.mxu0 0
      %2519 = vmatprep.subr.bf16.mxu0 0
      %2520 = vmatpush1.bf16.msra.mxu0 0
      %2521 = vmatprep.subr.bf16.mxu0 0
      %2522 = vmatpush1.bf16.msra.mxu0 0
      %2523 = vmatprep.subr.bf16.mxu0 0
      %2524 = vmatpush1.bf16.msra.mxu0 0
      %2525 = vmatprep.mubr.bf16.mxu0 0
      %2526 = vmatmul.mubr.bf16.gmra.mrb[0].mxu0 %v2482
      %v2527 = vpop.f32.mrb[0].mxu0
      %v2528 = vadd.f32 0.0, %v2527
      %v2529 = vpop.f32.mrb[0].mxu0
      %v2530 = vadd.f32 0.0, %v2529
      %v2531 = vpop.f32.mrb[0].mxu0
      %v2532 = vpop.f32.mrb[0].mxu0
      %2533 = vdwg.mxu0
      %2534 = vmatprep.subr.bf16.mxu0 0
      %2535 = vmatpush1.bf16.msra.mxu0 %v2491
      %2536 = vmatprep.subr.bf16.mxu0 0
      %2537 = vmatpush1.bf16.msra.mxu0 0
      %2538 = vmatprep.subr.bf16.mxu0 0
      %2539 = vmatpush1.bf16.msra.mxu0 0
      %2540 = vmatprep.subr.bf16.mxu0 0
      %2541 = vmatpush1.bf16.msra.mxu0 0
      %2542 = vmatprep.subr.bf16.mxu0 0
      %2543 = vmatpush1.bf16.msra.mxu0 0
      %2544 = vmatprep.subr.bf16.mxu0 0
      %2545 = vmatpush1.bf16.msra.mxu0 0
      %2546 = vmatprep.subr.bf16.mxu0 0
      %2547 = vmatpush1.bf16.msra.mxu0 0
      %2548 = vmatprep.subr.bf16.mxu0 0
      %2549 = vmatpush1.bf16.msra.mxu0 0
      %2550 = vmatprep.subr.bf16.mxu0 0
      %2551 = vmatpush1.bf16.msra.mxu0 0
      %2552 = vmatprep.subr.bf16.mxu0 0
      %2553 = vmatpush1.bf16.msra.mxu0 0
      %2554 = vmatprep.subr.bf16.mxu0 0
      %2555 = vmatpush1.bf16.msra.mxu0 0
      %2556 = vmatprep.subr.bf16.mxu0 0
      %2557 = vmatpush1.bf16.msra.mxu0 0
      %2558 = vmatprep.subr.bf16.mxu0 0
      %2559 = vmatpush1.bf16.msra.mxu0 0
      %2560 = vmatprep.subr.bf16.mxu0 0
      %2561 = vmatpush1.bf16.msra.mxu0 0
      %2562 = vmatprep.subr.bf16.mxu0 0
      %2563 = vmatpush1.bf16.msra.mxu0 0
      %2564 = vmatprep.subr.bf16.mxu0 0
      %2565 = vmatpush1.bf16.msra.mxu0 0
      %2566 = vmatprep.mubr.bf16.mxu0 0
      %2567 = vmatmul.mubr.bf16.gmra.mrb[0].mxu0 %v2482
      %v2568 = vpop.f32.mrb[0].mxu0
      %v2569 = vadd.f32 0.0, %v2568
      %v2570 = vpop.f32.mrb[0].mxu0
      %v2571 = vpop.f32.mrb[0].mxu0
      %v2572 = vpop.f32.mrb[0].mxu0
      %2573 = vdwg.mxu0
      %v2574 = vadd.f32 %v2465, %v2528
      %v2575 = vadd.f32 %v2466, %v2530
      %v2576 = vadd.f32 %v2467, %v2569
      %v2577 = vld [vmem:[%s2 + $0x54] sm:$0xf]
      %2578 = vrot.lane.b32.xlu0 %v296, 62
      %v2579 = vpop.permute.xlu0 %2578
      %2580 = vrot.lane.b32.xlu0 %v297, 62
      %v2581 = vpop.permute.xlu0 %2580
      %2582 = vrot.lane.b32.xlu0 %v298, 62
      %v2583 = vpop.permute.xlu0 %2582
      %2584 = vrot.lane.b32.xlu0 %v302, 62
      %v2585 = vpop.permute.xlu0 %2584
      %vm2586 = vcmask 506880
      %v2587 = vsel %vm2586, %v2579, %v2581
      %v2588 = vsel %vm2586, %v2581, %v2583
      %v2589 = vsel %vm2586, %v2583, %v2585
      %v2591 = vsel %vm318, %v2577, 0
      %v2594 = vsel %vm322, %v2587, 0
      %v2597 = vsel %vm322, %v2588, 0
      %v2600 = vsel %vm322, %v2589, 0
      %2602 = vmatprep.subr.bf16.mxu0 %v2597
      %2603 = vmatpush1.bf16.msra.mxu0 %v2594
      %2604 = vmatprep.subr.bf16.mxu0 0
      %2605 = vmatpush1.bf16.msra.mxu0 0
      %2606 = vmatprep.subr.bf16.mxu0 0
      %2607 = vmatpush1.bf16.msra.mxu0 0
      %2608 = vmatprep.subr.bf16.mxu0 0
      %2609 = vmatpush1.bf16.msra.mxu0 0
      %2610 = vmatprep.subr.bf16.mxu0 0
      %2611 = vmatpush1.bf16.msra.mxu0 0
      %2612 = vmatprep.subr.bf16.mxu0 0
      %2613 = vmatpush1.bf16.msra.mxu0 0
      %2614 = vmatprep.subr.bf16.mxu0 0
      %2615 = vmatpush1.bf16.msra.mxu0 0
      %2616 = vmatprep.subr.bf16.mxu0 0
      %2617 = vmatpush1.bf16.msra.mxu0 0
      %2618 = vmatprep.subr.bf16.mxu0 0
      %2619 = vmatpush1.bf16.msra.mxu0 0
      %2620 = vmatprep.subr.bf16.mxu0 0
      %2621 = vmatpush1.bf16.msra.mxu0 0
      %2622 = vmatprep.subr.bf16.mxu0 0
      %2623 = vmatpush1.bf16.msra.mxu0 0
      %2624 = vmatprep.subr.bf16.mxu0 0
      %2625 = vmatpush1.bf16.msra.mxu0 0
      %2626 = vmatprep.subr.bf16.mxu0 0
      %2627 = vmatpush1.bf16.msra.mxu0 0
      %2628 = vmatprep.subr.bf16.mxu0 0
      %2629 = vmatpush1.bf16.msra.mxu0 0
      %2630 = vmatprep.subr.bf16.mxu0 0
      %2631 = vmatpush1.bf16.msra.mxu0 0
      %2632 = vmatprep.subr.bf16.mxu0 0
      %2633 = vmatpush1.bf16.msra.mxu0 0
      %2634 = vmatprep.mubr.bf16.mxu0 0
      %2635 = vmatmul.mubr.bf16.gmra.mrb[0].mxu0 %v2591
      %v2636 = vpop.f32.mrb[0].mxu0
      %v2637 = vadd.f32 0.0, %v2636
      %v2638 = vpop.f32.mrb[0].mxu0
      %v2639 = vadd.f32 0.0, %v2638
      %v2640 = vpop.f32.mrb[0].mxu0
      %v2641 = vpop.f32.mrb[0].mxu0
      %2642 = vdwg.mxu0
      %2643 = vmatprep.subr.bf16.mxu0 0
      %2644 = vmatpush1.bf16.msra.mxu0 %v2600
      %2645 = vmatprep.subr.bf16.mxu0 0
      %2646 = vmatpush1.bf16.msra.mxu0 0
      %2647 = vmatprep.subr.bf16.mxu0 0
      %2648 = vmatpush1.bf16.msra.mxu0 0
      %2649 = vmatprep.subr.bf16.mxu0 0
      %2650 = vmatpush1.bf16.msra.mxu0 0
      %2651 = vmatprep.subr.bf16.mxu0 0
      %2652 = vmatpush1.bf16.msra.mxu0 0
      %2653 = vmatprep.subr.bf16.mxu0 0
      %2654 = vmatpush1.bf16.msra.mxu0 0
      %2655 = vmatprep.subr.bf16.mxu0 0
      %2656 = vmatpush1.bf16.msra.mxu0 0
      %2657 = vmatprep.subr.bf16.mxu0 0
      %2658 = vmatpush1.bf16.msra.mxu0 0
      %2659 = vmatprep.subr.bf16.mxu0 0
      %2660 = vmatpush1.bf16.msra.mxu0 0
      %2661 = vmatprep.subr.bf16.mxu0 0
      %2662 = vmatpush1.bf16.msra.mxu0 0
      %2663 = vmatprep.subr.bf16.mxu0 0
      %2664 = vmatpush1.bf16.msra.mxu0 0
      %2665 = vmatprep.subr.bf16.mxu0 0
      %2666 = vmatpush1.bf16.msra.mxu0 0
      %2667 = vmatprep.subr.bf16.mxu0 0
      %2668 = vmatpush1.bf16.msra.mxu0 0
      %2669 = vmatprep.subr.bf16.mxu0 0
      %2670 = vmatpush1.bf16.msra.mxu0 0
      %2671 = vmatprep.subr.bf16.mxu0 0
      %2672 = vmatpush1.bf16.msra.mxu0 0
      %2673 = vmatprep.subr.bf16.mxu0 0
      %2674 = vmatpush1.bf16.msra.mxu0 0
      %2675 = vmatprep.mubr.bf16.mxu0 0
      %2676 = vmatmul.mubr.bf16.gmra.mrb[0].mxu0 %v2591
      %v2677 = vpop.f32.mrb[0].mxu0
      %v2678 = vadd.f32 0.0, %v2677
      %v2679 = vpop.f32.mrb[0].mxu0
      %v2680 = vpop.f32.mrb[0].mxu0
      %v2681 = vpop.f32.mrb[0].mxu0
      %2682 = vdwg.mxu0
      %v2683 = vadd.f32 %v2574, %v2637
      %v2684 = vadd.f32 %v2575, %v2639
      %v2685 = vadd.f32 %v2576, %v2678
      %v2686 = vld [vmem:[%s2 + $0x58] sm:$0xf]
      %2687 = vrot.lane.b32.xlu0 %v296, 61
      %v2688 = vpop.permute.xlu0 %2687
      %2689 = vrot.lane.b32.xlu0 %v297, 61
      %v2690 = vpop.permute.xlu0 %2689
      %2691 = vrot.lane.b32.xlu0 %v298, 61
      %v2692 = vpop.permute.xlu0 %2691
      %2693 = vrot.lane.b32.xlu0 %v302, 61
      %v2694 = vpop.permute.xlu0 %2693
      %vm2695 = vcmask 498688
      %v2696 = vsel %vm2695, %v2688, %v2690
      %v2697 = vsel %vm2695, %v2690, %v2692
      %v2698 = vsel %vm2695, %v2692, %v2694
      %v2700 = vsel %vm318, %v2686, 0
      %v2703 = vsel %vm322, %v2696, 0
      %v2706 = vsel %vm322, %v2697, 0
      %v2709 = vsel %vm322, %v2698, 0
      %2711 = vmatprep.subr.bf16.mxu0 %v2706
      %2712 = vmatpush1.bf16.msra.mxu0 %v2703
      %2713 = vmatprep.subr.bf16.mxu0 0
      %2714 = vmatpush1.bf16.msra.mxu0 0
      %2715 = vmatprep.subr.bf16.mxu0 0
      %2716 = vmatpush1.bf16.msra.mxu0 0
      %2717 = vmatprep.subr.bf16.mxu0 0
      %2718 = vmatpush1.bf16.msra.mxu0 0
      %2719 = vmatprep.subr.bf16.mxu0 0
      %2720 = vmatpush1.bf16.msra.mxu0 0
      %2721 = vmatprep.subr.bf16.mxu0 0
      %2722 = vmatpush1.bf16.msra.mxu0 0
      %2723 = vmatprep.subr.bf16.mxu0 0
      %2724 = vmatpush1.bf16.msra.mxu0 0
      %2725 = vmatprep.subr.bf16.mxu0 0
      %2726 = vmatpush1.bf16.msra.mxu0 0
      %2727 = vmatprep.subr.bf16.mxu0 0
      %2728 = vmatpush1.bf16.msra.mxu0 0
      %2729 = vmatprep.subr.bf16.mxu0 0
      %2730 = vmatpush1.bf16.msra.mxu0 0
      %2731 = vmatprep.subr.bf16.mxu0 0
      %2732 = vmatpush1.bf16.msra.mxu0 0
      %2733 = vmatprep.subr.bf16.mxu0 0
      %2734 = vmatpush1.bf16.msra.mxu0 0
      %2735 = vmatprep.subr.bf16.mxu0 0
      %2736 = vmatpush1.bf16.msra.mxu0 0
      %2737 = vmatprep.subr.bf16.mxu0 0
      %2738 = vmatpush1.bf16.msra.mxu0 0
      %2739 = vmatprep.subr.bf16.mxu0 0
      %2740 = vmatpush1.bf16.msra.mxu0 0
      %2741 = vmatprep.subr.bf16.mxu0 0
      %2742 = vmatpush1.bf16.msra.mxu0 0
      %2743 = vmatprep.mubr.bf16.mxu0 0
      %2744 = vmatmul.mubr.bf16.gmra.mrb[0].mxu0 %v2700
      %v2745 = vpop.f32.mrb[0].mxu0
      %v2746 = vadd.f32 0.0, %v2745
      %v2747 = vpop.f32.mrb[0].mxu0
      %v2748 = vadd.f32 0.0, %v2747
      %v2749 = vpop.f32.mrb[0].mxu0
      %v2750 = vpop.f32.mrb[0].mxu0
      %2751 = vdwg.mxu0
      %2752 = vmatprep.subr.bf16.mxu0 0
      %2753 = vmatpush1.bf16.msra.mxu0 %v2709
      %2754 = vmatprep.subr.bf16.mxu0 0
      %2755 = vmatpush1.bf16.msra.mxu0 0
      %2756 = vmatprep.subr.bf16.mxu0 0
      %2757 = vmatpush1.bf16.msra.mxu0 0
      %2758 = vmatprep.subr.bf16.mxu0 0
      %2759 = vmatpush1.bf16.msra.mxu0 0
      %2760 = vmatprep.subr.bf16.mxu0 0
      %2761 = vmatpush1.bf16.msra.mxu0 0
      %2762 = vmatprep.subr.bf16.mxu0 0
      %2763 = vmatpush1.bf16.msra.mxu0 0
      %2764 = vmatprep.subr.bf16.mxu0 0
      %2765 = vmatpush1.bf16.msra.mxu0 0
      %2766 = vmatprep.subr.bf16.mxu0 0
      %2767 = vmatpush1.bf16.msra.mxu0 0
      %2768 = vmatprep.subr.bf16.mxu0 0
      %2769 = vmatpush1.bf16.msra.mxu0 0
      %2770 = vmatprep.subr.bf16.mxu0 0
      %2771 = vmatpush1.bf16.msra.mxu0 0
      %2772 = vmatprep.subr.bf16.mxu0 0
      %2773 = vmatpush1.bf16.msra.mxu0 0
      %2774 = vmatprep.subr.bf16.mxu0 0
      %2775 = vmatpush1.bf16.msra.mxu0 0
      %2776 = vmatprep.subr.bf16.mxu0 0
      %2777 = vmatpush1.bf16.msra.mxu0 0
      %2778 = vmatprep.subr.bf16.mxu0 0
      %2779 = vmatpush1.bf16.msra.mxu0 0
      %2780 = vmatprep.subr.bf16.mxu0 0
      %2781 = vmatpush1.bf16.msra.mxu0 0
      %2782 = vmatprep.subr.bf16.mxu0 0
      %2783 = vmatpush1.bf16.msra.mxu0 0
      %2784 = vmatprep.mubr.bf16.mxu0 0
      %2785 = vmatmul.mubr.bf16.gmra.mrb[0].mxu0 %v2700
      %v2786 = vpop.f32.mrb[0].mxu0
      %v2787 = vadd.f32 0.0, %v2786
      %v2788 = vpop.f32.mrb[0].mxu0
      %v2789 = vpop.f32.mrb[0].mxu0
      %v2790 = vpop.f32.mrb[0].mxu0
      %2791 = vdwg.mxu0
      %v2792 = vadd.f32 %v2683, %v2746
      %v2793 = vadd.f32 %v2684, %v2748
      %v2794 = vadd.f32 %v2685, %v2787
      %v2795 = vld [vmem:[%s2 + $0x5c] sm:$0xf]
      %2796 = vrot.lane.b32.xlu0 %v296, 60
      %v2797 = vpop.permute.xlu0 %2796
      %2798 = vrot.lane.b32.xlu0 %v297, 60
      %v2799 = vpop.permute.xlu0 %2798
      %2800 = vrot.lane.b32.xlu0 %v298, 60
      %v2801 = vpop.permute.xlu0 %2800
      %2802 = vrot.lane.b32.xlu0 %v302, 60
      %v2803 = vpop.permute.xlu0 %2802
      %vm2804 = vcmask 490496
      %v2805 = vsel %vm2804, %v2797, %v2799
      %v2806 = vsel %vm2804, %v2799, %v2801
      %v2807 = vsel %vm2804, %v2801, %v2803
      %v2809 = vsel %vm318, %v2795, 0
      %v2812 = vsel %vm322, %v2805, 0
      %v2815 = vsel %vm322, %v2806, 0
      %v2818 = vsel %vm322, %v2807, 0
      %2820 = vmatprep.subr.bf16.mxu0 %v2815
      %2821 = vmatpush1.bf16.msra.mxu0 %v2812
      %2822 = vmatprep.subr.bf16.mxu0 0
      %2823 = vmatpush1.bf16.msra.mxu0 0
      %2824 = vmatprep.subr.bf16.mxu0 0
      %2825 = vmatpush1.bf16.msra.mxu0 0
      %2826 = vmatprep.subr.bf16.mxu0 0
      %2827 = vmatpush1.bf16.msra.mxu0 0
      %2828 = vmatprep.subr.bf16.mxu0 0
      %2829 = vmatpush1.bf16.msra.mxu0 0
      %2830 = vmatprep.subr.bf16.mxu0 0
      %2831 = vmatpush1.bf16.msra.mxu0 0
      %2832 = vmatprep.subr.bf16.mxu0 0
      %2833 = vmatpush1.bf16.msra.mxu0 0
      %2834 = vmatprep.subr.bf16.mxu0 0
      %2835 = vmatpush1.bf16.msra.mxu0 0
      %2836 = vmatprep.subr.bf16.mxu0 0
      %2837 = vmatpush1.bf16.msra.mxu0 0
      %2838 = vmatprep.subr.bf16.mxu0 0
      %2839 = vmatpush1.bf16.msra.mxu0 0
      %2840 = vmatprep.subr.bf16.mxu0 0
      %2841 = vmatpush1.bf16.msra.mxu0 0
      %2842 = vmatprep.subr.bf16.mxu0 0
      %2843 = vmatpush1.bf16.msra.mxu0 0
      %2844 = vmatprep.subr.bf16.mxu0 0
      %2845 = vmatpush1.bf16.msra.mxu0 0
      %2846 = vmatprep.subr.bf16.mxu0 0
      %2847 = vmatpush1.bf16.msra.mxu0 0
      %2848 = vmatprep.subr.bf16.mxu0 0
      %2849 = vmatpush1.bf16.msra.mxu0 0
      %2850 = vmatprep.subr.bf16.mxu0 0
      %2851 = vmatpush1.bf16.msra.mxu0 0
      %2852 = vmatprep.mubr.bf16.mxu0 0
      %2853 = vmatmul.mubr.bf16.gmra.mrb[0].mxu0 %v2809
      %v2854 = vpop.f32.mrb[0].mxu0
      %v2855 = vadd.f32 0.0, %v2854
      %v2856 = vpop.f32.mrb[0].mxu0
      %v2857 = vadd.f32 0.0, %v2856
      %v2858 = vpop.f32.mrb[0].mxu0
      %v2859 = vpop.f32.mrb[0].mxu0
      %2860 = vdwg.mxu0
      %2861 = vmatprep.subr.bf16.mxu0 0
      %2862 = vmatpush1.bf16.msra.mxu0 %v2818
      %2863 = vmatprep.subr.bf16.mxu0 0
      %2864 = vmatpush1.bf16.msra.mxu0 0
      %2865 = vmatprep.subr.bf16.mxu0 0
      %2866 = vmatpush1.bf16.msra.mxu0 0
      %2867 = vmatprep.subr.bf16.mxu0 0
      %2868 = vmatpush1.bf16.msra.mxu0 0
      %2869 = vmatprep.subr.bf16.mxu0 0
      %2870 = vmatpush1.bf16.msra.mxu0 0
      %2871 = vmatprep.subr.bf16.mxu0 0
      %2872 = vmatpush1.bf16.msra.mxu0 0
      %2873 = vmatprep.subr.bf16.mxu0 0
      %2874 = vmatpush1.bf16.msra.mxu0 0
      %2875 = vmatprep.subr.bf16.mxu0 0
      %2876 = vmatpush1.bf16.msra.mxu0 0
      %2877 = vmatprep.subr.bf16.mxu0 0
      %2878 = vmatpush1.bf16.msra.mxu0 0
      %2879 = vmatprep.subr.bf16.mxu0 0
      %2880 = vmatpush1.bf16.msra.mxu0 0
      %2881 = vmatprep.subr.bf16.mxu0 0
      %2882 = vmatpush1.bf16.msra.mxu0 0
      %2883 = vmatprep.subr.bf16.mxu0 0
      %2884 = vmatpush1.bf16.msra.mxu0 0
      %2885 = vmatprep.subr.bf16.mxu0 0
      %2886 = vmatpush1.bf16.msra.mxu0 0
      %2887 = vmatprep.subr.bf16.mxu0 0
      %2888 = vmatpush1.bf16.msra.mxu0 0
      %2889 = vmatprep.subr.bf16.mxu0 0
      %2890 = vmatpush1.bf16.msra.mxu0 0
      %2891 = vmatprep.subr.bf16.mxu0 0
      %2892 = vmatpush1.bf16.msra.mxu0 0
      %2893 = vmatprep.mubr.bf16.mxu0 0
      %2894 = vmatmul.mubr.bf16.gmra.mrb[0].mxu0 %v2809
      %v2895 = vpop.f32.mrb[0].mxu0
      %v2896 = vadd.f32 0.0, %v2895
      %v2897 = vpop.f32.mrb[0].mxu0
      %v2898 = vpop.f32.mrb[0].mxu0
      %v2899 = vpop.f32.mrb[0].mxu0
      %2900 = vdwg.mxu0
      %v2901 = vadd.f32 %v2792, %v2855
      %v2902 = vadd.f32 %v2793, %v2857
      %v2903 = vadd.f32 %v2794, %v2896
      %v2904 = vld [vmem:[%s2 + $0x60] sm:$0xf]
      %2905 = vrot.lane.b32.xlu0 %v296, 59
      %v2906 = vpop.permute.xlu0 %2905
      %2907 = vrot.lane.b32.xlu0 %v297, 59
      %v2908 = vpop.permute.xlu0 %2907
      %2909 = vrot.lane.b32.xlu0 %v298, 59
      %v2910 = vpop.permute.xlu0 %2909
      %2911 = vrot.lane.b32.xlu0 %v302, 59
      %v2912 = vpop.permute.xlu0 %2911
      %vm2913 = vcmask 482304
      %v2914 = vsel %vm2913, %v2906, %v2908
      %v2915 = vsel %vm2913, %v2908, %v2910
      %v2916 = vsel %vm2913, %v2910, %v2912
      %v2918 = vsel %vm318, %v2904, 0
      %v2921 = vsel %vm322, %v2914, 0
      %v2924 = vsel %vm322, %v2915, 0
      %v2927 = vsel %vm322, %v2916, 0
      %2929 = vmatprep.subr.bf16.mxu0 %v2924
      %2930 = vmatpush1.bf16.msra.mxu0 %v2921
      %2931 = vmatprep.subr.bf16.mxu0 0
      %2932 = vmatpush1.bf16.msra.mxu0 0
      %2933 = vmatprep.subr.bf16.mxu0 0
      %2934 = vmatpush1.bf16.msra.mxu0 0
      %2935 = vmatprep.subr.bf16.mxu0 0
      %2936 = vmatpush1.bf16.msra.mxu0 0
      %2937 = vmatprep.subr.bf16.mxu0 0
      %2938 = vmatpush1.bf16.msra.mxu0 0
      %2939 = vmatprep.subr.bf16.mxu0 0
      %2940 = vmatpush1.bf16.msra.mxu0 0
      %2941 = vmatprep.subr.bf16.mxu0 0
      %2942 = vmatpush1.bf16.msra.mxu0 0
      %2943 = vmatprep.subr.bf16.mxu0 0
      %2944 = vmatpush1.bf16.msra.mxu0 0
      %2945 = vmatprep.subr.bf16.mxu0 0
      %2946 = vmatpush1.bf16.msra.mxu0 0
      %2947 = vmatprep.subr.bf16.mxu0 0
      %2948 = vmatpush1.bf16.msra.mxu0 0
      %2949 = vmatprep.subr.bf16.mxu0 0
      %2950 = vmatpush1.bf16.msra.mxu0 0
      %2951 = vmatprep.subr.bf16.mxu0 0
      %2952 = vmatpush1.bf16.msra.mxu0 0
      %2953 = vmatprep.subr.bf16.mxu0 0
      %2954 = vmatpush1.bf16.msra.mxu0 0
      %2955 = vmatprep.subr.bf16.mxu0 0
      %2956 = vmatpush1.bf16.msra.mxu0 0
      %2957 = vmatprep.subr.bf16.mxu0 0
      %2958 = vmatpush1.bf16.msra.mxu0 0
      %2959 = vmatprep.subr.bf16.mxu0 0
      %2960 = vmatpush1.bf16.msra.mxu0 0
      %2961 = vmatprep.mubr.bf16.mxu0 0
      %2962 = vmatmul.mubr.bf16.gmra.mrb[0].mxu0 %v2918
      %v2963 = vpop.f32.mrb[0].mxu0
      %v2964 = vadd.f32 0.0, %v2963
      %v2965 = vpop.f32.mrb[0].mxu0
      %v2966 = vadd.f32 0.0, %v2965
      %v2967 = vpop.f32.mrb[0].mxu0
      %v2968 = vpop.f32.mrb[0].mxu0
      %2969 = vdwg.mxu0
      %2970 = vmatprep.subr.bf16.mxu0 0
      %2971 = vmatpush1.bf16.msra.mxu0 %v2927
      %2972 = vmatprep.subr.bf16.mxu0 0
      %2973 = vmatpush1.bf16.msra.mxu0 0
      %2974 = vmatprep.subr.bf16.mxu0 0
      %2975 = vmatpush1.bf16.msra.mxu0 0
      %2976 = vmatprep.subr.bf16.mxu0 0
      %2977 = vmatpush1.bf16.msra.mxu0 0
      %2978 = vmatprep.subr.bf16.mxu0 0
      %2979 = vmatpush1.bf16.msra.mxu0 0
      %2980 = vmatprep.subr.bf16.mxu0 0
      %2981 = vmatpush1.bf16.msra.mxu0 0
      %2982 = vmatprep.subr.bf16.mxu0 0
      %2983 = vmatpush1.bf16.msra.mxu0 0
      %2984 = vmatprep.subr.bf16.mxu0 0
      %2985 = vmatpush1.bf16.msra.mxu0 0
      %2986 = vmatprep.subr.bf16.mxu0 0
      %2987 = vmatpush1.bf16.msra.mxu0 0
      %2988 = vmatprep.subr.bf16.mxu0 0
      %2989 = vmatpush1.bf16.msra.mxu0 0
      %2990 = vmatprep.subr.bf16.mxu0 0
      %2991 = vmatpush1.bf16.msra.mxu0 0
      %2992 = vmatprep.subr.bf16.mxu0 0
      %2993 = vmatpush1.bf16.msra.mxu0 0
      %2994 = vmatprep.subr.bf16.mxu0 0
      %2995 = vmatpush1.bf16.msra.mxu0 0
      %2996 = vmatprep.subr.bf16.mxu0 0
      %2997 = vmatpush1.bf16.msra.mxu0 0
      %2998 = vmatprep.subr.bf16.mxu0 0
      %2999 = vmatpush1.bf16.msra.mxu0 0
      %3000 = vmatprep.subr.bf16.mxu0 0
      %3001 = vmatpush1.bf16.msra.mxu0 0
      %3002 = vmatprep.mubr.bf16.mxu0 0
      %3003 = vmatmul.mubr.bf16.gmra.mrb[0].mxu0 %v2918
      %v3004 = vpop.f32.mrb[0].mxu0
      %v3005 = vadd.f32 0.0, %v3004
      %v3006 = vpop.f32.mrb[0].mxu0
      %v3007 = vpop.f32.mrb[0].mxu0
      %v3008 = vpop.f32.mrb[0].mxu0
      %3009 = vdwg.mxu0
      %v3010 = vadd.f32 %v2901, %v2964
      %v3011 = vadd.f32 %v2902, %v2966
      %v3012 = vadd.f32 %v2903, %v3005
      %v3013 = vld [vmem:[%s2 + $0x64] sm:$0xf]
      %3014 = vrot.lane.b32.xlu0 %v296, 58
      %v3015 = vpop.permute.xlu0 %3014
      %3016 = vrot.lane.b32.xlu0 %v297, 58
      %v3017 = vpop.permute.xlu0 %3016
      %3018 = vrot.lane.b32.xlu0 %v298, 58
      %v3019 = vpop.permute.xlu0 %3018
      %3020 = vrot.lane.b32.xlu0 %v302, 58
      %v3021 = vpop.permute.xlu0 %3020
      %vm3022 = vcmask 474112
      %v3023 = vsel %vm3022, %v3015, %v3017
      %v3024 = vsel %vm3022, %v3017, %v3019
      %v3025 = vsel %vm3022, %v3019, %v3021
      %v3027 = vsel %vm318, %v3013, 0
      %v3030 = vsel %vm322, %v3023, 0
      %v3033 = vsel %vm322, %v3024, 0
      %v3036 = vsel %vm322, %v3025, 0
      %3038 = vmatprep.subr.bf16.mxu0 %v3033
      %3039 = vmatpush1.bf16.msra.mxu0 %v3030
      %3040 = vmatprep.subr.bf16.mxu0 0
      %3041 = vmatpush1.bf16.msra.mxu0 0
      %3042 = vmatprep.subr.bf16.mxu0 0
      %3043 = vmatpush1.bf16.msra.mxu0 0
      %3044 = vmatprep.subr.bf16.mxu0 0
      %3045 = vmatpush1.bf16.msra.mxu0 0
      %3046 = vmatprep.subr.bf16.mxu0 0
      %3047 = vmatpush1.bf16.msra.mxu0 0
      %3048 = vmatprep.subr.bf16.mxu0 0
      %3049 = vmatpush1.bf16.msra.mxu0 0
      %3050 = vmatprep.subr.bf16.mxu0 0
      %3051 = vmatpush1.bf16.msra.mxu0 0
      %3052 = vmatprep.subr.bf16.mxu0 0
      %3053 = vmatpush1.bf16.msra.mxu0 0
      %3054 = vmatprep.subr.bf16.mxu0 0
      %3055 = vmatpush1.bf16.msra.mxu0 0
      %3056 = vmatprep.subr.bf16.mxu0 0
      %3057 = vmatpush1.bf16.msra.mxu0 0
      %3058 = vmatprep.subr.bf16.mxu0 0
      %3059 = vmatpush1.bf16.msra.mxu0 0
      %3060 = vmatprep.subr.bf16.mxu0 0
      %3061 = vmatpush1.bf16.msra.mxu0 0
      %3062 = vmatprep.subr.bf16.mxu0 0
      %3063 = vmatpush1.bf16.msra.mxu0 0
      %3064 = vmatprep.subr.bf16.mxu0 0
      %3065 = vmatpush1.bf16.msra.mxu0 0
      %3066 = vmatprep.subr.bf16.mxu0 0
      %3067 = vmatpush1.bf16.msra.mxu0 0
      %3068 = vmatprep.subr.bf16.mxu0 0
      %3069 = vmatpush1.bf16.msra.mxu0 0
      %3070 = vmatprep.mubr.bf16.mxu0 0
      %3071 = vmatmul.mubr.bf16.gmra.mrb[0].mxu0 %v3027
      %v3072 = vpop.f32.mrb[0].mxu0
      %v3073 = vadd.f32 0.0, %v3072
      %v3074 = vpop.f32.mrb[0].mxu0
      %v3075 = vadd.f32 0.0, %v3074
      %v3076 = vpop.f32.mrb[0].mxu0
      %v3077 = vpop.f32.mrb[0].mxu0
      %3078 = vdwg.mxu0
      %3079 = vmatprep.subr.bf16.mxu0 0
      %3080 = vmatpush1.bf16.msra.mxu0 %v3036
      %3081 = vmatprep.subr.bf16.mxu0 0
      %3082 = vmatpush1.bf16.msra.mxu0 0
      %3083 = vmatprep.subr.bf16.mxu0 0
      %3084 = vmatpush1.bf16.msra.mxu0 0
      %3085 = vmatprep.subr.bf16.mxu0 0
      %3086 = vmatpush1.bf16.msra.mxu0 0
      %3087 = vmatprep.subr.bf16.mxu0 0
      %3088 = vmatpush1.bf16.msra.mxu0 0
      %3089 = vmatprep.subr.bf16.mxu0 0
      %3090 = vmatpush1.bf16.msra.mxu0 0
      %3091 = vmatprep.subr.bf16.mxu0 0
      %3092 = vmatpush1.bf16.msra.mxu0 0
      %3093 = vmatprep.subr.bf16.mxu0 0
      %3094 = vmatpush1.bf16.msra.mxu0 0
      %3095 = vmatprep.subr.bf16.mxu0 0
      %3096 = vmatpush1.bf16.msra.mxu0 0
      %3097 = vmatprep.subr.bf16.mxu0 0
      %3098 = vmatpush1.bf16.msra.mxu0 0
      %3099 = vmatprep.subr.bf16.mxu0 0
      %3100 = vmatpush1.bf16.msra.mxu0 0
      %3101 = vmatprep.subr.bf16.mxu0 0
      %3102 = vmatpush1.bf16.msra.mxu0 0
      %3103 = vmatprep.subr.bf16.mxu0 0
      %3104 = vmatpush1.bf16.msra.mxu0 0
      %3105 = vmatprep.subr.bf16.mxu0 0
      %3106 = vmatpush1.bf16.msra.mxu0 0
      %3107 = vmatprep.subr.bf16.mxu0 0
      %3108 = vmatpush1.bf16.msra.mxu0 0
      %3109 = vmatprep.subr.bf16.mxu0 0
      %3110 = vmatpush1.bf16.msra.mxu0 0
      %3111 = vmatprep.mubr.bf16.mxu0 0
      %3112 = vmatmul.mubr.bf16.gmra.mrb[0].mxu0 %v3027
      %v3113 = vpop.f32.mrb[0].mxu0
      %v3114 = vadd.f32 0.0, %v3113
      %v3115 = vpop.f32.mrb[0].mxu0
      %v3116 = vpop.f32.mrb[0].mxu0
      %v3117 = vpop.f32.mrb[0].mxu0
      %3118 = vdwg.mxu0
      %v3119 = vadd.f32 %v3010, %v3073
      %v3120 = vadd.f32 %v3011, %v3075
      %v3121 = vadd.f32 %v3012, %v3114
      %v3122 = vld [vmem:[%s2 + $0x68] sm:$0xf]
      %3123 = vrot.lane.b32.xlu0 %v296, 57
      %v3124 = vpop.permute.xlu0 %3123
      %3125 = vrot.lane.b32.xlu0 %v297, 57
      %v3126 = vpop.permute.xlu0 %3125
      %3127 = vrot.lane.b32.xlu0 %v298, 57
      %v3128 = vpop.permute.xlu0 %3127
      %3129 = vrot.lane.b32.xlu0 %v302, 57
      %v3130 = vpop.permute.xlu0 %3129
      %vm3131 = vcmask 465920
      %v3132 = vsel %vm3131, %v3124, %v3126
      %v3133 = vsel %vm3131, %v3126, %v3128
      %v3134 = vsel %vm3131, %v3128, %v3130
      %v3136 = vsel %vm318, %v3122, 0
      %v3139 = vsel %vm322, %v3132, 0
      %v3142 = vsel %vm322, %v3133, 0
      %v3145 = vsel %vm322, %v3134, 0
      %3147 = vmatprep.subr.bf16.mxu0 %v3142
      %3148 = vmatpush1.bf16.msra.mxu0 %v3139
      %3149 = vmatprep.subr.bf16.mxu0 0
      %3150 = vmatpush1.bf16.msra.mxu0 0
      %3151 = vmatprep.subr.bf16.mxu0 0
      %3152 = vmatpush1.bf16.msra.mxu0 0
      %3153 = vmatprep.subr.bf16.mxu0 0
      %3154 = vmatpush1.bf16.msra.mxu0 0
      %3155 = vmatprep.subr.bf16.mxu0 0
      %3156 = vmatpush1.bf16.msra.mxu0 0
      %3157 = vmatprep.subr.bf16.mxu0 0
      %3158 = vmatpush1.bf16.msra.mxu0 0
      %3159 = vmatprep.subr.bf16.mxu0 0
      %3160 = vmatpush1.bf16.msra.mxu0 0
      %3161 = vmatprep.subr.bf16.mxu0 0
      %3162 = vmatpush1.bf16.msra.mxu0 0
      %3163 = vmatprep.subr.bf16.mxu0 0
      %3164 = vmatpush1.bf16.msra.mxu0 0
      %3165 = vmatprep.subr.bf16.mxu0 0
      %3166 = vmatpush1.bf16.msra.mxu0 0
      %3167 = vmatprep.subr.bf16.mxu0 0
      %3168 = vmatpush1.bf16.msra.mxu0 0
      %3169 = vmatprep.subr.bf16.mxu0 0
      %3170 = vmatpush1.bf16.msra.mxu0 0
      %3171 = vmatprep.subr.bf16.mxu0 0
      %3172 = vmatpush1.bf16.msra.mxu0 0
      %3173 = vmatprep.subr.bf16.mxu0 0
      %3174 = vmatpush1.bf16.msra.mxu0 0
      %3175 = vmatprep.subr.bf16.mxu0 0
      %3176 = vmatpush1.bf16.msra.mxu0 0
      %3177 = vmatprep.subr.bf16.mxu0 0
      %3178 = vmatpush1.bf16.msra.mxu0 0
      %3179 = vmatprep.mubr.bf16.mxu0 0
      %3180 = vmatmul.mubr.bf16.gmra.mrb[0].mxu0 %v3136
      %v3181 = vpop.f32.mrb[0].mxu0
      %v3182 = vadd.f32 0.0, %v3181
      %v3183 = vpop.f32.mrb[0].mxu0
      %v3184 = vadd.f32 0.0, %v3183
      %v3185 = vpop.f32.mrb[0].mxu0
      %v3186 = vpop.f32.mrb[0].mxu0
      %3187 = vdwg.mxu0
      %3188 = vmatprep.subr.bf16.mxu0 0
      %3189 = vmatpush1.bf16.msra.mxu0 %v3145
      %3190 = vmatprep.subr.bf16.mxu0 0
      %3191 = vmatpush1.bf16.msra.mxu0 0
      %3192 = vmatprep.subr.bf16.mxu0 0
      %3193 = vmatpush1.bf16.msra.mxu0 0
      %3194 = vmatprep.subr.bf16.mxu0 0
      %3195 = vmatpush1.bf16.msra.mxu0 0
      %3196 = vmatprep.subr.bf16.mxu0 0
      %3197 = vmatpush1.bf16.msra.mxu0 0
      %3198 = vmatprep.subr.bf16.mxu0 0
      %3199 = vmatpush1.bf16.msra.mxu0 0
      %3200 = vmatprep.subr.bf16.mxu0 0
      %3201 = vmatpush1.bf16.msra.mxu0 0
      %3202 = vmatprep.subr.bf16.mxu0 0
      %3203 = vmatpush1.bf16.msra.mxu0 0
      %3204 = vmatprep.subr.bf16.mxu0 0
      %3205 = vmatpush1.bf16.msra.mxu0 0
      %3206 = vmatprep.subr.bf16.mxu0 0
      %3207 = vmatpush1.bf16.msra.mxu0 0
      %3208 = vmatprep.subr.bf16.mxu0 0
      %3209 = vmatpush1.bf16.msra.mxu0 0
      %3210 = vmatprep.subr.bf16.mxu0 0
      %3211 = vmatpush1.bf16.msra.mxu0 0
      %3212 = vmatprep.subr.bf16.mxu0 0
      %3213 = vmatpush1.bf16.msra.mxu0 0
      %3214 = vmatprep.subr.bf16.mxu0 0
      %3215 = vmatpush1.bf16.msra.mxu0 0
      %3216 = vmatprep.subr.bf16.mxu0 0
      %3217 = vmatpush1.bf16.msra.mxu0 0
      %3218 = vmatprep.subr.bf16.mxu0 0
      %3219 = vmatpush1.bf16.msra.mxu0 0
      %3220 = vmatprep.mubr.bf16.mxu0 0
      %3221 = vmatmul.mubr.bf16.gmra.mrb[0].mxu0 %v3136
      %v3222 = vpop.f32.mrb[0].mxu0
      %v3223 = vadd.f32 0.0, %v3222
      %v3224 = vpop.f32.mrb[0].mxu0
      %v3225 = vpop.f32.mrb[0].mxu0
      %v3226 = vpop.f32.mrb[0].mxu0
      %3227 = vdwg.mxu0
      %v3228 = vadd.f32 %v3119, %v3182
      %v3229 = vadd.f32 %v3120, %v3184
      %v3230 = vadd.f32 %v3121, %v3223
      %v3231 = vld [vmem:[%s2 + $0x6c] sm:$0xf]
      %3232 = vrot.lane.b32.xlu0 %v296, 56
      %v3233 = vpop.permute.xlu0 %3232
      %3234 = vrot.lane.b32.xlu0 %v297, 56
      %v3235 = vpop.permute.xlu0 %3234
      %3236 = vrot.lane.b32.xlu0 %v298, 56
      %v3237 = vpop.permute.xlu0 %3236
      %3238 = vrot.lane.b32.xlu0 %v302, 56
      %v3239 = vpop.permute.xlu0 %3238
      %vm3240 = vcmask 457728
      %v3241 = vsel %vm3240, %v3233, %v3235
      %v3242 = vsel %vm3240, %v3235, %v3237
      %v3243 = vsel %vm3240, %v3237, %v3239
      %v3245 = vsel %vm318, %v3231, 0
      %v3248 = vsel %vm322, %v3241, 0
      %v3251 = vsel %vm322, %v3242, 0
      %v3254 = vsel %vm322, %v3243, 0
      %3256 = vmatprep.subr.bf16.mxu0 %v3251
      %3257 = vmatpush1.bf16.msra.mxu0 %v3248
      %3258 = vmatprep.subr.bf16.mxu0 0
      %3259 = vmatpush1.bf16.msra.mxu0 0
      %3260 = vmatprep.subr.bf16.mxu0 0
      %3261 = vmatpush1.bf16.msra.mxu0 0
      %3262 = vmatprep.subr.bf16.mxu0 0
      %3263 = vmatpush1.bf16.msra.mxu0 0
      %3264 = vmatprep.subr.bf16.mxu0 0
      %3265 = vmatpush1.bf16.msra.mxu0 0
      %3266 = vmatprep.subr.bf16.mxu0 0
      %3267 = vmatpush1.bf16.msra.mxu0 0
      %3268 = vmatprep.subr.bf16.mxu0 0
      %3269 = vmatpush1.bf16.msra.mxu0 0
      %3270 = vmatprep.subr.bf16.mxu0 0
      %3271 = vmatpush1.bf16.msra.mxu0 0
      %3272 = vmatprep.subr.bf16.mxu0 0
      %3273 = vmatpush1.bf16.msra.mxu0 0
      %3274 = vmatprep.subr.bf16.mxu0 0
      %3275 = vmatpush1.bf16.msra.mxu0 0
      %3276 = vmatprep.subr.bf16.mxu0 0
      %3277 = vmatpush1.bf16.msra.mxu0 0
      %3278 = vmatprep.subr.bf16.mxu0 0
      %3279 = vmatpush1.bf16.msra.mxu0 0
      %3280 = vmatprep.subr.bf16.mxu0 0
      %3281 = vmatpush1.bf16.msra.mxu0 0
      %3282 = vmatprep.subr.bf16.mxu0 0
      %3283 = vmatpush1.bf16.msra.mxu0 0
      %3284 = vmatprep.subr.bf16.mxu0 0
      %3285 = vmatpush1.bf16.msra.mxu0 0
      %3286 = vmatprep.subr.bf16.mxu0 0
      %3287 = vmatpush1.bf16.msra.mxu0 0
      %3288 = vmatprep.mubr.bf16.mxu0 0
      %3289 = vmatmul.mubr.bf16.gmra.mrb[0].mxu0 %v3245
      %v3290 = vpop.f32.mrb[0].mxu0
      %v3291 = vadd.f32 0.0, %v3290
      %v3292 = vpop.f32.mrb[0].mxu0
      %v3293 = vadd.f32 0.0, %v3292
      %v3294 = vpop.f32.mrb[0].mxu0
      %v3295 = vpop.f32.mrb[0].mxu0
      %3296 = vdwg.mxu0
      %3297 = vmatprep.subr.bf16.mxu0 0
      %3298 = vmatpush1.bf16.msra.mxu0 %v3254
      %3299 = vmatprep.subr.bf16.mxu0 0
      %3300 = vmatpush1.bf16.msra.mxu0 0
      %3301 = vmatprep.subr.bf16.mxu0 0
      %3302 = vmatpush1.bf16.msra.mxu0 0
      %3303 = vmatprep.subr.bf16.mxu0 0
      %3304 = vmatpush1.bf16.msra.mxu0 0
      %3305 = vmatprep.subr.bf16.mxu0 0
      %3306 = vmatpush1.bf16.msra.mxu0 0
      %3307 = vmatprep.subr.bf16.mxu0 0
      %3308 = vmatpush1.bf16.msra.mxu0 0
      %3309 = vmatprep.subr.bf16.mxu0 0
      %3310 = vmatpush1.bf16.msra.mxu0 0
      %3311 = vmatprep.subr.bf16.mxu0 0
      %3312 = vmatpush1.bf16.msra.mxu0 0
      %3313 = vmatprep.subr.bf16.mxu0 0
      %3314 = vmatpush1.bf16.msra.mxu0 0
      %3315 = vmatprep.subr.bf16.mxu0 0
      %3316 = vmatpush1.bf16.msra.mxu0 0
      %3317 = vmatprep.subr.bf16.mxu0 0
      %3318 = vmatpush1.bf16.msra.mxu0 0
      %3319 = vmatprep.subr.bf16.mxu0 0
      %3320 = vmatpush1.bf16.msra.mxu0 0
      %3321 = vmatprep.subr.bf16.mxu0 0
      %3322 = vmatpush1.bf16.msra.mxu0 0
      %3323 = vmatprep.subr.bf16.mxu0 0
      %3324 = vmatpush1.bf16.msra.mxu0 0
      %3325 = vmatprep.subr.bf16.mxu0 0
      %3326 = vmatpush1.bf16.msra.mxu0 0
      %3327 = vmatprep.subr.bf16.mxu0 0
      %3328 = vmatpush1.bf16.msra.mxu0 0
      %3329 = vmatprep.mubr.bf16.mxu0 0
      %3330 = vmatmul.mubr.bf16.gmra.mrb[0].mxu0 %v3245
      %v3331 = vpop.f32.mrb[0].mxu0
      %v3332 = vadd.f32 0.0, %v3331
      %v3333 = vpop.f32.mrb[0].mxu0
      %v3334 = vpop.f32.mrb[0].mxu0
      %v3335 = vpop.f32.mrb[0].mxu0
      %3336 = vdwg.mxu0
      %v3337 = vadd.f32 %v3228, %v3291
      %v3338 = vadd.f32 %v3229, %v3293
      %v3339 = vadd.f32 %v3230, %v3332
      %v3340 = vld [vmem:[%s2 + $0x70] sm:$0xf]
      %3341 = vrot.lane.b32.xlu0 %v296, 40
      %v3342 = vpop.permute.xlu0 %3341
      %3343 = vrot.lane.b32.xlu0 %v297, 40
      %v3344 = vpop.permute.xlu0 %3343
      %3345 = vrot.lane.b32.xlu0 %v298, 40
      %v3346 = vpop.permute.xlu0 %3345
      %3347 = vrot.lane.b32.xlu0 %v302, 40
      %v3348 = vpop.permute.xlu0 %3347
      %vm3349 = vcmask 326656
      %v3350 = vsel %vm3349, %v3342, %v3344
      %v3351 = vsel %vm3349, %v3344, %v3346
      %v3352 = vsel %vm3349, %v3346, %v3348
      %v3354 = vsel %vm318, %v3340, 0
      %v3357 = vsel %vm322, %v3350, 0
      %v3360 = vsel %vm322, %v3351, 0
      %v3363 = vsel %vm322, %v3352, 0
      %3365 = vmatprep.subr.bf16.mxu0 %v3360
      %3366 = vmatpush1.bf16.msra.mxu0 %v3357
      %3367 = vmatprep.subr.bf16.mxu0 0
      %3368 = vmatpush1.bf16.msra.mxu0 0
      %3369 = vmatprep.subr.bf16.mxu0 0
      %3370 = vmatpush1.bf16.msra.mxu0 0
      %3371 = vmatprep.subr.bf16.mxu0 0
      %3372 = vmatpush1.bf16.msra.mxu0 0
      %3373 = vmatprep.subr.bf16.mxu0 0
      %3374 = vmatpush1.bf16.msra.mxu0 0
      %3375 = vmatprep.subr.bf16.mxu0 0
      %3376 = vmatpush1.bf16.msra.mxu0 0
      %3377 = vmatprep.subr.bf16.mxu0 0
      %3378 = vmatpush1.bf16.msra.mxu0 0
      %3379 = vmatprep.subr.bf16.mxu0 0
      %3380 = vmatpush1.bf16.msra.mxu0 0
      %3381 = vmatprep.subr.bf16.mxu0 0
      %3382 = vmatpush1.bf16.msra.mxu0 0
      %3383 = vmatprep.subr.bf16.mxu0 0
      %3384 = vmatpush1.bf16.msra.mxu0 0
      %3385 = vmatprep.subr.bf16.mxu0 0
      %3386 = vmatpush1.bf16.msra.mxu0 0
      %3387 = vmatprep.subr.bf16.mxu0 0
      %3388 = vmatpush1.bf16.msra.mxu0 0
      %3389 = vmatprep.subr.bf16.mxu0 0
      %3390 = vmatpush1.bf16.msra.mxu0 0
      %3391 = vmatprep.subr.bf16.mxu0 0
      %3392 = vmatpush1.bf16.msra.mxu0 0
      %3393 = vmatprep.subr.bf16.mxu0 0
      %3394 = vmatpush1.bf16.msra.mxu0 0
      %3395 = vmatprep.subr.bf16.mxu0 0
      %3396 = vmatpush1.bf16.msra.mxu0 0
      %3397 = vmatprep.mubr.bf16.mxu0 0
      %3398 = vmatmul.mubr.bf16.gmra.mrb[0].mxu0 %v3354
      %v3399 = vpop.f32.mrb[0].mxu0
      %v3400 = vadd.f32 0.0, %v3399
      %v3401 = vpop.f32.mrb[0].mxu0
      %v3402 = vadd.f32 0.0, %v3401
      %v3403 = vpop.f32.mrb[0].mxu0
      %v3404 = vpop.f32.mrb[0].mxu0
      %3405 = vdwg.mxu0
      %3406 = vmatprep.subr.bf16.mxu0 0
      %3407 = vmatpush1.bf16.msra.mxu0 %v3363
      %3408 = vmatprep.subr.bf16.mxu0 0
      %3409 = vmatpush1.bf16.msra.mxu0 0
      %3410 = vmatprep.subr.bf16.mxu0 0
      %3411 = vmatpush1.bf16.msra.mxu0 0
      %3412 = vmatprep.subr.bf16.mxu0 0
      %3413 = vmatpush1.bf16.msra.mxu0 0
      %3414 = vmatprep.subr.bf16.mxu0 0
      %3415 = vmatpush1.bf16.msra.mxu0 0
      %3416 = vmatprep.subr.bf16.mxu0 0
      %3417 = vmatpush1.bf16.msra.mxu0 0
      %3418 = vmatprep.subr.bf16.mxu0 0
      %3419 = vmatpush1.bf16.msra.mxu0 0
      %3420 = vmatprep.subr.bf16.mxu0 0
      %3421 = vmatpush1.bf16.msra.mxu0 0
      %3422 = vmatprep.subr.bf16.mxu0 0
      %3423 = vmatpush1.bf16.msra.mxu0 0
      %3424 = vmatprep.subr.bf16.mxu0 0
      %3425 = vmatpush1.bf16.msra.mxu0 0
      %3426 = vmatprep.subr.bf16.mxu0 0
      %3427 = vmatpush1.bf16.msra.mxu0 0
      %3428 = vmatprep.subr.bf16.mxu0 0
      %3429 = vmatpush1.bf16.msra.mxu0 0
      %3430 = vmatprep.subr.bf16.mxu0 0
      %3431 = vmatpush1.bf16.msra.mxu0 0
      %3432 = vmatprep.subr.bf16.mxu0 0
      %3433 = vmatpush1.bf16.msra.mxu0 0
      %3434 = vmatprep.subr.bf16.mxu0 0
      %3435 = vmatpush1.bf16.msra.mxu0 0
      %3436 = vmatprep.subr.bf16.mxu0 0
      %3437 = vmatpush1.bf16.msra.mxu0 0
      %3438 = vmatprep.mubr.bf16.mxu0 0
      %3439 = vmatmul.mubr.bf16.gmra.mrb[0].mxu0 %v3354
      %v3440 = vpop.f32.mrb[0].mxu0
      %v3441 = vadd.f32 0.0, %v3440
      %v3442 = vpop.f32.mrb[0].mxu0
      %v3443 = vpop.f32.mrb[0].mxu0
      %v3444 = vpop.f32.mrb[0].mxu0
      %3445 = vdwg.mxu0
      %v3446 = vadd.f32 %v3337, %v3400
      %v3447 = vadd.f32 %v3338, %v3402
      %v3448 = vadd.f32 %v3339, %v3441
      %v3449 = vld [vmem:[%s2 + $0x74] sm:$0xf]
      %3450 = vrot.lane.b32.xlu0 %v296, 39
      %v3451 = vpop.permute.xlu0 %3450
      %3452 = vrot.lane.b32.xlu0 %v297, 39
      %v3453 = vpop.permute.xlu0 %3452
      %3454 = vrot.lane.b32.xlu0 %v298, 39
      %v3455 = vpop.permute.xlu0 %3454
      %3456 = vrot.lane.b32.xlu0 %v302, 39
      %v3457 = vpop.permute.xlu0 %3456
      %vm3458 = vcmask 318464
      %v3459 = vsel %vm3458, %v3451, %v3453
      %v3460 = vsel %vm3458, %v3453, %v3455
      %v3461 = vsel %vm3458, %v3455, %v3457
      %v3463 = vsel %vm318, %v3449, 0
      %v3466 = vsel %vm322, %v3459, 0
      %v3469 = vsel %vm322, %v3460, 0
      %v3472 = vsel %vm322, %v3461, 0
      %3474 = vmatprep.subr.bf16.mxu0 %v3469
      %3475 = vmatpush1.bf16.msra.mxu0 %v3466
      %3476 = vmatprep.subr.bf16.mxu0 0
      %3477 = vmatpush1.bf16.msra.mxu0 0
      %3478 = vmatprep.subr.bf16.mxu0 0
      %3479 = vmatpush1.bf16.msra.mxu0 0
      %3480 = vmatprep.subr.bf16.mxu0 0
      %3481 = vmatpush1.bf16.msra.mxu0 0
      %3482 = vmatprep.subr.bf16.mxu0 0
      %3483 = vmatpush1.bf16.msra.mxu0 0
      %3484 = vmatprep.subr.bf16.mxu0 0
      %3485 = vmatpush1.bf16.msra.mxu0 0
      %3486 = vmatprep.subr.bf16.mxu0 0
      %3487 = vmatpush1.bf16.msra.mxu0 0
      %3488 = vmatprep.subr.bf16.mxu0 0
      %3489 = vmatpush1.bf16.msra.mxu0 0
      %3490 = vmatprep.subr.bf16.mxu0 0
      %3491 = vmatpush1.bf16.msra.mxu0 0
      %3492 = vmatprep.subr.bf16.mxu0 0
      %3493 = vmatpush1.bf16.msra.mxu0 0
      %3494 = vmatprep.subr.bf16.mxu0 0
      %3495 = vmatpush1.bf16.msra.mxu0 0
      %3496 = vmatprep.subr.bf16.mxu0 0
      %3497 = vmatpush1.bf16.msra.mxu0 0
      %3498 = vmatprep.subr.bf16.mxu0 0
      %3499 = vmatpush1.bf16.msra.mxu0 0
      %3500 = vmatprep.subr.bf16.mxu0 0
      %3501 = vmatpush1.bf16.msra.mxu0 0
      %3502 = vmatprep.subr.bf16.mxu0 0
      %3503 = vmatpush1.bf16.msra.mxu0 0
      %3504 = vmatprep.subr.bf16.mxu0 0
      %3505 = vmatpush1.bf16.msra.mxu0 0
      %3506 = vmatprep.mubr.bf16.mxu0 0
      %3507 = vmatmul.mubr.bf16.gmra.mrb[0].mxu0 %v3463
      %v3508 = vpop.f32.mrb[0].mxu0
      %v3509 = vadd.f32 0.0, %v3508
      %v3510 = vpop.f32.mrb[0].mxu0
      %v3511 = vadd.f32 0.0, %v3510
      %v3512 = vpop.f32.mrb[0].mxu0
      %v3513 = vpop.f32.mrb[0].mxu0
      %3514 = vdwg.mxu0
      %3515 = vmatprep.subr.bf16.mxu0 0
      %3516 = vmatpush1.bf16.msra.mxu0 %v3472
      %3517 = vmatprep.subr.bf16.mxu0 0
      %3518 = vmatpush1.bf16.msra.mxu0 0
      %3519 = vmatprep.subr.bf16.mxu0 0
      %3520 = vmatpush1.bf16.msra.mxu0 0
      %3521 = vmatprep.subr.bf16.mxu0 0
      %3522 = vmatpush1.bf16.msra.mxu0 0
      %3523 = vmatprep.subr.bf16.mxu0 0
      %3524 = vmatpush1.bf16.msra.mxu0 0
      %3525 = vmatprep.subr.bf16.mxu0 0
      %3526 = vmatpush1.bf16.msra.mxu0 0
      %3527 = vmatprep.subr.bf16.mxu0 0
      %3528 = vmatpush1.bf16.msra.mxu0 0
      %3529 = vmatprep.subr.bf16.mxu0 0
      %3530 = vmatpush1.bf16.msra.mxu0 0
      %3531 = vmatprep.subr.bf16.mxu0 0
      %3532 = vmatpush1.bf16.msra.mxu0 0
      %3533 = vmatprep.subr.bf16.mxu0 0
      %3534 = vmatpush1.bf16.msra.mxu0 0
      %3535 = vmatprep.subr.bf16.mxu0 0
      %3536 = vmatpush1.bf16.msra.mxu0 0
      %3537 = vmatprep.subr.bf16.mxu0 0
      %3538 = vmatpush1.bf16.msra.mxu0 0
      %3539 = vmatprep.subr.bf16.mxu0 0
      %3540 = vmatpush1.bf16.msra.mxu0 0
      %3541 = vmatprep.subr.bf16.mxu0 0
      %3542 = vmatpush1.bf16.msra.mxu0 0
      %3543 = vmatprep.subr.bf16.mxu0 0
      %3544 = vmatpush1.bf16.msra.mxu0 0
      %3545 = vmatprep.subr.bf16.mxu0 0
      %3546 = vmatpush1.bf16.msra.mxu0 0
      %3547 = vmatprep.mubr.bf16.mxu0 0
      %3548 = vmatmul.mubr.bf16.gmra.mrb[0].mxu0 %v3463
      %v3549 = vpop.f32.mrb[0].mxu0
      %v3550 = vadd.f32 0.0, %v3549
      %v3551 = vpop.f32.mrb[0].mxu0
      %v3552 = vpop.f32.mrb[0].mxu0
      %v3553 = vpop.f32.mrb[0].mxu0
      %3554 = vdwg.mxu0
      %v3555 = vadd.f32 %v3446, %v3509
      %v3556 = vadd.f32 %v3447, %v3511
      %v3557 = vadd.f32 %v3448, %v3550
      %v3558 = vld [vmem:[%s2 + $0x78] sm:$0xf]
      %3559 = vrot.lane.b32.xlu0 %v296, 38
      %v3560 = vpop.permute.xlu0 %3559
      %3561 = vrot.lane.b32.xlu0 %v297, 38
      %v3562 = vpop.permute.xlu0 %3561
      %3563 = vrot.lane.b32.xlu0 %v298, 38
      %v3564 = vpop.permute.xlu0 %3563
      %3565 = vrot.lane.b32.xlu0 %v302, 38
      %v3566 = vpop.permute.xlu0 %3565
      %vm3567 = vcmask 310272
      %v3568 = vsel %vm3567, %v3560, %v3562
      %v3569 = vsel %vm3567, %v3562, %v3564
      %v3570 = vsel %vm3567, %v3564, %v3566
      %v3572 = vsel %vm318, %v3558, 0
      %v3575 = vsel %vm322, %v3568, 0
      %v3578 = vsel %vm322, %v3569, 0
      %v3581 = vsel %vm322, %v3570, 0
      %3583 = vmatprep.subr.bf16.mxu0 %v3578
      %3584 = vmatpush1.bf16.msra.mxu0 %v3575
      %3585 = vmatprep.subr.bf16.mxu0 0
      %3586 = vmatpush1.bf16.msra.mxu0 0
      %3587 = vmatprep.subr.bf16.mxu0 0
      %3588 = vmatpush1.bf16.msra.mxu0 0
      %3589 = vmatprep.subr.bf16.mxu0 0
      %3590 = vmatpush1.bf16.msra.mxu0 0
      %3591 = vmatprep.subr.bf16.mxu0 0
      %3592 = vmatpush1.bf16.msra.mxu0 0
      %3593 = vmatprep.subr.bf16.mxu0 0
      %3594 = vmatpush1.bf16.msra.mxu0 0
      %3595 = vmatprep.subr.bf16.mxu0 0
      %3596 = vmatpush1.bf16.msra.mxu0 0
      %3597 = vmatprep.subr.bf16.mxu0 0
      %3598 = vmatpush1.bf16.msra.mxu0 0
      %3599 = vmatprep.subr.bf16.mxu0 0
      %3600 = vmatpush1.bf16.msra.mxu0 0
      %3601 = vmatprep.subr.bf16.mxu0 0
      %3602 = vmatpush1.bf16.msra.mxu0 0
      %3603 = vmatprep.subr.bf16.mxu0 0
      %3604 = vmatpush1.bf16.msra.mxu0 0
      %3605 = vmatprep.subr.bf16.mxu0 0
      %3606 = vmatpush1.bf16.msra.mxu0 0
      %3607 = vmatprep.subr.bf16.mxu0 0
      %3608 = vmatpush1.bf16.msra.mxu0 0
      %3609 = vmatprep.subr.bf16.mxu0 0
      %3610 = vmatpush1.bf16.msra.mxu0 0
      %3611 = vmatprep.subr.bf16.mxu0 0
      %3612 = vmatpush1.bf16.msra.mxu0 0
      %3613 = vmatprep.subr.bf16.mxu0 0
      %3614 = vmatpush1.bf16.msra.mxu0 0
      %3615 = vmatprep.mubr.bf16.mxu0 0
      %3616 = vmatmul.mubr.bf16.gmra.mrb[0].mxu0 %v3572
      %v3617 = vpop.f32.mrb[0].mxu0
      %v3618 = vadd.f32 0.0, %v3617
      %v3619 = vpop.f32.mrb[0].mxu0
      %v3620 = vadd.f32 0.0, %v3619
      %v3621 = vpop.f32.mrb[0].mxu0
      %v3622 = vpop.f32.mrb[0].mxu0
      %3623 = vdwg.mxu0
      %3624 = vmatprep.subr.bf16.mxu0 0
      %3625 = vmatpush1.bf16.msra.mxu0 %v3581
      %3626 = vmatprep.subr.bf16.mxu0 0
      %3627 = vmatpush1.bf16.msra.mxu0 0
      %3628 = vmatprep.subr.bf16.mxu0 0
      %3629 = vmatpush1.bf16.msra.mxu0 0
      %3630 = vmatprep.subr.bf16.mxu0 0
      %3631 = vmatpush1.bf16.msra.mxu0 0
      %3632 = vmatprep.subr.bf16.mxu0 0
      %3633 = vmatpush1.bf16.msra.mxu0 0
      %3634 = vmatprep.subr.bf16.mxu0 0
      %3635 = vmatpush1.bf16.msra.mxu0 0
      %3636 = vmatprep.subr.bf16.mxu0 0
      %3637 = vmatpush1.bf16.msra.mxu0 0
      %3638 = vmatprep.subr.bf16.mxu0 0
      %3639 = vmatpush1.bf16.msra.mxu0 0
      %3640 = vmatprep.subr.bf16.mxu0 0
      %3641 = vmatpush1.bf16.msra.mxu0 0
      %3642 = vmatprep.subr.bf16.mxu0 0
      %3643 = vmatpush1.bf16.msra.mxu0 0
      %3644 = vmatprep.subr.bf16.mxu0 0
      %3645 = vmatpush1.bf16.msra.mxu0 0
      %3646 = vmatprep.subr.bf16.mxu0 0
      %3647 = vmatpush1.bf16.msra.mxu0 0
      %3648 = vmatprep.subr.bf16.mxu0 0
      %3649 = vmatpush1.bf16.msra.mxu0 0
      %3650 = vmatprep.subr.bf16.mxu0 0
      %3651 = vmatpush1.bf16.msra.mxu0 0
      %3652 = vmatprep.subr.bf16.mxu0 0
      %3653 = vmatpush1.bf16.msra.mxu0 0
      %3654 = vmatprep.subr.bf16.mxu0 0
      %3655 = vmatpush1.bf16.msra.mxu0 0
      %3656 = vmatprep.mubr.bf16.mxu0 0
      %3657 = vmatmul.mubr.bf16.gmra.mrb[0].mxu0 %v3572
      %v3658 = vpop.f32.mrb[0].mxu0
      %v3659 = vadd.f32 0.0, %v3658
      %v3660 = vpop.f32.mrb[0].mxu0
      %v3661 = vpop.f32.mrb[0].mxu0
      %v3662 = vpop.f32.mrb[0].mxu0
      %3663 = vdwg.mxu0
      %v3664 = vadd.f32 %v3555, %v3618
      %v3665 = vadd.f32 %v3556, %v3620
      %v3666 = vadd.f32 %v3557, %v3659
      %v3667 = vld [vmem:[%s2 + $0x7c] sm:$0xf]
      %3668 = vrot.lane.b32.xlu0 %v296, 37
      %v3669 = vpop.permute.xlu0 %3668
      %3670 = vrot.lane.b32.xlu0 %v297, 37
      %v3671 = vpop.permute.xlu0 %3670
      %3672 = vrot.lane.b32.xlu0 %v298, 37
      %v3673 = vpop.permute.xlu0 %3672
      %3674 = vrot.lane.b32.xlu0 %v302, 37
      %v3675 = vpop.permute.xlu0 %3674
      %vm3676 = vcmask 302080
      %v3677 = vsel %vm3676, %v3669, %v3671
      %v3678 = vsel %vm3676, %v3671, %v3673
      %v3679 = vsel %vm3676, %v3673, %v3675
      %v3681 = vsel %vm318, %v3667, 0
      %v3684 = vsel %vm322, %v3677, 0
      %v3687 = vsel %vm322, %v3678, 0
      %v3690 = vsel %vm322, %v3679, 0
      %3692 = vmatprep.subr.bf16.mxu0 %v3687
      %3693 = vmatpush1.bf16.msra.mxu0 %v3684
      %3694 = vmatprep.subr.bf16.mxu0 0
      %3695 = vmatpush1.bf16.msra.mxu0 0
      %3696 = vmatprep.subr.bf16.mxu0 0
      %3697 = vmatpush1.bf16.msra.mxu0 0
      %3698 = vmatprep.subr.bf16.mxu0 0
      %3699 = vmatpush1.bf16.msra.mxu0 0
      %3700 = vmatprep.subr.bf16.mxu0 0
      %3701 = vmatpush1.bf16.msra.mxu0 0
      %3702 = vmatprep.subr.bf16.mxu0 0
      %3703 = vmatpush1.bf16.msra.mxu0 0
      %3704 = vmatprep.subr.bf16.mxu0 0
      %3705 = vmatpush1.bf16.msra.mxu0 0
      %3706 = vmatprep.subr.bf16.mxu0 0
      %3707 = vmatpush1.bf16.msra.mxu0 0
      %3708 = vmatprep.subr.bf16.mxu0 0
      %3709 = vmatpush1.bf16.msra.mxu0 0
      %3710 = vmatprep.subr.bf16.mxu0 0
      %3711 = vmatpush1.bf16.msra.mxu0 0
      %3712 = vmatprep.subr.bf16.mxu0 0
      %3713 = vmatpush1.bf16.msra.mxu0 0
      %3714 = vmatprep.subr.bf16.mxu0 0
      %3715 = vmatpush1.bf16.msra.mxu0 0
      %3716 = vmatprep.subr.bf16.mxu0 0
      %3717 = vmatpush1.bf16.msra.mxu0 0
      %3718 = vmatprep.subr.bf16.mxu0 0
      %3719 = vmatpush1.bf16.msra.mxu0 0
      %3720 = vmatprep.subr.bf16.mxu0 0
      %3721 = vmatpush1.bf16.msra.mxu0 0
      %3722 = vmatprep.subr.bf16.mxu0 0
      %3723 = vmatpush1.bf16.msra.mxu0 0
      %3724 = vmatprep.mubr.bf16.mxu0 0
      %3725 = vmatmul.mubr.bf16.gmra.mrb[0].mxu0 %v3681
      %v3726 = vpop.f32.mrb[0].mxu0
      %v3727 = vadd.f32 0.0, %v3726
      %v3728 = vpop.f32.mrb[0].mxu0
      %v3729 = vadd.f32 0.0, %v3728
      %v3730 = vpop.f32.mrb[0].mxu0
      %v3731 = vpop.f32.mrb[0].mxu0
      %3732 = vdwg.mxu0
      %3733 = vmatprep.subr.bf16.mxu0 0
      %3734 = vmatpush1.bf16.msra.mxu0 %v3690
      %3735 = vmatprep.subr.bf16.mxu0 0
      %3736 = vmatpush1.bf16.msra.mxu0 0
      %3737 = vmatprep.subr.bf16.mxu0 0
      %3738 = vmatpush1.bf16.msra.mxu0 0
      %3739 = vmatprep.subr.bf16.mxu0 0
      %3740 = vmatpush1.bf16.msra.mxu0 0
      %3741 = vmatprep.subr.bf16.mxu0 0
      %3742 = vmatpush1.bf16.msra.mxu0 0
      %3743 = vmatprep.subr.bf16.mxu0 0
      %3744 = vmatpush1.bf16.msra.mxu0 0
      %3745 = vmatprep.subr.bf16.mxu0 0
      %3746 = vmatpush1.bf16.msra.mxu0 0
      %3747 = vmatprep.subr.bf16.mxu0 0
      %3748 = vmatpush1.bf16.msra.mxu0 0
      %3749 = vmatprep.subr.bf16.mxu0 0
      %3750 = vmatpush1.bf16.msra.mxu0 0
      %3751 = vmatprep.subr.bf16.mxu0 0
      %3752 = vmatpush1.bf16.msra.mxu0 0
      %3753 = vmatprep.subr.bf16.mxu0 0
      %3754 = vmatpush1.bf16.msra.mxu0 0
      %3755 = vmatprep.subr.bf16.mxu0 0
      %3756 = vmatpush1.bf16.msra.mxu0 0
      %3757 = vmatprep.subr.bf16.mxu0 0
      %3758 = vmatpush1.bf16.msra.mxu0 0
      %3759 = vmatprep.subr.bf16.mxu0 0
      %3760 = vmatpush1.bf16.msra.mxu0 0
      %3761 = vmatprep.subr.bf16.mxu0 0
      %3762 = vmatpush1.bf16.msra.mxu0 0
      %3763 = vmatprep.subr.bf16.mxu0 0
      %3764 = vmatpush1.bf16.msra.mxu0 0
      %3765 = vmatprep.mubr.bf16.mxu0 0
      %3766 = vmatmul.mubr.bf16.gmra.mrb[0].mxu0 %v3681
      %v3767 = vpop.f32.mrb[0].mxu0
      %v3768 = vadd.f32 0.0, %v3767
      %v3769 = vpop.f32.mrb[0].mxu0
      %v3770 = vpop.f32.mrb[0].mxu0
      %v3771 = vpop.f32.mrb[0].mxu0
      %3772 = vdwg.mxu0
      %v3773 = vadd.f32 %v3664, %v3727
      %v3774 = vadd.f32 %v3665, %v3729
      %v3775 = vadd.f32 %v3666, %v3768
      %v3776 = vld [vmem:[%s2 + $0x80] sm:$0xf]
      %3777 = vrot.lane.b32.xlu0 %v296, 36
      %v3778 = vpop.permute.xlu0 %3777
      %3779 = vrot.lane.b32.xlu0 %v297, 36
      %v3780 = vpop.permute.xlu0 %3779
      %3781 = vrot.lane.b32.xlu0 %v298, 36
      %v3782 = vpop.permute.xlu0 %3781
      %3783 = vrot.lane.b32.xlu0 %v302, 36
      %v3784 = vpop.permute.xlu0 %3783
      %vm3785 = vcmask 293888
      %v3786 = vsel %vm3785, %v3778, %v3780
      %v3787 = vsel %vm3785, %v3780, %v3782
      %v3788 = vsel %vm3785, %v3782, %v3784
      %v3790 = vsel %vm318, %v3776, 0
      %v3793 = vsel %vm322, %v3786, 0
      %v3796 = vsel %vm322, %v3787, 0
      %v3799 = vsel %vm322, %v3788, 0
      %3801 = vmatprep.subr.bf16.mxu0 %v3796
      %3802 = vmatpush1.bf16.msra.mxu0 %v3793
      %3803 = vmatprep.subr.bf16.mxu0 0
      %3804 = vmatpush1.bf16.msra.mxu0 0
      %3805 = vmatprep.subr.bf16.mxu0 0
      %3806 = vmatpush1.bf16.msra.mxu0 0
      %3807 = vmatprep.subr.bf16.mxu0 0
      %3808 = vmatpush1.bf16.msra.mxu0 0
      %3809 = vmatprep.subr.bf16.mxu0 0
      %3810 = vmatpush1.bf16.msra.mxu0 0
      %3811 = vmatprep.subr.bf16.mxu0 0
      %3812 = vmatpush1.bf16.msra.mxu0 0
      %3813 = vmatprep.subr.bf16.mxu0 0
      %3814 = vmatpush1.bf16.msra.mxu0 0
      %3815 = vmatprep.subr.bf16.mxu0 0
      %3816 = vmatpush1.bf16.msra.mxu0 0
      %3817 = vmatprep.subr.bf16.mxu0 0
      %3818 = vmatpush1.bf16.msra.mxu0 0
      %3819 = vmatprep.subr.bf16.mxu0 0
      %3820 = vmatpush1.bf16.msra.mxu0 0
      %3821 = vmatprep.subr.bf16.mxu0 0
      %3822 = vmatpush1.bf16.msra.mxu0 0
      %3823 = vmatprep.subr.bf16.mxu0 0
      %3824 = vmatpush1.bf16.msra.mxu0 0
      %3825 = vmatprep.subr.bf16.mxu0 0
      %3826 = vmatpush1.bf16.msra.mxu0 0
      %3827 = vmatprep.subr.bf16.mxu0 0
      %3828 = vmatpush1.bf16.msra.mxu0 0
      %3829 = vmatprep.subr.bf16.mxu0 0
      %3830 = vmatpush1.bf16.msra.mxu0 0
      %3831 = vmatprep.subr.bf16.mxu0 0
      %3832 = vmatpush1.bf16.msra.mxu0 0
      %3833 = vmatprep.mubr.bf16.mxu0 0
      %3834 = vmatmul.mubr.bf16.gmra.mrb[0].mxu0 %v3790
      %v3835 = vpop.f32.mrb[0].mxu0
      %v3836 = vadd.f32 0.0, %v3835
      %v3837 = vpop.f32.mrb[0].mxu0
      %v3838 = vadd.f32 0.0, %v3837
      %v3839 = vpop.f32.mrb[0].mxu0
      %v3840 = vpop.f32.mrb[0].mxu0
      %3841 = vdwg.mxu0
      %3842 = vmatprep.subr.bf16.mxu0 0
      %3843 = vmatpush1.bf16.msra.mxu0 %v3799
      %3844 = vmatprep.subr.bf16.mxu0 0
      %3845 = vmatpush1.bf16.msra.mxu0 0
      %3846 = vmatprep.subr.bf16.mxu0 0
      %3847 = vmatpush1.bf16.msra.mxu0 0
      %3848 = vmatprep.subr.bf16.mxu0 0
      %3849 = vmatpush1.bf16.msra.mxu0 0
      %3850 = vmatprep.subr.bf16.mxu0 0
      %3851 = vmatpush1.bf16.msra.mxu0 0
      %3852 = vmatprep.subr.bf16.mxu0 0
      %3853 = vmatpush1.bf16.msra.mxu0 0
      %3854 = vmatprep.subr.bf16.mxu0 0
      %3855 = vmatpush1.bf16.msra.mxu0 0
      %3856 = vmatprep.subr.bf16.mxu0 0
      %3857 = vmatpush1.bf16.msra.mxu0 0
      %3858 = vmatprep.subr.bf16.mxu0 0
      %3859 = vmatpush1.bf16.msra.mxu0 0
      %3860 = vmatprep.subr.bf16.mxu0 0
      %3861 = vmatpush1.bf16.msra.mxu0 0
      %3862 = vmatprep.subr.bf16.mxu0 0
      %3863 = vmatpush1.bf16.msra.mxu0 0
      %3864 = vmatprep.subr.bf16.mxu0 0
      %3865 = vmatpush1.bf16.msra.mxu0 0
      %3866 = vmatprep.subr.bf16.mxu0 0
      %3867 = vmatpush1.bf16.msra.mxu0 0
      %3868 = vmatprep.subr.bf16.mxu0 0
      %3869 = vmatpush1.bf16.msra.mxu0 0
      %3870 = vmatprep.subr.bf16.mxu0 0
      %3871 = vmatpush1.bf16.msra.mxu0 0
      %3872 = vmatprep.subr.bf16.mxu0 0
      %3873 = vmatpush1.bf16.msra.mxu0 0
      %3874 = vmatprep.mubr.bf16.mxu0 0
      %3875 = vmatmul.mubr.bf16.gmra.mrb[0].mxu0 %v3790
      %v3876 = vpop.f32.mrb[0].mxu0
      %v3877 = vadd.f32 0.0, %v3876
      %v3878 = vpop.f32.mrb[0].mxu0
      %v3879 = vpop.f32.mrb[0].mxu0
      %v3880 = vpop.f32.mrb[0].mxu0
      %3881 = vdwg.mxu0
      %v3882 = vadd.f32 %v3773, %v3836
      %v3883 = vadd.f32 %v3774, %v3838
      %v3884 = vadd.f32 %v3775, %v3877
      %v3885 = vld [vmem:[%s2 + $0x84] sm:$0xf]
      %3886 = vrot.lane.b32.xlu0 %v296, 35
      %v3887 = vpop.permute.xlu0 %3886
      %3888 = vrot.lane.b32.xlu0 %v297, 35
      %v3889 = vpop.permute.xlu0 %3888
      %3890 = vrot.lane.b32.xlu0 %v298, 35
      %v3891 = vpop.permute.xlu0 %3890
      %3892 = vrot.lane.b32.xlu0 %v302, 35
      %v3893 = vpop.permute.xlu0 %3892
      %vm3894 = vcmask 285696
      %v3895 = vsel %vm3894, %v3887, %v3889
      %v3896 = vsel %vm3894, %v3889, %v3891
      %v3897 = vsel %vm3894, %v3891, %v3893
      %v3899 = vsel %vm318, %v3885, 0
      %v3902 = vsel %vm322, %v3895, 0
      %v3905 = vsel %vm322, %v3896, 0
      %v3908 = vsel %vm322, %v3897, 0
      %3910 = vmatprep.subr.bf16.mxu0 %v3905
      %3911 = vmatpush1.bf16.msra.mxu0 %v3902
      %3912 = vmatprep.subr.bf16.mxu0 0
      %3913 = vmatpush1.bf16.msra.mxu0 0
      %3914 = vmatprep.subr.bf16.mxu0 0
      %3915 = vmatpush1.bf16.msra.mxu0 0
      %3916 = vmatprep.subr.bf16.mxu0 0
      %3917 = vmatpush1.bf16.msra.mxu0 0
      %3918 = vmatprep.subr.bf16.mxu0 0
      %3919 = vmatpush1.bf16.msra.mxu0 0
      %3920 = vmatprep.subr.bf16.mxu0 0
      %3921 = vmatpush1.bf16.msra.mxu0 0
      %3922 = vmatprep.subr.bf16.mxu0 0
      %3923 = vmatpush1.bf16.msra.mxu0 0
      %3924 = vmatprep.subr.bf16.mxu0 0
      %3925 = vmatpush1.bf16.msra.mxu0 0
      %3926 = vmatprep.subr.bf16.mxu0 0
      %3927 = vmatpush1.bf16.msra.mxu0 0
      %3928 = vmatprep.subr.bf16.mxu0 0
      %3929 = vmatpush1.bf16.msra.mxu0 0
      %3930 = vmatprep.subr.bf16.mxu0 0
      %3931 = vmatpush1.bf16.msra.mxu0 0
      %3932 = vmatprep.subr.bf16.mxu0 0
      %3933 = vmatpush1.bf16.msra.mxu0 0
      %3934 = vmatprep.subr.bf16.mxu0 0
      %3935 = vmatpush1.bf16.msra.mxu0 0
      %3936 = vmatprep.subr.bf16.mxu0 0
      %3937 = vmatpush1.bf16.msra.mxu0 0
      %3938 = vmatprep.subr.bf16.mxu0 0
      %3939 = vmatpush1.bf16.msra.mxu0 0
      %3940 = vmatprep.subr.bf16.mxu0 0
      %3941 = vmatpush1.bf16.msra.mxu0 0
      %3942 = vmatprep.mubr.bf16.mxu0 0
      %3943 = vmatmul.mubr.bf16.gmra.mrb[0].mxu0 %v3899
      %v3944 = vpop.f32.mrb[0].mxu0
      %v3945 = vadd.f32 0.0, %v3944
      %v3946 = vpop.f32.mrb[0].mxu0
      %v3947 = vadd.f32 0.0, %v3946
      %v3948 = vpop.f32.mrb[0].mxu0
      %v3949 = vpop.f32.mrb[0].mxu0
      %3950 = vdwg.mxu0
      %3951 = vmatprep.subr.bf16.mxu0 0
      %3952 = vmatpush1.bf16.msra.mxu0 %v3908
      %3953 = vmatprep.subr.bf16.mxu0 0
      %3954 = vmatpush1.bf16.msra.mxu0 0
      %3955 = vmatprep.subr.bf16.mxu0 0
      %3956 = vmatpush1.bf16.msra.mxu0 0
      %3957 = vmatprep.subr.bf16.mxu0 0
      %3958 = vmatpush1.bf16.msra.mxu0 0
      %3959 = vmatprep.subr.bf16.mxu0 0
      %3960 = vmatpush1.bf16.msra.mxu0 0
      %3961 = vmatprep.subr.bf16.mxu0 0
      %3962 = vmatpush1.bf16.msra.mxu0 0
      %3963 = vmatprep.subr.bf16.mxu0 0
      %3964 = vmatpush1.bf16.msra.mxu0 0
      %3965 = vmatprep.subr.bf16.mxu0 0
      %3966 = vmatpush1.bf16.msra.mxu0 0
      %3967 = vmatprep.subr.bf16.mxu0 0
      %3968 = vmatpush1.bf16.msra.mxu0 0
      %3969 = vmatprep.subr.bf16.mxu0 0
      %3970 = vmatpush1.bf16.msra.mxu0 0
      %3971 = vmatprep.subr.bf16.mxu0 0
      %3972 = vmatpush1.bf16.msra.mxu0 0
      %3973 = vmatprep.subr.bf16.mxu0 0
      %3974 = vmatpush1.bf16.msra.mxu0 0
      %3975 = vmatprep.subr.bf16.mxu0 0
      %3976 = vmatpush1.bf16.msra.mxu0 0
      %3977 = vmatprep.subr.bf16.mxu0 0
      %3978 = vmatpush1.bf16.msra.mxu0 0
      %3979 = vmatprep.subr.bf16.mxu0 0
      %3980 = vmatpush1.bf16.msra.mxu0 0
      %3981 = vmatprep.subr.bf16.mxu0 0
      %3982 = vmatpush1.bf16.msra.mxu0 0
      %3983 = vmatprep.mubr.bf16.mxu0 0
      %3984 = vmatmul.mubr.bf16.gmra.mrb[0].mxu0 %v3899
      %v3985 = vpop.f32.mrb[0].mxu0
      %v3986 = vadd.f32 0.0, %v3985
      %v3987 = vpop.f32.mrb[0].mxu0
      %v3988 = vpop.f32.mrb[0].mxu0
      %v3989 = vpop.f32.mrb[0].mxu0
      %3990 = vdwg.mxu0
      %v3991 = vadd.f32 %v3882, %v3945
      %v3992 = vadd.f32 %v3883, %v3947
      %v3993 = vadd.f32 %v3884, %v3986
      %v3994 = vld [vmem:[%s2 + $0x88] sm:$0xf]
      %3995 = vrot.lane.b32.xlu0 %v296, 34
      %v3996 = vpop.permute.xlu0 %3995
      %3997 = vrot.lane.b32.xlu0 %v297, 34
      %v3998 = vpop.permute.xlu0 %3997
      %3999 = vrot.lane.b32.xlu0 %v298, 34
      %v4000 = vpop.permute.xlu0 %3999
      %4001 = vrot.lane.b32.xlu0 %v302, 34
      %v4002 = vpop.permute.xlu0 %4001
      %vm4003 = vcmask 277504
      %v4004 = vsel %vm4003, %v3996, %v3998
      %v4005 = vsel %vm4003, %v3998, %v4000
      %v4006 = vsel %vm4003, %v4000, %v4002
      %v4008 = vsel %vm318, %v3994, 0
      %v4011 = vsel %vm322, %v4004, 0
      %v4014 = vsel %vm322, %v4005, 0
      %v4017 = vsel %vm322, %v4006, 0
      %4019 = vmatprep.subr.bf16.mxu0 %v4014
      %4020 = vmatpush1.bf16.msra.mxu0 %v4011
      %4021 = vmatprep.subr.bf16.mxu0 0
      %4022 = vmatpush1.bf16.msra.mxu0 0
      %4023 = vmatprep.subr.bf16.mxu0 0
      %4024 = vmatpush1.bf16.msra.mxu0 0
      %4025 = vmatprep.subr.bf16.mxu0 0
      %4026 = vmatpush1.bf16.msra.mxu0 0
      %4027 = vmatprep.subr.bf16.mxu0 0
      %4028 = vmatpush1.bf16.msra.mxu0 0
      %4029 = vmatprep.subr.bf16.mxu0 0
      %4030 = vmatpush1.bf16.msra.mxu0 0
      %4031 = vmatprep.subr.bf16.mxu0 0
      %4032 = vmatpush1.bf16.msra.mxu0 0
      %4033 = vmatprep.subr.bf16.mxu0 0
      %4034 = vmatpush1.bf16.msra.mxu0 0
      %4035 = vmatprep.subr.bf16.mxu0 0
      %4036 = vmatpush1.bf16.msra.mxu0 0
      %4037 = vmatprep.subr.bf16.mxu0 0
      %4038 = vmatpush1.bf16.msra.mxu0 0
      %4039 = vmatprep.subr.bf16.mxu0 0
      %4040 = vmatpush1.bf16.msra.mxu0 0
      %4041 = vmatprep.subr.bf16.mxu0 0
      %4042 = vmatpush1.bf16.msra.mxu0 0
      %4043 = vmatprep.subr.bf16.mxu0 0
      %4044 = vmatpush1.bf16.msra.mxu0 0
      %4045 = vmatprep.subr.bf16.mxu0 0
      %4046 = vmatpush1.bf16.msra.mxu0 0
      %4047 = vmatprep.subr.bf16.mxu0 0
      %4048 = vmatpush1.bf16.msra.mxu0 0
      %4049 = vmatprep.subr.bf16.mxu0 0
      %4050 = vmatpush1.bf16.msra.mxu0 0
      %4051 = vmatprep.mubr.bf16.mxu0 0
      %4052 = vmatmul.mubr.bf16.gmra.mrb[0].mxu0 %v4008
      %v4053 = vpop.f32.mrb[0].mxu0
      %v4054 = vadd.f32 0.0, %v4053
      %v4055 = vpop.f32.mrb[0].mxu0
      %v4056 = vadd.f32 0.0, %v4055
      %v4057 = vpop.f32.mrb[0].mxu0
      %v4058 = vpop.f32.mrb[0].mxu0
      %4059 = vdwg.mxu0
      %4060 = vmatprep.subr.bf16.mxu0 0
      %4061 = vmatpush1.bf16.msra.mxu0 %v4017
      %4062 = vmatprep.subr.bf16.mxu0 0
      %4063 = vmatpush1.bf16.msra.mxu0 0
      %4064 = vmatprep.subr.bf16.mxu0 0
      %4065 = vmatpush1.bf16.msra.mxu0 0
      %4066 = vmatprep.subr.bf16.mxu0 0
      %4067 = vmatpush1.bf16.msra.mxu0 0
      %4068 = vmatprep.subr.bf16.mxu0 0
      %4069 = vmatpush1.bf16.msra.mxu0 0
      %4070 = vmatprep.subr.bf16.mxu0 0
      %4071 = vmatpush1.bf16.msra.mxu0 0
      %4072 = vmatprep.subr.bf16.mxu0 0
      %4073 = vmatpush1.bf16.msra.mxu0 0
      %4074 = vmatprep.subr.bf16.mxu0 0
      %4075 = vmatpush1.bf16.msra.mxu0 0
      %4076 = vmatprep.subr.bf16.mxu0 0
      %4077 = vmatpush1.bf16.msra.mxu0 0
      %4078 = vmatprep.subr.bf16.mxu0 0
      %4079 = vmatpush1.bf16.msra.mxu0 0
      %4080 = vmatprep.subr.bf16.mxu0 0
      %4081 = vmatpush1.bf16.msra.mxu0 0
      %4082 = vmatprep.subr.bf16.mxu0 0
      %4083 = vmatpush1.bf16.msra.mxu0 0
      %4084 = vmatprep.subr.bf16.mxu0 0
      %4085 = vmatpush1.bf16.msra.mxu0 0
      %4086 = vmatprep.subr.bf16.mxu0 0
      %4087 = vmatpush1.bf16.msra.mxu0 0
      %4088 = vmatprep.subr.bf16.mxu0 0
      %4089 = vmatpush1.bf16.msra.mxu0 0
      %4090 = vmatprep.subr.bf16.mxu0 0
      %4091 = vmatpush1.bf16.msra.mxu0 0
      %4092 = vmatprep.mubr.bf16.mxu0 0
      %4093 = vmatmul.mubr.bf16.gmra.mrb[0].mxu0 %v4008
      %v4094 = vpop.f32.mrb[0].mxu0
      %v4095 = vadd.f32 0.0, %v4094
      %v4096 = vpop.f32.mrb[0].mxu0
      %v4097 = vpop.f32.mrb[0].mxu0
      %v4098 = vpop.f32.mrb[0].mxu0
      %4099 = vdwg.mxu0
      %v4100 = vadd.f32 %v3991, %v4054
      %v4101 = vadd.f32 %v3992, %v4056
      %v4102 = vadd.f32 %v3993, %v4095
      %v4103 = vld [vmem:[%s2 + $0x8c] sm:$0xf]
      %4104 = vrot.lane.b32.xlu0 %v296, 18
      %v4105 = vpop.permute.xlu0 %4104
      %4106 = vrot.lane.b32.xlu0 %v297, 18
      %v4107 = vpop.permute.xlu0 %4106
      %4108 = vrot.lane.b32.xlu0 %v298, 18
      %v4109 = vpop.permute.xlu0 %4108
      %4110 = vrot.lane.b32.xlu0 %v302, 18
      %v4111 = vpop.permute.xlu0 %4110
      %vm4112 = vcmask 146432
      %v4113 = vsel %vm4112, %v4105, %v4107
      %v4114 = vsel %vm4112, %v4107, %v4109
      %v4115 = vsel %vm4112, %v4109, %v4111
      %v4117 = vsel %vm318, %v4103, 0
      %v4120 = vsel %vm322, %v4113, 0
      %v4123 = vsel %vm322, %v4114, 0
      %v4126 = vsel %vm322, %v4115, 0
      %4128 = vmatprep.subr.bf16.mxu0 %v4123
      %4129 = vmatpush1.bf16.msra.mxu0 %v4120
      %4130 = vmatprep.subr.bf16.mxu0 0
      %4131 = vmatpush1.bf16.msra.mxu0 0
      %4132 = vmatprep.subr.bf16.mxu0 0
      %4133 = vmatpush1.bf16.msra.mxu0 0
      %4134 = vmatprep.subr.bf16.mxu0 0
      %4135 = vmatpush1.bf16.msra.mxu0 0
      %4136 = vmatprep.subr.bf16.mxu0 0
      %4137 = vmatpush1.bf16.msra.mxu0 0
      %4138 = vmatprep.subr.bf16.mxu0 0
      %4139 = vmatpush1.bf16.msra.mxu0 0
      %4140 = vmatprep.subr.bf16.mxu0 0
      %4141 = vmatpush1.bf16.msra.mxu0 0
      %4142 = vmatprep.subr.bf16.mxu0 0
      %4143 = vmatpush1.bf16.msra.mxu0 0
      %4144 = vmatprep.subr.bf16.mxu0 0
      %4145 = vmatpush1.bf16.msra.mxu0 0
      %4146 = vmatprep.subr.bf16.mxu0 0
      %4147 = vmatpush1.bf16.msra.mxu0 0
      %4148 = vmatprep.subr.bf16.mxu0 0
      %4149 = vmatpush1.bf16.msra.mxu0 0
      %4150 = vmatprep.subr.bf16.mxu0 0
      %4151 = vmatpush1.bf16.msra.mxu0 0
      %4152 = vmatprep.subr.bf16.mxu0 0
      %4153 = vmatpush1.bf16.msra.mxu0 0
      %4154 = vmatprep.subr.bf16.mxu0 0
      %4155 = vmatpush1.bf16.msra.mxu0 0
      %4156 = vmatprep.subr.bf16.mxu0 0
      %4157 = vmatpush1.bf16.msra.mxu0 0
      %4158 = vmatprep.subr.bf16.mxu0 0
      %4159 = vmatpush1.bf16.msra.mxu0 0
      %4160 = vmatprep.mubr.bf16.mxu0 0
      %4161 = vmatmul.mubr.bf16.gmra.mrb[0].mxu0 %v4117
      %v4162 = vpop.f32.mrb[0].mxu0
      %v4163 = vadd.f32 0.0, %v4162
      %v4164 = vpop.f32.mrb[0].mxu0
      %v4165 = vadd.f32 0.0, %v4164
      %v4166 = vpop.f32.mrb[0].mxu0
      %v4167 = vpop.f32.mrb[0].mxu0
      %4168 = vdwg.mxu0
      %4169 = vmatprep.subr.bf16.mxu0 0
      %4170 = vmatpush1.bf16.msra.mxu0 %v4126
      %4171 = vmatprep.subr.bf16.mxu0 0
      %4172 = vmatpush1.bf16.msra.mxu0 0
      %4173 = vmatprep.subr.bf16.mxu0 0
      %4174 = vmatpush1.bf16.msra.mxu0 0
      %4175 = vmatprep.subr.bf16.mxu0 0
      %4176 = vmatpush1.bf16.msra.mxu0 0
      %4177 = vmatprep.subr.bf16.mxu0 0
      %4178 = vmatpush1.bf16.msra.mxu0 0
      %4179 = vmatprep.subr.bf16.mxu0 0
      %4180 = vmatpush1.bf16.msra.mxu0 0
      %4181 = vmatprep.subr.bf16.mxu0 0
      %4182 = vmatpush1.bf16.msra.mxu0 0
      %4183 = vmatprep.subr.bf16.mxu0 0
      %4184 = vmatpush1.bf16.msra.mxu0 0
      %4185 = vmatprep.subr.bf16.mxu0 0
      %4186 = vmatpush1.bf16.msra.mxu0 0
      %4187 = vmatprep.subr.bf16.mxu0 0
      %4188 = vmatpush1.bf16.msra.mxu0 0
      %4189 = vmatprep.subr.bf16.mxu0 0
      %4190 = vmatpush1.bf16.msra.mxu0 0
      %4191 = vmatprep.subr.bf16.mxu0 0
      %4192 = vmatpush1.bf16.msra.mxu0 0
      %4193 = vmatprep.subr.bf16.mxu0 0
      %4194 = vmatpush1.bf16.msra.mxu0 0
      %4195 = vmatprep.subr.bf16.mxu0 0
      %4196 = vmatpush1.bf16.msra.mxu0 0
      %4197 = vmatprep.subr.bf16.mxu0 0
      %4198 = vmatpush1.bf16.msra.mxu0 0
      %4199 = vmatprep.subr.bf16.mxu0 0
      %4200 = vmatpush1.bf16.msra.mxu0 0
      %4201 = vmatprep.mubr.bf16.mxu0 0
      %4202 = vmatmul.mubr.bf16.gmra.mrb[0].mxu0 %v4117
      %v4203 = vpop.f32.mrb[0].mxu0
      %v4204 = vadd.f32 0.0, %v4203
      %v4205 = vpop.f32.mrb[0].mxu0
      %v4206 = vpop.f32.mrb[0].mxu0
      %v4207 = vpop.f32.mrb[0].mxu0
      %4208 = vdwg.mxu0
      %v4209 = vadd.f32 %v4100, %v4163
      %v4210 = vadd.f32 %v4101, %v4165
      %v4211 = vadd.f32 %v4102, %v4204
      %v4212 = vld [vmem:[%s2 + $0x90] sm:$0xf]
      %4213 = vrot.lane.b32.xlu0 %v296, 17
      %v4214 = vpop.permute.xlu0 %4213
      %4215 = vrot.lane.b32.xlu0 %v297, 17
      %v4216 = vpop.permute.xlu0 %4215
      %4217 = vrot.lane.b32.xlu0 %v298, 17
      %v4218 = vpop.permute.xlu0 %4217
      %4219 = vrot.lane.b32.xlu0 %v302, 17
      %v4220 = vpop.permute.xlu0 %4219
      %vm4221 = vcmask 138240
      %v4222 = vsel %vm4221, %v4214, %v4216
      %v4223 = vsel %vm4221, %v4216, %v4218
      %v4224 = vsel %vm4221, %v4218, %v4220
      %v4226 = vsel %vm318, %v4212, 0
      %v4229 = vsel %vm322, %v4222, 0
      %v4232 = vsel %vm322, %v4223, 0
      %v4235 = vsel %vm322, %v4224, 0
      %4237 = vmatprep.subr.bf16.mxu0 %v4232
      %4238 = vmatpush1.bf16.msra.mxu0 %v4229
      %4239 = vmatprep.subr.bf16.mxu0 0
      %4240 = vmatpush1.bf16.msra.mxu0 0
      %4241 = vmatprep.subr.bf16.mxu0 0
      %4242 = vmatpush1.bf16.msra.mxu0 0
      %4243 = vmatprep.subr.bf16.mxu0 0
      %4244 = vmatpush1.bf16.msra.mxu0 0
      %4245 = vmatprep.subr.bf16.mxu0 0
      %4246 = vmatpush1.bf16.msra.mxu0 0
      %4247 = vmatprep.subr.bf16.mxu0 0
      %4248 = vmatpush1.bf16.msra.mxu0 0
      %4249 = vmatprep.subr.bf16.mxu0 0
      %4250 = vmatpush1.bf16.msra.mxu0 0
      %4251 = vmatprep.subr.bf16.mxu0 0
      %4252 = vmatpush1.bf16.msra.mxu0 0
      %4253 = vmatprep.subr.bf16.mxu0 0
      %4254 = vmatpush1.bf16.msra.mxu0 0
      %4255 = vmatprep.subr.bf16.mxu0 0
      %4256 = vmatpush1.bf16.msra.mxu0 0
      %4257 = vmatprep.subr.bf16.mxu0 0
      %4258 = vmatpush1.bf16.msra.mxu0 0
      %4259 = vmatprep.subr.bf16.mxu0 0
      %4260 = vmatpush1.bf16.msra.mxu0 0
      %4261 = vmatprep.subr.bf16.mxu0 0
      %4262 = vmatpush1.bf16.msra.mxu0 0
      %4263 = vmatprep.subr.bf16.mxu0 0
      %4264 = vmatpush1.bf16.msra.mxu0 0
      %4265 = vmatprep.subr.bf16.mxu0 0
      %4266 = vmatpush1.bf16.msra.mxu0 0
      %4267 = vmatprep.subr.bf16.mxu0 0
      %4268 = vmatpush1.bf16.msra.mxu0 0
      %4269 = vmatprep.mubr.bf16.mxu0 0
      %4270 = vmatmul.mubr.bf16.gmra.mrb[0].mxu0 %v4226
      %v4271 = vpop.f32.mrb[0].mxu0
      %v4272 = vadd.f32 0.0, %v4271
      %v4273 = vpop.f32.mrb[0].mxu0
      %v4274 = vadd.f32 0.0, %v4273
      %v4275 = vpop.f32.mrb[0].mxu0
      %v4276 = vpop.f32.mrb[0].mxu0
      %4277 = vdwg.mxu0
      %4278 = vmatprep.subr.bf16.mxu0 0
      %4279 = vmatpush1.bf16.msra.mxu0 %v4235
      %4280 = vmatprep.subr.bf16.mxu0 0
      %4281 = vmatpush1.bf16.msra.mxu0 0
      %4282 = vmatprep.subr.bf16.mxu0 0
      %4283 = vmatpush1.bf16.msra.mxu0 0
      %4284 = vmatprep.subr.bf16.mxu0 0
      %4285 = vmatpush1.bf16.msra.mxu0 0
      %4286 = vmatprep.subr.bf16.mxu0 0
      %4287 = vmatpush1.bf16.msra.mxu0 0
      %4288 = vmatprep.subr.bf16.mxu0 0
      %4289 = vmatpush1.bf16.msra.mxu0 0
      %4290 = vmatprep.subr.bf16.mxu0 0
      %4291 = vmatpush1.bf16.msra.mxu0 0
      %4292 = vmatprep.subr.bf16.mxu0 0
      %4293 = vmatpush1.bf16.msra.mxu0 0
      %4294 = vmatprep.subr.bf16.mxu0 0
      %4295 = vmatpush1.bf16.msra.mxu0 0
      %4296 = vmatprep.subr.bf16.mxu0 0
      %4297 = vmatpush1.bf16.msra.mxu0 0
      %4298 = vmatprep.subr.bf16.mxu0 0
      %4299 = vmatpush1.bf16.msra.mxu0 0
      %4300 = vmatprep.subr.bf16.mxu0 0
      %4301 = vmatpush1.bf16.msra.mxu0 0
      %4302 = vmatprep.subr.bf16.mxu0 0
      %4303 = vmatpush1.bf16.msra.mxu0 0
      %4304 = vmatprep.subr.bf16.mxu0 0
      %4305 = vmatpush1.bf16.msra.mxu0 0
      %4306 = vmatprep.subr.bf16.mxu0 0
      %4307 = vmatpush1.bf16.msra.mxu0 0
      %4308 = vmatprep.subr.bf16.mxu0 0
      %4309 = vmatpush1.bf16.msra.mxu0 0
      %4310 = vmatprep.mubr.bf16.mxu0 0
      %4311 = vmatmul.mubr.bf16.gmra.mrb[0].mxu0 %v4226
      %v4312 = vpop.f32.mrb[0].mxu0
      %v4313 = vadd.f32 0.0, %v4312
      %v4314 = vpop.f32.mrb[0].mxu0
      %v4315 = vpop.f32.mrb[0].mxu0
      %v4316 = vpop.f32.mrb[0].mxu0
      %4317 = vdwg.mxu0
      %v4318 = vadd.f32 %v4209, %v4272
      %v4319 = vadd.f32 %v4210, %v4274
      %v4320 = vadd.f32 %v4211, %v4313
      %v4321 = vld [vmem:[%s2 + $0x94] sm:$0xf]
      %4322 = vrot.lane.b32.xlu0 %v296, 16
      %v4323 = vpop.permute.xlu0 %4322
      %4324 = vrot.lane.b32.xlu0 %v297, 16
      %v4325 = vpop.permute.xlu0 %4324
      %4326 = vrot.lane.b32.xlu0 %v298, 16
      %v4327 = vpop.permute.xlu0 %4326
      %4328 = vrot.lane.b32.xlu0 %v302, 16
      %v4329 = vpop.permute.xlu0 %4328
      %vm4330 = vcmask 130048
      %v4331 = vsel %vm4330, %v4323, %v4325
      %v4332 = vsel %vm4330, %v4325, %v4327
      %v4333 = vsel %vm4330, %v4327, %v4329
      %v4335 = vsel %vm318, %v4321, 0
      %v4338 = vsel %vm322, %v4331, 0
      %v4341 = vsel %vm322, %v4332, 0
      %v4344 = vsel %vm322, %v4333, 0
      %4346 = vmatprep.subr.bf16.mxu0 %v4341
      %4347 = vmatpush1.bf16.msra.mxu0 %v4338
      %4348 = vmatprep.subr.bf16.mxu0 0
      %4349 = vmatpush1.bf16.msra.mxu0 0
      %4350 = vmatprep.subr.bf16.mxu0 0
      %4351 = vmatpush1.bf16.msra.mxu0 0
      %4352 = vmatprep.subr.bf16.mxu0 0
      %4353 = vmatpush1.bf16.msra.mxu0 0
      %4354 = vmatprep.subr.bf16.mxu0 0
      %4355 = vmatpush1.bf16.msra.mxu0 0
      %4356 = vmatprep.subr.bf16.mxu0 0
      %4357 = vmatpush1.bf16.msra.mxu0 0
      %4358 = vmatprep.subr.bf16.mxu0 0
      %4359 = vmatpush1.bf16.msra.mxu0 0
      %4360 = vmatprep.subr.bf16.mxu0 0
      %4361 = vmatpush1.bf16.msra.mxu0 0
      %4362 = vmatprep.subr.bf16.mxu0 0
      %4363 = vmatpush1.bf16.msra.mxu0 0
      %4364 = vmatprep.subr.bf16.mxu0 0
      %4365 = vmatpush1.bf16.msra.mxu0 0
      %4366 = vmatprep.subr.bf16.mxu0 0
      %4367 = vmatpush1.bf16.msra.mxu0 0
      %4368 = vmatprep.subr.bf16.mxu0 0
      %4369 = vmatpush1.bf16.msra.mxu0 0
      %4370 = vmatprep.subr.bf16.mxu0 0
      %4371 = vmatpush1.bf16.msra.mxu0 0
      %4372 = vmatprep.subr.bf16.mxu0 0
      %4373 = vmatpush1.bf16.msra.mxu0 0
      %4374 = vmatprep.subr.bf16.mxu0 0
      %4375 = vmatpush1.bf16.msra.mxu0 0
      %4376 = vmatprep.subr.bf16.mxu0 0
      %4377 = vmatpush1.bf16.msra.mxu0 0
      %4378 = vmatprep.mubr.bf16.mxu0 0
      %4379 = vmatmul.mubr.bf16.gmra.mrb[0].mxu0 %v4335
      %v4380 = vpop.f32.mrb[0].mxu0
      %v4381 = vadd.f32 0.0, %v4380
      %v4382 = vpop.f32.mrb[0].mxu0
      %v4383 = vadd.f32 0.0, %v4382
      %v4384 = vpop.f32.mrb[0].mxu0
      %v4385 = vpop.f32.mrb[0].mxu0
      %4386 = vdwg.mxu0
      %4387 = vmatprep.subr.bf16.mxu0 0
      %4388 = vmatpush1.bf16.msra.mxu0 %v4344
      %4389 = vmatprep.subr.bf16.mxu0 0
      %4390 = vmatpush1.bf16.msra.mxu0 0
      %4391 = vmatprep.subr.bf16.mxu0 0
      %4392 = vmatpush1.bf16.msra.mxu0 0
      %4393 = vmatprep.subr.bf16.mxu0 0
      %4394 = vmatpush1.bf16.msra.mxu0 0
      %4395 = vmatprep.subr.bf16.mxu0 0
      %4396 = vmatpush1.bf16.msra.mxu0 0
      %4397 = vmatprep.subr.bf16.mxu0 0
      %4398 = vmatpush1.bf16.msra.mxu0 0
      %4399 = vmatprep.subr.bf16.mxu0 0
      %4400 = vmatpush1.bf16.msra.mxu0 0
      %4401 = vmatprep.subr.bf16.mxu0 0
      %4402 = vmatpush1.bf16.msra.mxu0 0
      %4403 = vmatprep.subr.bf16.mxu0 0
      %4404 = vmatpush1.bf16.msra.mxu0 0
      %4405 = vmatprep.subr.bf16.mxu0 0
      %4406 = vmatpush1.bf16.msra.mxu0 0
      %4407 = vmatprep.subr.bf16.mxu0 0
      %4408 = vmatpush1.bf16.msra.mxu0 0
      %4409 = vmatprep.subr.bf16.mxu0 0
      %4410 = vmatpush1.bf16.msra.mxu0 0
      %4411 = vmatprep.subr.bf16.mxu0 0
      %4412 = vmatpush1.bf16.msra.mxu0 0
      %4413 = vmatprep.subr.bf16.mxu0 0
      %4414 = vmatpush1.bf16.msra.mxu0 0
      %4415 = vmatprep.subr.bf16.mxu0 0
      %4416 = vmatpush1.bf16.msra.mxu0 0
      %4417 = vmatprep.subr.bf16.mxu0 0
      %4418 = vmatpush1.bf16.msra.mxu0 0
      %4419 = vmatprep.mubr.bf16.mxu0 0
      %4420 = vmatmul.mubr.bf16.gmra.mrb[0].mxu0 %v4335
      %v4421 = vpop.f32.mrb[0].mxu0
      %v4422 = vadd.f32 0.0, %v4421
      %v4423 = vpop.f32.mrb[0].mxu0
      %v4424 = vpop.f32.mrb[0].mxu0
      %v4425 = vpop.f32.mrb[0].mxu0
      %4426 = vdwg.mxu0
      %v4427 = vadd.f32 %v4318, %v4381
      %v4428 = vadd.f32 %v4319, %v4383
      %v4429 = vadd.f32 %v4320, %v4422
      %v4430 = vld [vmem:[%s2 + $0x98] sm:$0xf]
      %4431 = vrot.lane.b32.xlu0 %v296, 15
      %v4432 = vpop.permute.xlu0 %4431
      %4433 = vrot.lane.b32.xlu0 %v297, 15
      %v4434 = vpop.permute.xlu0 %4433
      %4435 = vrot.lane.b32.xlu0 %v298, 15
      %v4436 = vpop.permute.xlu0 %4435
      %4437 = vrot.lane.b32.xlu0 %v302, 15
      %v4438 = vpop.permute.xlu0 %4437
      %vm4439 = vcmask 121856
      %v4440 = vsel %vm4439, %v4432, %v4434
      %v4441 = vsel %vm4439, %v4434, %v4436
      %v4442 = vsel %vm4439, %v4436, %v4438
      %v4444 = vsel %vm318, %v4430, 0
      %v4447 = vsel %vm322, %v4440, 0
      %v4450 = vsel %vm322, %v4441, 0
      %v4453 = vsel %vm322, %v4442, 0
      %4455 = vmatprep.subr.bf16.mxu0 %v4450
      %4456 = vmatpush1.bf16.msra.mxu0 %v4447
      %4457 = vmatprep.subr.bf16.mxu0 0
      %4458 = vmatpush1.bf16.msra.mxu0 0
      %4459 = vmatprep.subr.bf16.mxu0 0
      %4460 = vmatpush1.bf16.msra.mxu0 0
      %4461 = vmatprep.subr.bf16.mxu0 0
      %4462 = vmatpush1.bf16.msra.mxu0 0
      %4463 = vmatprep.subr.bf16.mxu0 0
      %4464 = vmatpush1.bf16.msra.mxu0 0
      %4465 = vmatprep.subr.bf16.mxu0 0
      %4466 = vmatpush1.bf16.msra.mxu0 0
      %4467 = vmatprep.subr.bf16.mxu0 0
      %4468 = vmatpush1.bf16.msra.mxu0 0
      %4469 = vmatprep.subr.bf16.mxu0 0
      %4470 = vmatpush1.bf16.msra.mxu0 0
      %4471 = vmatprep.subr.bf16.mxu0 0
      %4472 = vmatpush1.bf16.msra.mxu0 0
      %4473 = vmatprep.subr.bf16.mxu0 0
      %4474 = vmatpush1.bf16.msra.mxu0 0
      %4475 = vmatprep.subr.bf16.mxu0 0
      %4476 = vmatpush1.bf16.msra.mxu0 0
      %4477 = vmatprep.subr.bf16.mxu0 0
      %4478 = vmatpush1.bf16.msra.mxu0 0
      %4479 = vmatprep.subr.bf16.mxu0 0
      %4480 = vmatpush1.bf16.msra.mxu0 0
      %4481 = vmatprep.subr.bf16.mxu0 0
      %4482 = vmatpush1.bf16.msra.mxu0 0
      %4483 = vmatprep.subr.bf16.mxu0 0
      %4484 = vmatpush1.bf16.msra.mxu0 0
      %4485 = vmatprep.subr.bf16.mxu0 0
      %4486 = vmatpush1.bf16.msra.mxu0 0
      %4487 = vmatprep.mubr.bf16.mxu0 0
      %4488 = vmatmul.mubr.bf16.gmra.mrb[0].mxu0 %v4444
      %v4489 = vpop.f32.mrb[0].mxu0
      %v4490 = vadd.f32 0.0, %v4489
      %v4491 = vpop.f32.mrb[0].mxu0
      %v4492 = vadd.f32 0.0, %v4491
      %v4493 = vpop.f32.mrb[0].mxu0
      %v4494 = vpop.f32.mrb[0].mxu0
      %4495 = vdwg.mxu0
      %4496 = vmatprep.subr.bf16.mxu0 0
      %4497 = vmatpush1.bf16.msra.mxu0 %v4453
      %4498 = vmatprep.subr.bf16.mxu0 0
      %4499 = vmatpush1.bf16.msra.mxu0 0
      %4500 = vmatprep.subr.bf16.mxu0 0
      %4501 = vmatpush1.bf16.msra.mxu0 0
      %4502 = vmatprep.subr.bf16.mxu0 0
      %4503 = vmatpush1.bf16.msra.mxu0 0
      %4504 = vmatprep.subr.bf16.mxu0 0
      %4505 = vmatpush1.bf16.msra.mxu0 0
      %4506 = vmatprep.subr.bf16.mxu0 0
      %4507 = vmatpush1.bf16.msra.mxu0 0
      %4508 = vmatprep.subr.bf16.mxu0 0
      %4509 = vmatpush1.bf16.msra.mxu0 0
      %4510 = vmatprep.subr.bf16.mxu0 0
      %4511 = vmatpush1.bf16.msra.mxu0 0
      %4512 = vmatprep.subr.bf16.mxu0 0
      %4513 = vmatpush1.bf16.msra.mxu0 0
      %4514 = vmatprep.subr.bf16.mxu0 0
      %4515 = vmatpush1.bf16.msra.mxu0 0
      %4516 = vmatprep.subr.bf16.mxu0 0
      %4517 = vmatpush1.bf16.msra.mxu0 0
      %4518 = vmatprep.subr.bf16.mxu0 0
      %4519 = vmatpush1.bf16.msra.mxu0 0
      %4520 = vmatprep.subr.bf16.mxu0 0
      %4521 = vmatpush1.bf16.msra.mxu0 0
      %4522 = vmatprep.subr.bf16.mxu0 0
      %4523 = vmatpush1.bf16.msra.mxu0 0
      %4524 = vmatprep.subr.bf16.mxu0 0
      %4525 = vmatpush1.bf16.msra.mxu0 0
      %4526 = vmatprep.subr.bf16.mxu0 0
      %4527 = vmatpush1.bf16.msra.mxu0 0
      %4528 = vmatprep.mubr.bf16.mxu0 0
      %4529 = vmatmul.mubr.bf16.gmra.mrb[0].mxu0 %v4444
      %v4530 = vpop.f32.mrb[0].mxu0
      %v4531 = vadd.f32 0.0, %v4530
      %v4532 = vpop.f32.mrb[0].mxu0
      %v4533 = vpop.f32.mrb[0].mxu0
      %v4534 = vpop.f32.mrb[0].mxu0
      %4535 = vdwg.mxu0
      %v4536 = vadd.f32 %v4427, %v4490
      %v4537 = vadd.f32 %v4428, %v4492
      %v4538 = vadd.f32 %v4429, %v4531
      %v4539 = vld [vmem:[%s2 + $0x9c] sm:$0xf]
      %4540 = vrot.lane.b32.xlu0 %v296, 14
      %v4541 = vpop.permute.xlu0 %4540
      %4542 = vrot.lane.b32.xlu0 %v297, 14
      %v4543 = vpop.permute.xlu0 %4542
      %4544 = vrot.lane.b32.xlu0 %v298, 14
      %v4545 = vpop.permute.xlu0 %4544
      %4546 = vrot.lane.b32.xlu0 %v302, 14
      %v4547 = vpop.permute.xlu0 %4546
      %vm4548 = vcmask 113664
      %v4549 = vsel %vm4548, %v4541, %v4543
      %v4550 = vsel %vm4548, %v4543, %v4545
      %v4551 = vsel %vm4548, %v4545, %v4547
      %v4553 = vsel %vm318, %v4539, 0
      %v4556 = vsel %vm322, %v4549, 0
      %v4559 = vsel %vm322, %v4550, 0
      %v4562 = vsel %vm322, %v4551, 0
      %4564 = vmatprep.subr.bf16.mxu0 %v4559
      %4565 = vmatpush1.bf16.msra.mxu0 %v4556
      %4566 = vmatprep.subr.bf16.mxu0 0
      %4567 = vmatpush1.bf16.msra.mxu0 0
      %4568 = vmatprep.subr.bf16.mxu0 0
      %4569 = vmatpush1.bf16.msra.mxu0 0
      %4570 = vmatprep.subr.bf16.mxu0 0
      %4571 = vmatpush1.bf16.msra.mxu0 0
      %4572 = vmatprep.subr.bf16.mxu0 0
      %4573 = vmatpush1.bf16.msra.mxu0 0
      %4574 = vmatprep.subr.bf16.mxu0 0
      %4575 = vmatpush1.bf16.msra.mxu0 0
      %4576 = vmatprep.subr.bf16.mxu0 0
      %4577 = vmatpush1.bf16.msra.mxu0 0
      %4578 = vmatprep.subr.bf16.mxu0 0
      %4579 = vmatpush1.bf16.msra.mxu0 0
      %4580 = vmatprep.subr.bf16.mxu0 0
      %4581 = vmatpush1.bf16.msra.mxu0 0
      %4582 = vmatprep.subr.bf16.mxu0 0
      %4583 = vmatpush1.bf16.msra.mxu0 0
      %4584 = vmatprep.subr.bf16.mxu0 0
      %4585 = vmatpush1.bf16.msra.mxu0 0
      %4586 = vmatprep.subr.bf16.mxu0 0
      %4587 = vmatpush1.bf16.msra.mxu0 0
      %4588 = vmatprep.subr.bf16.mxu0 0
      %4589 = vmatpush1.bf16.msra.mxu0 0
      %4590 = vmatprep.subr.bf16.mxu0 0
      %4591 = vmatpush1.bf16.msra.mxu0 0
      %4592 = vmatprep.subr.bf16.mxu0 0
      %4593 = vmatpush1.bf16.msra.mxu0 0
      %4594 = vmatprep.subr.bf16.mxu0 0
      %4595 = vmatpush1.bf16.msra.mxu0 0
      %4596 = vmatprep.mubr.bf16.mxu0 0
      %4597 = vmatmul.mubr.bf16.gmra.mrb[0].mxu0 %v4553
      %v4598 = vpop.f32.mrb[0].mxu0
      %v4599 = vadd.f32 0.0, %v4598
      %v4600 = vpop.f32.mrb[0].mxu0
      %v4601 = vadd.f32 0.0, %v4600
      %v4602 = vpop.f32.mrb[0].mxu0
      %v4603 = vpop.f32.mrb[0].mxu0
      %4604 = vdwg.mxu0
      %4605 = vmatprep.subr.bf16.mxu0 0
      %4606 = vmatpush1.bf16.msra.mxu0 %v4562
      %4607 = vmatprep.subr.bf16.mxu0 0
      %4608 = vmatpush1.bf16.msra.mxu0 0
      %4609 = vmatprep.subr.bf16.mxu0 0
      %4610 = vmatpush1.bf16.msra.mxu0 0
      %4611 = vmatprep.subr.bf16.mxu0 0
      %4612 = vmatpush1.bf16.msra.mxu0 0
      %4613 = vmatprep.subr.bf16.mxu0 0
      %4614 = vmatpush1.bf16.msra.mxu0 0
      %4615 = vmatprep.subr.bf16.mxu0 0
      %4616 = vmatpush1.bf16.msra.mxu0 0
      %4617 = vmatprep.subr.bf16.mxu0 0
      %4618 = vmatpush1.bf16.msra.mxu0 0
      %4619 = vmatprep.subr.bf16.mxu0 0
      %4620 = vmatpush1.bf16.msra.mxu0 0
      %4621 = vmatprep.subr.bf16.mxu0 0
      %4622 = vmatpush1.bf16.msra.mxu0 0
      %4623 = vmatprep.subr.bf16.mxu0 0
      %4624 = vmatpush1.bf16.msra.mxu0 0
      %4625 = vmatprep.subr.bf16.mxu0 0
      %4626 = vmatpush1.bf16.msra.mxu0 0
      %4627 = vmatprep.subr.bf16.mxu0 0
      %4628 = vmatpush1.bf16.msra.mxu0 0
      %4629 = vmatprep.subr.bf16.mxu0 0
      %4630 = vmatpush1.bf16.msra.mxu0 0
      %4631 = vmatprep.subr.bf16.mxu0 0
      %4632 = vmatpush1.bf16.msra.mxu0 0
      %4633 = vmatprep.subr.bf16.mxu0 0
      %4634 = vmatpush1.bf16.msra.mxu0 0
      %4635 = vmatprep.subr.bf16.mxu0 0
      %4636 = vmatpush1.bf16.msra.mxu0 0
      %4637 = vmatprep.mubr.bf16.mxu0 0
      %4638 = vmatmul.mubr.bf16.gmra.mrb[0].mxu0 %v4553
      %v4639 = vpop.f32.mrb[0].mxu0
      %v4640 = vadd.f32 0.0, %v4639
      %v4641 = vpop.f32.mrb[0].mxu0
      %v4642 = vpop.f32.mrb[0].mxu0
      %v4643 = vpop.f32.mrb[0].mxu0
      %4644 = vdwg.mxu0
      %v4645 = vadd.f32 %v4536, %v4599
      %v4646 = vadd.f32 %v4537, %v4601
      %v4647 = vadd.f32 %v4538, %v4640
      %v4648 = vld [vmem:[%s2 + $0xa0] sm:$0xf]
      %4649 = vrot.lane.b32.xlu0 %v296, 13
      %v4650 = vpop.permute.xlu0 %4649
      %4651 = vrot.lane.b32.xlu0 %v297, 13
      %v4652 = vpop.permute.xlu0 %4651
      %4653 = vrot.lane.b32.xlu0 %v298, 13
      %v4654 = vpop.permute.xlu0 %4653
      %4655 = vrot.lane.b32.xlu0 %v302, 13
      %v4656 = vpop.permute.xlu0 %4655
      %vm4657 = vcmask 105472
      %v4658 = vsel %vm4657, %v4650, %v4652
      %v4659 = vsel %vm4657, %v4652, %v4654
      %v4660 = vsel %vm4657, %v4654, %v4656
      %v4662 = vsel %vm318, %v4648, 0
      %v4665 = vsel %vm322, %v4658, 0
      %v4668 = vsel %vm322, %v4659, 0
      %v4671 = vsel %vm322, %v4660, 0
      %4673 = vmatprep.subr.bf16.mxu0 %v4668
      %4674 = vmatpush1.bf16.msra.mxu0 %v4665
      %4675 = vmatprep.subr.bf16.mxu0 0
      %4676 = vmatpush1.bf16.msra.mxu0 0
      %4677 = vmatprep.subr.bf16.mxu0 0
      %4678 = vmatpush1.bf16.msra.mxu0 0
      %4679 = vmatprep.subr.bf16.mxu0 0
      %4680 = vmatpush1.bf16.msra.mxu0 0
      %4681 = vmatprep.subr.bf16.mxu0 0
      %4682 = vmatpush1.bf16.msra.mxu0 0
      %4683 = vmatprep.subr.bf16.mxu0 0
      %4684 = vmatpush1.bf16.msra.mxu0 0
      %4685 = vmatprep.subr.bf16.mxu0 0
      %4686 = vmatpush1.bf16.msra.mxu0 0
      %4687 = vmatprep.subr.bf16.mxu0 0
      %4688 = vmatpush1.bf16.msra.mxu0 0
      %4689 = vmatprep.subr.bf16.mxu0 0
      %4690 = vmatpush1.bf16.msra.mxu0 0
      %4691 = vmatprep.subr.bf16.mxu0 0
      %4692 = vmatpush1.bf16.msra.mxu0 0
      %4693 = vmatprep.subr.bf16.mxu0 0
      %4694 = vmatpush1.bf16.msra.mxu0 0
      %4695 = vmatprep.subr.bf16.mxu0 0
      %4696 = vmatpush1.bf16.msra.mxu0 0
      %4697 = vmatprep.subr.bf16.mxu0 0
      %4698 = vmatpush1.bf16.msra.mxu0 0
      %4699 = vmatprep.subr.bf16.mxu0 0
      %4700 = vmatpush1.bf16.msra.mxu0 0
      %4701 = vmatprep.subr.bf16.mxu0 0
      %4702 = vmatpush1.bf16.msra.mxu0 0
      %4703 = vmatprep.subr.bf16.mxu0 0
      %4704 = vmatpush1.bf16.msra.mxu0 0
      %4705 = vmatprep.mubr.bf16.mxu0 0
      %4706 = vmatmul.mubr.bf16.gmra.mrb[0].mxu0 %v4662
      %v4707 = vpop.f32.mrb[0].mxu0
      %v4708 = vadd.f32 0.0, %v4707
      %v4709 = vpop.f32.mrb[0].mxu0
      %v4710 = vadd.f32 0.0, %v4709
      %v4711 = vpop.f32.mrb[0].mxu0
      %v4712 = vpop.f32.mrb[0].mxu0
      %4713 = vdwg.mxu0
      %4714 = vmatprep.subr.bf16.mxu0 0
      %4715 = vmatpush1.bf16.msra.mxu0 %v4671
      %4716 = vmatprep.subr.bf16.mxu0 0
      %4717 = vmatpush1.bf16.msra.mxu0 0
      %4718 = vmatprep.subr.bf16.mxu0 0
      %4719 = vmatpush1.bf16.msra.mxu0 0
      %4720 = vmatprep.subr.bf16.mxu0 0
      %4721 = vmatpush1.bf16.msra.mxu0 0
      %4722 = vmatprep.subr.bf16.mxu0 0
      %4723 = vmatpush1.bf16.msra.mxu0 0
      %4724 = vmatprep.subr.bf16.mxu0 0
      %4725 = vmatpush1.bf16.msra.mxu0 0
      %4726 = vmatprep.subr.bf16.mxu0 0
      %4727 = vmatpush1.bf16.msra.mxu0 0
      %4728 = vmatprep.subr.bf16.mxu0 0
      %4729 = vmatpush1.bf16.msra.mxu0 0
      %4730 = vmatprep.subr.bf16.mxu0 0
      %4731 = vmatpush1.bf16.msra.mxu0 0
      %4732 = vmatprep.subr.bf16.mxu0 0
      %4733 = vmatpush1.bf16.msra.mxu0 0
      %4734 = vmatprep.subr.bf16.mxu0 0
      %4735 = vmatpush1.bf16.msra.mxu0 0
      %4736 = vmatprep.subr.bf16.mxu0 0
      %4737 = vmatpush1.bf16.msra.mxu0 0
      %4738 = vmatprep.subr.bf16.mxu0 0
      %4739 = vmatpush1.bf16.msra.mxu0 0
      %4740 = vmatprep.subr.bf16.mxu0 0
      %4741 = vmatpush1.bf16.msra.mxu0 0
      %4742 = vmatprep.subr.bf16.mxu0 0
      %4743 = vmatpush1.bf16.msra.mxu0 0
      %4744 = vmatprep.subr.bf16.mxu0 0
      %4745 = vmatpush1.bf16.msra.mxu0 0
      %4746 = vmatprep.mubr.bf16.mxu0 0
      %4747 = vmatmul.mubr.bf16.gmra.mrb[0].mxu0 %v4662
      %v4748 = vpop.f32.mrb[0].mxu0
      %v4749 = vadd.f32 0.0, %v4748
      %v4750 = vpop.f32.mrb[0].mxu0
      %v4751 = vpop.f32.mrb[0].mxu0
      %v4752 = vpop.f32.mrb[0].mxu0
      %4753 = vdwg.mxu0
      %v4754 = vadd.f32 %v4645, %v4708
      %v4755 = vadd.f32 %v4646, %v4710
      %v4756 = vadd.f32 %v4647, %v4749
      %v4757 = vld [vmem:[%s2 + $0xa4] sm:$0xf]
      %4758 = vrot.lane.b32.xlu0 %v296, 12
      %v4759 = vpop.permute.xlu0 %4758
      %4760 = vrot.lane.b32.xlu0 %v297, 12
      %v4761 = vpop.permute.xlu0 %4760
      %4762 = vrot.lane.b32.xlu0 %v298, 12
      %v4763 = vpop.permute.xlu0 %4762
      %4764 = vrot.lane.b32.xlu0 %v302, 12
      %v4765 = vpop.permute.xlu0 %4764
      %vm4766 = vcmask 97280
      %v4767 = vsel %vm4766, %v4759, %v4761
      %v4768 = vsel %vm4766, %v4761, %v4763
      %v4769 = vsel %vm4766, %v4763, %v4765
      %v4771 = vsel %vm318, %v4757, 0
      %v4774 = vsel %vm322, %v4767, 0
      %v4777 = vsel %vm322, %v4768, 0
      %v4780 = vsel %vm322, %v4769, 0
      %4782 = vmatprep.subr.bf16.mxu0 %v4777
      %4783 = vmatpush1.bf16.msra.mxu0 %v4774
      %4784 = vmatprep.subr.bf16.mxu0 0
      %4785 = vmatpush1.bf16.msra.mxu0 0
      %4786 = vmatprep.subr.bf16.mxu0 0
      %4787 = vmatpush1.bf16.msra.mxu0 0
      %4788 = vmatprep.subr.bf16.mxu0 0
      %4789 = vmatpush1.bf16.msra.mxu0 0
      %4790 = vmatprep.subr.bf16.mxu0 0
      %4791 = vmatpush1.bf16.msra.mxu0 0
      %4792 = vmatprep.subr.bf16.mxu0 0
      %4793 = vmatpush1.bf16.msra.mxu0 0
      %4794 = vmatprep.subr.bf16.mxu0 0
      %4795 = vmatpush1.bf16.msra.mxu0 0
      %4796 = vmatprep.subr.bf16.mxu0 0
      %4797 = vmatpush1.bf16.msra.mxu0 0
      %4798 = vmatprep.subr.bf16.mxu0 0
      %4799 = vmatpush1.bf16.msra.mxu0 0
      %4800 = vmatprep.subr.bf16.mxu0 0
      %4801 = vmatpush1.bf16.msra.mxu0 0
      %4802 = vmatprep.subr.bf16.mxu0 0
      %4803 = vmatpush1.bf16.msra.mxu0 0
      %4804 = vmatprep.subr.bf16.mxu0 0
      %4805 = vmatpush1.bf16.msra.mxu0 0
      %4806 = vmatprep.subr.bf16.mxu0 0
      %4807 = vmatpush1.bf16.msra.mxu0 0
      %4808 = vmatprep.subr.bf16.mxu0 0
      %4809 = vmatpush1.bf16.msra.mxu0 0
      %4810 = vmatprep.subr.bf16.mxu0 0
      %4811 = vmatpush1.bf16.msra.mxu0 0
      %4812 = vmatprep.subr.bf16.mxu0 0
      %4813 = vmatpush1.bf16.msra.mxu0 0
      %4814 = vmatprep.mubr.bf16.mxu0 0
      %4815 = vmatmul.mubr.bf16.gmra.mrb[0].mxu0 %v4771
      %v4816 = vpop.f32.mrb[0].mxu0
      %v4817 = vadd.f32 0.0, %v4816
      %v4818 = vpop.f32.mrb[0].mxu0
      %v4819 = vadd.f32 0.0, %v4818
      %v4820 = vpop.f32.mrb[0].mxu0
      %v4821 = vpop.f32.mrb[0].mxu0
      %4822 = vdwg.mxu0
      %4823 = vmatprep.subr.bf16.mxu0 0
      %4824 = vmatpush1.bf16.msra.mxu0 %v4780
      %4825 = vmatprep.subr.bf16.mxu0 0
      %4826 = vmatpush1.bf16.msra.mxu0 0
      %4827 = vmatprep.subr.bf16.mxu0 0
      %4828 = vmatpush1.bf16.msra.mxu0 0
      %4829 = vmatprep.subr.bf16.mxu0 0
      %4830 = vmatpush1.bf16.msra.mxu0 0
      %4831 = vmatprep.subr.bf16.mxu0 0
      %4832 = vmatpush1.bf16.msra.mxu0 0
      %4833 = vmatprep.subr.bf16.mxu0 0
      %4834 = vmatpush1.bf16.msra.mxu0 0
      %4835 = vmatprep.subr.bf16.mxu0 0
      %4836 = vmatpush1.bf16.msra.mxu0 0
      %4837 = vmatprep.subr.bf16.mxu0 0
      %4838 = vmatpush1.bf16.msra.mxu0 0
      %4839 = vmatprep.subr.bf16.mxu0 0
      %4840 = vmatpush1.bf16.msra.mxu0 0
      %4841 = vmatprep.subr.bf16.mxu0 0
      %4842 = vmatpush1.bf16.msra.mxu0 0
      %4843 = vmatprep.subr.bf16.mxu0 0
      %4844 = vmatpush1.bf16.msra.mxu0 0
      %4845 = vmatprep.subr.bf16.mxu0 0
      %4846 = vmatpush1.bf16.msra.mxu0 0
      %4847 = vmatprep.subr.bf16.mxu0 0
      %4848 = vmatpush1.bf16.msra.mxu0 0
      %4849 = vmatprep.subr.bf16.mxu0 0
      %4850 = vmatpush1.bf16.msra.mxu0 0
      %4851 = vmatprep.subr.bf16.mxu0 0
      %4852 = vmatpush1.bf16.msra.mxu0 0
      %4853 = vmatprep.subr.bf16.mxu0 0
      %4854 = vmatpush1.bf16.msra.mxu0 0
      %4855 = vmatprep.mubr.bf16.mxu0 0
      %4856 = vmatmul.mubr.bf16.gmra.mrb[0].mxu0 %v4771
      %v4857 = vpop.f32.mrb[0].mxu0
      %v4858 = vadd.f32 0.0, %v4857
      %v4859 = vpop.f32.mrb[0].mxu0
      %v4860 = vpop.f32.mrb[0].mxu0
      %v4861 = vpop.f32.mrb[0].mxu0
      %4862 = vdwg.mxu0
      %v4863 = vadd.f32 %v4754, %v4817
      %v4864 = vadd.f32 %v4755, %v4819
      %v4865 = vadd.f32 %v4756, %v4858
      %v4866 = vld [vmem:[%s2 + $0xa8] sm:$0xf]
      %4867 = vrot.lane.b32.xlu0 %v303, 124
      %v4868 = vpop.permute.xlu0 %4867
      %v4869 = vsel %vm733, %v732, %v4868
      %v4871 = vsel %vm318, %v4866, 0
      %v4874 = vsel %vm322, %v4869, 0
      %4876 = vmatprep.subr.bf16.mxu0 %v747
      %4877 = vmatpush1.bf16.msra.mxu0 %v744
      %4878 = vmatprep.subr.bf16.mxu0 0
      %4879 = vmatpush1.bf16.msra.mxu0 0
      %4880 = vmatprep.subr.bf16.mxu0 0
      %4881 = vmatpush1.bf16.msra.mxu0 0
      %4882 = vmatprep.subr.bf16.mxu0 0
      %4883 = vmatpush1.bf16.msra.mxu0 0
      %4884 = vmatprep.subr.bf16.mxu0 0
      %4885 = vmatpush1.bf16.msra.mxu0 0
      %4886 = vmatprep.subr.bf16.mxu0 0
      %4887 = vmatpush1.bf16.msra.mxu0 0
      %4888 = vmatprep.subr.bf16.mxu0 0
      %4889 = vmatpush1.bf16.msra.mxu0 0
      %4890 = vmatprep.subr.bf16.mxu0 0
      %4891 = vmatpush1.bf16.msra.mxu0 0
      %4892 = vmatprep.subr.bf16.mxu0 0
      %4893 = vmatpush1.bf16.msra.mxu0 0
      %4894 = vmatprep.subr.bf16.mxu0 0
      %4895 = vmatpush1.bf16.msra.mxu0 0
      %4896 = vmatprep.subr.bf16.mxu0 0
      %4897 = vmatpush1.bf16.msra.mxu0 0
      %4898 = vmatprep.subr.bf16.mxu0 0
      %4899 = vmatpush1.bf16.msra.mxu0 0
      %4900 = vmatprep.subr.bf16.mxu0 0
      %4901 = vmatpush1.bf16.msra.mxu0 0
      %4902 = vmatprep.subr.bf16.mxu0 0
      %4903 = vmatpush1.bf16.msra.mxu0 0
      %4904 = vmatprep.subr.bf16.mxu0 0
      %4905 = vmatpush1.bf16.msra.mxu0 0
      %4906 = vmatprep.subr.bf16.mxu0 0
      %4907 = vmatpush1.bf16.msra.mxu0 0
      %4908 = vmatprep.mubr.bf16.mxu0 0
      %4909 = vmatmul.mubr.bf16.gmra.mrb[0].mxu0 %v4871
      %v4910 = vpop.f32.mrb[0].mxu0
      %v4911 = vadd.f32 0.0, %v4910
      %v4912 = vpop.f32.mrb[0].mxu0
      %v4913 = vadd.f32 0.0, %v4912
      %v4914 = vpop.f32.mrb[0].mxu0
      %v4915 = vpop.f32.mrb[0].mxu0
      %4916 = vdwg.mxu0
      %4917 = vmatprep.subr.bf16.mxu0 0
      %4918 = vmatpush1.bf16.msra.mxu0 %v4874
      %4919 = vmatprep.subr.bf16.mxu0 0
      %4920 = vmatpush1.bf16.msra.mxu0 0
      %4921 = vmatprep.subr.bf16.mxu0 0
      %4922 = vmatpush1.bf16.msra.mxu0 0
      %4923 = vmatprep.subr.bf16.mxu0 0
      %4924 = vmatpush1.bf16.msra.mxu0 0
      %4925 = vmatprep.subr.bf16.mxu0 0
      %4926 = vmatpush1.bf16.msra.mxu0 0
      %4927 = vmatprep.subr.bf16.mxu0 0
      %4928 = vmatpush1.bf16.msra.mxu0 0
      %4929 = vmatprep.subr.bf16.mxu0 0
      %4930 = vmatpush1.bf16.msra.mxu0 0
      %4931 = vmatprep.subr.bf16.mxu0 0
      %4932 = vmatpush1.bf16.msra.mxu0 0
      %4933 = vmatprep.subr.bf16.mxu0 0
      %4934 = vmatpush1.bf16.msra.mxu0 0
      %4935 = vmatprep.subr.bf16.mxu0 0
      %4936 = vmatpush1.bf16.msra.mxu0 0
      %4937 = vmatprep.subr.bf16.mxu0 0
      %4938 = vmatpush1.bf16.msra.mxu0 0
      %4939 = vmatprep.subr.bf16.mxu0 0
      %4940 = vmatpush1.bf16.msra.mxu0 0
      %4941 = vmatprep.subr.bf16.mxu0 0
      %4942 = vmatpush1.bf16.msra.mxu0 0
      %4943 = vmatprep.subr.bf16.mxu0 0
      %4944 = vmatpush1.bf16.msra.mxu0 0
      %4945 = vmatprep.subr.bf16.mxu0 0
      %4946 = vmatpush1.bf16.msra.mxu0 0
      %4947 = vmatprep.subr.bf16.mxu0 0
      %4948 = vmatpush1.bf16.msra.mxu0 0
      %4949 = vmatprep.mubr.bf16.mxu0 0
      %4950 = vmatmul.mubr.bf16.gmra.mrb[0].mxu0 %v4871
      %v4951 = vpop.f32.mrb[0].mxu0
      %v4952 = vadd.f32 0.0, %v4951
      %v4953 = vpop.f32.mrb[0].mxu0
      %v4954 = vpop.f32.mrb[0].mxu0
      %v4955 = vpop.f32.mrb[0].mxu0
      %4956 = vdwg.mxu0
      %v4957 = vadd.f32 %v4863, %v4911
      %v4958 = vadd.f32 %v4864, %v4913
      %v4959 = vadd.f32 %v4865, %v4952
      %v4960 = vld [vmem:[%s2 + $0xac] sm:$0xf]
      %4961 = vrot.lane.b32.xlu0 %v303, 123
      %v4962 = vpop.permute.xlu0 %4961
      %v4963 = vsel %vm842, %v841, %v4962
      %v4965 = vsel %vm318, %v4960, 0
      %v4968 = vsel %vm322, %v4963, 0
      %4970 = vmatprep.subr.bf16.mxu0 %v856
      %4971 = vmatpush1.bf16.msra.mxu0 %v853
      %4972 = vmatprep.subr.bf16.mxu0 0
      %4973 = vmatpush1.bf16.msra.mxu0 0
      %4974 = vmatprep.subr.bf16.mxu0 0
      %4975 = vmatpush1.bf16.msra.mxu0 0
      %4976 = vmatprep.subr.bf16.mxu0 0
      %4977 = vmatpush1.bf16.msra.mxu0 0
      %4978 = vmatprep.subr.bf16.mxu0 0
      %4979 = vmatpush1.bf16.msra.mxu0 0
      %4980 = vmatprep.subr.bf16.mxu0 0
      %4981 = vmatpush1.bf16.msra.mxu0 0
      %4982 = vmatprep.subr.bf16.mxu0 0
      %4983 = vmatpush1.bf16.msra.mxu0 0
      %4984 = vmatprep.subr.bf16.mxu0 0
      %4985 = vmatpush1.bf16.msra.mxu0 0
      %4986 = vmatprep.subr.bf16.mxu0 0
      %4987 = vmatpush1.bf16.msra.mxu0 0
      %4988 = vmatprep.subr.bf16.mxu0 0
      %4989 = vmatpush1.bf16.msra.mxu0 0
      %4990 = vmatprep.subr.bf16.mxu0 0
      %4991 = vmatpush1.bf16.msra.mxu0 0
      %4992 = vmatprep.subr.bf16.mxu0 0
      %4993 = vmatpush1.bf16.msra.mxu0 0
      %4994 = vmatprep.subr.bf16.mxu0 0
      %4995 = vmatpush1.bf16.msra.mxu0 0
      %4996 = vmatprep.subr.bf16.mxu0 0
      %4997 = vmatpush1.bf16.msra.mxu0 0
      %4998 = vmatprep.subr.bf16.mxu0 0
      %4999 = vmatpush1.bf16.msra.mxu0 0
      %5000 = vmatprep.subr.bf16.mxu0 0
      %5001 = vmatpush1.bf16.msra.mxu0 0
      %5002 = vmatprep.mubr.bf16.mxu0 0
      %5003 = vmatmul.mubr.bf16.gmra.mrb[0].mxu0 %v4965
      %v5004 = vpop.f32.mrb[0].mxu0
      %v5005 = vadd.f32 0.0, %v5004
      %v5006 = vpop.f32.mrb[0].mxu0
      %v5007 = vadd.f32 0.0, %v5006
      %v5008 = vpop.f32.mrb[0].mxu0
      %v5009 = vpop.f32.mrb[0].mxu0
      %5010 = vdwg.mxu0
      %5011 = vmatprep.subr.bf16.mxu0 0
      %5012 = vmatpush1.bf16.msra.mxu0 %v4968
      %5013 = vmatprep.subr.bf16.mxu0 0
      %5014 = vmatpush1.bf16.msra.mxu0 0
      %5015 = vmatprep.subr.bf16.mxu0 0
      %5016 = vmatpush1.bf16.msra.mxu0 0
      %5017 = vmatprep.subr.bf16.mxu0 0
      %5018 = vmatpush1.bf16.msra.mxu0 0
      %5019 = vmatprep.subr.bf16.mxu0 0
      %5020 = vmatpush1.bf16.msra.mxu0 0
      %5021 = vmatprep.subr.bf16.mxu0 0
      %5022 = vmatpush1.bf16.msra.mxu0 0
      %5023 = vmatprep.subr.bf16.mxu0 0
      %5024 = vmatpush1.bf16.msra.mxu0 0
      %5025 = vmatprep.subr.bf16.mxu0 0
      %5026 = vmatpush1.bf16.msra.mxu0 0
      %5027 = vmatprep.subr.bf16.mxu0 0
      %5028 = vmatpush1.bf16.msra.mxu0 0
      %5029 = vmatprep.subr.bf16.mxu0 0
      %5030 = vmatpush1.bf16.msra.mxu0 0
      %5031 = vmatprep.subr.bf16.mxu0 0
      %5032 = vmatpush1.bf16.msra.mxu0 0
      %5033 = vmatprep.subr.bf16.mxu0 0
      %5034 = vmatpush1.bf16.msra.mxu0 0
      %5035 = vmatprep.subr.bf16.mxu0 0
      %5036 = vmatpush1.bf16.msra.mxu0 0
      %5037 = vmatprep.subr.bf16.mxu0 0
      %5038 = vmatpush1.bf16.msra.mxu0 0
      %5039 = vmatprep.subr.bf16.mxu0 0
      %5040 = vmatpush1.bf16.msra.mxu0 0
      %5041 = vmatprep.subr.bf16.mxu0 0
      %5042 = vmatpush1.bf16.msra.mxu0 0
      %5043 = vmatprep.mubr.bf16.mxu0 0
      %5044 = vmatmul.mubr.bf16.gmra.mrb[0].mxu0 %v4965
      %v5045 = vpop.f32.mrb[0].mxu0
      %v5046 = vadd.f32 0.0, %v5045
      %v5047 = vpop.f32.mrb[0].mxu0
      %v5048 = vpop.f32.mrb[0].mxu0
      %v5049 = vpop.f32.mrb[0].mxu0
      %5050 = vdwg.mxu0
      %v5051 = vadd.f32 %v4957, %v5005
      %v5052 = vadd.f32 %v4958, %v5007
      %v5053 = vadd.f32 %v4959, %v5046
      %v5054 = vld [vmem:[%s2 + $0xb0] sm:$0xf]
      %5055 = vrot.lane.b32.xlu0 %v303, 122
      %v5056 = vpop.permute.xlu0 %5055
      %v5057 = vsel %vm951, %v950, %v5056
      %v5059 = vsel %vm318, %v5054, 0
      %v5062 = vsel %vm322, %v5057, 0
      %5064 = vmatprep.subr.bf16.mxu0 %v965
      %5065 = vmatpush1.bf16.msra.mxu0 %v962
      %5066 = vmatprep.subr.bf16.mxu0 0
      %5067 = vmatpush1.bf16.msra.mxu0 0
      %5068 = vmatprep.subr.bf16.mxu0 0
      %5069 = vmatpush1.bf16.msra.mxu0 0
      %5070 = vmatprep.subr.bf16.mxu0 0
      %5071 = vmatpush1.bf16.msra.mxu0 0
      %5072 = vmatprep.subr.bf16.mxu0 0
      %5073 = vmatpush1.bf16.msra.mxu0 0
      %5074 = vmatprep.subr.bf16.mxu0 0
      %5075 = vmatpush1.bf16.msra.mxu0 0
      %5076 = vmatprep.subr.bf16.mxu0 0
      %5077 = vmatpush1.bf16.msra.mxu0 0
      %5078 = vmatprep.subr.bf16.mxu0 0
      %5079 = vmatpush1.bf16.msra.mxu0 0
      %5080 = vmatprep.subr.bf16.mxu0 0
      %5081 = vmatpush1.bf16.msra.mxu0 0
      %5082 = vmatprep.subr.bf16.mxu0 0
      %5083 = vmatpush1.bf16.msra.mxu0 0
      %5084 = vmatprep.subr.bf16.mxu0 0
      %5085 = vmatpush1.bf16.msra.mxu0 0
      %5086 = vmatprep.subr.bf16.mxu0 0
      %5087 = vmatpush1.bf16.msra.mxu0 0
      %5088 = vmatprep.subr.bf16.mxu0 0
      %5089 = vmatpush1.bf16.msra.mxu0 0
      %5090 = vmatprep.subr.bf16.mxu0 0
      %5091 = vmatpush1.bf16.msra.mxu0 0
      %5092 = vmatprep.subr.bf16.mxu0 0
      %5093 = vmatpush1.bf16.msra.mxu0 0
      %5094 = vmatprep.subr.bf16.mxu0 0
      %5095 = vmatpush1.bf16.msra.mxu0 0
      %5096 = vmatprep.mubr.bf16.mxu0 0
      %5097 = vmatmul.mubr.bf16.gmra.mrb[0].mxu0 %v5059
      %v5098 = vpop.f32.mrb[0].mxu0
      %v5099 = vadd.f32 0.0, %v5098
      %v5100 = vpop.f32.mrb[0].mxu0
      %v5101 = vadd.f32 0.0, %v5100
      %v5102 = vpop.f32.mrb[0].mxu0
      %v5103 = vpop.f32.mrb[0].mxu0
      %5104 = vdwg.mxu0
      %5105 = vmatprep.subr.bf16.mxu0 0
      %5106 = vmatpush1.bf16.msra.mxu0 %v5062
      %5107 = vmatprep.subr.bf16.mxu0 0
      %5108 = vmatpush1.bf16.msra.mxu0 0
      %5109 = vmatprep.subr.bf16.mxu0 0
      %5110 = vmatpush1.bf16.msra.mxu0 0
      %5111 = vmatprep.subr.bf16.mxu0 0
      %5112 = vmatpush1.bf16.msra.mxu0 0
      %5113 = vmatprep.subr.bf16.mxu0 0
      %5114 = vmatpush1.bf16.msra.mxu0 0
      %5115 = vmatprep.subr.bf16.mxu0 0
      %5116 = vmatpush1.bf16.msra.mxu0 0
      %5117 = vmatprep.subr.bf16.mxu0 0
      %5118 = vmatpush1.bf16.msra.mxu0 0
      %5119 = vmatprep.subr.bf16.mxu0 0
      %5120 = vmatpush1.bf16.msra.mxu0 0
      %5121 = vmatprep.subr.bf16.mxu0 0
      %5122 = vmatpush1.bf16.msra.mxu0 0
      %5123 = vmatprep.subr.bf16.mxu0 0
      %5124 = vmatpush1.bf16.msra.mxu0 0
      %5125 = vmatprep.subr.bf16.mxu0 0
      %5126 = vmatpush1.bf16.msra.mxu0 0
      %5127 = vmatprep.subr.bf16.mxu0 0
      %5128 = vmatpush1.bf16.msra.mxu0 0
      %5129 = vmatprep.subr.bf16.mxu0 0
      %5130 = vmatpush1.bf16.msra.mxu0 0
      %5131 = vmatprep.subr.bf16.mxu0 0
      %5132 = vmatpush1.bf16.msra.mxu0 0
      %5133 = vmatprep.subr.bf16.mxu0 0
      %5134 = vmatpush1.bf16.msra.mxu0 0
      %5135 = vmatprep.subr.bf16.mxu0 0
      %5136 = vmatpush1.bf16.msra.mxu0 0
      %5137 = vmatprep.mubr.bf16.mxu0 0
      %5138 = vmatmul.mubr.bf16.gmra.mrb[0].mxu0 %v5059
      %v5139 = vpop.f32.mrb[0].mxu0
      %v5140 = vadd.f32 0.0, %v5139
      %v5141 = vpop.f32.mrb[0].mxu0
      %v5142 = vpop.f32.mrb[0].mxu0
      %v5143 = vpop.f32.mrb[0].mxu0
      %5144 = vdwg.mxu0
      %v5145 = vadd.f32 %v5051, %v5099
      %v5146 = vadd.f32 %v5052, %v5101
      %v5147 = vadd.f32 %v5053, %v5140
      %v5148 = vld [vmem:[%s2 + $0xb4] sm:$0xf]
      %5149 = vrot.lane.b32.xlu0 %v297, 121
      %v5150 = vpop.permute.xlu0 %5149
      %5151 = vrot.lane.b32.xlu0 %v298, 121
      %v5152 = vpop.permute.xlu0 %5151
      %5153 = vrot.lane.b32.xlu0 %v302, 121
      %v5154 = vpop.permute.xlu0 %5153
      %5155 = vrot.lane.b32.xlu0 %v303, 121
      %v5156 = vpop.permute.xlu0 %5155
      %vm5157 = vcmask 990208
      %v5158 = vsel %vm5157, %v5150, %v5152
      %v5159 = vsel %vm5157, %v5152, %v5154
      %v5160 = vsel %vm5157, %v5154, %v5156
      %v5162 = vsel %vm318, %v5148, 0
      %v5165 = vsel %vm322, %v5158, 0
      %v5168 = vsel %vm322, %v5159, 0
      %v5171 = vsel %vm322, %v5160, 0
      %5173 = vmatprep.subr.bf16.mxu0 %v5168
      %5174 = vmatpush1.bf16.msra.mxu0 %v5165
      %5175 = vmatprep.subr.bf16.mxu0 0
      %5176 = vmatpush1.bf16.msra.mxu0 0
      %5177 = vmatprep.subr.bf16.mxu0 0
      %5178 = vmatpush1.bf16.msra.mxu0 0
      %5179 = vmatprep.subr.bf16.mxu0 0
      %5180 = vmatpush1.bf16.msra.mxu0 0
      %5181 = vmatprep.subr.bf16.mxu0 0
      %5182 = vmatpush1.bf16.msra.mxu0 0
      %5183 = vmatprep.subr.bf16.mxu0 0
      %5184 = vmatpush1.bf16.msra.mxu0 0
      %5185 = vmatprep.subr.bf16.mxu0 0
      %5186 = vmatpush1.bf16.msra.mxu0 0
      %5187 = vmatprep.subr.bf16.mxu0 0
      %5188 = vmatpush1.bf16.msra.mxu0 0
      %5189 = vmatprep.subr.bf16.mxu0 0
      %5190 = vmatpush1.bf16.msra.mxu0 0
      %5191 = vmatprep.subr.bf16.mxu0 0
      %5192 = vmatpush1.bf16.msra.mxu0 0
      %5193 = vmatprep.subr.bf16.mxu0 0
      %5194 = vmatpush1.bf16.msra.mxu0 0
      %5195 = vmatprep.subr.bf16.mxu0 0
      %5196 = vmatpush1.bf16.msra.mxu0 0
      %5197 = vmatprep.subr.bf16.mxu0 0
      %5198 = vmatpush1.bf16.msra.mxu0 0
      %5199 = vmatprep.subr.bf16.mxu0 0
      %5200 = vmatpush1.bf16.msra.mxu0 0
      %5201 = vmatprep.subr.bf16.mxu0 0
      %5202 = vmatpush1.bf16.msra.mxu0 0
      %5203 = vmatprep.subr.bf16.mxu0 0
      %5204 = vmatpush1.bf16.msra.mxu0 0
      %5205 = vmatprep.mubr.bf16.mxu0 0
      %5206 = vmatmul.mubr.bf16.gmra.mrb[0].mxu0 %v5162
      %v5207 = vpop.f32.mrb[0].mxu0
      %v5208 = vadd.f32 0.0, %v5207
      %v5209 = vpop.f32.mrb[0].mxu0
      %v5210 = vadd.f32 0.0, %v5209
      %v5211 = vpop.f32.mrb[0].mxu0
      %v5212 = vpop.f32.mrb[0].mxu0
      %5213 = vdwg.mxu0
      %5214 = vmatprep.subr.bf16.mxu0 0
      %5215 = vmatpush1.bf16.msra.mxu0 %v5171
      %5216 = vmatprep.subr.bf16.mxu0 0
      %5217 = vmatpush1.bf16.msra.mxu0 0
      %5218 = vmatprep.subr.bf16.mxu0 0
      %5219 = vmatpush1.bf16.msra.mxu0 0
      %5220 = vmatprep.subr.bf16.mxu0 0
      %5221 = vmatpush1.bf16.msra.mxu0 0
      %5222 = vmatprep.subr.bf16.mxu0 0
      %5223 = vmatpush1.bf16.msra.mxu0 0
      %5224 = vmatprep.subr.bf16.mxu0 0
      %5225 = vmatpush1.bf16.msra.mxu0 0
      %5226 = vmatprep.subr.bf16.mxu0 0
      %5227 = vmatpush1.bf16.msra.mxu0 0
      %5228 = vmatprep.subr.bf16.mxu0 0
      %5229 = vmatpush1.bf16.msra.mxu0 0
      %5230 = vmatprep.subr.bf16.mxu0 0
      %5231 = vmatpush1.bf16.msra.mxu0 0
      %5232 = vmatprep.subr.bf16.mxu0 0
      %5233 = vmatpush1.bf16.msra.mxu0 0
      %5234 = vmatprep.subr.bf16.mxu0 0
      %5235 = vmatpush1.bf16.msra.mxu0 0
      %5236 = vmatprep.subr.bf16.mxu0 0
      %5237 = vmatpush1.bf16.msra.mxu0 0
      %5238 = vmatprep.subr.bf16.mxu0 0
      %5239 = vmatpush1.bf16.msra.mxu0 0
      %5240 = vmatprep.subr.bf16.mxu0 0
      %5241 = vmatpush1.bf16.msra.mxu0 0
      %5242 = vmatprep.subr.bf16.mxu0 0
      %5243 = vmatpush1.bf16.msra.mxu0 0
      %5244 = vmatprep.subr.bf16.mxu0 0
      %5245 = vmatpush1.bf16.msra.mxu0 0
      %5246 = vmatprep.mubr.bf16.mxu0 0
      %5247 = vmatmul.mubr.bf16.gmra.mrb[0].mxu0 %v5162
      %v5248 = vpop.f32.mrb[0].mxu0
      %v5249 = vadd.f32 0.0, %v5248
      %v5250 = vpop.f32.mrb[0].mxu0
      %v5251 = vpop.f32.mrb[0].mxu0
      %v5252 = vpop.f32.mrb[0].mxu0
      %5253 = vdwg.mxu0
      %v5254 = vadd.f32 %v5145, %v5208
      %v5255 = vadd.f32 %v5146, %v5210
      %v5256 = vadd.f32 %v5147, %v5249
      %v5257 = vld [vmem:[%s2 + $0xb8] sm:$0xf]
      %5258 = vrot.lane.b32.xlu0 %v297, 120
      %v5259 = vpop.permute.xlu0 %5258
      %5260 = vrot.lane.b32.xlu0 %v298, 120
      %v5261 = vpop.permute.xlu0 %5260
      %5262 = vrot.lane.b32.xlu0 %v302, 120
      %v5263 = vpop.permute.xlu0 %5262
      %5264 = vrot.lane.b32.xlu0 %v303, 120
      %v5265 = vpop.permute.xlu0 %5264
      %vm5266 = vcmask 982016
      %v5267 = vsel %vm5266, %v5259, %v5261
      %v5268 = vsel %vm5266, %v5261, %v5263
      %v5269 = vsel %vm5266, %v5263, %v5265
      %v5271 = vsel %vm318, %v5257, 0
      %v5274 = vsel %vm322, %v5267, 0
      %v5277 = vsel %vm322, %v5268, 0
      %v5280 = vsel %vm322, %v5269, 0
      %5282 = vmatprep.subr.bf16.mxu0 %v5277
      %5283 = vmatpush1.bf16.msra.mxu0 %v5274
      %5284 = vmatprep.subr.bf16.mxu0 0
      %5285 = vmatpush1.bf16.msra.mxu0 0
      %5286 = vmatprep.subr.bf16.mxu0 0
      %5287 = vmatpush1.bf16.msra.mxu0 0
      %5288 = vmatprep.subr.bf16.mxu0 0
      %5289 = vmatpush1.bf16.msra.mxu0 0
      %5290 = vmatprep.subr.bf16.mxu0 0
      %5291 = vmatpush1.bf16.msra.mxu0 0
      %5292 = vmatprep.subr.bf16.mxu0 0
      %5293 = vmatpush1.bf16.msra.mxu0 0
      %5294 = vmatprep.subr.bf16.mxu0 0
      %5295 = vmatpush1.bf16.msra.mxu0 0
      %5296 = vmatprep.subr.bf16.mxu0 0
      %5297 = vmatpush1.bf16.msra.mxu0 0
      %5298 = vmatprep.subr.bf16.mxu0 0
      %5299 = vmatpush1.bf16.msra.mxu0 0
      %5300 = vmatprep.subr.bf16.mxu0 0
      %5301 = vmatpush1.bf16.msra.mxu0 0
      %5302 = vmatprep.subr.bf16.mxu0 0
      %5303 = vmatpush1.bf16.msra.mxu0 0
      %5304 = vmatprep.subr.bf16.mxu0 0
      %5305 = vmatpush1.bf16.msra.mxu0 0
      %5306 = vmatprep.subr.bf16.mxu0 0
      %5307 = vmatpush1.bf16.msra.mxu0 0
      %5308 = vmatprep.subr.bf16.mxu0 0
      %5309 = vmatpush1.bf16.msra.mxu0 0
      %5310 = vmatprep.subr.bf16.mxu0 0
      %5311 = vmatpush1.bf16.msra.mxu0 0
      %5312 = vmatprep.subr.bf16.mxu0 0
      %5313 = vmatpush1.bf16.msra.mxu0 0
      %5314 = vmatprep.mubr.bf16.mxu0 0
      %5315 = vmatmul.mubr.bf16.gmra.mrb[0].mxu0 %v5271
      %v5316 = vpop.f32.mrb[0].mxu0
      %v5317 = vadd.f32 0.0, %v5316
      %v5318 = vpop.f32.mrb[0].mxu0
      %v5319 = vadd.f32 0.0, %v5318
      %v5320 = vpop.f32.mrb[0].mxu0
      %v5321 = vpop.f32.mrb[0].mxu0
      %5322 = vdwg.mxu0
      %5323 = vmatprep.subr.bf16.mxu0 0
      %5324 = vmatpush1.bf16.msra.mxu0 %v5280
      %5325 = vmatprep.subr.bf16.mxu0 0
      %5326 = vmatpush1.bf16.msra.mxu0 0
      %5327 = vmatprep.subr.bf16.mxu0 0
      %5328 = vmatpush1.bf16.msra.mxu0 0
      %5329 = vmatprep.subr.bf16.mxu0 0
      %5330 = vmatpush1.bf16.msra.mxu0 0
      %5331 = vmatprep.subr.bf16.mxu0 0
      %5332 = vmatpush1.bf16.msra.mxu0 0
      %5333 = vmatprep.subr.bf16.mxu0 0
      %5334 = vmatpush1.bf16.msra.mxu0 0
      %5335 = vmatprep.subr.bf16.mxu0 0
      %5336 = vmatpush1.bf16.msra.mxu0 0
      %5337 = vmatprep.subr.bf16.mxu0 0
      %5338 = vmatpush1.bf16.msra.mxu0 0
      %5339 = vmatprep.subr.bf16.mxu0 0
      %5340 = vmatpush1.bf16.msra.mxu0 0
      %5341 = vmatprep.subr.bf16.mxu0 0
      %5342 = vmatpush1.bf16.msra.mxu0 0
      %5343 = vmatprep.subr.bf16.mxu0 0
      %5344 = vmatpush1.bf16.msra.mxu0 0
      %5345 = vmatprep.subr.bf16.mxu0 0
      %5346 = vmatpush1.bf16.msra.mxu0 0
      %5347 = vmatprep.subr.bf16.mxu0 0
      %5348 = vmatpush1.bf16.msra.mxu0 0
      %5349 = vmatprep.subr.bf16.mxu0 0
      %5350 = vmatpush1.bf16.msra.mxu0 0
      %5351 = vmatprep.subr.bf16.mxu0 0
      %5352 = vmatpush1.bf16.msra.mxu0 0
      %5353 = vmatprep.subr.bf16.mxu0 0
      %5354 = vmatpush1.bf16.msra.mxu0 0
      %5355 = vmatprep.mubr.bf16.mxu0 0
      %5356 = vmatmul.mubr.bf16.gmra.mrb[0].mxu0 %v5271
      %v5357 = vpop.f32.mrb[0].mxu0
      %v5358 = vadd.f32 0.0, %v5357
      %v5359 = vpop.f32.mrb[0].mxu0
      %v5360 = vpop.f32.mrb[0].mxu0
      %v5361 = vpop.f32.mrb[0].mxu0
      %5362 = vdwg.mxu0
      %v5363 = vadd.f32 %v5254, %v5317
      %v5364 = vadd.f32 %v5255, %v5319
      %v5365 = vadd.f32 %v5256, %v5358
      %v5366 = vld [vmem:[%s2 + $0xbc] sm:$0xf]
      %5367 = vrot.lane.b32.xlu0 %v297, 119
      %v5368 = vpop.permute.xlu0 %5367
      %5369 = vrot.lane.b32.xlu0 %v298, 119
      %v5370 = vpop.permute.xlu0 %5369
      %5371 = vrot.lane.b32.xlu0 %v302, 119
      %v5372 = vpop.permute.xlu0 %5371
      %5373 = vrot.lane.b32.xlu0 %v303, 119
      %v5374 = vpop.permute.xlu0 %5373
      %vm5375 = vcmask 973824
      %v5376 = vsel %vm5375, %v5368, %v5370
      %v5377 = vsel %vm5375, %v5370, %v5372
      %v5378 = vsel %vm5375, %v5372, %v5374
      %v5380 = vsel %vm318, %v5366, 0
      %v5383 = vsel %vm322, %v5376, 0
      %v5386 = vsel %vm322, %v5377, 0
      %v5389 = vsel %vm322, %v5378, 0
      %5391 = vmatprep.subr.bf16.mxu0 %v5386
      %5392 = vmatpush1.bf16.msra.mxu0 %v5383
      %5393 = vmatprep.subr.bf16.mxu0 0
      %5394 = vmatpush1.bf16.msra.mxu0 0
      %5395 = vmatprep.subr.bf16.mxu0 0
      %5396 = vmatpush1.bf16.msra.mxu0 0
      %5397 = vmatprep.subr.bf16.mxu0 0
      %5398 = vmatpush1.bf16.msra.mxu0 0
      %5399 = vmatprep.subr.bf16.mxu0 0
      %5400 = vmatpush1.bf16.msra.mxu0 0
      %5401 = vmatprep.subr.bf16.mxu0 0
      %5402 = vmatpush1.bf16.msra.mxu0 0
      %5403 = vmatprep.subr.bf16.mxu0 0
      %5404 = vmatpush1.bf16.msra.mxu0 0
      %5405 = vmatprep.subr.bf16.mxu0 0
      %5406 = vmatpush1.bf16.msra.mxu0 0
      %5407 = vmatprep.subr.bf16.mxu0 0
      %5408 = vmatpush1.bf16.msra.mxu0 0
      %5409 = vmatprep.subr.bf16.mxu0 0
      %5410 = vmatpush1.bf16.msra.mxu0 0
      %5411 = vmatprep.subr.bf16.mxu0 0
      %5412 = vmatpush1.bf16.msra.mxu0 0
      %5413 = vmatprep.subr.bf16.mxu0 0
      %5414 = vmatpush1.bf16.msra.mxu0 0
      %5415 = vmatprep.subr.bf16.mxu0 0
      %5416 = vmatpush1.bf16.msra.mxu0 0
      %5417 = vmatprep.subr.bf16.mxu0 0
      %5418 = vmatpush1.bf16.msra.mxu0 0
      %5419 = vmatprep.subr.bf16.mxu0 0
      %5420 = vmatpush1.bf16.msra.mxu0 0
      %5421 = vmatprep.subr.bf16.mxu0 0
      %5422 = vmatpush1.bf16.msra.mxu0 0
      %5423 = vmatprep.mubr.bf16.mxu0 0
      %5424 = vmatmul.mubr.bf16.gmra.mrb[0].mxu0 %v5380
      %v5425 = vpop.f32.mrb[0].mxu0
      %v5426 = vadd.f32 0.0, %v5425
      %v5427 = vpop.f32.mrb[0].mxu0
      %v5428 = vadd.f32 0.0, %v5427
      %v5429 = vpop.f32.mrb[0].mxu0
      %v5430 = vpop.f32.mrb[0].mxu0
      %5431 = vdwg.mxu0
      %5432 = vmatprep.subr.bf16.mxu0 0
      %5433 = vmatpush1.bf16.msra.mxu0 %v5389
      %5434 = vmatprep.subr.bf16.mxu0 0
      %5435 = vmatpush1.bf16.msra.mxu0 0
      %5436 = vmatprep.subr.bf16.mxu0 0
      %5437 = vmatpush1.bf16.msra.mxu0 0
      %5438 = vmatprep.subr.bf16.mxu0 0
      %5439 = vmatpush1.bf16.msra.mxu0 0
      %5440 = vmatprep.subr.bf16.mxu0 0
      %5441 = vmatpush1.bf16.msra.mxu0 0
      %5442 = vmatprep.subr.bf16.mxu0 0
      %5443 = vmatpush1.bf16.msra.mxu0 0
      %5444 = vmatprep.subr.bf16.mxu0 0
      %5445 = vmatpush1.bf16.msra.mxu0 0
      %5446 = vmatprep.subr.bf16.mxu0 0
      %5447 = vmatpush1.bf16.msra.mxu0 0
      %5448 = vmatprep.subr.bf16.mxu0 0
      %5449 = vmatpush1.bf16.msra.mxu0 0
      %5450 = vmatprep.subr.bf16.mxu0 0
      %5451 = vmatpush1.bf16.msra.mxu0 0
      %5452 = vmatprep.subr.bf16.mxu0 0
      %5453 = vmatpush1.bf16.msra.mxu0 0
      %5454 = vmatprep.subr.bf16.mxu0 0
      %5455 = vmatpush1.bf16.msra.mxu0 0
      %5456 = vmatprep.subr.bf16.mxu0 0
      %5457 = vmatpush1.bf16.msra.mxu0 0
      %5458 = vmatprep.subr.bf16.mxu0 0
      %5459 = vmatpush1.bf16.msra.mxu0 0
      %5460 = vmatprep.subr.bf16.mxu0 0
      %5461 = vmatpush1.bf16.msra.mxu0 0
      %5462 = vmatprep.subr.bf16.mxu0 0
      %5463 = vmatpush1.bf16.msra.mxu0 0
      %5464 = vmatprep.mubr.bf16.mxu0 0
      %5465 = vmatmul.mubr.bf16.gmra.mrb[0].mxu0 %v5380
      %v5466 = vpop.f32.mrb[0].mxu0
      %v5467 = vadd.f32 0.0, %v5466
      %v5468 = vpop.f32.mrb[0].mxu0
      %v5469 = vpop.f32.mrb[0].mxu0
      %v5470 = vpop.f32.mrb[0].mxu0
      %5471 = vdwg.mxu0
      %v5472 = vadd.f32 %v5363, %v5426
      %v5473 = vadd.f32 %v5364, %v5428
      %v5474 = vadd.f32 %v5365, %v5467
      %v5475 = vld [vmem:[%s2 + $0xc0] sm:$0xf]
      %5476 = vrot.lane.b32.xlu0 %v297, 118
      %v5477 = vpop.permute.xlu0 %5476
      %5478 = vrot.lane.b32.xlu0 %v298, 118
      %v5479 = vpop.permute.xlu0 %5478
      %5480 = vrot.lane.b32.xlu0 %v302, 118
      %v5481 = vpop.permute.xlu0 %5480
      %5482 = vrot.lane.b32.xlu0 %v303, 118
      %v5483 = vpop.permute.xlu0 %5482
      %vm5484 = vcmask 965632
      %v5485 = vsel %vm5484, %v5477, %v5479
      %v5486 = vsel %vm5484, %v5479, %v5481
      %v5487 = vsel %vm5484, %v5481, %v5483
      %v5489 = vsel %vm318, %v5475, 0
      %v5492 = vsel %vm322, %v5485, 0
      %v5495 = vsel %vm322, %v5486, 0
      %v5498 = vsel %vm322, %v5487, 0
      %5500 = vmatprep.subr.bf16.mxu0 %v5495
      %5501 = vmatpush1.bf16.msra.mxu0 %v5492
      %5502 = vmatprep.subr.bf16.mxu0 0
      %5503 = vmatpush1.bf16.msra.mxu0 0
      %5504 = vmatprep.subr.bf16.mxu0 0
      %5505 = vmatpush1.bf16.msra.mxu0 0
      %5506 = vmatprep.subr.bf16.mxu0 0
      %5507 = vmatpush1.bf16.msra.mxu0 0
      %5508 = vmatprep.subr.bf16.mxu0 0
      %5509 = vmatpush1.bf16.msra.mxu0 0
      %5510 = vmatprep.subr.bf16.mxu0 0
      %5511 = vmatpush1.bf16.msra.mxu0 0
      %5512 = vmatprep.subr.bf16.mxu0 0
      %5513 = vmatpush1.bf16.msra.mxu0 0
      %5514 = vmatprep.subr.bf16.mxu0 0
      %5515 = vmatpush1.bf16.msra.mxu0 0
      %5516 = vmatprep.subr.bf16.mxu0 0
      %5517 = vmatpush1.bf16.msra.mxu0 0
      %5518 = vmatprep.subr.bf16.mxu0 0
      %5519 = vmatpush1.bf16.msra.mxu0 0
      %5520 = vmatprep.subr.bf16.mxu0 0
      %5521 = vmatpush1.bf16.msra.mxu0 0
      %5522 = vmatprep.subr.bf16.mxu0 0
      %5523 = vmatpush1.bf16.msra.mxu0 0
      %5524 = vmatprep.subr.bf16.mxu0 0
      %5525 = vmatpush1.bf16.msra.mxu0 0
      %5526 = vmatprep.subr.bf16.mxu0 0
      %5527 = vmatpush1.bf16.msra.mxu0 0
      %5528 = vmatprep.subr.bf16.mxu0 0
      %5529 = vmatpush1.bf16.msra.mxu0 0
      %5530 = vmatprep.subr.bf16.mxu0 0
      %5531 = vmatpush1.bf16.msra.mxu0 0
      %5532 = vmatprep.mubr.bf16.mxu0 0
      %5533 = vmatmul.mubr.bf16.gmra.mrb[0].mxu0 %v5489
      %v5534 = vpop.f32.mrb[0].mxu0
      %v5535 = vadd.f32 0.0, %v5534
      %v5536 = vpop.f32.mrb[0].mxu0
      %v5537 = vadd.f32 0.0, %v5536
      %v5538 = vpop.f32.mrb[0].mxu0
      %v5539 = vpop.f32.mrb[0].mxu0
      %5540 = vdwg.mxu0
      %5541 = vmatprep.subr.bf16.mxu0 0
      %5542 = vmatpush1.bf16.msra.mxu0 %v5498
      %5543 = vmatprep.subr.bf16.mxu0 0
      %5544 = vmatpush1.bf16.msra.mxu0 0
      %5545 = vmatprep.subr.bf16.mxu0 0
      %5546 = vmatpush1.bf16.msra.mxu0 0
      %5547 = vmatprep.subr.bf16.mxu0 0
      %5548 = vmatpush1.bf16.msra.mxu0 0
      %5549 = vmatprep.subr.bf16.mxu0 0
      %5550 = vmatpush1.bf16.msra.mxu0 0
      %5551 = vmatprep.subr.bf16.mxu0 0
      %5552 = vmatpush1.bf16.msra.mxu0 0
      %5553 = vmatprep.subr.bf16.mxu0 0
      %5554 = vmatpush1.bf16.msra.mxu0 0
      %5555 = vmatprep.subr.bf16.mxu0 0
      %5556 = vmatpush1.bf16.msra.mxu0 0
      %5557 = vmatprep.subr.bf16.mxu0 0
      %5558 = vmatpush1.bf16.msra.mxu0 0
      %5559 = vmatprep.subr.bf16.mxu0 0
      %5560 = vmatpush1.bf16.msra.mxu0 0
      %5561 = vmatprep.subr.bf16.mxu0 0
      %5562 = vmatpush1.bf16.msra.mxu0 0
      %5563 = vmatprep.subr.bf16.mxu0 0
      %5564 = vmatpush1.bf16.msra.mxu0 0
      %5565 = vmatprep.subr.bf16.mxu0 0
      %5566 = vmatpush1.bf16.msra.mxu0 0
      %5567 = vmatprep.subr.bf16.mxu0 0
      %5568 = vmatpush1.bf16.msra.mxu0 0
      %5569 = vmatprep.subr.bf16.mxu0 0
      %5570 = vmatpush1.bf16.msra.mxu0 0
      %5571 = vmatprep.subr.bf16.mxu0 0
      %5572 = vmatpush1.bf16.msra.mxu0 0
      %5573 = vmatprep.mubr.bf16.mxu0 0
      %5574 = vmatmul.mubr.bf16.gmra.mrb[0].mxu0 %v5489
      %v5575 = vpop.f32.mrb[0].mxu0
      %v5576 = vadd.f32 0.0, %v5575
      %v5577 = vpop.f32.mrb[0].mxu0
      %v5578 = vpop.f32.mrb[0].mxu0
      %v5579 = vpop.f32.mrb[0].mxu0
      %5580 = vdwg.mxu0
      %v5581 = vadd.f32 %v5472, %v5535
      %v5582 = vadd.f32 %v5473, %v5537
      %v5583 = vadd.f32 %v5474, %v5576
      %5584 = vst [vmem:[%s281] sm:$0xff] %v5581
      %5585 = vst [vmem:[%s281 + $0x8] sm:$0xff] %v5582
      %5586 = vst [vmem:[%s281 + $0x10] sm:$0xff] %v5583
      %v5587 = vld [vmem:[%s275] sm:$0x7]
      %v5589 = vlaneseq
      %v5590 = vshrl.u32 %v5589, 7
      %v5591 = vsub.s32 0, %v5590
      %v5592 = vrot.slane %v5587, %v5591
      %v5593 = vlaneseq
      %v5594 = vshrl.u32 %v5593, 7
      %v5595 = vsub.s32 1, %v5594
      %v5596 = vrot.slane %v5587, %v5595
      %v5597 = vlaneseq
      %v5598 = vshrl.u32 %v5597, 7
      %v5599 = vsub.s32 2, %v5598
      %v5600 = vrot.slane %v5587, %v5599
      %v5604 = vmul.f32 %v5581, %v5592
      %v5605 = vmul.f32 %v5582, %v5596
      %v5606 = vmul.f32 %v5583, %v5600
      %v5607 = vadd.f32 %v5604, %v5605
      %v5608 = vadd.f32 %v5607, %v5606
      %5609 = vadd.xlane.f32.xlu0 %v5608
      %v5610 = vpop.xlane.xlu0 %5609
      %v5611 = vmul.f32 %v5604, %v5581
      %v5612 = vmul.f32 %v5605, %v5582
      %v5613 = vmul.f32 %v5606, %v5583
      %v5614 = vadd.f32 %v5611, %v5612
      %v5615 = vadd.f32 %v5614, %v5613
      %5616 = vadd.xlane.f32.xlu0 %v5615
      %v5617 = vpop.xlane.xlu0 %5616
      %vm5618 = vcmask 7168
      %v5619 = vsel %vm5618, %v5610, %v5617
      %vm5620 = vcmask 15360
      %5621 = vst.msk [vmem:[%s286] sm:$0xff] %vm5620, %v5619
      %s5622 = smul.u32 3, %s17
      %p5623 = scmp.lt.s32.totalorder %s5622, 8
      %s5624 = scalar_select %p5623, %s5622, 8
      %s5625 = smul.addr %s5624, 8
      %s5626 = scalar_lea.vmem %s4, %s5625
      %p5627 = scmp.lt.s32.totalorder %s17, 2
      %s5628 = scalar_select %p5627, %s17, 2
      %s5629 = smul.addr %s5628, 8
      %s5630 = scalar_lea.vmem %s5, %s5629
      // Predicated region
      $region37: #{encoder_forward.18} parent=35 // pred_check
        %p5631 = pneg %p136
      $region38: #{encoder_forward.18} parent=35 // pred_check_branch
        %5633 = sbr.rel (%p5631) target = $region40
      $region39: #{encoder_forward.18} parent=35 // pred_region
        %s5634 = smul.u32 3, %s17
      $region40: #{encoder_forward.18} parent=35 // pred_fallthru
        _
      // Predicated region
      $region41: #{encoder_forward.18} parent=35 // pred_check
        %p5635 = pneg %p162
      $region42: #{encoder_forward.18} parent=35 // pred_check_branch
        %5637 = sbr.rel (%p5635) target = $region44
      $region43: #{encoder_forward.18} parent=35 // pred_region
        _
      $region44: #{encoder_forward.18} parent=35 // pred_fallthru
        _
    $region36: #{encoder_forward.18} parent=5 // pred_fallthru
      _
    %p5638 = scmp.le.s32.totalorder 2, %s12
    // Predicated region
    $region45: #{encoder_forward.18} parent=5 // pred_check
      %p5639 = pneg %p5638
    $region46: #{encoder_forward.18} parent=5 // pred_check_branch
      %5641 = sbr.rel (%p5639) target = $region48
    $region47: #{encoder_forward.18} parent=5 // pred_region
      %s5642 = ssub.s32 %s12, 2
      // Predicated region
      $region49: #{encoder_forward.18} parent=47 // pred_check
        %p5643 = pneg %p142
      $region50: #{encoder_forward.18} parent=47 // pred_check_branch
        %5645 = sbr.rel (%p5643) target = $region52
      $region51: #{encoder_forward.18} parent=47 // pred_region
        %s5646 = smul.u32 3, %s18
        %p5647 = scmp.lt.s32.totalorder %s5646, 8
        %s5648 = scalar_select %p5647, %s5646, 8
        %s5649 = smul.addr %s5648, 8
        %s5650 = scalar_lea.vmem %s4, %s5649
      $region52: #{encoder_forward.18} parent=47 // pred_fallthru
        _
      // Predicated region
      $region53: #{encoder_forward.18} parent=47 // pred_check
        %p5651 = pneg %p168
      $region54: #{encoder_forward.18} parent=47 // pred_check_branch
        %5653 = sbr.rel (%p5651) target = $region56
      $region55: #{encoder_forward.18} parent=47 // pred_region
        %p5654 = scmp.lt.s32.totalorder %s18, 2
        %s5655 = scalar_select %p5654, %s18, 2
        %s5656 = smul.addr %s5655, 8
        %s5657 = scalar_lea.vmem %s5, %s5656
      $region56: #{encoder_forward.18} parent=47 // pred_fallthru
        _
    $region48: #{encoder_forward.18} parent=5 // pred_fallthru
      _
  $region6: #{encoder_forward.18} parent=0 // loop_footer
    %s16 = sadd.s32 1, %s12
  $region7: #{encoder_forward.18} parent=0 // loop_footer_branch
    %11 = sbr.rel target = $region3
  $region8: #{encoder_forward.18} parent=0 // loop_exit
    _

// kernel: encoder_forward.20
$region0: #{encoder_forward.20}
  #allocation0 [shape = 'u32[]', space=smem, size = 0x4, offset = 0x4, fixed_abs, tag = 'smem constant byte address 0x4 - core index']
  #allocation1 [shape = 'u32[144,128]{1,0:T(1,128)}', space=vmem, size = 0x12000, scoped, tag = 'internal scratch']
  %s0 = inlined_call_operand.vmem [shape: bf16[32,384], index: 0, kind: input, shape index: {}, may-alias: {0,1}]
  %s1 = inlined_call_operand.vmem [shape: bf16[32,384], index: 1, kind: input, shape index: {}, may-alias: {0,1}]
  %s2 = inlined_call_operand.vmem [shape: bf16[144,8], index: 2, kind: input, shape index: {}]
  %s3 = inlined_call_operand.vmem [shape: f32[1,256], index: 3, kind: input, shape index: {}]
  %s4 = inlined_call_operand.vmem [shape: f32[16,256], index: 4, kind: output, shape index: {0}]
  %s5 = inlined_call_operand.vmem [shape: f32[2,16,2], index: 5, kind: output, shape index: {1}]
  %6 = xla_tuple %s4, %s5
  %s7 = sld [smem:[#allocation0]]
  $region173: #{encoder_forward.20} parent=0
    _
  %s9 = ssub.s32 1, %s7
  %s10 = scalar_select 0, %s9, %s7
  $region1: #{encoder_forward.20} parent=0
    #allocation2 [shape = 'u8[16384]{0}', space=vmem, size = 0x4000, scoped, tag = 'input window, operand 0']
    #allocation3 [shape = 'u8[16384]{0}', space=vmem, size = 0x4000, scoped, tag = 'input window, operand 1']
    #allocation4 [shape = 'u8[16384]{0}', space=vmem, size = 0x4000, scoped, tag = 'output window, operand 0']
    loop: start=0, step=1, limit=4
    $region2: #{encoder_forward.20} parent=1 // loop_pre_header
      _
    $region3: #{encoder_forward.20} parent=1 // loop_header
      %s12 = sphi 0, %s16
      %p13 = scmp.ge.s32.totalorder %s12, 4
      %s22 = sphi 0, %s24
      %s25 = sphi 0, %s22
      %s26 = sphi 0, %s25
      %s42 = sphi 0, %s26
      %s50 = sphi 0, %s52
      %s53 = sphi 0, %s50
      %s54 = sphi 0, %s53
      %s70 = sphi 0, %s54
      %s74 = sphi 0, %s74
      %s76 = sphi 0, %s74
      %s77 = sphi 0, %s76
      %s91 = sphi 0, %s77
      %s97 = sphi 0, %s99
      %s100 = sphi 0, %s97
      %s101 = sphi 0, %s100
      %s117 = sphi 0, %s101
      %s123 = sphi 0, %s125
      %s126 = sphi 0, %s123
      %s127 = sphi 0, %s126
      %s143 = sphi 0, %s127
      %s149 = sphi 0, %s151
      %s152 = sphi 0, %s149
      %s153 = sphi 0, %s152
      %s169 = sphi 0, %s153
    $region4: #{encoder_forward.20} parent=1 // loop_header_branch
      %15 = sbr.rel (%p13) target = $region8
    $region5: #{encoder_forward.20} parent=1 // loop_body
      %s17 = ssub.s32 %s12, 1
      %s18 = ssub.s32 %s12, 2
      %s19 = sadd.s32 %s12, 1
      %s20 = ssub.s32 %s12, %s19
      %p21 = scmp.eq.s32.totalorder %s20, 0
      %s23 = sadd.s32 %s22, 1
      %s24 = scalar_select %p21, %s22, %s23
      %p27 = pneg %p21
      %p28 = scmp.eq.s32.totalorder %s12, 1
      %p29 = por %p27, %p28
      %p30 = scmp.ne.s32.totalorder %s22, %s25
      %p31 = scmp.eq.s32.totalorder %s12, 0
      %p32 = por %p30, %p31
      %p33 = scmp.ne.s32.totalorder %s22, %s25
      %p34 = scmp.eq.s32.totalorder %s17, 1
      %p35 = por %p33, %p34
      %p36 = scmp.ne.s32.totalorder %s25, %s26
      %p37 = scmp.eq.s32.totalorder %s17, 0
      %p38 = por %p36, %p37
      %p39 = scmp.ne.s32.totalorder %s25, %s26
      %p40 = scmp.eq.s32.totalorder %s18, 1
      %p41 = por %p39, %p40
      %p43 = scmp.ne.s32.totalorder %s26, %s42
      %p44 = scmp.eq.s32.totalorder %s18, 0
      %p45 = por %p43, %p44
      %s46 = sadd.s32 %s12, 1
      %s47 = sadd.s32 %s19, 1
      %s48 = ssub.s32 %s46, %s47
      %p49 = scmp.eq.s32.totalorder %s48, 0
      %s51 = sadd.s32 %s50, 1
      %s52 = scalar_select %p49, %s50, %s51
      %p55 = pneg %p49
      %p56 = scmp.eq.s32.totalorder %s12, 1
      %p57 = por %p55, %p56
      %p58 = scmp.ne.s32.totalorder %s50, %s53
      %p59 = scmp.eq.s32.totalorder %s12, 0
      %p60 = por %p58, %p59
      %p61 = scmp.ne.s32.totalorder %s50, %s53
      %p62 = scmp.eq.s32.totalorder %s17, 1
      %p63 = por %p61, %p62
      %p64 = scmp.ne.s32.totalorder %s53, %s54
      %p65 = scmp.eq.s32.totalorder %s17, 0
      %p66 = por %p64, %p65
      %p67 = scmp.ne.s32.totalorder %s53, %s54
      %p68 = scmp.eq.s32.totalorder %s18, 1
      %p69 = por %p67, %p68
      %p71 = scmp.ne.s32.totalorder %s54, %s70
      %p72 = scmp.eq.s32.totalorder %s18, 0
      %p73 = por %p71, %p72
      %s75 = sadd.s32 %s74, 1
      %p78 = scmp.eq.s32.totalorder %s12, 1
      %p79 = scmp.ne.s32.totalorder %s74, %s76
      %p80 = scmp.eq.s32.totalorder %s12, 0
      %p81 = por %p79, %p80
      %p82 = scmp.ne.s32.totalorder %s74, %s76
      %p83 = scmp.eq.s32.totalorder %s17, 1
      %p84 = por %p82, %p83
      %p85 = scmp.ne.s32.totalorder %s76, %s77
      %p86 = scmp.eq.s32.totalorder %s17, 0
      %p87 = por %p85, %p86
      %p88 = scmp.ne.s32.totalorder %s76, %s77
      %p89 = scmp.eq.s32.totalorder %s18, 1
      %p90 = por %p88, %p89
      %p92 = scmp.ne.s32.totalorder %s77, %s91
      %p93 = scmp.eq.s32.totalorder %s18, 0
      %p94 = por %p92, %p93
      %s95 = ssub.s32 %s12, %s19
      %p96 = scmp.eq.s32.totalorder %s95, 0
      %s98 = sadd.s32 %s97, 1
      %s99 = scalar_select %p96, %s97, %s98
      %p102 = pneg %p96
      %p103 = scmp.eq.s32.totalorder %s12, 1
      %p104 = por %p102, %p103
      %p105 = scmp.ne.s32.totalorder %s97, %s100
      %p106 = scmp.eq.s32.totalorder %s12, 0
      %p107 = por %p105, %p106
      %p108 = scmp.ne.s32.totalorder %s97, %s100
      %p109 = scmp.eq.s32.totalorder %s17, 1
      %p110 = por %p108, %p109
      %p111 = scmp.ne.s32.totalorder %s100, %s101
      %p112 = scmp.eq.s32.totalorder %s17, 0
      %p113 = por %p111, %p112
      %p114 = scmp.ne.s32.totalorder %s100, %s101
      %p115 = scmp.eq.s32.totalorder %s18, 1
      %p116 = por %p114, %p115
      %p118 = scmp.ne.s32.totalorder %s101, %s117
      %p119 = scmp.eq.s32.totalorder %s18, 0
      %p120 = por %p118, %p119
      %s121 = ssub.s32 %s12, %s19
      %p122 = scmp.eq.s32.totalorder %s121, 0
      %s124 = sadd.s32 %s123, 1
      %s125 = scalar_select %p122, %s123, %s124
      %p128 = pneg %p122
      %p129 = scmp.eq.s32.totalorder %s12, 1
      %p130 = por %p128, %p129
      %p131 = scmp.ne.s32.totalorder %s123, %s126
      %p132 = scmp.eq.s32.totalorder %s12, 0
      %p133 = por %p131, %p132
      %p134 = scmp.ne.s32.totalorder %s123, %s126
      %p135 = scmp.eq.s32.totalorder %s17, 1
      %p136 = por %p134, %p135
      %p137 = scmp.ne.s32.totalorder %s126, %s127
      %p138 = scmp.eq.s32.totalorder %s17, 0
      %p139 = por %p137, %p138
      %p140 = scmp.ne.s32.totalorder %s126, %s127
      %p141 = scmp.eq.s32.totalorder %s18, 1
      %p142 = por %p140, %p141
      %p144 = scmp.ne.s32.totalorder %s127, %s143
      %p145 = scmp.eq.s32.totalorder %s18, 0
      %p146 = por %p144, %p145
      %s147 = ssub.s32 %s12, %s19
      %p148 = scmp.eq.s32.totalorder %s147, 0
      %s150 = sadd.s32 %s149, 1
      %s151 = scalar_select %p148, %s149, %s150
      %p154 = pneg %p148
      %p155 = scmp.eq.s32.totalorder %s12, 1
      %p156 = por %p154, %p155
      %p157 = scmp.ne.s32.totalorder %s149, %s152
      %p158 = scmp.eq.s32.totalorder %s12, 0
      %p159 = por %p157, %p158
      %p160 = scmp.ne.s32.totalorder %s149, %s152
      %p161 = scmp.eq.s32.totalorder %s17, 1
      %p162 = por %p160, %p161
      %p163 = scmp.ne.s32.totalorder %s152, %s153
      %p164 = scmp.eq.s32.totalorder %s17, 0
      %p165 = por %p163, %p164
      %p166 = scmp.ne.s32.totalorder %s152, %s153
      %p167 = scmp.eq.s32.totalorder %s18, 1
      %p168 = por %p166, %p167
      %p170 = scmp.ne.s32.totalorder %s153, %s169
      %p171 = scmp.eq.s32.totalorder %s18, 0
      %p172 = por %p170, %p171
      %p173 = scmp.le.s32.totalorder 1, %s12
      %p174 = scmp.lt.s32.totalorder %s12, 3
      %p175 = pnand %p173, %p174
      %p176 = pneg %p175
      // Predicated region
      $region9: #{encoder_forward.20} parent=5 // pred_check
        _
      $region10: #{encoder_forward.20} parent=5 // pred_check_branch
        %178 = sbr.rel (%p175) target = $region12
      $region11: #{encoder_forward.20} parent=5 // pred_region
        %s179 = ssub.s32 %s12, 1
        // Predicated region
        $region13: #{encoder_forward.20} parent=11 // pred_check
          %p180 = pneg %p87
        $region14: #{encoder_forward.20} parent=11 // pred_check_branch
          %182 = sbr.rel (%p180) target = $region16
        $region15: #{encoder_forward.20} parent=11 // pred_region
          _
        $region16: #{encoder_forward.20} parent=11 // pred_fallthru
          _
      $region12: #{encoder_forward.20} parent=5 // pred_fallthru
        _
      %p183 = scmp.lt.s32.totalorder %s12, 2
      // Predicated region
      $region17: #{encoder_forward.20} parent=5 // pred_check
        %p184 = pneg %p183
      $region18: #{encoder_forward.20} parent=5 // pred_check_branch
        %186 = sbr.rel (%p184) target = $region20
      $region19: #{encoder_forward.20} parent=5 // pred_region
        // Predicated region
        $region21: #{encoder_forward.20} parent=19 // pred_check
          %p187 = pneg %p32
        $region22: #{encoder_forward.20} parent=19 // pred_check_branch
          %189 = sbr.rel (%p187) target = $region24
        $region23: #{encoder_forward.20} parent=19 // pred_region
          %s190 = sand.u32 %s22, 1
          %s191 = sand.u32 %s22, 1
          %s192 = smul.addr %s191, 16
          %s193 = scalar_lea.vmem [#allocation2], %s192
          %s194 = smul.addr %s12, 4
          %s195 = scalar_lea.vmem %s0, %s194
          // Predicated region
          $region25: #{encoder_forward.20} parent=23 // pred_check
            _
          $region26: #{encoder_forward.20} parent=23 // pred_check_branch
            %197 = sbr.rel (0) target = $region28
          $region27: #{encoder_forward.20} parent=23 // pred_region
            // Predicated region
            $region29: #{encoder_forward.20} parent=27 // pred_check
              _
            $region30: #{encoder_forward.20} parent=27 // pred_check_branch
              %199 = sbr.rel target = $region32
            $region31: #{encoder_forward.20} parent=27 // pred_region
              // Predicated region
              $region44: #{encoder_forward.20} parent=31 // pred_check
                _
              $region45: #{encoder_forward.20} parent=31 // pred_check_branch
                %220 = sbr.rel (0) target = $region47
              $region46: #{encoder_forward.20} parent=31 // pred_region
                loop: start=0, step=1, limit=1
                $region48: #{encoder_forward.20} parent=46 // loop_pre_header
                  _
                $region49: #{encoder_forward.20} parent=46 // loop_header
                  %s222 = sphi 0, %s226
                  %p223 = scmp.ge.s32.totalorder %s222, 1
                  %s227 = sphi %s195, %s195
                  %s228 = sphi %s193, %s193
                $region50: #{encoder_forward.20} parent=46 // loop_header_branch
                  %225 = sbr.rel (%p223) target = $region54
                $region51: #{encoder_forward.20} parent=46 // loop_body
                  _
                $region52: #{encoder_forward.20} parent=46 // loop_footer
                  %s226 = sadd.s32 1, %s222
                $region53: #{encoder_forward.20} parent=46 // loop_footer_branch
                  %221 = sbr.rel target = $region49
                $region54: #{encoder_forward.20} parent=46 // loop_exit
                  _
                loop: start=0, step=1, limit=1
                $region55: #{encoder_forward.20} parent=46 // loop_pre_header
                  _
                $region56: #{encoder_forward.20} parent=46 // loop_header
                  %s231 = sphi 0, %s235
                  %p232 = scmp.ge.s32.totalorder %s231, 1
                  %s236 = sphi %s195, %s195
                  %s237 = sphi %s193, %s193
                $region57: #{encoder_forward.20} parent=46 // loop_header_branch
                  %234 = sbr.rel (%p232) target = $region61
                $region58: #{encoder_forward.20} parent=46 // loop_body
                  %v238 = vld [vmem:[%s236] sm:$0xf]
                  %239 = vst [vmem:[%s237] sm:$0xf] %v238
                  %v240 = vld [vmem:[%s236 + $0xc] sm:$0xf]
                  %241 = vst [vmem:[%s237 + $0x4] sm:$0xf] %v240
                  %v242 = vld [vmem:[%s236 + $0x18] sm:$0xf]
                  %243 = vst [vmem:[%s237 + $0x8] sm:$0xf] %v242
                  %v244 = vld [vmem:[%s236 + $0x24] sm:$0xf]
                  %245 = vst [vmem:[%s237 + $0xc] sm:$0xf] %v244
                $region59: #{encoder_forward.20} parent=46 // loop_footer
                  %s235 = sadd.s32 1, %s231
                $region60: #{encoder_forward.20} parent=46 // loop_footer_branch
                  %230 = sbr.rel target = $region56
                $region61: #{encoder_forward.20} parent=46 // loop_exit
                  _
              $region47: #{encoder_forward.20} parent=31 // pred_fallthru
                _
            $region32: #{encoder_forward.20} parent=27 // pred_fallthru
              _
            // Predicated region
            $region33: #{encoder_forward.20} parent=27 // pred_check
              _
            $region34: #{encoder_forward.20} parent=27 // pred_check_branch
              %201 = sbr.rel (0) target = $region36
            $region35: #{encoder_forward.20} parent=27 // pred_region
              loop: start=0, step=1, limit=1
              $region37: #{encoder_forward.20} parent=35 // loop_pre_header
                _
              $region38: #{encoder_forward.20} parent=35 // loop_header
                %s204 = sphi 0, %s208
                %p205 = scmp.ge.s32.totalorder %s204, 1
                %s209 = sphi %s195, %s195
                %s210 = sphi %s193, %s193
              $region39: #{encoder_forward.20} parent=35 // loop_header_branch
                %207 = sbr.rel (%p205) target = $region43
              $region40: #{encoder_forward.20} parent=35 // loop_body
                %v211 = vld [vmem:[%s209] sm:$0xf]
                %212 = vst [vmem:[%s210] sm:$0xf] %v211
                %v213 = vld [vmem:[%s209 + $0xc] sm:$0xf]
                %214 = vst [vmem:[%s210 + $0x4] sm:$0xf] %v213
                %v215 = vld [vmem:[%s209 + $0x18] sm:$0xf]
                %216 = vst [vmem:[%s210 + $0x8] sm:$0xf] %v215
                %v217 = vld [vmem:[%s209 + $0x24] sm:$0xf]
                %218 = vst [vmem:[%s210 + $0xc] sm:$0xf] %v217
              $region41: #{encoder_forward.20} parent=35 // loop_footer
                %s208 = sadd.s32 1, %s204
              $region42: #{encoder_forward.20} parent=35 // loop_footer_branch
                %203 = sbr.rel target = $region38
              $region43: #{encoder_forward.20} parent=35 // loop_exit
                _
            $region36: #{encoder_forward.20} parent=27 // pred_fallthru
              _
          $region28: #{encoder_forward.20} parent=23 // pred_fallthru
            _
          %246 = vnop
        $region24: #{encoder_forward.20} parent=19 // pred_fallthru
          _
        // Predicated region
        $region62: #{encoder_forward.20} parent=19 // pred_check
          %p247 = pneg %p60
        $region63: #{encoder_forward.20} parent=19 // pred_check_branch
          %249 = sbr.rel (%p247) target = $region65
        $region64: #{encoder_forward.20} parent=19 // pred_region
          %s250 = sand.u32 %s50, 1
          %s251 = sand.u32 %s50, 1
          %s252 = smul.addr %s251, 16
          %s253 = scalar_lea.vmem [#allocation3], %s252
          %s254 = sadd.s32 %s12, 1
          %s255 = smul.addr %s254, 4
          %s256 = scalar_lea.vmem %s1, %s255
          // Predicated region
          $region66: #{encoder_forward.20} parent=64 // pred_check
            _
          $region67: #{encoder_forward.20} parent=64 // pred_check_branch
            %258 = sbr.rel (0) target = $region69
          $region68: #{encoder_forward.20} parent=64 // pred_region
            // Predicated region
            $region70: #{encoder_forward.20} parent=68 // pred_check
              _
            $region71: #{encoder_forward.20} parent=68 // pred_check_branch
              %260 = sbr.rel target = $region73
            $region72: #{encoder_forward.20} parent=68 // pred_region
              // Predicated region
              $region85: #{encoder_forward.20} parent=72 // pred_check
                _
              $region86: #{encoder_forward.20} parent=72 // pred_check_branch
                %281 = sbr.rel (0) target = $region88
              $region87: #{encoder_forward.20} parent=72 // pred_region
                loop: start=0, step=1, limit=1
                $region89: #{encoder_forward.20} parent=87 // loop_pre_header
                  _
                $region90: #{encoder_forward.20} parent=87 // loop_header
                  %s283 = sphi 0, %s287
                  %p284 = scmp.ge.s32.totalorder %s283, 1
                  %s288 = sphi %s256, %s256
                  %s289 = sphi %s253, %s253
                $region91: #{encoder_forward.20} parent=87 // loop_header_branch
                  %286 = sbr.rel (%p284) target = $region95
                $region92: #{encoder_forward.20} parent=87 // loop_body
                  _
                $region93: #{encoder_forward.20} parent=87 // loop_footer
                  %s287 = sadd.s32 1, %s283
                $region94: #{encoder_forward.20} parent=87 // loop_footer_branch
                  %282 = sbr.rel target = $region90
                $region95: #{encoder_forward.20} parent=87 // loop_exit
                  _
                loop: start=0, step=1, limit=1
                $region96: #{encoder_forward.20} parent=87 // loop_pre_header
                  _
                $region97: #{encoder_forward.20} parent=87 // loop_header
                  %s292 = sphi 0, %s296
                  %p293 = scmp.ge.s32.totalorder %s292, 1
                  %s297 = sphi %s256, %s256
                  %s298 = sphi %s253, %s253
                $region98: #{encoder_forward.20} parent=87 // loop_header_branch
                  %295 = sbr.rel (%p293) target = $region102
                $region99: #{encoder_forward.20} parent=87 // loop_body
                  %v299 = vld [vmem:[%s297] sm:$0xf]
                  %300 = vst [vmem:[%s298] sm:$0xf] %v299
                  %v301 = vld [vmem:[%s297 + $0xc] sm:$0xf]
                  %302 = vst [vmem:[%s298 + $0x4] sm:$0xf] %v301
                  %v303 = vld [vmem:[%s297 + $0x18] sm:$0xf]
                  %304 = vst [vmem:[%s298 + $0x8] sm:$0xf] %v303
                  %v305 = vld [vmem:[%s297 + $0x24] sm:$0xf]
                  %306 = vst [vmem:[%s298 + $0xc] sm:$0xf] %v305
                $region100: #{encoder_forward.20} parent=87 // loop_footer
                  %s296 = sadd.s32 1, %s292
                $region101: #{encoder_forward.20} parent=87 // loop_footer_branch
                  %291 = sbr.rel target = $region97
                $region102: #{encoder_forward.20} parent=87 // loop_exit
                  _
              $region88: #{encoder_forward.20} parent=72 // pred_fallthru
                _
            $region73: #{encoder_forward.20} parent=68 // pred_fallthru
              _
            // Predicated region
            $region74: #{encoder_forward.20} parent=68 // pred_check
              _
            $region75: #{encoder_forward.20} parent=68 // pred_check_branch
              %262 = sbr.rel (0) target = $region77
            $region76: #{encoder_forward.20} parent=68 // pred_region
              loop: start=0, step=1, limit=1
              $region78: #{encoder_forward.20} parent=76 // loop_pre_header
                _
              $region79: #{encoder_forward.20} parent=76 // loop_header
                %s265 = sphi 0, %s269
                %p266 = scmp.ge.s32.totalorder %s265, 1
                %s270 = sphi %s256, %s256
                %s271 = sphi %s253, %s253
              $region80: #{encoder_forward.20} parent=76 // loop_header_branch
                %268 = sbr.rel (%p266) target = $region84
              $region81: #{encoder_forward.20} parent=76 // loop_body
                %v272 = vld [vmem:[%s270] sm:$0xf]
                %273 = vst [vmem:[%s271] sm:$0xf] %v272
                %v274 = vld [vmem:[%s270 + $0xc] sm:$0xf]
                %275 = vst [vmem:[%s271 + $0x4] sm:$0xf] %v274
                %v276 = vld [vmem:[%s270 + $0x18] sm:$0xf]
                %277 = vst [vmem:[%s271 + $0x8] sm:$0xf] %v276
                %v278 = vld [vmem:[%s270 + $0x24] sm:$0xf]
                %279 = vst [vmem:[%s271 + $0xc] sm:$0xf] %v278
              $region82: #{encoder_forward.20} parent=76 // loop_footer
                %s269 = sadd.s32 1, %s265
              $region83: #{encoder_forward.20} parent=76 // loop_footer_branch
                %264 = sbr.rel target = $region79
              $region84: #{encoder_forward.20} parent=76 // loop_exit
                _
            $region77: #{encoder_forward.20} parent=68 // pred_fallthru
              _
          $region69: #{encoder_forward.20} parent=64 // pred_fallthru
            _
          %307 = vnop
        $region65: #{encoder_forward.20} parent=19 // pred_fallthru
          _
        // Predicated region
        $region103: #{encoder_forward.20} parent=19 // pred_check
          %p308 = pneg %p107
        $region104: #{encoder_forward.20} parent=19 // pred_check_branch
          %310 = sbr.rel (%p308) target = $region106
        $region105: #{encoder_forward.20} parent=19 // pred_region
          %p311 = scmp.lt.s32.totalorder %s12, 1
          %s312 = scalar_select %p311, %s12, 1
          %s313 = scalar_lea.vmem %s3, %s312
        $region106: #{encoder_forward.20} parent=19 // pred_fallthru
          _
      $region20: #{encoder_forward.20} parent=5 // pred_fallthru
        _
      %p314 = scmp.le.s32.totalorder 1, %s12
      %p315 = scmp.lt.s32.totalorder %s12, 3
      %p316 = pnand %p314, %p315
      %p317 = pneg %p316
      // Predicated region
      $region107: #{encoder_forward.20} parent=5 // pred_check
        _
      $region108: #{encoder_forward.20} parent=5 // pred_check_branch
        %319 = sbr.rel (%p316) target = $region110
      $region109: #{encoder_forward.20} parent=5 // pred_region
        %s320 = ssub.s32 %s12, 1
        %s321 = sand.u32 %s25, 1
        %s322 = sand.u32 %s25, 1
        %s323 = smul.addr %s322, 16
        %s324 = scalar_lea.vmem [#allocation2], %s323
        // Predicated region
        $region111: #{encoder_forward.20} parent=109 // pred_check
          %p325 = pneg %p38
        $region112: #{encoder_forward.20} parent=109 // pred_check_branch
          %327 = sbr.rel (%p325) target = $region114
        $region113: #{encoder_forward.20} parent=109 // pred_region
          _
        $region114: #{encoder_forward.20} parent=109 // pred_fallthru
          _
        %s328 = sand.u32 %s53, 1
        %s329 = sand.u32 %s53, 1
        %s330 = smul.addr %s329, 16
        %s331 = scalar_lea.vmem [#allocation3], %s330
        // Predicated region
        $region115: #{encoder_forward.20} parent=109 // pred_check
          %p332 = pneg %p66
        $region116: #{encoder_forward.20} parent=109 // pred_check_branch
          %334 = sbr.rel (%p332) target = $region118
        $region117: #{encoder_forward.20} parent=109 // pred_region
          _
        $region118: #{encoder_forward.20} parent=109 // pred_fallthru
          _
        %s335 = sand.u32 %s25, 1
        %s336 = sand.u32 %s25, 1
        %s337 = smul.addr %s336, 16
        %s338 = scalar_lea.vmem [#allocation2], %s337
        %p339 = pneg %p38
        %p340 = pneg %p35
        %s341 = sand.u32 %s53, 1
        %s342 = sand.u32 %s53, 1
        %s343 = smul.addr %s342, 16
        %s344 = scalar_lea.vmem [#allocation3], %s343
        %p345 = pneg %p66
        %p346 = pneg %p63
        %p347 = pneg %p87
        %p348 = pneg %p84
        %p349 = scmp.lt.s32.totalorder %s17, 1
        %s350 = scalar_select %p349, %s17, 1
        %s351 = scalar_lea.vmem %s3, %s350
        %p352 = pneg %p113
        %p353 = pneg %p110
        %p354 = pneg %p139
        %p355 = pneg %p136
        %s356 = sand.u32 %s126, 1
        %s357 = sand.u32 %s126, 1
        %s358 = smul.addr %s357, 16
        %s359 = scalar_lea.vmem [#allocation4], %s358
        %p360 = pneg %p165
        %p361 = pneg %p162
        %p362 = scmp.lt.s32.totalorder %s17, 1
        %s363 = scalar_select %p362, %s17, 1
        %s364 = smul.addr %s363, 2
        %s365 = smul.addr %s364, 8
        %s366 = scalar_lea.vmem %s5, %s365
        %s367 = sadd.s32 %s17, 1
        %p368 = scmp.lt.s32.totalorder %s17, 1
        %s369 = scalar_select %p368, %s17, 1
        %s370 = scalar_lea.vmem %s3, %s369
        %p371 = scmp.lt.s32.totalorder %s17, 1
        %s372 = scalar_select %p371, %s17, 1
        %s373 = smul.addr %s372, 2
        %s374 = smul.addr %s373, 8
        %s375 = scalar_lea.vmem %s5, %s374
        %v377 = vld [vmem:[%s324] sm:$0xf]
        %v378 = vld [vmem:[%s324 + $0x4] sm:$0xf]
        %v379 = vld [vmem:[%s324 + $0x8] sm:$0xf]
        %v380 = vld [vmem:[%s324 + $0xc] sm:$0xf]
        %v381 = vld [vmem:[%s331] sm:$0xf]
        %v382 = vld [vmem:[%s331 + $0x4] sm:$0xf]
        %v383 = vld [vmem:[%s331 + $0x8] sm:$0xf]
        %v384 = vld [vmem:[%s331 + $0xc] sm:$0xf]
        %v389 = vunpack.c.l.b16 %v377
        %v390 = vunpack.c.l.b16 %v378
        %v391 = vunpack.c.l.b16 %v379
        %v392 = vunpack.c.l.b16 %v380
        %v393 = vpack.c.b16 %v390, %v389
        %v394 = vpack.c.b16 %v392, %v391
        %v399 = vunpack.c.l.b16 %v381
        %v400 = vunpack.c.l.b16 %v382
        %v401 = vunpack.c.l.b16 %v383
        %v402 = vunpack.c.l.b16 %v384
        %v403 = vpack.c.b16 %v400, %v399
        %v404 = vpack.c.b16 %v402, %v401
        %v405 = vld [vmem:[%s2] sm:$0xf]
        %v406 = vld [vmem:[%s2 + $0x4] sm:$0xf]
        %v407 = vld [vmem:[%s2 + $0x8] sm:$0xf]
        %v408 = vld [vmem:[%s2 + $0xc] sm:$0xf]
        %v411 = vunpack.c.l.b16 %v407
        %v412 = vunpack.c.l.b16 %v408
        %v413 = vpack.c.b16 %v412, %v411
        %v414 = vrot.slane %v393, 4
        %vm415 = vcmask 64512
        %v417 = vsel %vm415, %v413, 0
        %vm419 = vcmask 1043456
        %v421 = vsel %vm419, %v414, 0
        %423 = vmatprep.subr.bf16.mxu0 0
        %424 = vmatpush1.bf16.msra.mxu0 %v421
        %425 = vmatprep.subr.bf16.mxu0 0
        %426 = vmatpush1.bf16.msra.mxu0 0
        %427 = vmatprep.subr.bf16.mxu0 0
        %428 = vmatpush1.bf16.msra.mxu0 0
        %429 = vmatprep.subr.bf16.mxu0 0
        %430 = vmatpush1.bf16.msra.mxu0 0
        %431 = vmatprep.subr.bf16.mxu0 0
        %432 = vmatpush1.bf16.msra.mxu0 0
        %433 = vmatprep.subr.bf16.mxu0 0
        %434 = vmatpush1.bf16.msra.mxu0 0
        %435 = vmatprep.subr.bf16.mxu0 0
        %436 = vmatpush1.bf16.msra.mxu0 0
        %437 = vmatprep.subr.bf16.mxu0 0
        %438 = vmatpush1.bf16.msra.mxu0 0
        %439 = vmatprep.subr.bf16.mxu0 0
        %440 = vmatpush1.bf16.msra.mxu0 0
        %441 = vmatprep.subr.bf16.mxu0 0
        %442 = vmatpush1.bf16.msra.mxu0 0
        %443 = vmatprep.subr.bf16.mxu0 0
        %444 = vmatpush1.bf16.msra.mxu0 0
        %445 = vmatprep.subr.bf16.mxu0 0
        %446 = vmatpush1.bf16.msra.mxu0 0
        %447 = vmatprep.subr.bf16.mxu0 0
        %448 = vmatpush1.bf16.msra.mxu0 0
        %449 = vmatprep.subr.bf16.mxu0 0
        %450 = vmatpush1.bf16.msra.mxu0 0
        %451 = vmatprep.subr.bf16.mxu0 0
        %452 = vmatpush1.bf16.msra.mxu0 0
        %453 = vmatprep.subr.bf16.mxu0 0
        %454 = vmatpush1.bf16.msra.mxu0 0
        %455 = vmatprep.mubr.bf16.mxu0 0
        %456 = vmatmul.mubr.bf16.gmra.mrb[0].mxu0 %v417
        %v457 = vpop.f32.mrb[0].mxu0
        %v458 = vadd.f32 0.0, %v457
        %v459 = vpop.f32.mrb[0].mxu0
        %v460 = vpop.f32.mrb[0].mxu0
        %v461 = vadd.f32 0.0, %v460
        %v462 = vpop.f32.mrb[0].mxu0
        %463 = vdwg.mxu0
        %v466 = vunpack.c.l.b16 %v405
        %v467 = vunpack.c.l.b16 %v406
        %v468 = vpack.c.b16 %v467, %v466
        %v470 = vsel %vm415, %v468, 0
        %v473 = vsel %vm419, %v393, 0
        %475 = vmatprep.subr.bf16.mxu0 0
        %476 = vmatpush1.bf16.msra.mxu0 %v473
        %477 = vmatprep.subr.bf16.mxu0 0
        %478 = vmatpush1.bf16.msra.mxu0 0
        %479 = vmatprep.subr.bf16.mxu0 0
        %480 = vmatpush1.bf16.msra.mxu0 0
        %481 = vmatprep.subr.bf16.mxu0 0
        %482 = vmatpush1.bf16.msra.mxu0 0
        %483 = vmatprep.subr.bf16.mxu0 0
        %484 = vmatpush1.bf16.msra.mxu0 0
        %485 = vmatprep.subr.bf16.mxu0 0
        %486 = vmatpush1.bf16.msra.mxu0 0
        %487 = vmatprep.subr.bf16.mxu0 0
        %488 = vmatpush1.bf16.msra.mxu0 0
        %489 = vmatprep.subr.bf16.mxu0 0
        %490 = vmatpush1.bf16.msra.mxu0 0
        %491 = vmatprep.subr.bf16.mxu0 0
        %492 = vmatpush1.bf16.msra.mxu0 0
        %493 = vmatprep.subr.bf16.mxu0 0
        %494 = vmatpush1.bf16.msra.mxu0 0
        %495 = vmatprep.subr.bf16.mxu0 0
        %496 = vmatpush1.bf16.msra.mxu0 0
        %497 = vmatprep.subr.bf16.mxu0 0
        %498 = vmatpush1.bf16.msra.mxu0 0
        %499 = vmatprep.subr.bf16.mxu0 0
        %500 = vmatpush1.bf16.msra.mxu0 0
        %501 = vmatprep.subr.bf16.mxu0 0
        %502 = vmatpush1.bf16.msra.mxu0 0
        %503 = vmatprep.subr.bf16.mxu0 0
        %504 = vmatpush1.bf16.msra.mxu0 0
        %505 = vmatprep.subr.bf16.mxu0 0
        %506 = vmatpush1.bf16.msra.mxu0 0
        %507 = vmatprep.mubr.bf16.mxu0 0
        %508 = vmatmul.mubr.bf16.gmra.mrb[0].mxu0 %v470
        %v509 = vpop.f32.mrb[0].mxu0
        %v510 = vadd.f32 %v458, %v509
        %v511 = vpop.f32.mrb[0].mxu0
        %v512 = vpop.f32.mrb[0].mxu0
        %v513 = vadd.f32 %v461, %v512
        %v514 = vpop.f32.mrb[0].mxu0
        %515 = vdwg.mxu0
        %v516 = vld [vmem:[%s2 + $0x10] sm:$0xf]
        %v517 = vld [vmem:[%s2 + $0x14] sm:$0xf]
        %v520 = vunpack.c.l.b16 %v516
        %v521 = vunpack.c.l.b16 %v517
        %v522 = vpack.c.b16 %v521, %v520
        %523 = vrot.lane.b32.xlu0 %v393, 127
        %v524 = vpop.permute.xlu0 %523
        %525 = vrot.lane.b32.xlu0 %v403, 127
        %v526 = vpop.permute.xlu0 %525
        %vm527 = vcmask 1039360
        %v528 = vsel %vm527, %v524, %v526
        %v530 = vsel %vm415, %v522, 0
        %v533 = vsel %vm419, %v528, 0
        %535 = vmatprep.subr.bf16.mxu0 0
        %536 = vmatpush1.bf16.msra.mxu0 %v533
        %537 = vmatprep.subr.bf16.mxu0 0
        %538 = vmatpush1.bf16.msra.mxu0 0
        %539 = vmatprep.subr.bf16.mxu0 0
        %540 = vmatpush1.bf16.msra.mxu0 0
        %541 = vmatprep.subr.bf16.mxu0 0
        %542 = vmatpush1.bf16.msra.mxu0 0
        %543 = vmatprep.subr.bf16.mxu0 0
        %544 = vmatpush1.bf16.msra.mxu0 0
        %545 = vmatprep.subr.bf16.mxu0 0
        %546 = vmatpush1.bf16.msra.mxu0 0
        %547 = vmatprep.subr.bf16.mxu0 0
        %548 = vmatpush1.bf16.msra.mxu0 0
        %549 = vmatprep.subr.bf16.mxu0 0
        %550 = vmatpush1.bf16.msra.mxu0 0
        %551 = vmatprep.subr.bf16.mxu0 0
        %552 = vmatpush1.bf16.msra.mxu0 0
        %553 = vmatprep.subr.bf16.mxu0 0
        %554 = vmatpush1.bf16.msra.mxu0 0
        %555 = vmatprep.subr.bf16.mxu0 0
        %556 = vmatpush1.bf16.msra.mxu0 0
        %557 = vmatprep.subr.bf16.mxu0 0
        %558 = vmatpush1.bf16.msra.mxu0 0
        %559 = vmatprep.subr.bf16.mxu0 0
        %560 = vmatpush1.bf16.msra.mxu0 0
        %561 = vmatprep.subr.bf16.mxu0 0
        %562 = vmatpush1.bf16.msra.mxu0 0
        %563 = vmatprep.subr.bf16.mxu0 0
        %564 = vmatpush1.bf16.msra.mxu0 0
        %565 = vmatprep.subr.bf16.mxu0 0
        %566 = vmatpush1.bf16.msra.mxu0 0
        %567 = vmatprep.mubr.bf16.mxu0 0
        %568 = vmatmul.mubr.bf16.gmra.mrb[0].mxu0 %v530
        %v569 = vpop.f32.mrb[0].mxu0
        %v570 = vadd.f32 0.0, %v569
        %v571 = vpop.f32.mrb[0].mxu0
        %v572 = vpop.f32.mrb[0].mxu0
        %v573 = vadd.f32 0.0, %v572
        %v574 = vpop.f32.mrb[0].mxu0
        %575 = vdwg.mxu0
        %v576 = vadd.f32 %v510, %v570
        %v577 = vadd.f32 %v513, %v573
        %v578 = vld [vmem:[%s2 + $0x18] sm:$0xf]
        %v579 = vld [vmem:[%s2 + $0x1c] sm:$0xf]
        %v582 = vunpack.c.l.b16 %v578
        %v583 = vunpack.c.l.b16 %v579
        %v584 = vpack.c.b16 %v583, %v582
        %v586 = vsel %vm415, %v584, 0
        %v589 = vsel %vm419, %v394, 0
        %591 = vmatprep.subr.bf16.mxu0 0
        %592 = vmatpush1.bf16.msra.mxu0 %v589
        %593 = vmatprep.subr.bf16.mxu0 0
        %594 = vmatpush1.bf16.msra.mxu0 0
        %595 = vmatprep.subr.bf16.mxu0 0
        %596 = vmatpush1.bf16.msra.mxu0 0
        %597 = vmatprep.subr.bf16.mxu0 0
        %598 = vmatpush1.bf16.msra.mxu0 0
        %599 = vmatprep.subr.bf16.mxu0 0
        %600 = vmatpush1.bf16.msra.mxu0 0
        %601 = vmatprep.subr.bf16.mxu0 0
        %602 = vmatpush1.bf16.msra.mxu0 0
        %603 = vmatprep.subr.bf16.mxu0 0
        %604 = vmatpush1.bf16.msra.mxu0 0
        %605 = vmatprep.subr.bf16.mxu0 0
        %606 = vmatpush1.bf16.msra.mxu0 0
        %607 = vmatprep.subr.bf16.mxu0 0
        %608 = vmatpush1.bf16.msra.mxu0 0
        %609 = vmatprep.subr.bf16.mxu0 0
        %610 = vmatpush1.bf16.msra.mxu0 0
        %611 = vmatprep.subr.bf16.mxu0 0
        %612 = vmatpush1.bf16.msra.mxu0 0
        %613 = vmatprep.subr.bf16.mxu0 0
        %614 = vmatpush1.bf16.msra.mxu0 0
        %615 = vmatprep.subr.bf16.mxu0 0
        %616 = vmatpush1.bf16.msra.mxu0 0
        %617 = vmatprep.subr.bf16.mxu0 0
        %618 = vmatpush1.bf16.msra.mxu0 0
        %619 = vmatprep.subr.bf16.mxu0 0
        %620 = vmatpush1.bf16.msra.mxu0 0
        %621 = vmatprep.subr.bf16.mxu0 0
        %622 = vmatpush1.bf16.msra.mxu0 0
        %623 = vmatprep.mubr.bf16.mxu0 0
        %624 = vmatmul.mubr.bf16.gmra.mrb[0].mxu0 %v586
        %v625 = vpop.f32.mrb[0].mxu0
        %v626 = vadd.f32 0.0, %v625
        %v627 = vpop.f32.mrb[0].mxu0
        %v628 = vpop.f32.mrb[0].mxu0
        %v629 = vadd.f32 0.0, %v628
        %v630 = vpop.f32.mrb[0].mxu0
        %631 = vdwg.mxu0
        %v632 = vadd.f32 %v576, %v626
        %v633 = vadd.f32 %v577, %v629
        %v634 = vld [vmem:[%s2 + $0x20] sm:$0xf]
        %v635 = vld [vmem:[%s2 + $0x24] sm:$0xf]
        %v638 = vunpack.c.l.b16 %v634
        %v639 = vunpack.c.l.b16 %v635
        %v640 = vpack.c.b16 %v639, %v638
        %v641 = vrot.slane %v394, 4
        %v643 = vsel %vm415, %v640, 0
        %v646 = vsel %vm419, %v641, 0
        %648 = vmatprep.subr.bf16.mxu0 0
        %649 = vmatpush1.bf16.msra.mxu0 %v646
        %650 = vmatprep.subr.bf16.mxu0 0
        %651 = vmatpush1.bf16.msra.mxu0 0
        %652 = vmatprep.subr.bf16.mxu0 0
        %653 = vmatpush1.bf16.msra.mxu0 0
        %654 = vmatprep.subr.bf16.mxu0 0
        %655 = vmatpush1.bf16.msra.mxu0 0
        %656 = vmatprep.subr.bf16.mxu0 0
        %657 = vmatpush1.bf16.msra.mxu0 0
        %658 = vmatprep.subr.bf16.mxu0 0
        %659 = vmatpush1.bf16.msra.mxu0 0
        %660 = vmatprep.subr.bf16.mxu0 0
        %661 = vmatpush1.bf16.msra.mxu0 0
        %662 = vmatprep.subr.bf16.mxu0 0
        %663 = vmatpush1.bf16.msra.mxu0 0
        %664 = vmatprep.subr.bf16.mxu0 0
        %665 = vmatpush1.bf16.msra.mxu0 0
        %666 = vmatprep.subr.bf16.mxu0 0
        %667 = vmatpush1.bf16.msra.mxu0 0
        %668 = vmatprep.subr.bf16.mxu0 0
        %669 = vmatpush1.bf16.msra.mxu0 0
        %670 = vmatprep.subr.bf16.mxu0 0
        %671 = vmatpush1.bf16.msra.mxu0 0
        %672 = vmatprep.subr.bf16.mxu0 0
        %673 = vmatpush1.bf16.msra.mxu0 0
        %674 = vmatprep.subr.bf16.mxu0 0
        %675 = vmatpush1.bf16.msra.mxu0 0
        %676 = vmatprep.subr.bf16.mxu0 0
        %677 = vmatpush1.bf16.msra.mxu0 0
        %678 = vmatprep.subr.bf16.mxu0 0
        %679 = vmatpush1.bf16.msra.mxu0 0
        %680 = vmatprep.mubr.bf16.mxu0 0
        %681 = vmatmul.mubr.bf16.gmra.mrb[0].mxu0 %v643
        %v682 = vpop.f32.mrb[0].mxu0
        %v683 = vadd.f32 0.0, %v682
        %v684 = vpop.f32.mrb[0].mxu0
        %v685 = vpop.f32.mrb[0].mxu0
        %v686 = vadd.f32 0.0, %v685
        %v687 = vpop.f32.mrb[0].mxu0
        %688 = vdwg.mxu0
        %v689 = vadd.f32 %v632, %v683
        %v690 = vadd.f32 %v633, %v686
        %v691 = vld [vmem:[%s2 + $0x28] sm:$0xf]
        %v692 = vld [vmem:[%s2 + $0x2c] sm:$0xf]
        %v695 = vunpack.c.l.b16 %v691
        %v696 = vunpack.c.l.b16 %v692
        %v697 = vpack.c.b16 %v696, %v695
        %698 = vrot.lane.b32.xlu0 %v394, 127
        %v699 = vpop.permute.xlu0 %698
        %700 = vrot.lane.b32.xlu0 %v404, 127
        %v701 = vpop.permute.xlu0 %700
        %v702 = vsel %vm527, %v699, %v701
        %v704 = vsel %vm415, %v697, 0
        %v707 = vsel %vm419, %v702, 0
        %709 = vmatprep.subr.bf16.mxu0 0
        %710 = vmatpush1.bf16.msra.mxu0 %v707
        %711 = vmatprep.subr.bf16.mxu0 0
        %712 = vmatpush1.bf16.msra.mxu0 0
        %713 = vmatprep.subr.bf16.mxu0 0
        %714 = vmatpush1.bf16.msra.mxu0 0
        %715 = vmatprep.subr.bf16.mxu0 0
        %716 = vmatpush1.bf16.msra.mxu0 0
        %717 = vmatprep.subr.bf16.mxu0 0
        %718 = vmatpush1.bf16.msra.mxu0 0
        %719 = vmatprep.subr.bf16.mxu0 0
        %720 = vmatpush1.bf16.msra.mxu0 0
        %721 = vmatprep.subr.bf16.mxu0 0
        %722 = vmatpush1.bf16.msra.mxu0 0
        %723 = vmatprep.subr.bf16.mxu0 0
        %724 = vmatpush1.bf16.msra.mxu0 0
        %725 = vmatprep.subr.bf16.mxu0 0
        %726 = vmatpush1.bf16.msra.mxu0 0
        %727 = vmatprep.subr.bf16.mxu0 0
        %728 = vmatpush1.bf16.msra.mxu0 0
        %729 = vmatprep.subr.bf16.mxu0 0
        %730 = vmatpush1.bf16.msra.mxu0 0
        %731 = vmatprep.subr.bf16.mxu0 0
        %732 = vmatpush1.bf16.msra.mxu0 0
        %733 = vmatprep.subr.bf16.mxu0 0
        %734 = vmatpush1.bf16.msra.mxu0 0
        %735 = vmatprep.subr.bf16.mxu0 0
        %736 = vmatpush1.bf16.msra.mxu0 0
        %737 = vmatprep.subr.bf16.mxu0 0
        %738 = vmatpush1.bf16.msra.mxu0 0
        %739 = vmatprep.subr.bf16.mxu0 0
        %740 = vmatpush1.bf16.msra.mxu0 0
        %741 = vmatprep.mubr.bf16.mxu0 0
        %742 = vmatmul.mubr.bf16.gmra.mrb[0].mxu0 %v704
        %v743 = vpop.f32.mrb[0].mxu0
        %v744 = vadd.f32 0.0, %v743
        %v745 = vpop.f32.mrb[0].mxu0
        %v746 = vpop.f32.mrb[0].mxu0
        %v747 = vadd.f32 0.0, %v746
        %v748 = vpop.f32.mrb[0].mxu0
        %749 = vdwg.mxu0
        %v750 = vadd.f32 %v689, %v744
        %v751 = vadd.f32 %v690, %v747
        %v752 = vld [vmem:[%s2 + $0x30] sm:$0xf]
        %v753 = vld [vmem:[%s2 + $0x34] sm:$0xf]
        %v756 = vunpack.c.l.b16 %v752
        %v757 = vunpack.c.l.b16 %v753
        %v758 = vpack.c.b16 %v757, %v756
        %759 = vrot.lane.b32.xlu0 %v393, 119
        %v760 = vpop.permute.xlu0 %759
        %761 = vrot.lane.b32.xlu0 %v403, 119
        %v762 = vpop.permute.xlu0 %761
        %vm763 = vcmask 973824
        %v764 = vsel %vm763, %v760, %v762
        %v766 = vsel %vm415, %v758, 0
        %v769 = vsel %vm419, %v764, 0
        %771 = vmatprep.subr.bf16.mxu0 0
        %772 = vmatpush1.bf16.msra.mxu0 %v769
        %773 = vmatprep.subr.bf16.mxu0 0
        %774 = vmatpush1.bf16.msra.mxu0 0
        %775 = vmatprep.subr.bf16.mxu0 0
        %776 = vmatpush1.bf16.msra.mxu0 0
        %777 = vmatprep.subr.bf16.mxu0 0
        %778 = vmatpush1.bf16.msra.mxu0 0
        %779 = vmatprep.subr.bf16.mxu0 0
        %780 = vmatpush1.bf16.msra.mxu0 0
        %781 = vmatprep.subr.bf16.mxu0 0
        %782 = vmatpush1.bf16.msra.mxu0 0
        %783 = vmatprep.subr.bf16.mxu0 0
        %784 = vmatpush1.bf16.msra.mxu0 0
        %785 = vmatprep.subr.bf16.mxu0 0
        %786 = vmatpush1.bf16.msra.mxu0 0
        %787 = vmatprep.subr.bf16.mxu0 0
        %788 = vmatpush1.bf16.msra.mxu0 0
        %789 = vmatprep.subr.bf16.mxu0 0
        %790 = vmatpush1.bf16.msra.mxu0 0
        %791 = vmatprep.subr.bf16.mxu0 0
        %792 = vmatpush1.bf16.msra.mxu0 0
        %793 = vmatprep.subr.bf16.mxu0 0
        %794 = vmatpush1.bf16.msra.mxu0 0
        %795 = vmatprep.subr.bf16.mxu0 0
        %796 = vmatpush1.bf16.msra.mxu0 0
        %797 = vmatprep.subr.bf16.mxu0 0
        %798 = vmatpush1.bf16.msra.mxu0 0
        %799 = vmatprep.subr.bf16.mxu0 0
        %800 = vmatpush1.bf16.msra.mxu0 0
        %801 = vmatprep.subr.bf16.mxu0 0
        %802 = vmatpush1.bf16.msra.mxu0 0
        %803 = vmatprep.mubr.bf16.mxu0 0
        %804 = vmatmul.mubr.bf16.gmra.mrb[0].mxu0 %v766
        %v805 = vpop.f32.mrb[0].mxu0
        %v806 = vadd.f32 0.0, %v805
        %v807 = vpop.f32.mrb[0].mxu0
        %v808 = vpop.f32.mrb[0].mxu0
        %v809 = vadd.f32 0.0, %v808
        %v810 = vpop.f32.mrb[0].mxu0
        %811 = vdwg.mxu0
        %v812 = vadd.f32 %v750, %v806
        %v813 = vadd.f32 %v751, %v809
        %v814 = vld [vmem:[%s2 + $0x38] sm:$0xf]
        %v815 = vld [vmem:[%s2 + $0x3c] sm:$0xf]
        %v818 = vunpack.c.l.b16 %v814
        %v819 = vunpack.c.l.b16 %v815
        %v820 = vpack.c.b16 %v819, %v818
        %v821 = vrot.slane %v403, 4
        %822 = vrot.lane.b32.xlu0 %v414, 119
        %v823 = vpop.permute.xlu0 %822
        %824 = vrot.lane.b32.xlu0 %v821, 119
        %v825 = vpop.permute.xlu0 %824
        %v826 = vsel %vm763, %v823, %v825
        %v828 = vsel %vm415, %v820, 0
        %v831 = vsel %vm419, %v826, 0
        %833 = vmatprep.subr.bf16.mxu0 0
        %834 = vmatpush1.bf16.msra.mxu0 %v831
        %835 = vmatprep.subr.bf16.mxu0 0
        %836 = vmatpush1.bf16.msra.mxu0 0
        %837 = vmatprep.subr.bf16.mxu0 0
        %838 = vmatpush1.bf16.msra.mxu0 0
        %839 = vmatprep.subr.bf16.mxu0 0
        %840 = vmatpush1.bf16.msra.mxu0 0
        %841 = vmatprep.subr.bf16.mxu0 0
        %842 = vmatpush1.bf16.msra.mxu0 0
        %843 = vmatprep.subr.bf16.mxu0 0
        %844 = vmatpush1.bf16.msra.mxu0 0
        %845 = vmatprep.subr.bf16.mxu0 0
        %846 = vmatpush1.bf16.msra.mxu0 0
        %847 = vmatprep.subr.bf16.mxu0 0
        %848 = vmatpush1.bf16.msra.mxu0 0
        %849 = vmatprep.subr.bf16.mxu0 0
        %850 = vmatpush1.bf16.msra.mxu0 0
        %851 = vmatprep.subr.bf16.mxu0 0
        %852 = vmatpush1.bf16.msra.mxu0 0
        %853 = vmatprep.subr.bf16.mxu0 0
        %854 = vmatpush1.bf16.msra.mxu0 0
        %855 = vmatprep.subr.bf16.mxu0 0
        %856 = vmatpush1.bf16.msra.mxu0 0
        %857 = vmatprep.subr.bf16.mxu0 0
        %858 = vmatpush1.bf16.msra.mxu0 0
        %859 = vmatprep.subr.bf16.mxu0 0
        %860 = vmatpush1.bf16.msra.mxu0 0
        %861 = vmatprep.subr.bf16.mxu0 0
        %862 = vmatpush1.bf16.msra.mxu0 0
        %863 = vmatprep.subr.bf16.mxu0 0
        %864 = vmatpush1.bf16.msra.mxu0 0
        %865 = vmatprep.mubr.bf16.mxu0 0
        %866 = vmatmul.mubr.bf16.gmra.mrb[0].mxu0 %v828
        %v867 = vpop.f32.mrb[0].mxu0
        %v868 = vadd.f32 0.0, %v867
        %v869 = vpop.f32.mrb[0].mxu0
        %v870 = vpop.f32.mrb[0].mxu0
        %v871 = vadd.f32 0.0, %v870
        %v872 = vpop.f32.mrb[0].mxu0
        %873 = vdwg.mxu0
        %v874 = vadd.f32 %v812, %v868
        %v875 = vadd.f32 %v813, %v871
        %v876 = vld [vmem:[%s2 + $0x40] sm:$0xf]
        %v877 = vld [vmem:[%s2 + $0x44] sm:$0xf]
        %v880 = vunpack.c.l.b16 %v876
        %v881 = vunpack.c.l.b16 %v877
        %v882 = vpack.c.b16 %v881, %v880
        %883 = vrot.lane.b32.xlu0 %v393, 118
        %v884 = vpop.permute.xlu0 %883
        %885 = vrot.lane.b32.xlu0 %v403, 118
        %v886 = vpop.permute.xlu0 %885
        %vm887 = vcmask 965632
        %v888 = vsel %vm887, %v884, %v886
        %v890 = vsel %vm415, %v882, 0
        %v893 = vsel %vm419, %v888, 0
        %895 = vmatprep.subr.bf16.mxu0 0
        %896 = vmatpush1.bf16.msra.mxu0 %v893
        %897 = vmatprep.subr.bf16.mxu0 0
        %898 = vmatpush1.bf16.msra.mxu0 0
        %899 = vmatprep.subr.bf16.mxu0 0
        %900 = vmatpush1.bf16.msra.mxu0 0
        %901 = vmatprep.subr.bf16.mxu0 0
        %902 = vmatpush1.bf16.msra.mxu0 0
        %903 = vmatprep.subr.bf16.mxu0 0
        %904 = vmatpush1.bf16.msra.mxu0 0
        %905 = vmatprep.subr.bf16.mxu0 0
        %906 = vmatpush1.bf16.msra.mxu0 0
        %907 = vmatprep.subr.bf16.mxu0 0
        %908 = vmatpush1.bf16.msra.mxu0 0
        %909 = vmatprep.subr.bf16.mxu0 0
        %910 = vmatpush1.bf16.msra.mxu0 0
        %911 = vmatprep.subr.bf16.mxu0 0
        %912 = vmatpush1.bf16.msra.mxu0 0
        %913 = vmatprep.subr.bf16.mxu0 0
        %914 = vmatpush1.bf16.msra.mxu0 0
        %915 = vmatprep.subr.bf16.mxu0 0
        %916 = vmatpush1.bf16.msra.mxu0 0
        %917 = vmatprep.subr.bf16.mxu0 0
        %918 = vmatpush1.bf16.msra.mxu0 0
        %919 = vmatprep.subr.bf16.mxu0 0
        %920 = vmatpush1.bf16.msra.mxu0 0
        %921 = vmatprep.subr.bf16.mxu0 0
        %922 = vmatpush1.bf16.msra.mxu0 0
        %923 = vmatprep.subr.bf16.mxu0 0
        %924 = vmatpush1.bf16.msra.mxu0 0
        %925 = vmatprep.subr.bf16.mxu0 0
        %926 = vmatpush1.bf16.msra.mxu0 0
        %927 = vmatprep.mubr.bf16.mxu0 0
        %928 = vmatmul.mubr.bf16.gmra.mrb[0].mxu0 %v890
        %v929 = vpop.f32.mrb[0].mxu0
        %v930 = vadd.f32 0.0, %v929
        %v931 = vpop.f32.mrb[0].mxu0
        %v932 = vpop.f32.mrb[0].mxu0
        %v933 = vadd.f32 0.0, %v932
        %v934 = vpop.f32.mrb[0].mxu0
        %935 = vdwg.mxu0
        %v936 = vadd.f32 %v874, %v930
        %v937 = vadd.f32 %v875, %v933
        %938 = vst [vmem:[%s359] sm:$0xff] %v936
        %939 = vst [vmem:[%s359 + $0x8] sm:$0xff] %v937
        %v940 = vld [vmem:[%s370] sm:$0x1]
        %v942 = vlaneseq
        %v943 = vshrl.u32 %v942, 7
        %v944 = vsub.s32 0, %v943
        %v945 = vrot.slane %v940, %v944
        %v947 = vmul.f32 %v936, %v945
        %v948 = vmul.f32 %v937, %v945
        %949 = vadd.xlane.f32.xlu0 %v947
        %v950 = vpop.xlane.xlu0 %949
        %951 = vadd.xlane.f32.xlu0 %v948
        %v952 = vpop.xlane.xlu0 %951
        %v953 = vmul.f32 %v947, %v936
        %v954 = vmul.f32 %v948, %v937
        %955 = vadd.xlane.f32.xlu0 %v953
        %v956 = vpop.xlane.xlu0 %955
        %957 = vadd.xlane.f32.xlu0 %v954
        %v958 = vpop.xlane.xlu0 %957
        %vm959 = vcmask 7168
        %v960 = vsel %vm959, %v950, %v956
        %v961 = vsel %vm959, %v952, %v958
        %vm962 = vcmask 15360
        %963 = vst.msk [vmem:[%s375] sm:$0xff] %vm962, %v960
        %964 = vst.msk [vmem:[%s375 + $0x8] sm:$0xff] %vm962, %v961
        %s965 = sand.u32 %s126, 1
        %s966 = sand.u32 %s126, 1
        %s967 = smul.addr %s966, 16
        %s968 = scalar_lea.vmem [#allocation4], %s967
        %p969 = scmp.lt.s32.totalorder %s17, 1
        %s970 = scalar_select %p969, %s17, 1
        %s971 = smul.addr %s970, 2
        %s972 = smul.addr %s971, 8
        %s973 = scalar_lea.vmem %s5, %s972
        // Predicated region
        $region119: #{encoder_forward.20} parent=109 // pred_check
          %p974 = pneg %p136
        $region120: #{encoder_forward.20} parent=109 // pred_check_branch
          %976 = sbr.rel (%p974) target = $region122
        $region121: #{encoder_forward.20} parent=109 // pred_region
          %s977 = smul.addr %s17, 8
          %s978 = scalar_lea.vmem %s4, %s977
          // Predicated region
          $region123: #{encoder_forward.20} parent=121 // pred_check
            _
          $region124: #{encoder_forward.20} parent=121 // pred_check_branch
            %980 = sbr.rel (0) target = $region126
          $region125: #{encoder_forward.20} parent=121 // pred_region
            // Predicated region
            $region127: #{encoder_forward.20} parent=125 // pred_check
              _
            $region128: #{encoder_forward.20} parent=125 // pred_check_branch
              %982 = sbr.rel (0) target = $region130
            $region129: #{encoder_forward.20} parent=125 // pred_region
              // Predicated region
              $region142: #{encoder_forward.20} parent=129 // pred_check
                _
              $region143: #{encoder_forward.20} parent=129 // pred_check_branch
                %999 = sbr.rel (0) target = $region145
              $region144: #{encoder_forward.20} parent=129 // pred_region
                loop: start=0, step=1, limit=1
                $region146: #{encoder_forward.20} parent=144 // loop_pre_header
                  _
                $region147: #{encoder_forward.20} parent=144 // loop_header
                  %s1001 = sphi 0, %s1005
                  %p1002 = scmp.ge.s32.totalorder %s1001, 1
                  %s1006 = sphi %s968, %s968
                  %s1007 = sphi %s978, %s978
                $region148: #{encoder_forward.20} parent=144 // loop_header_branch
                  %1004 = sbr.rel (%p1002) target = $region152
                $region149: #{encoder_forward.20} parent=144 // loop_body
                  %v1008 = vld [vmem:[%s1006] sm:$0xff]
                  %1009 = vst [vmem:[%s1007] sm:$0xff] %v1008
                  %v1010 = vld [vmem:[%s1006 + $0x8] sm:$0xff]
                  %1011 = vst [vmem:[%s1007 + $0x10] sm:$0xff] %v1010
                $region150: #{encoder_forward.20} parent=144 // loop_footer
                  %s1005 = sadd.s32 1, %s1001
                $region151: #{encoder_forward.20} parent=144 // loop_footer_branch
                  %1000 = sbr.rel target = $region147
                $region152: #{encoder_forward.20} parent=144 // loop_exit
                  _
              $region145: #{encoder_forward.20} parent=129 // pred_fallthru
                _
              // Predicated region
              $region153: #{encoder_forward.20} parent=129 // pred_check
                _
              $region154: #{encoder_forward.20} parent=129 // pred_check_branch
                %1013 = sbr.rel target = $region156
              $region155: #{encoder_forward.20} parent=129 // pred_region
                _
              $region156: #{encoder_forward.20} parent=129 // pred_fallthru
                _
            $region130: #{encoder_forward.20} parent=125 // pred_fallthru
              _
            // Predicated region
            $region131: #{encoder_forward.20} parent=125 // pred_check
              _
            $region132: #{encoder_forward.20} parent=125 // pred_check_branch
              %984 = sbr.rel target = $region134
            $region133: #{encoder_forward.20} parent=125 // pred_region
              loop: start=0, step=1, limit=1
              $region135: #{encoder_forward.20} parent=133 // loop_pre_header
                _
              $region136: #{encoder_forward.20} parent=133 // loop_header
                %s987 = sphi 0, %s991
                %p988 = scmp.ge.s32.totalorder %s987, 1
                %s992 = sphi %s968, %s968
                %s993 = sphi %s978, %s978
              $region137: #{encoder_forward.20} parent=133 // loop_header_branch
                %990 = sbr.rel (%p988) target = $region141
              $region138: #{encoder_forward.20} parent=133 // loop_body
                %v994 = vld [vmem:[%s992] sm:$0xff]
                %995 = vst [vmem:[%s993] sm:$0xff] %v994
                %v996 = vld [vmem:[%s992 + $0x8] sm:$0xff]
                %997 = vst [vmem:[%s993 + $0x10] sm:$0xff] %v996
              $region139: #{encoder_forward.20} parent=133 // loop_footer
                %s991 = sadd.s32 1, %s987
              $region140: #{encoder_forward.20} parent=133 // loop_footer_branch
                %986 = sbr.rel target = $region136
              $region141: #{encoder_forward.20} parent=133 // loop_exit
                _
            $region134: #{encoder_forward.20} parent=125 // pred_fallthru
              _
          $region126: #{encoder_forward.20} parent=121 // pred_fallthru
            _
          %1014 = vnop
        $region122: #{encoder_forward.20} parent=109 // pred_fallthru
          _
        // Predicated region
        $region157: #{encoder_forward.20} parent=109 // pred_check
          %p1015 = pneg %p162
        $region158: #{encoder_forward.20} parent=109 // pred_check_branch
          %1017 = sbr.rel (%p1015) target = $region160
        $region159: #{encoder_forward.20} parent=109 // pred_region
          _
        $region160: #{encoder_forward.20} parent=109 // pred_fallthru
          _
      $region110: #{encoder_forward.20} parent=5 // pred_fallthru
        _
      %p1018 = scmp.le.s32.totalorder 2, %s12
      // Predicated region
      $region161: #{encoder_forward.20} parent=5 // pred_check
        %p1019 = pneg %p1018
      $region162: #{encoder_forward.20} parent=5 // pred_check_branch
        %1021 = sbr.rel (%p1019) target = $region164
      $region163: #{encoder_forward.20} parent=5 // pred_region
        %s1022 = ssub.s32 %s12, 2
        // Predicated region
        $region165: #{encoder_forward.20} parent=163 // pred_check
          %p1023 = pneg %p142
        $region166: #{encoder_forward.20} parent=163 // pred_check_branch
          %1025 = sbr.rel (%p1023) target = $region168
        $region167: #{encoder_forward.20} parent=163 // pred_region
          %s1026 = sand.u32 %s127, 1
          %s1027 = sand.u32 %s127, 1
          %s1028 = smul.addr %s1027, 16
          %s1029 = scalar_lea.vmem [#allocation4], %s1028
        $region168: #{encoder_forward.20} parent=163 // pred_fallthru
          _
        // Predicated region
        $region169: #{encoder_forward.20} parent=163 // pred_check
          %p1030 = pneg %p168
        $region170: #{encoder_forward.20} parent=163 // pred_check_branch
          %1032 = sbr.rel (%p1030) target = $region172
        $region171: #{encoder_forward.20} parent=163 // pred_region
          %p1033 = scmp.lt.s32.totalorder %s18, 1
          %s1034 = scalar_select %p1033, %s18, 1
          %s1035 = smul.addr %s1034, 2
          %s1036 = smul.addr %s1035, 8
          %s1037 = scalar_lea.vmem %s5, %s1036
        $region172: #{encoder_forward.20} parent=163 // pred_fallthru
          _
      $region164: #{encoder_forward.20} parent=5 // pred_fallthru
        _
    $region6: #{encoder_forward.20} parent=1 // loop_footer
      %s16 = sadd.s32 1, %s12
    $region7: #{encoder_forward.20} parent=1 // loop_footer_branch
      %11 = sbr.rel target = $region3
    $region8: #{encoder_forward.20} parent=1 // loop_exit
      _

// kernel: encoder_forward.21
$region0: #{encoder_forward.21}
  #allocation0 [shape = 'u32[]', space=smem, size = 0x4, offset = 0x4, fixed_abs, tag = 'smem constant byte address 0x4 - core index']
  #allocation1 [shape = 'u32[144,128]{1,0:T(1,128)}', space=vmem, size = 0x12000, scoped, tag = 'internal scratch']
  %s0 = inlined_call_operand.vmem [shape: f32[16,128], index: 0, kind: input, shape index: {}]
  %s1 = inlined_call_operand.vmem [shape: f32[16,1], index: 1, kind: input, shape index: {}]
  %s2 = inlined_call_operand.vmem [shape: f32[16,1], index: 2, kind: input, shape index: {}]
  %s3 = inlined_call_operand.vmem [shape: f32[16,128], index: 3, kind: output, shape index: {}]
  %s4 = sld [smem:[#allocation0]]
  $region22: #{encoder_forward.21} parent=0
    _
  %s6 = ssub.s32 1, %s4
  %s7 = scalar_select 0, %s6, %s4
  // Predicated region
  $region2: #{encoder_forward.21} parent=0 // pred_check
    _
  $region3: #{encoder_forward.21} parent=0 // pred_check_branch
    %9 = sbr.rel (0) target = $region5
  $region4: #{encoder_forward.21} parent=0 // pred_region
    _
  $region5: #{encoder_forward.21} parent=0 // pred_fallthru
    _
  // Predicated region
  $region6: #{encoder_forward.21} parent=0 // pred_check
    _
  $region7: #{encoder_forward.21} parent=0 // pred_check_branch
    %11 = sbr.rel (0) target = $region9
  $region8: #{encoder_forward.21} parent=0 // pred_region
    _
  $region9: #{encoder_forward.21} parent=0 // pred_fallthru
    _
  // Predicated region
  $region10: #{encoder_forward.21} parent=0 // pred_check
    _
  $region11: #{encoder_forward.21} parent=0 // pred_check_branch
    %13 = sbr.rel (0) target = $region13
  $region12: #{encoder_forward.21} parent=0 // pred_region
    _
  $region13: #{encoder_forward.21} parent=0 // pred_fallthru
    _
  %v14 = vld [vmem:[%s0] sm:$0xff]
  %v15 = vld [vmem:[%s0 + $0x8] sm:$0xff]
  %v16 = vld [vmem:[%s1] sm:$0xff]
  %v17 = vld [vmem:[%s1 + $0x8] sm:$0xff]
  %19 = vset.pattern.permute.xlu0 0
  %20 = vperm.xlu0 %19, %v16
  %v21 = vpop.permute.xlu0 %20
  %24 = vset.pattern.permute.xlu0 0
  %25 = vperm.xlu0 %24, %v17
  %v26 = vpop.permute.xlu0 %25
  %v28 = vmul.f32 %v14, %v21
  %v29 = vmul.f32 %v15, %v26
  %v30 = vld [vmem:[%s2] sm:$0xff]
  %v31 = vld [vmem:[%s2 + $0x8] sm:$0xff]
  %33 = vset.pattern.permute.xlu0 0
  %34 = vperm.xlu0 %33, %v30
  %v35 = vpop.permute.xlu0 %34
  %38 = vset.pattern.permute.xlu0 0
  %39 = vperm.xlu0 %38, %v31
  %v40 = vpop.permute.xlu0 %39
  %v42 = vadd.f32 %v28, %v35
  %v43 = vadd.f32 %v29, %v40
  %vm44 = vcmp.ge.f32.partialorder %v42, 0.0
  %vm45 = vcmp.ge.f32.partialorder %v43, 0.0
  %v46 = vmul.f32 %v42, 0.01
  %v47 = vmul.f32 %v43, 0.01
  %v48 = vsel %vm44, %v42, %v46
  %v49 = vsel %vm45, %v43, %v47
  %50 = vst [vmem:[%s3] sm:$0xff] %v48
  %51 = vst [vmem:[%s3 + $0x8] sm:$0xff] %v49
  // Predicated region
  $region14: #{encoder_forward.21} parent=0 // pred_check
    _
  $region15: #{encoder_forward.21} parent=0 // pred_check_branch
    %53 = sbr.rel (0) target = $region17
  $region16: #{encoder_forward.21} parent=0 // pred_region
    _
  $region17: #{encoder_forward.21} parent=0 // pred_fallthru
    _
  // Predicated region
  $region18: #{encoder_forward.21} parent=0 // pred_check
    _
  $region19: #{encoder_forward.21} parent=0 // pred_check_branch
    %55 = sbr.rel (0) target = $region21
  $region20: #{encoder_forward.21} parent=0 // pred_region
    _
  $region21: #{encoder_forward.21} parent=0 // pred_fallthru
    _

// kernel: encoder_forward.23
$region0: #{encoder_forward.23}
  #allocation0 [shape = 'u32[]', space=smem, size = 0x4, offset = 0x4, fixed_abs, tag = 'smem constant byte address 0x4 - core index']
  #allocation1 [shape = 'u32[144,128]{1,0:T(1,128)}', space=vmem, size = 0x12000, scoped, tag = 'internal scratch']
  %s0 = inlined_call_operand.vmem [shape: f32[32,128], index: 0, kind: input, shape index: {}]
  %s1 = inlined_call_operand.vmem [shape: f32[32,1], index: 1, kind: input, shape index: {}]
  %s2 = inlined_call_operand.vmem [shape: f32[32,1], index: 2, kind: input, shape index: {}]
  %s3 = inlined_call_operand.vmem [shape: f32[32,128], index: 3, kind: output, shape index: {}]
  %s4 = sld [smem:[#allocation0]]
  $region22: #{encoder_forward.23} parent=0
    _
  %s6 = ssub.s32 1, %s4
  %s7 = scalar_select 0, %s6, %s4
  // Predicated region
  $region2: #{encoder_forward.23} parent=0 // pred_check
    _
  $region3: #{encoder_forward.23} parent=0 // pred_check_branch
    %9 = sbr.rel (0) target = $region5
  $region4: #{encoder_forward.23} parent=0 // pred_region
    _
  $region5: #{encoder_forward.23} parent=0 // pred_fallthru
    _
  // Predicated region
  $region6: #{encoder_forward.23} parent=0 // pred_check
    _
  $region7: #{encoder_forward.23} parent=0 // pred_check_branch
    %11 = sbr.rel (0) target = $region9
  $region8: #{encoder_forward.23} parent=0 // pred_region
    _
  $region9: #{encoder_forward.23} parent=0 // pred_fallthru
    _
  // Predicated region
  $region10: #{encoder_forward.23} parent=0 // pred_check
    _
  $region11: #{encoder_forward.23} parent=0 // pred_check_branch
    %13 = sbr.rel (0) target = $region13
  $region12: #{encoder_forward.23} parent=0 // pred_region
    _
  $region13: #{encoder_forward.23} parent=0 // pred_fallthru
    _
  %v14 = vld [vmem:[%s0] sm:$0xff]
  %v15 = vld [vmem:[%s0 + $0x8] sm:$0xff]
  %v16 = vld [vmem:[%s0 + $0x10] sm:$0xff]
  %v17 = vld [vmem:[%s0 + $0x18] sm:$0xff]
  %v18 = vld [vmem:[%s1] sm:$0xff]
  %v19 = vld [vmem:[%s1 + $0x8] sm:$0xff]
  %v20 = vld [vmem:[%s1 + $0x10] sm:$0xff]
  %v21 = vld [vmem:[%s1 + $0x18] sm:$0xff]
  %23 = vset.pattern.permute.xlu0 0
  %24 = vperm.xlu0 %23, %v18
  %v25 = vpop.permute.xlu0 %24
  %28 = vset.pattern.permute.xlu0 0
  %29 = vperm.xlu0 %28, %v19
  %v30 = vpop.permute.xlu0 %29
  %33 = vset.pattern.permute.xlu0 0
  %34 = vperm.xlu0 %33, %v20
  %v35 = vpop.permute.xlu0 %34
  %38 = vset.pattern.permute.xlu0 0
  %39 = vperm.xlu0 %38, %v21
  %v40 = vpop.permute.xlu0 %39
  %v42 = vmul.f32 %v14, %v25
  %v43 = vmul.f32 %v15, %v30
  %v44 = vmul.f32 %v16, %v35
  %v45 = vmul.f32 %v17, %v40
  %v46 = vld [vmem:[%s2] sm:$0xff]
  %v47 = vld [vmem:[%s2 + $0x8] sm:$0xff]
  %v48 = vld [vmem:[%s2 + $0x10] sm:$0xff]
  %v49 = vld [vmem:[%s2 + $0x18] sm:$0xff]
  %51 = vset.pattern.permute.xlu0 0
  %52 = vperm.xlu0 %51, %v46
  %v53 = vpop.permute.xlu0 %52
  %56 = vset.pattern.permute.xlu0 0
  %57 = vperm.xlu0 %56, %v47
  %v58 = vpop.permute.xlu0 %57
  %61 = vset.pattern.permute.xlu0 0
  %62 = vperm.xlu0 %61, %v48
  %v63 = vpop.permute.xlu0 %62
  %66 = vset.pattern.permute.xlu0 0
  %67 = vperm.xlu0 %66, %v49
  %v68 = vpop.permute.xlu0 %67
  %v70 = vadd.f32 %v42, %v53
  %v71 = vadd.f32 %v43, %v58
  %v72 = vadd.f32 %v44, %v63
  %v73 = vadd.f32 %v45, %v68
  %vm74 = vcmp.ge.f32.partialorder %v70, 0.0
  %vm75 = vcmp.ge.f32.partialorder %v71, 0.0
  %vm76 = vcmp.ge.f32.partialorder %v72, 0.0
  %vm77 = vcmp.ge.f32.partialorder %v73, 0.0
  %v78 = vmul.f32 %v70, 0.01
  %v79 = vmul.f32 %v71, 0.01
  %v80 = vmul.f32 %v72, 0.01
  %v81 = vmul.f32 %v73, 0.01
  %v82 = vsel %vm74, %v70, %v78
  %v83 = vsel %vm75, %v71, %v79
  %v84 = vsel %vm76, %v72, %v80
  %v85 = vsel %vm77, %v73, %v81
  %86 = vst [vmem:[%s3] sm:$0xff] %v82
  %87 = vst [vmem:[%s3 + $0x8] sm:$0xff] %v83
  %88 = vst [vmem:[%s3 + $0x10] sm:$0xff] %v84
  %89 = vst [vmem:[%s3 + $0x18] sm:$0xff] %v85
  // Predicated region
  $region14: #{encoder_forward.23} parent=0 // pred_check
    _
  $region15: #{encoder_forward.23} parent=0 // pred_check_branch
    %91 = sbr.rel (0) target = $region17
  $region16: #{encoder_forward.23} parent=0 // pred_region
    _
  $region17: #{encoder_forward.23} parent=0 // pred_fallthru
    _
  // Predicated region
  $region18: #{encoder_forward.23} parent=0 // pred_check
    _
  $region19: #{encoder_forward.23} parent=0 // pred_check_branch
    %93 = sbr.rel (0) target = $region21
  $region20: #{encoder_forward.23} parent=0 // pred_region
    _
  $region21: #{encoder_forward.23} parent=0 // pred_fallthru
    _

// kernel: encoder_forward.22
$region0: #{encoder_forward.22}
  #allocation0 [shape = 'u32[]', space=smem, size = 0x4, offset = 0x4, fixed_abs, tag = 'smem constant byte address 0x4 - core index']
  #allocation1 [shape = 'u32[144,128]{1,0:T(1,128)}', space=vmem, size = 0x12000, scoped, tag = 'internal scratch']
  %s0 = inlined_call_operand.vmem [shape: bf16[64,256], index: 0, kind: input, shape index: {}, may-alias: {0,1}]
  %s1 = inlined_call_operand.vmem [shape: bf16[64,256], index: 1, kind: input, shape index: {}, may-alias: {0,1}]
  %s2 = inlined_call_operand.vmem [shape: bf16[288,16], index: 2, kind: input, shape index: {}]
  %s3 = inlined_call_operand.vmem [shape: f32[1,128], index: 3, kind: input, shape index: {}]
  %s4 = inlined_call_operand.vmem [shape: f32[32,128], index: 4, kind: output, shape index: {0}]
  %s5 = inlined_call_operand.vmem [shape: f32[1,32,2], index: 5, kind: output, shape index: {1}]
  %6 = xla_tuple %s4, %s5
  %s7 = sld [smem:[#allocation0]]
  $region116: #{encoder_forward.22} parent=0
    _
  %s9 = ssub.s32 1, %s7
  %s10 = scalar_select 0, %s9, %s7
  $region1: #{encoder_forward.22} parent=0
    #allocation2 [shape = 'u8[16384]{0}', space=vmem, size = 0x4000, scoped, tag = 'input window, operand 0, single buffered']
    #allocation3 [shape = 'u8[16384]{0}', space=vmem, size = 0x4000, scoped, tag = 'input window, operand 1, single buffered']
    // Predicated region
    $region2: #{encoder_forward.22} parent=1 // pred_check
      _
    $region3: #{encoder_forward.22} parent=1 // pred_check_branch
      %12 = sbr.rel (0) target = $region5
    $region4: #{encoder_forward.22} parent=1 // pred_region
      // Predicated region
      $region6: #{encoder_forward.22} parent=4 // pred_check
        _
      $region7: #{encoder_forward.22} parent=4 // pred_check_branch
        %14 = sbr.rel (0) target = $region9
      $region8: #{encoder_forward.22} parent=4 // pred_region
        // Predicated region
        $region10: #{encoder_forward.22} parent=8 // pred_check
          _
        $region11: #{encoder_forward.22} parent=8 // pred_check_branch
          %16 = sbr.rel target = $region13
        $region12: #{encoder_forward.22} parent=8 // pred_region
          // Predicated region
          $region25: #{encoder_forward.22} parent=12 // pred_check
            _
          $region26: #{encoder_forward.22} parent=12 // pred_check_branch
            %45 = sbr.rel (0) target = $region28
          $region27: #{encoder_forward.22} parent=12 // pred_region
            loop: start=0, step=1, limit=1
            $region29: #{encoder_forward.22} parent=27 // loop_pre_header
              _
            $region30: #{encoder_forward.22} parent=27 // loop_header
              %s47 = sphi 0, %s51
              %p48 = scmp.ge.s32.totalorder %s47, 1
              %s52 = sphi %s0, %s0
              %s53 = sphi [#allocation2], [#allocation2]
            $region31: #{encoder_forward.22} parent=27 // loop_header_branch
              %50 = sbr.rel (%p48) target = $region35
            $region32: #{encoder_forward.22} parent=27 // loop_body
              _
            $region33: #{encoder_forward.22} parent=27 // loop_footer
              %s51 = sadd.s32 1, %s47
            $region34: #{encoder_forward.22} parent=27 // loop_footer_branch
              %46 = sbr.rel target = $region30
            $region35: #{encoder_forward.22} parent=27 // loop_exit
              _
            loop: start=0, step=1, limit=1
            $region36: #{encoder_forward.22} parent=27 // loop_pre_header
              _
            $region37: #{encoder_forward.22} parent=27 // loop_header
              %s56 = sphi 0, %s60
              %p57 = scmp.ge.s32.totalorder %s56, 1
              %s61 = sphi %s0, %s0
              %s62 = sphi [#allocation2], [#allocation2]
            $region38: #{encoder_forward.22} parent=27 // loop_header_branch
              %59 = sbr.rel (%p57) target = $region42
            $region39: #{encoder_forward.22} parent=27 // loop_body
              %v63 = vld [vmem:[%s61] sm:$0xf]
              %64 = vst [vmem:[%s62] sm:$0xf] %v63
              %v65 = vld [vmem:[%s61 + $0x8] sm:$0xf]
              %66 = vst [vmem:[%s62 + $0x4] sm:$0xf] %v65
              %v67 = vld [vmem:[%s61 + $0x10] sm:$0xf]
              %68 = vst [vmem:[%s62 + $0x8] sm:$0xf] %v67
              %v69 = vld [vmem:[%s61 + $0x18] sm:$0xf]
              %70 = vst [vmem:[%s62 + $0xc] sm:$0xf] %v69
              %v71 = vld [vmem:[%s61 + $0x20] sm:$0xf]
              %72 = vst [vmem:[%s62 + $0x10] sm:$0xf] %v71
              %v73 = vld [vmem:[%s61 + $0x28] sm:$0xf]
              %74 = vst [vmem:[%s62 + $0x14] sm:$0xf] %v73
              %v75 = vld [vmem:[%s61 + $0x30] sm:$0xf]
              %76 = vst [vmem:[%s62 + $0x18] sm:$0xf] %v75
              %v77 = vld [vmem:[%s61 + $0x38] sm:$0xf]
              %78 = vst [vmem:[%s62 + $0x1c] sm:$0xf] %v77
            $region40: #{encoder_forward.22} parent=27 // loop_footer
              %s60 = sadd.s32 1, %s56
            $region41: #{encoder_forward.22} parent=27 // loop_footer_branch
              %55 = sbr.rel target = $region37
            $region42: #{encoder_forward.22} parent=27 // loop_exit
              _
          $region28: #{encoder_forward.22} parent=12 // pred_fallthru
            _
        $region13: #{encoder_forward.22} parent=8 // pred_fallthru
          _
        // Predicated region
        $region14: #{encoder_forward.22} parent=8 // pred_check
          _
        $region15: #{encoder_forward.22} parent=8 // pred_check_branch
          %18 = sbr.rel (0) target = $region17
        $region16: #{encoder_forward.22} parent=8 // pred_region
          loop: start=0, step=1, limit=1
          $region18: #{encoder_forward.22} parent=16 // loop_pre_header
            _
          $region19: #{encoder_forward.22} parent=16 // loop_header
            %s21 = sphi 0, %s25
            %p22 = scmp.ge.s32.totalorder %s21, 1
            %s26 = sphi %s0, %s0
            %s27 = sphi [#allocation2], [#allocation2]
          $region20: #{encoder_forward.22} parent=16 // loop_header_branch
            %24 = sbr.rel (%p22) target = $region24
          $region21: #{encoder_forward.22} parent=16 // loop_body
            %v28 = vld [vmem:[%s26] sm:$0xf]
            %29 = vst [vmem:[%s27] sm:$0xf] %v28
            %v30 = vld [vmem:[%s26 + $0x8] sm:$0xf]
            %31 = vst [vmem:[%s27 + $0x4] sm:$0xf] %v30
            %v32 = vld [vmem:[%s26 + $0x10] sm:$0xf]
            %33 = vst [vmem:[%s27 + $0x8] sm:$0xf] %v32
            %v34 = vld [vmem:[%s26 + $0x18] sm:$0xf]
            %35 = vst [vmem:[%s27 + $0xc] sm:$0xf] %v34
            %v36 = vld [vmem:[%s26 + $0x20] sm:$0xf]
            %37 = vst [vmem:[%s27 + $0x10] sm:$0xf] %v36
            %v38 = vld [vmem:[%s26 + $0x28] sm:$0xf]
            %39 = vst [vmem:[%s27 + $0x14] sm:$0xf] %v38
            %v40 = vld [vmem:[%s26 + $0x30] sm:$0xf]
            %41 = vst [vmem:[%s27 + $0x18] sm:$0xf] %v40
            %v42 = vld [vmem:[%s26 + $0x38] sm:$0xf]
            %43 = vst [vmem:[%s27 + $0x1c] sm:$0xf] %v42
          $region22: #{encoder_forward.22} parent=16 // loop_footer
            %s25 = sadd.s32 1, %s21
          $region23: #{encoder_forward.22} parent=16 // loop_footer_branch
            %20 = sbr.rel target = $region19
          $region24: #{encoder_forward.22} parent=16 // loop_exit
            _
        $region17: #{encoder_forward.22} parent=8 // pred_fallthru
          _
      $region9: #{encoder_forward.22} parent=4 // pred_fallthru
        _
      %79 = vnop
    $region5: #{encoder_forward.22} parent=1 // pred_fallthru
      _
    // Predicated region
    $region43: #{encoder_forward.22} parent=1 // pred_check
      _
    $region44: #{encoder_forward.22} parent=1 // pred_check_branch
      %81 = sbr.rel (0) target = $region46
    $region45: #{encoder_forward.22} parent=1 // pred_region
      %s82 = sadd.s32 0, 1
      %s83 = smul.addr %s82, 4
      %s84 = scalar_lea.vmem %s1, %s83
      // Predicated region
      $region47: #{encoder_forward.22} parent=45 // pred_check
        _
      $region48: #{encoder_forward.22} parent=45 // pred_check_branch
        %86 = sbr.rel (0) target = $region50
      $region49: #{encoder_forward.22} parent=45 // pred_region
        // Predicated region
        $region51: #{encoder_forward.22} parent=49 // pred_check
          _
        $region52: #{encoder_forward.22} parent=49 // pred_check_branch
          %88 = sbr.rel target = $region54
        $region53: #{encoder_forward.22} parent=49 // pred_region
          // Predicated region
          $region66: #{encoder_forward.22} parent=53 // pred_check
            _
          $region67: #{encoder_forward.22} parent=53 // pred_check_branch
            %117 = sbr.rel (0) target = $region69
          $region68: #{encoder_forward.22} parent=53 // pred_region
            loop: start=0, step=1, limit=1
            $region70: #{encoder_forward.22} parent=68 // loop_pre_header
              _
            $region71: #{encoder_forward.22} parent=68 // loop_header
              %s119 = sphi 0, %s123
              %p120 = scmp.ge.s32.totalorder %s119, 1
              %s124 = sphi %s84, %s84
              %s125 = sphi [#allocation3], [#allocation3]
            $region72: #{encoder_forward.22} parent=68 // loop_header_branch
              %122 = sbr.rel (%p120) target = $region76
            $region73: #{encoder_forward.22} parent=68 // loop_body
              _
            $region74: #{encoder_forward.22} parent=68 // loop_footer
              %s123 = sadd.s32 1, %s119
            $region75: #{encoder_forward.22} parent=68 // loop_footer_branch
              %118 = sbr.rel target = $region71
            $region76: #{encoder_forward.22} parent=68 // loop_exit
              _
            loop: start=0, step=1, limit=1
            $region77: #{encoder_forward.22} parent=68 // loop_pre_header
              _
            $region78: #{encoder_forward.22} parent=68 // loop_header
              %s128 = sphi 0, %s132
              %p129 = scmp.ge.s32.totalorder %s128, 1
              %s133 = sphi %s84, %s84
              %s134 = sphi [#allocation3], [#allocation3]
            $region79: #{encoder_forward.22} parent=68 // loop_header_branch
              %131 = sbr.rel (%p129) target = $region83
            $region80: #{encoder_forward.22} parent=68 // loop_body
              %v135 = vld [vmem:[%s133] sm:$0xf]
              %136 = vst [vmem:[%s134] sm:$0xf] %v135
              %v137 = vld [vmem:[%s133 + $0x8] sm:$0xf]
              %138 = vst [vmem:[%s134 + $0x4] sm:$0xf] %v137
              %v139 = vld [vmem:[%s133 + $0x10] sm:$0xf]
              %140 = vst [vmem:[%s134 + $0x8] sm:$0xf] %v139
              %v141 = vld [vmem:[%s133 + $0x18] sm:$0xf]
              %142 = vst [vmem:[%s134 + $0xc] sm:$0xf] %v141
              %v143 = vld [vmem:[%s133 + $0x20] sm:$0xf]
              %144 = vst [vmem:[%s134 + $0x10] sm:$0xf] %v143
              %v145 = vld [vmem:[%s133 + $0x28] sm:$0xf]
              %146 = vst [vmem:[%s134 + $0x14] sm:$0xf] %v145
              %v147 = vld [vmem:[%s133 + $0x30] sm:$0xf]
              %148 = vst [vmem:[%s134 + $0x18] sm:$0xf] %v147
              %v149 = vld [vmem:[%s133 + $0x38] sm:$0xf]
              %150 = vst [vmem:[%s134 + $0x1c] sm:$0xf] %v149
            $region81: #{encoder_forward.22} parent=68 // loop_footer
              %s132 = sadd.s32 1, %s128
            $region82: #{encoder_forward.22} parent=68 // loop_footer_branch
              %127 = sbr.rel target = $region78
            $region83: #{encoder_forward.22} parent=68 // loop_exit
              _
          $region69: #{encoder_forward.22} parent=53 // pred_fallthru
            _
        $region54: #{encoder_forward.22} parent=49 // pred_fallthru
          _
        // Predicated region
        $region55: #{encoder_forward.22} parent=49 // pred_check
          _
        $region56: #{encoder_forward.22} parent=49 // pred_check_branch
          %90 = sbr.rel (0) target = $region58
        $region57: #{encoder_forward.22} parent=49 // pred_region
          loop: start=0, step=1, limit=1
          $region59: #{encoder_forward.22} parent=57 // loop_pre_header
            _
          $region60: #{encoder_forward.22} parent=57 // loop_header
            %s93 = sphi 0, %s97
            %p94 = scmp.ge.s32.totalorder %s93, 1
            %s98 = sphi %s84, %s84
            %s99 = sphi [#allocation3], [#allocation3]
          $region61: #{encoder_forward.22} parent=57 // loop_header_branch
            %96 = sbr.rel (%p94) target = $region65
          $region62: #{encoder_forward.22} parent=57 // loop_body
            %v100 = vld [vmem:[%s98] sm:$0xf]
            %101 = vst [vmem:[%s99] sm:$0xf] %v100
            %v102 = vld [vmem:[%s98 + $0x8] sm:$0xf]
            %103 = vst [vmem:[%s99 + $0x4] sm:$0xf] %v102
            %v104 = vld [vmem:[%s98 + $0x10] sm:$0xf]
            %105 = vst [vmem:[%s99 + $0x8] sm:$0xf] %v104
            %v106 = vld [vmem:[%s98 + $0x18] sm:$0xf]
            %107 = vst [vmem:[%s99 + $0xc] sm:$0xf] %v106
            %v108 = vld [vmem:[%s98 + $0x20] sm:$0xf]
            %109 = vst [vmem:[%s99 + $0x10] sm:$0xf] %v108
            %v110 = vld [vmem:[%s98 + $0x28] sm:$0xf]
            %111 = vst [vmem:[%s99 + $0x14] sm:$0xf] %v110
            %v112 = vld [vmem:[%s98 + $0x30] sm:$0xf]
            %113 = vst [vmem:[%s99 + $0x18] sm:$0xf] %v112
            %v114 = vld [vmem:[%s98 + $0x38] sm:$0xf]
            %115 = vst [vmem:[%s99 + $0x1c] sm:$0xf] %v114
          $region63: #{encoder_forward.22} parent=57 // loop_footer
            %s97 = sadd.s32 1, %s93
          $region64: #{encoder_forward.22} parent=57 // loop_footer_branch
            %92 = sbr.rel target = $region60
          $region65: #{encoder_forward.22} parent=57 // loop_exit
            _
        $region58: #{encoder_forward.22} parent=49 // pred_fallthru
          _
      $region50: #{encoder_forward.22} parent=45 // pred_fallthru
        _
      %151 = vnop
    $region46: #{encoder_forward.22} parent=1 // pred_fallthru
      _
    // Predicated region
    $region84: #{encoder_forward.22} parent=1 // pred_check
      _
    $region85: #{encoder_forward.22} parent=1 // pred_check_branch
      %153 = sbr.rel (0) target = $region87
    $region86: #{encoder_forward.22} parent=1 // pred_region
      _
    $region87: #{encoder_forward.22} parent=1 // pred_fallthru
      _
    // Predicated region
    $region88: #{encoder_forward.22} parent=1 // pred_check
      _
    $region89: #{encoder_forward.22} parent=1 // pred_check_branch
      %155 = sbr.rel (0) target = $region91
    $region90: #{encoder_forward.22} parent=1 // pred_region
      _
    $region91: #{encoder_forward.22} parent=1 // pred_fallthru
      _
    // Predicated region
    $region92: #{encoder_forward.22} parent=1 // pred_check
      _
    $region93: #{encoder_forward.22} parent=1 // pred_check_branch
      %157 = sbr.rel (0) target = $region95
    $region94: #{encoder_forward.22} parent=1 // pred_region
      _
    $region95: #{encoder_forward.22} parent=1 // pred_fallthru
      _
    // Predicated region
    $region96: #{encoder_forward.22} parent=1 // pred_check
      _
    $region97: #{encoder_forward.22} parent=1 // pred_check_branch
      %159 = sbr.rel (0) target = $region99
    $region98: #{encoder_forward.22} parent=1 // pred_region
      _
    $region99: #{encoder_forward.22} parent=1 // pred_fallthru
      _
    %s160 = sadd.s32 0, 1
    %v162 = vld [vmem:[#allocation2] sm:$0xf]
    %v163 = vld [vmem:[#allocation2 + $0x4] sm:$0xf]
    %v164 = vld [vmem:[#allocation2 + $0x8] sm:$0xf]
    %v165 = vld [vmem:[#allocation2 + $0xc] sm:$0xf]
    %v166 = vld [vmem:[#allocation2 + $0x10] sm:$0xf]
    %v167 = vld [vmem:[#allocation2 + $0x14] sm:$0xf]
    %v168 = vld [vmem:[#allocation2 + $0x18] sm:$0xf]
    %v169 = vld [vmem:[#allocation2 + $0x1c] sm:$0xf]
    %v170 = vld [vmem:[#allocation3] sm:$0xf]
    %v171 = vld [vmem:[#allocation3 + $0x4] sm:$0xf]
    %v172 = vld [vmem:[#allocation3 + $0x8] sm:$0xf]
    %v173 = vld [vmem:[#allocation3 + $0xc] sm:$0xf]
    %v174 = vld [vmem:[#allocation3 + $0x10] sm:$0xf]
    %v175 = vld [vmem:[#allocation3 + $0x14] sm:$0xf]
    %v184 = vunpack.c.l.b16 %v162
    %v185 = vunpack.c.l.b16 %v163
    %v186 = vunpack.c.l.b16 %v164
    %v187 = vunpack.c.l.b16 %v165
    %v188 = vunpack.c.l.b16 %v166
    %v189 = vunpack.c.l.b16 %v167
    %v190 = vunpack.c.l.b16 %v168
    %v191 = vunpack.c.l.b16 %v169
    %v192 = vpack.c.b16 %v185, %v184
    %v193 = vpack.c.b16 %v187, %v186
    %v194 = vpack.c.b16 %v189, %v188
    %v195 = vpack.c.b16 %v191, %v190
    %v206 = vunpack.c.l.b16 %v170
    %v207 = vunpack.c.l.b16 %v171
    %v208 = vunpack.c.l.b16 %v172
    %v209 = vunpack.c.l.b16 %v173
    %v210 = vunpack.c.l.b16 %v174
    %v211 = vunpack.c.l.b16 %v175
    %v212 = vpack.c.b16 %v207, %v206
    %v213 = vpack.c.b16 %v209, %v208
    %v214 = vpack.c.b16 %v211, %v210
    %v215 = vld [vmem:[%s2] sm:$0xf]
    %v216 = vld [vmem:[%s2 + $0x4] sm:$0xf]
    %v217 = vld [vmem:[%s2 + $0x8] sm:$0xf]
    %v218 = vld [vmem:[%s2 + $0xc] sm:$0xf]
    %v219 = vld [vmem:[%s2 + $0x10] sm:$0xf]
    %v220 = vld [vmem:[%s2 + $0x14] sm:$0xf]
    %v221 = vld [vmem:[%s2 + $0x18] sm:$0xf]
    %v222 = vld [vmem:[%s2 + $0x1c] sm:$0xf]
    %v227 = vunpack.c.l.b16 %v219
    %v228 = vunpack.c.l.b16 %v220
    %v229 = vunpack.c.l.b16 %v221
    %v230 = vunpack.c.l.b16 %v222
    %v231 = vpack.c.b16 %v228, %v227
    %v232 = vpack.c.b16 %v230, %v229
    %vm233 = vcmask 130048
    %v235 = vsel %vm233, %v231, 0
    %v238 = vsel %vm233, %v232, 0
    %240 = vmatprep.subr.bf16.mxu0 0
    %241 = vmatpush1.bf16.msra.mxu0 %v193
    %242 = vmatprep.subr.bf16.mxu0 0
    %243 = vmatpush1.bf16.msra.mxu0 0
    %244 = vmatprep.subr.bf16.mxu0 0
    %245 = vmatpush1.bf16.msra.mxu0 0
    %246 = vmatprep.subr.bf16.mxu0 0
    %247 = vmatpush1.bf16.msra.mxu0 0
    %248 = vmatprep.subr.bf16.mxu0 0
    %249 = vmatpush1.bf16.msra.mxu0 0
    %250 = vmatprep.subr.bf16.mxu0 0
    %251 = vmatpush1.bf16.msra.mxu0 0
    %252 = vmatprep.subr.bf16.mxu0 0
    %253 = vmatpush1.bf16.msra.mxu0 0
    %254 = vmatprep.subr.bf16.mxu0 0
    %255 = vmatpush1.bf16.msra.mxu0 0
    %256 = vmatprep.subr.bf16.mxu0 0
    %257 = vmatpush1.bf16.msra.mxu0 0
    %258 = vmatprep.subr.bf16.mxu0 0
    %259 = vmatpush1.bf16.msra.mxu0 0
    %260 = vmatprep.subr.bf16.mxu0 0
    %261 = vmatpush1.bf16.msra.mxu0 0
    %262 = vmatprep.subr.bf16.mxu0 0
    %263 = vmatpush1.bf16.msra.mxu0 0
    %264 = vmatprep.subr.bf16.mxu0 0
    %265 = vmatpush1.bf16.msra.mxu0 0
    %266 = vmatprep.subr.bf16.mxu0 0
    %267 = vmatpush1.bf16.msra.mxu0 0
    %268 = vmatprep.subr.bf16.mxu0 0
    %269 = vmatpush1.bf16.msra.mxu0 0
    %270 = vmatprep.subr.bf16.mxu0 0
    %271 = vmatpush1.bf16.msra.mxu0 0
    %272 = vmatprep.mubr.bf16.mxu0 0
    %273 = vmatmul.mubr.bf16.gmra.mrb[0].mxu0 %v235
    %v274 = vpop.f32.mrb[0].mxu0
    %v275 = vadd.f32 0.0, %v274
    %v276 = vpop.f32.mrb[0].mxu0
    %v277 = vpop.f32.mrb[0].mxu0
    %v278 = vadd.f32 0.0, %v277
    %v279 = vpop.f32.mrb[0].mxu0
    %280 = vmatprep.mubr.bf16.mxu0 0
    %281 = vmatmul.mubr.bf16.gmra.mrb[0].mxu0 %v238
    %v282 = vpop.f32.mrb[0].mxu0
    %v283 = vadd.f32 0.0, %v282
    %v284 = vpop.f32.mrb[0].mxu0
    %v285 = vpop.f32.mrb[0].mxu0
    %v286 = vadd.f32 0.0, %v285
    %v287 = vpop.f32.mrb[0].mxu0
    %288 = vdwg.mxu0
    %v293 = vunpack.c.l.b16 %v215
    %v294 = vunpack.c.l.b16 %v216
    %v295 = vunpack.c.l.b16 %v217
    %v296 = vunpack.c.l.b16 %v218
    %v297 = vpack.c.b16 %v294, %v293
    %v298 = vpack.c.b16 %v296, %v295
    %v300 = vsel %vm233, %v297, 0
    %v303 = vsel %vm233, %v298, 0
    %305 = vmatprep.subr.bf16.mxu0 0
    %306 = vmatpush1.bf16.msra.mxu0 %v192
    %307 = vmatprep.subr.bf16.mxu0 0
    %308 = vmatpush1.bf16.msra.mxu0 0
    %309 = vmatprep.subr.bf16.mxu0 0
    %310 = vmatpush1.bf16.msra.mxu0 0
    %311 = vmatprep.subr.bf16.mxu0 0
    %312 = vmatpush1.bf16.msra.mxu0 0
    %313 = vmatprep.subr.bf16.mxu0 0
    %314 = vmatpush1.bf16.msra.mxu0 0
    %315 = vmatprep.subr.bf16.mxu0 0
    %316 = vmatpush1.bf16.msra.mxu0 0
    %317 = vmatprep.subr.bf16.mxu0 0
    %318 = vmatpush1.bf16.msra.mxu0 0
    %319 = vmatprep.subr.bf16.mxu0 0
    %320 = vmatpush1.bf16.msra.mxu0 0
    %321 = vmatprep.subr.bf16.mxu0 0
    %322 = vmatpush1.bf16.msra.mxu0 0
    %323 = vmatprep.subr.bf16.mxu0 0
    %324 = vmatpush1.bf16.msra.mxu0 0
    %325 = vmatprep.subr.bf16.mxu0 0
    %326 = vmatpush1.bf16.msra.mxu0 0
    %327 = vmatprep.subr.bf16.mxu0 0
    %328 = vmatpush1.bf16.msra.mxu0 0
    %329 = vmatprep.subr.bf16.mxu0 0
    %330 = vmatpush1.bf16.msra.mxu0 0
    %331 = vmatprep.subr.bf16.mxu0 0
    %332 = vmatpush1.bf16.msra.mxu0 0
    %333 = vmatprep.subr.bf16.mxu0 0
    %334 = vmatpush1.bf16.msra.mxu0 0
    %335 = vmatprep.subr.bf16.mxu0 0
    %336 = vmatpush1.bf16.msra.mxu0 0
    %337 = vmatprep.mubr.bf16.mxu0 0
    %338 = vmatmul.mubr.bf16.gmra.mrb[0].mxu0 %v300
    %v339 = vpop.f32.mrb[0].mxu0
    %v340 = vadd.f32 %v275, %v339
    %v341 = vpop.f32.mrb[0].mxu0
    %v342 = vpop.f32.mrb[0].mxu0
    %v343 = vadd.f32 %v278, %v342
    %v344 = vpop.f32.mrb[0].mxu0
    %345 = vmatprep.mubr.bf16.mxu0 0
    %346 = vmatmul.mubr.bf16.gmra.mrb[0].mxu0 %v303
    %v347 = vpop.f32.mrb[0].mxu0
    %v348 = vadd.f32 %v283, %v347
    %v349 = vpop.f32.mrb[0].mxu0
    %v350 = vpop.f32.mrb[0].mxu0
    %v351 = vadd.f32 %v286, %v350
    %v352 = vpop.f32.mrb[0].mxu0
    %353 = vdwg.mxu0
    %v354 = vld [vmem:[%s2 + $0x20] sm:$0xf]
    %v355 = vld [vmem:[%s2 + $0x24] sm:$0xf]
    %v356 = vld [vmem:[%s2 + $0x28] sm:$0xf]
    %v357 = vld [vmem:[%s2 + $0x2c] sm:$0xf]
    %v362 = vunpack.c.l.b16 %v354
    %v363 = vunpack.c.l.b16 %v355
    %v364 = vunpack.c.l.b16 %v356
    %v365 = vunpack.c.l.b16 %v357
    %v366 = vpack.c.b16 %v363, %v362
    %v367 = vpack.c.b16 %v365, %v364
    %368 = vrot.lane.b32.xlu0 %v192, 127
    %v369 = vpop.permute.xlu0 %368
    %370 = vrot.lane.b32.xlu0 %v212, 127
    %v371 = vpop.permute.xlu0 %370
    %vm372 = vcmask 1039360
    %v373 = vsel %vm372, %v369, %v371
    %v376 = vsel %vm233, %v366, 0
    %v379 = vsel %vm233, %v367, 0
    %381 = vmatprep.subr.bf16.mxu0 0
    %382 = vmatpush1.bf16.msra.mxu0 %v373
    %383 = vmatprep.subr.bf16.mxu0 0
    %384 = vmatpush1.bf16.msra.mxu0 0
    %385 = vmatprep.subr.bf16.mxu0 0
    %386 = vmatpush1.bf16.msra.mxu0 0
    %387 = vmatprep.subr.bf16.mxu0 0
    %388 = vmatpush1.bf16.msra.mxu0 0
    %389 = vmatprep.subr.bf16.mxu0 0
    %390 = vmatpush1.bf16.msra.mxu0 0
    %391 = vmatprep.subr.bf16.mxu0 0
    %392 = vmatpush1.bf16.msra.mxu0 0
    %393 = vmatprep.subr.bf16.mxu0 0
    %394 = vmatpush1.bf16.msra.mxu0 0
    %395 = vmatprep.subr.bf16.mxu0 0
    %396 = vmatpush1.bf16.msra.mxu0 0
    %397 = vmatprep.subr.bf16.mxu0 0
    %398 = vmatpush1.bf16.msra.mxu0 0
    %399 = vmatprep.subr.bf16.mxu0 0
    %400 = vmatpush1.bf16.msra.mxu0 0
    %401 = vmatprep.subr.bf16.mxu0 0
    %402 = vmatpush1.bf16.msra.mxu0 0
    %403 = vmatprep.subr.bf16.mxu0 0
    %404 = vmatpush1.bf16.msra.mxu0 0
    %405 = vmatprep.subr.bf16.mxu0 0
    %406 = vmatpush1.bf16.msra.mxu0 0
    %407 = vmatprep.subr.bf16.mxu0 0
    %408 = vmatpush1.bf16.msra.mxu0 0
    %409 = vmatprep.subr.bf16.mxu0 0
    %410 = vmatpush1.bf16.msra.mxu0 0
    %411 = vmatprep.subr.bf16.mxu0 0
    %412 = vmatpush1.bf16.msra.mxu0 0
    %413 = vmatprep.mubr.bf16.mxu0 0
    %414 = vmatmul.mubr.bf16.gmra.mrb[0].mxu0 %v376
    %v415 = vpop.f32.mrb[0].mxu0
    %v416 = vadd.f32 0.0, %v415
    %v417 = vpop.f32.mrb[0].mxu0
    %v418 = vpop.f32.mrb[0].mxu0
    %v419 = vadd.f32 0.0, %v418
    %v420 = vpop.f32.mrb[0].mxu0
    %421 = vmatprep.mubr.bf16.mxu0 0
    %422 = vmatmul.mubr.bf16.gmra.mrb[0].mxu0 %v379
    %v423 = vpop.f32.mrb[0].mxu0
    %v424 = vadd.f32 0.0, %v423
    %v425 = vpop.f32.mrb[0].mxu0
    %v426 = vpop.f32.mrb[0].mxu0
    %v427 = vadd.f32 0.0, %v426
    %v428 = vpop.f32.mrb[0].mxu0
    %429 = vdwg.mxu0
    %v430 = vadd.f32 %v340, %v416
    %v431 = vadd.f32 %v343, %v419
    %v432 = vadd.f32 %v348, %v424
    %v433 = vadd.f32 %v351, %v427
    %v434 = vld [vmem:[%s2 + $0x30] sm:$0xf]
    %v435 = vld [vmem:[%s2 + $0x34] sm:$0xf]
    %v436 = vld [vmem:[%s2 + $0x38] sm:$0xf]
    %v437 = vld [vmem:[%s2 + $0x3c] sm:$0xf]
    %v442 = vunpack.c.l.b16 %v434
    %v443 = vunpack.c.l.b16 %v435
    %v444 = vunpack.c.l.b16 %v436
    %v445 = vunpack.c.l.b16 %v437
    %v446 = vpack.c.b16 %v443, %v442
    %v447 = vpack.c.b16 %v445, %v444
    %v449 = vsel %vm233, %v446, 0
    %v452 = vsel %vm233, %v447, 0
    %454 = vmatprep.subr.bf16.mxu0 0
    %455 = vmatpush1.bf16.msra.mxu0 %v194
    %456 = vmatprep.subr.bf16.mxu0 0
    %457 = vmatpush1.bf16.msra.mxu0 0
    %458 = vmatprep.subr.bf16.mxu0 0
    %459 = vmatpush1.bf16.msra.mxu0 0
    %460 = vmatprep.subr.bf16.mxu0 0
    %461 = vmatpush1.bf16.msra.mxu0 0
    %462 = vmatprep.subr.bf16.mxu0 0
    %463 = vmatpush1.bf16.msra.mxu0 0
    %464 = vmatprep.subr.bf16.mxu0 0
    %465 = vmatpush1.bf16.msra.mxu0 0
    %466 = vmatprep.subr.bf16.mxu0 0
    %467 = vmatpush1.bf16.msra.mxu0 0
    %468 = vmatprep.subr.bf16.mxu0 0
    %469 = vmatpush1.bf16.msra.mxu0 0
    %470 = vmatprep.subr.bf16.mxu0 0
    %471 = vmatpush1.bf16.msra.mxu0 0
    %472 = vmatprep.subr.bf16.mxu0 0
    %473 = vmatpush1.bf16.msra.mxu0 0
    %474 = vmatprep.subr.bf16.mxu0 0
    %475 = vmatpush1.bf16.msra.mxu0 0
    %476 = vmatprep.subr.bf16.mxu0 0
    %477 = vmatpush1.bf16.msra.mxu0 0
    %478 = vmatprep.subr.bf16.mxu0 0
    %479 = vmatpush1.bf16.msra.mxu0 0
    %480 = vmatprep.subr.bf16.mxu0 0
    %481 = vmatpush1.bf16.msra.mxu0 0
    %482 = vmatprep.subr.bf16.mxu0 0
    %483 = vmatpush1.bf16.msra.mxu0 0
    %484 = vmatprep.subr.bf16.mxu0 0
    %485 = vmatpush1.bf16.msra.mxu0 0
    %486 = vmatprep.mubr.bf16.mxu0 0
    %487 = vmatmul.mubr.bf16.gmra.mrb[0].mxu0 %v449
    %v488 = vpop.f32.mrb[0].mxu0
    %v489 = vadd.f32 0.0, %v488
    %v490 = vpop.f32.mrb[0].mxu0
    %v491 = vpop.f32.mrb[0].mxu0
    %v492 = vadd.f32 0.0, %v491
    %v493 = vpop.f32.mrb[0].mxu0
    %494 = vmatprep.mubr.bf16.mxu0 0
    %495 = vmatmul.mubr.bf16.gmra.mrb[0].mxu0 %v452
    %v496 = vpop.f32.mrb[0].mxu0
    %v497 = vadd.f32 0.0, %v496
    %v498 = vpop.f32.mrb[0].mxu0
    %v499 = vpop.f32.mrb[0].mxu0
    %v500 = vadd.f32 0.0, %v499
    %v501 = vpop.f32.mrb[0].mxu0
    %502 = vdwg.mxu0
    %v503 = vadd.f32 %v430, %v489
    %v504 = vadd.f32 %v431, %v492
    %v505 = vadd.f32 %v432, %v497
    %v506 = vadd.f32 %v433, %v500
    %v507 = vld [vmem:[%s2 + $0x40] sm:$0xf]
    %v508 = vld [vmem:[%s2 + $0x44] sm:$0xf]
    %v509 = vld [vmem:[%s2 + $0x48] sm:$0xf]
    %v510 = vld [vmem:[%s2 + $0x4c] sm:$0xf]
    %v515 = vunpack.c.l.b16 %v507
    %v516 = vunpack.c.l.b16 %v508
    %v517 = vunpack.c.l.b16 %v509
    %v518 = vunpack.c.l.b16 %v510
    %v519 = vpack.c.b16 %v516, %v515
    %v520 = vpack.c.b16 %v518, %v517
    %v522 = vsel %vm233, %v519, 0
    %v525 = vsel %vm233, %v520, 0
    %527 = vmatprep.subr.bf16.mxu0 0
    %528 = vmatpush1.bf16.msra.mxu0 %v195
    %529 = vmatprep.subr.bf16.mxu0 0
    %530 = vmatpush1.bf16.msra.mxu0 0
    %531 = vmatprep.subr.bf16.mxu0 0
    %532 = vmatpush1.bf16.msra.mxu0 0
    %533 = vmatprep.subr.bf16.mxu0 0
    %534 = vmatpush1.bf16.msra.mxu0 0
    %535 = vmatprep.subr.bf16.mxu0 0
    %536 = vmatpush1.bf16.msra.mxu0 0
    %537 = vmatprep.subr.bf16.mxu0 0
    %538 = vmatpush1.bf16.msra.mxu0 0
    %539 = vmatprep.subr.bf16.mxu0 0
    %540 = vmatpush1.bf16.msra.mxu0 0
    %541 = vmatprep.subr.bf16.mxu0 0
    %542 = vmatpush1.bf16.msra.mxu0 0
    %543 = vmatprep.subr.bf16.mxu0 0
    %544 = vmatpush1.bf16.msra.mxu0 0
    %545 = vmatprep.subr.bf16.mxu0 0
    %546 = vmatpush1.bf16.msra.mxu0 0
    %547 = vmatprep.subr.bf16.mxu0 0
    %548 = vmatpush1.bf16.msra.mxu0 0
    %549 = vmatprep.subr.bf16.mxu0 0
    %550 = vmatpush1.bf16.msra.mxu0 0
    %551 = vmatprep.subr.bf16.mxu0 0
    %552 = vmatpush1.bf16.msra.mxu0 0
    %553 = vmatprep.subr.bf16.mxu0 0
    %554 = vmatpush1.bf16.msra.mxu0 0
    %555 = vmatprep.subr.bf16.mxu0 0
    %556 = vmatpush1.bf16.msra.mxu0 0
    %557 = vmatprep.subr.bf16.mxu0 0
    %558 = vmatpush1.bf16.msra.mxu0 0
    %559 = vmatprep.mubr.bf16.mxu0 0
    %560 = vmatmul.mubr.bf16.gmra.mrb[0].mxu0 %v522
    %v561 = vpop.f32.mrb[0].mxu0
    %v562 = vadd.f32 0.0, %v561
    %v563 = vpop.f32.mrb[0].mxu0
    %v564 = vpop.f32.mrb[0].mxu0
    %v565 = vadd.f32 0.0, %v564
    %v566 = vpop.f32.mrb[0].mxu0
    %567 = vmatprep.mubr.bf16.mxu0 0
    %568 = vmatmul.mubr.bf16.gmra.mrb[0].mxu0 %v525
    %v569 = vpop.f32.mrb[0].mxu0
    %v570 = vadd.f32 0.0, %v569
    %v571 = vpop.f32.mrb[0].mxu0
    %v572 = vpop.f32.mrb[0].mxu0
    %v573 = vadd.f32 0.0, %v572
    %v574 = vpop.f32.mrb[0].mxu0
    %575 = vdwg.mxu0
    %v576 = vadd.f32 %v503, %v562
    %v577 = vadd.f32 %v504, %v565
    %v578 = vadd.f32 %v505, %v570
    %v579 = vadd.f32 %v506, %v573
    %v580 = vld [vmem:[%s2 + $0x50] sm:$0xf]
    %v581 = vld [vmem:[%s2 + $0x54] sm:$0xf]
    %v582 = vld [vmem:[%s2 + $0x58] sm:$0xf]
    %v583 = vld [vmem:[%s2 + $0x5c] sm:$0xf]
    %v588 = vunpack.c.l.b16 %v580
    %v589 = vunpack.c.l.b16 %v581
    %v590 = vunpack.c.l.b16 %v582
    %v591 = vunpack.c.l.b16 %v583
    %v592 = vpack.c.b16 %v589, %v588
    %v593 = vpack.c.b16 %v591, %v590
    %594 = vrot.lane.b32.xlu0 %v194, 127
    %v595 = vpop.permute.xlu0 %594
    %596 = vrot.lane.b32.xlu0 %v214, 127
    %v597 = vpop.permute.xlu0 %596
    %v598 = vsel %vm372, %v595, %v597
    %v601 = vsel %vm233, %v592, 0
    %v604 = vsel %vm233, %v593, 0
    %606 = vmatprep.subr.bf16.mxu0 0
    %607 = vmatpush1.bf16.msra.mxu0 %v598
    %608 = vmatprep.subr.bf16.mxu0 0
    %609 = vmatpush1.bf16.msra.mxu0 0
    %610 = vmatprep.subr.bf16.mxu0 0
    %611 = vmatpush1.bf16.msra.mxu0 0
    %612 = vmatprep.subr.bf16.mxu0 0
    %613 = vmatpush1.bf16.msra.mxu0 0
    %614 = vmatprep.subr.bf16.mxu0 0
    %615 = vmatpush1.bf16.msra.mxu0 0
    %616 = vmatprep.subr.bf16.mxu0 0
    %617 = vmatpush1.bf16.msra.mxu0 0
    %618 = vmatprep.subr.bf16.mxu0 0
    %619 = vmatpush1.bf16.msra.mxu0 0
    %620 = vmatprep.subr.bf16.mxu0 0
    %621 = vmatpush1.bf16.msra.mxu0 0
    %622 = vmatprep.subr.bf16.mxu0 0
    %623 = vmatpush1.bf16.msra.mxu0 0
    %624 = vmatprep.subr.bf16.mxu0 0
    %625 = vmatpush1.bf16.msra.mxu0 0
    %626 = vmatprep.subr.bf16.mxu0 0
    %627 = vmatpush1.bf16.msra.mxu0 0
    %628 = vmatprep.subr.bf16.mxu0 0
    %629 = vmatpush1.bf16.msra.mxu0 0
    %630 = vmatprep.subr.bf16.mxu0 0
    %631 = vmatpush1.bf16.msra.mxu0 0
    %632 = vmatprep.subr.bf16.mxu0 0
    %633 = vmatpush1.bf16.msra.mxu0 0
    %634 = vmatprep.subr.bf16.mxu0 0
    %635 = vmatpush1.bf16.msra.mxu0 0
    %636 = vmatprep.subr.bf16.mxu0 0
    %637 = vmatpush1.bf16.msra.mxu0 0
    %638 = vmatprep.mubr.bf16.mxu0 0
    %639 = vmatmul.mubr.bf16.gmra.mrb[0].mxu0 %v601
    %v640 = vpop.f32.mrb[0].mxu0
    %v641 = vadd.f32 0.0, %v640
    %v642 = vpop.f32.mrb[0].mxu0
    %v643 = vpop.f32.mrb[0].mxu0
    %v644 = vadd.f32 0.0, %v643
    %v645 = vpop.f32.mrb[0].mxu0
    %646 = vmatprep.mubr.bf16.mxu0 0
    %647 = vmatmul.mubr.bf16.gmra.mrb[0].mxu0 %v604
    %v648 = vpop.f32.mrb[0].mxu0
    %v649 = vadd.f32 0.0, %v648
    %v650 = vpop.f32.mrb[0].mxu0
    %v651 = vpop.f32.mrb[0].mxu0
    %v652 = vadd.f32 0.0, %v651
    %v653 = vpop.f32.mrb[0].mxu0
    %654 = vdwg.mxu0
    %v655 = vadd.f32 %v576, %v641
    %v656 = vadd.f32 %v577, %v644
    %v657 = vadd.f32 %v578, %v649
    %v658 = vadd.f32 %v579, %v652
    %v659 = vld [vmem:[%s2 + $0x60] sm:$0xf]
    %v660 = vld [vmem:[%s2 + $0x64] sm:$0xf]
    %v661 = vld [vmem:[%s2 + $0x68] sm:$0xf]
    %v662 = vld [vmem:[%s2 + $0x6c] sm:$0xf]
    %v667 = vunpack.c.l.b16 %v659
    %v668 = vunpack.c.l.b16 %v660
    %v669 = vunpack.c.l.b16 %v661
    %v670 = vunpack.c.l.b16 %v662
    %v671 = vpack.c.b16 %v668, %v667
    %v672 = vpack.c.b16 %v670, %v669
    %673 = vrot.lane.b32.xlu0 %v192, 123
    %v674 = vpop.permute.xlu0 %673
    %675 = vrot.lane.b32.xlu0 %v212, 123
    %v676 = vpop.permute.xlu0 %675
    %vm677 = vcmask 1006592
    %v678 = vsel %vm677, %v674, %v676
    %v681 = vsel %vm233, %v671, 0
    %v684 = vsel %vm233, %v672, 0
    %686 = vmatprep.subr.bf16.mxu0 0
    %687 = vmatpush1.bf16.msra.mxu0 %v678
    %688 = vmatprep.subr.bf16.mxu0 0
    %689 = vmatpush1.bf16.msra.mxu0 0
    %690 = vmatprep.subr.bf16.mxu0 0
    %691 = vmatpush1.bf16.msra.mxu0 0
    %692 = vmatprep.subr.bf16.mxu0 0
    %693 = vmatpush1.bf16.msra.mxu0 0
    %694 = vmatprep.subr.bf16.mxu0 0
    %695 = vmatpush1.bf16.msra.mxu0 0
    %696 = vmatprep.subr.bf16.mxu0 0
    %697 = vmatpush1.bf16.msra.mxu0 0
    %698 = vmatprep.subr.bf16.mxu0 0
    %699 = vmatpush1.bf16.msra.mxu0 0
    %700 = vmatprep.subr.bf16.mxu0 0
    %701 = vmatpush1.bf16.msra.mxu0 0
    %702 = vmatprep.subr.bf16.mxu0 0
    %703 = vmatpush1.bf16.msra.mxu0 0
    %704 = vmatprep.subr.bf16.mxu0 0
    %705 = vmatpush1.bf16.msra.mxu0 0
    %706 = vmatprep.subr.bf16.mxu0 0
    %707 = vmatpush1.bf16.msra.mxu0 0
    %708 = vmatprep.subr.bf16.mxu0 0
    %709 = vmatpush1.bf16.msra.mxu0 0
    %710 = vmatprep.subr.bf16.mxu0 0
    %711 = vmatpush1.bf16.msra.mxu0 0
    %712 = vmatprep.subr.bf16.mxu0 0
    %713 = vmatpush1.bf16.msra.mxu0 0
    %714 = vmatprep.subr.bf16.mxu0 0
    %715 = vmatpush1.bf16.msra.mxu0 0
    %716 = vmatprep.subr.bf16.mxu0 0
    %717 = vmatpush1.bf16.msra.mxu0 0
    %718 = vmatprep.mubr.bf16.mxu0 0
    %719 = vmatmul.mubr.bf16.gmra.mrb[0].mxu0 %v681
    %v720 = vpop.f32.mrb[0].mxu0
    %v721 = vadd.f32 0.0, %v720
    %v722 = vpop.f32.mrb[0].mxu0
    %v723 = vpop.f32.mrb[0].mxu0
    %v724 = vadd.f32 0.0, %v723
    %v725 = vpop.f32.mrb[0].mxu0
    %726 = vmatprep.mubr.bf16.mxu0 0
    %727 = vmatmul.mubr.bf16.gmra.mrb[0].mxu0 %v684
    %v728 = vpop.f32.mrb[0].mxu0
    %v729 = vadd.f32 0.0, %v728
    %v730 = vpop.f32.mrb[0].mxu0
    %v731 = vpop.f32.mrb[0].mxu0
    %v732 = vadd.f32 0.0, %v731
    %v733 = vpop.f32.mrb[0].mxu0
    %734 = vdwg.mxu0
    %v735 = vadd.f32 %v655, %v721
    %v736 = vadd.f32 %v656, %v724
    %v737 = vadd.f32 %v657, %v729
    %v738 = vadd.f32 %v658, %v732
    %v739 = vld [vmem:[%s2 + $0x70] sm:$0xf]
    %v740 = vld [vmem:[%s2 + $0x74] sm:$0xf]
    %v741 = vld [vmem:[%s2 + $0x78] sm:$0xf]
    %v742 = vld [vmem:[%s2 + $0x7c] sm:$0xf]
    %v747 = vunpack.c.l.b16 %v739
    %v748 = vunpack.c.l.b16 %v740
    %v749 = vunpack.c.l.b16 %v741
    %v750 = vunpack.c.l.b16 %v742
    %v751 = vpack.c.b16 %v748, %v747
    %v752 = vpack.c.b16 %v750, %v749
    %753 = vrot.lane.b32.xlu0 %v193, 123
    %v754 = vpop.permute.xlu0 %753
    %755 = vrot.lane.b32.xlu0 %v213, 123
    %v756 = vpop.permute.xlu0 %755
    %v757 = vsel %vm677, %v754, %v756
    %v760 = vsel %vm233, %v751, 0
    %v763 = vsel %vm233, %v752, 0
    %765 = vmatprep.subr.bf16.mxu0 0
    %766 = vmatpush1.bf16.msra.mxu0 %v757
    %767 = vmatprep.subr.bf16.mxu0 0
    %768 = vmatpush1.bf16.msra.mxu0 0
    %769 = vmatprep.subr.bf16.mxu0 0
    %770 = vmatpush1.bf16.msra.mxu0 0
    %771 = vmatprep.subr.bf16.mxu0 0
    %772 = vmatpush1.bf16.msra.mxu0 0
    %773 = vmatprep.subr.bf16.mxu0 0
    %774 = vmatpush1.bf16.msra.mxu0 0
    %775 = vmatprep.subr.bf16.mxu0 0
    %776 = vmatpush1.bf16.msra.mxu0 0
    %777 = vmatprep.subr.bf16.mxu0 0
    %778 = vmatpush1.bf16.msra.mxu0 0
    %779 = vmatprep.subr.bf16.mxu0 0
    %780 = vmatpush1.bf16.msra.mxu0 0
    %781 = vmatprep.subr.bf16.mxu0 0
    %782 = vmatpush1.bf16.msra.mxu0 0
    %783 = vmatprep.subr.bf16.mxu0 0
    %784 = vmatpush1.bf16.msra.mxu0 0
    %785 = vmatprep.subr.bf16.mxu0 0
    %786 = vmatpush1.bf16.msra.mxu0 0
    %787 = vmatprep.subr.bf16.mxu0 0
    %788 = vmatpush1.bf16.msra.mxu0 0
    %789 = vmatprep.subr.bf16.mxu0 0
    %790 = vmatpush1.bf16.msra.mxu0 0
    %791 = vmatprep.subr.bf16.mxu0 0
    %792 = vmatpush1.bf16.msra.mxu0 0
    %793 = vmatprep.subr.bf16.mxu0 0
    %794 = vmatpush1.bf16.msra.mxu0 0
    %795 = vmatprep.subr.bf16.mxu0 0
    %796 = vmatpush1.bf16.msra.mxu0 0
    %797 = vmatprep.mubr.bf16.mxu0 0
    %798 = vmatmul.mubr.bf16.gmra.mrb[0].mxu0 %v760
    %v799 = vpop.f32.mrb[0].mxu0
    %v800 = vadd.f32 0.0, %v799
    %v801 = vpop.f32.mrb[0].mxu0
    %v802 = vpop.f32.mrb[0].mxu0
    %v803 = vadd.f32 0.0, %v802
    %v804 = vpop.f32.mrb[0].mxu0
    %805 = vmatprep.mubr.bf16.mxu0 0
    %806 = vmatmul.mubr.bf16.gmra.mrb[0].mxu0 %v763
    %v807 = vpop.f32.mrb[0].mxu0
    %v808 = vadd.f32 0.0, %v807
    %v809 = vpop.f32.mrb[0].mxu0
    %v810 = vpop.f32.mrb[0].mxu0
    %v811 = vadd.f32 0.0, %v810
    %v812 = vpop.f32.mrb[0].mxu0
    %813 = vdwg.mxu0
    %v814 = vadd.f32 %v735, %v800
    %v815 = vadd.f32 %v736, %v803
    %v816 = vadd.f32 %v737, %v808
    %v817 = vadd.f32 %v738, %v811
    %v818 = vld [vmem:[%s2 + $0x80] sm:$0xf]
    %v819 = vld [vmem:[%s2 + $0x84] sm:$0xf]
    %v820 = vld [vmem:[%s2 + $0x88] sm:$0xf]
    %v821 = vld [vmem:[%s2 + $0x8c] sm:$0xf]
    %v826 = vunpack.c.l.b16 %v818
    %v827 = vunpack.c.l.b16 %v819
    %v828 = vunpack.c.l.b16 %v820
    %v829 = vunpack.c.l.b16 %v821
    %v830 = vpack.c.b16 %v827, %v826
    %v831 = vpack.c.b16 %v829, %v828
    %832 = vrot.lane.b32.xlu0 %v192, 122
    %v833 = vpop.permute.xlu0 %832
    %834 = vrot.lane.b32.xlu0 %v212, 122
    %v835 = vpop.permute.xlu0 %834
    %vm836 = vcmask 998400
    %v837 = vsel %vm836, %v833, %v835
    %v840 = vsel %vm233, %v830, 0
    %v843 = vsel %vm233, %v831, 0
    %845 = vmatprep.subr.bf16.mxu0 0
    %846 = vmatpush1.bf16.msra.mxu0 %v837
    %847 = vmatprep.subr.bf16.mxu0 0
    %848 = vmatpush1.bf16.msra.mxu0 0
    %849 = vmatprep.subr.bf16.mxu0 0
    %850 = vmatpush1.bf16.msra.mxu0 0
    %851 = vmatprep.subr.bf16.mxu0 0
    %852 = vmatpush1.bf16.msra.mxu0 0
    %853 = vmatprep.subr.bf16.mxu0 0
    %854 = vmatpush1.bf16.msra.mxu0 0
    %855 = vmatprep.subr.bf16.mxu0 0
    %856 = vmatpush1.bf16.msra.mxu0 0
    %857 = vmatprep.subr.bf16.mxu0 0
    %858 = vmatpush1.bf16.msra.mxu0 0
    %859 = vmatprep.subr.bf16.mxu0 0
    %860 = vmatpush1.bf16.msra.mxu0 0
    %861 = vmatprep.subr.bf16.mxu0 0
    %862 = vmatpush1.bf16.msra.mxu0 0
    %863 = vmatprep.subr.bf16.mxu0 0
    %864 = vmatpush1.bf16.msra.mxu0 0
    %865 = vmatprep.subr.bf16.mxu0 0
    %866 = vmatpush1.bf16.msra.mxu0 0
    %867 = vmatprep.subr.bf16.mxu0 0
    %868 = vmatpush1.bf16.msra.mxu0 0
    %869 = vmatprep.subr.bf16.mxu0 0
    %870 = vmatpush1.bf16.msra.mxu0 0
    %871 = vmatprep.subr.bf16.mxu0 0
    %872 = vmatpush1.bf16.msra.mxu0 0
    %873 = vmatprep.subr.bf16.mxu0 0
    %874 = vmatpush1.bf16.msra.mxu0 0
    %875 = vmatprep.subr.bf16.mxu0 0
    %876 = vmatpush1.bf16.msra.mxu0 0
    %877 = vmatprep.mubr.bf16.mxu0 0
    %878 = vmatmul.mubr.bf16.gmra.mrb[0].mxu0 %v840
    %v879 = vpop.f32.mrb[0].mxu0
    %v880 = vadd.f32 0.0, %v879
    %v881 = vpop.f32.mrb[0].mxu0
    %v882 = vpop.f32.mrb[0].mxu0
    %v883 = vadd.f32 0.0, %v882
    %v884 = vpop.f32.mrb[0].mxu0
    %885 = vmatprep.mubr.bf16.mxu0 0
    %886 = vmatmul.mubr.bf16.gmra.mrb[0].mxu0 %v843
    %v887 = vpop.f32.mrb[0].mxu0
    %v888 = vadd.f32 0.0, %v887
    %v889 = vpop.f32.mrb[0].mxu0
    %v890 = vpop.f32.mrb[0].mxu0
    %v891 = vadd.f32 0.0, %v890
    %v892 = vpop.f32.mrb[0].mxu0
    %893 = vdwg.mxu0
    %v894 = vadd.f32 %v814, %v880
    %v895 = vadd.f32 %v815, %v883
    %v896 = vadd.f32 %v816, %v888
    %v897 = vadd.f32 %v817, %v891
    %898 = vst [vmem:[%s4] sm:$0xff] %v894
    %899 = vst [vmem:[%s4 + $0x8] sm:$0xff] %v895
    %900 = vst [vmem:[%s4 + $0x10] sm:$0xff] %v896
    %901 = vst [vmem:[%s4 + $0x18] sm:$0xff] %v897
    %v902 = vld [vmem:[%s3] sm:$0x1]
    %v904 = vlaneseq
    %v905 = vshrl.u32 %v904, 7
    %v906 = vsub.s32 0, %v905
    %v907 = vrot.slane %v902, %v906
    %v909 = vmul.f32 %v894, %v907
    %v910 = vmul.f32 %v895, %v907
    %v911 = vmul.f32 %v896, %v907
    %v912 = vmul.f32 %v897, %v907
    %913 = vadd.xlane.f32.xlu0 %v909
    %v914 = vpop.xlane.xlu0 %913
    %915 = vadd.xlane.f32.xlu0 %v910
    %v916 = vpop.xlane.xlu0 %915
    %917 = vadd.xlane.f32.xlu0 %v911
    %v918 = vpop.xlane.xlu0 %917
    %919 = vadd.xlane.f32.xlu0 %v912
    %v920 = vpop.xlane.xlu0 %919
    %v921 = vmul.f32 %v909, %v894
    %v922 = vmul.f32 %v910, %v895
    %v923 = vmul.f32 %v911, %v896
    %v924 = vmul.f32 %v912, %v897
    %925 = vadd.xlane.f32.xlu0 %v921
    %v926 = vpop.xlane.xlu0 %925
    %927 = vadd.xlane.f32.xlu0 %v922
    %v928 = vpop.xlane.xlu0 %927
    %929 = vadd.xlane.f32.xlu0 %v923
    %v930 = vpop.xlane.xlu0 %929
    %931 = vadd.xlane.f32.xlu0 %v924
    %v932 = vpop.xlane.xlu0 %931
    %vm933 = vcmask 7168
    %v934 = vsel %vm933, %v914, %v926
    %v935 = vsel %vm933, %v916, %v928
    %v936 = vsel %vm933, %v918, %v930
    %v937 = vsel %vm933, %v920, %v932
    %vm938 = vcmask 15360
    %939 = vst.msk [vmem:[%s5] sm:$0xff] %vm938, %v934
    %940 = vst.msk [vmem:[%s5 + $0x8] sm:$0xff] %vm938, %v935
    %941 = vst.msk [vmem:[%s5 + $0x10] sm:$0xff] %vm938, %v936
    %942 = vst.msk [vmem:[%s5 + $0x18] sm:$0xff] %vm938, %v937
    // Predicated region
    $region100: #{encoder_forward.22} parent=1 // pred_check
      _
    $region101: #{encoder_forward.22} parent=1 // pred_check_branch
      %944 = sbr.rel (0) target = $region103
    $region102: #{encoder_forward.22} parent=1 // pred_region
      _
    $region103: #{encoder_forward.22} parent=1 // pred_fallthru
      _
    // Predicated region
    $region104: #{encoder_forward.22} parent=1 // pred_check
      _
    $region105: #{encoder_forward.22} parent=1 // pred_check_branch
      %946 = sbr.rel (0) target = $region107
    $region106: #{encoder_forward.22} parent=1 // pred_region
      _
    $region107: #{encoder_forward.22} parent=1 // pred_fallthru
      _
    // Predicated region
    $region108: #{encoder_forward.22} parent=1 // pred_check
      _
    $region109: #{encoder_forward.22} parent=1 // pred_check_branch
      %948 = sbr.rel (0) target = $region111
    $region110: #{encoder_forward.22} parent=1 // pred_region
      _
    $region111: #{encoder_forward.22} parent=1 // pred_fallthru
      _
    // Predicated region
    $region112: #{encoder_forward.22} parent=1 // pred_check
      _
    $region113: #{encoder_forward.22} parent=1 // pred_check_branch
      %950 = sbr.rel (0) target = $region115
    $region114: #{encoder_forward.22} parent=1 // pred_region
      _
    $region115: #{encoder_forward.22} parent=1 // pred_fallthru
      _

// kernel: encoder_forward.27
$region0: #{encoder_forward.27}
  #allocation0 [shape = 'u32[]', space=smem, size = 0x4, offset = 0x4, fixed_abs, tag = 'smem constant byte address 0x4 - core index']
  #allocation1 [shape = 'u32[144,128]{1,0:T(1,128)}', space=vmem, size = 0x12000, scoped, tag = 'internal scratch']
  %s0 = inlined_call_operand.vmem [shape: f32[32,128], index: 0, kind: input, shape index: {}]
  %s1 = inlined_call_operand.vmem [shape: f32[32,1], index: 1, kind: input, shape index: {}]
  %s2 = inlined_call_operand.vmem [shape: f32[32,1], index: 2, kind: input, shape index: {}]
  %s3 = inlined_call_operand.vmem [shape: f32[32,128], index: 3, kind: input, shape index: {}]
  %s4 = inlined_call_operand.vmem [shape: f32[32,128], index: 4, kind: output, shape index: {}]
  %s5 = sld [smem:[#allocation0]]
  $region26: #{encoder_forward.27} parent=0
    _
  %s7 = ssub.s32 1, %s5
  %s8 = scalar_select 0, %s7, %s5
  // Predicated region
  $region2: #{encoder_forward.27} parent=0 // pred_check
    _
  $region3: #{encoder_forward.27} parent=0 // pred_check_branch
    %10 = sbr.rel (0) target = $region5
  $region4: #{encoder_forward.27} parent=0 // pred_region
    _
  $region5: #{encoder_forward.27} parent=0 // pred_fallthru
    _
  // Predicated region
  $region6: #{encoder_forward.27} parent=0 // pred_check
    _
  $region7: #{encoder_forward.27} parent=0 // pred_check_branch
    %12 = sbr.rel (0) target = $region9
  $region8: #{encoder_forward.27} parent=0 // pred_region
    _
  $region9: #{encoder_forward.27} parent=0 // pred_fallthru
    _
  // Predicated region
  $region10: #{encoder_forward.27} parent=0 // pred_check
    _
  $region11: #{encoder_forward.27} parent=0 // pred_check_branch
    %14 = sbr.rel (0) target = $region13
  $region12: #{encoder_forward.27} parent=0 // pred_region
    _
  $region13: #{encoder_forward.27} parent=0 // pred_fallthru
    _
  // Predicated region
  $region14: #{encoder_forward.27} parent=0 // pred_check
    _
  $region15: #{encoder_forward.27} parent=0 // pred_check_branch
    %16 = sbr.rel (0) target = $region17
  $region16: #{encoder_forward.27} parent=0 // pred_region
    _
  $region17: #{encoder_forward.27} parent=0 // pred_fallthru
    _
  %v17 = vld [vmem:[%s0] sm:$0xff]
  %v18 = vld [vmem:[%s0 + $0x8] sm:$0xff]
  %v19 = vld [vmem:[%s0 + $0x10] sm:$0xff]
  %v20 = vld [vmem:[%s0 + $0x18] sm:$0xff]
  %v21 = vld [vmem:[%s1] sm:$0xff]
  %v22 = vld [vmem:[%s1 + $0x8] sm:$0xff]
  %v23 = vld [vmem:[%s1 + $0x10] sm:$0xff]
  %v24 = vld [vmem:[%s1 + $0x18] sm:$0xff]
  %26 = vset.pattern.permute.xlu0 0
  %27 = vperm.xlu0 %26, %v21
  %v28 = vpop.permute.xlu0 %27
  %31 = vset.pattern.permute.xlu0 0
  %32 = vperm.xlu0 %31, %v22
  %v33 = vpop.permute.xlu0 %32
  %36 = vset.pattern.permute.xlu0 0
  %37 = vperm.xlu0 %36, %v23
  %v38 = vpop.permute.xlu0 %37
  %41 = vset.pattern.permute.xlu0 0
  %42 = vperm.xlu0 %41, %v24
  %v43 = vpop.permute.xlu0 %42
  %v45 = vmul.f32 %v17, %v28
  %v46 = vmul.f32 %v18, %v33
  %v47 = vmul.f32 %v19, %v38
  %v48 = vmul.f32 %v20, %v43
  %v49 = vld [vmem:[%s2] sm:$0xff]
  %v50 = vld [vmem:[%s2 + $0x8] sm:$0xff]
  %v51 = vld [vmem:[%s2 + $0x10] sm:$0xff]
  %v52 = vld [vmem:[%s2 + $0x18] sm:$0xff]
  %54 = vset.pattern.permute.xlu0 0
  %55 = vperm.xlu0 %54, %v49
  %v56 = vpop.permute.xlu0 %55
  %59 = vset.pattern.permute.xlu0 0
  %60 = vperm.xlu0 %59, %v50
  %v61 = vpop.permute.xlu0 %60
  %64 = vset.pattern.permute.xlu0 0
  %65 = vperm.xlu0 %64, %v51
  %v66 = vpop.permute.xlu0 %65
  %69 = vset.pattern.permute.xlu0 0
  %70 = vperm.xlu0 %69, %v52
  %v71 = vpop.permute.xlu0 %70
  %v73 = vadd.f32 %v45, %v56
  %v74 = vadd.f32 %v46, %v61
  %v75 = vadd.f32 %v47, %v66
  %v76 = vadd.f32 %v48, %v71
  %v77 = vld [vmem:[%s3] sm:$0xff]
  %v78 = vld [vmem:[%s3 + $0x8] sm:$0xff]
  %v79 = vld [vmem:[%s3 + $0x10] sm:$0xff]
  %v80 = vld [vmem:[%s3 + $0x18] sm:$0xff]
  %v81 = vadd.f32 %v73, %v77
  %v82 = vadd.f32 %v74, %v78
  %v83 = vadd.f32 %v75, %v79
  %v84 = vadd.f32 %v76, %v80
  %85 = vst [vmem:[%s4] sm:$0xff] %v81
  %86 = vst [vmem:[%s4 + $0x8] sm:$0xff] %v82
  %87 = vst [vmem:[%s4 + $0x10] sm:$0xff] %v83
  %88 = vst [vmem:[%s4 + $0x18] sm:$0xff] %v84
  // Predicated region
  $region18: #{encoder_forward.27} parent=0 // pred_check
    _
  $region19: #{encoder_forward.27} parent=0 // pred_check_branch
    %90 = sbr.rel (0) target = $region21
  $region20: #{encoder_forward.27} parent=0 // pred_region
    _
  $region21: #{encoder_forward.27} parent=0 // pred_fallthru
    _
  // Predicated region
  $region22: #{encoder_forward.27} parent=0 // pred_check
    _
  $region23: #{encoder_forward.27} parent=0 // pred_check_branch
    %92 = sbr.rel (0) target = $region25
  $region24: #{encoder_forward.27} parent=0 // pred_region
    _
  $region25: #{encoder_forward.27} parent=0 // pred_fallthru
    _

// kernel: encoder_forward.25
$region0: #{encoder_forward.25}
  #allocation0 [shape = 'u32[]', space=smem, size = 0x4, offset = 0x4, fixed_abs, tag = 'smem constant byte address 0x4 - core index']
  #allocation1 [shape = 'u32[144,128]{1,0:T(1,128)}', space=vmem, size = 0x12000, scoped, tag = 'internal scratch']
  %s0 = inlined_call_operand.vmem [shape: f32[32,128], index: 0, kind: input, shape index: {}]
  %s1 = inlined_call_operand.vmem [shape: f32[32,1], index: 1, kind: input, shape index: {}]
  %s2 = inlined_call_operand.vmem [shape: f32[32,1], index: 2, kind: input, shape index: {}]
  %s3 = inlined_call_operand.vmem [shape: f32[32,128], index: 3, kind: output, shape index: {}]
  %s4 = sld [smem:[#allocation0]]
  $region22: #{encoder_forward.25} parent=0
    _
  %s6 = ssub.s32 1, %s4
  %s7 = scalar_select 0, %s6, %s4
  // Predicated region
  $region2: #{encoder_forward.25} parent=0 // pred_check
    _
  $region3: #{encoder_forward.25} parent=0 // pred_check_branch
    %9 = sbr.rel (0) target = $region5
  $region4: #{encoder_forward.25} parent=0 // pred_region
    _
  $region5: #{encoder_forward.25} parent=0 // pred_fallthru
    _
  // Predicated region
  $region6: #{encoder_forward.25} parent=0 // pred_check
    _
  $region7: #{encoder_forward.25} parent=0 // pred_check_branch
    %11 = sbr.rel (0) target = $region9
  $region8: #{encoder_forward.25} parent=0 // pred_region
    _
  $region9: #{encoder_forward.25} parent=0 // pred_fallthru
    _
  // Predicated region
  $region10: #{encoder_forward.25} parent=0 // pred_check
    _
  $region11: #{encoder_forward.25} parent=0 // pred_check_branch
    %13 = sbr.rel (0) target = $region13
  $region12: #{encoder_forward.25} parent=0 // pred_region
    _
  $region13: #{encoder_forward.25} parent=0 // pred_fallthru
    _
  %v14 = vld [vmem:[%s0] sm:$0xff]
  %v15 = vld [vmem:[%s0 + $0x8] sm:$0xff]
  %v16 = vld [vmem:[%s0 + $0x10] sm:$0xff]
  %v17 = vld [vmem:[%s0 + $0x18] sm:$0xff]
  %v18 = vld [vmem:[%s1] sm:$0xff]
  %v19 = vld [vmem:[%s1 + $0x8] sm:$0xff]
  %v20 = vld [vmem:[%s1 + $0x10] sm:$0xff]
  %v21 = vld [vmem:[%s1 + $0x18] sm:$0xff]
  %23 = vset.pattern.permute.xlu0 0
  %24 = vperm.xlu0 %23, %v18
  %v25 = vpop.permute.xlu0 %24
  %28 = vset.pattern.permute.xlu0 0
  %29 = vperm.xlu0 %28, %v19
  %v30 = vpop.permute.xlu0 %29
  %33 = vset.pattern.permute.xlu0 0
  %34 = vperm.xlu0 %33, %v20
  %v35 = vpop.permute.xlu0 %34
  %38 = vset.pattern.permute.xlu0 0
  %39 = vperm.xlu0 %38, %v21
  %v40 = vpop.permute.xlu0 %39
  %v42 = vmul.f32 %v14, %v25
  %v43 = vmul.f32 %v15, %v30
  %v44 = vmul.f32 %v16, %v35
  %v45 = vmul.f32 %v17, %v40
  %v46 = vld [vmem:[%s2] sm:$0xff]
  %v47 = vld [vmem:[%s2 + $0x8] sm:$0xff]
  %v48 = vld [vmem:[%s2 + $0x10] sm:$0xff]
  %v49 = vld [vmem:[%s2 + $0x18] sm:$0xff]
  %51 = vset.pattern.permute.xlu0 0
  %52 = vperm.xlu0 %51, %v46
  %v53 = vpop.permute.xlu0 %52
  %56 = vset.pattern.permute.xlu0 0
  %57 = vperm.xlu0 %56, %v47
  %v58 = vpop.permute.xlu0 %57
  %61 = vset.pattern.permute.xlu0 0
  %62 = vperm.xlu0 %61, %v48
  %v63 = vpop.permute.xlu0 %62
  %66 = vset.pattern.permute.xlu0 0
  %67 = vperm.xlu0 %66, %v49
  %v68 = vpop.permute.xlu0 %67
  %v70 = vadd.f32 %v42, %v53
  %v71 = vadd.f32 %v43, %v58
  %v72 = vadd.f32 %v44, %v63
  %v73 = vadd.f32 %v45, %v68
  %v74 = vmax.f32 %v70, 0.0
  %v75 = vmax.f32 %v71, 0.0
  %v76 = vmax.f32 %v72, 0.0
  %v77 = vmax.f32 %v73, 0.0
  %78 = vst [vmem:[%s3] sm:$0xff] %v74
  %79 = vst [vmem:[%s3 + $0x8] sm:$0xff] %v75
  %80 = vst [vmem:[%s3 + $0x10] sm:$0xff] %v76
  %81 = vst [vmem:[%s3 + $0x18] sm:$0xff] %v77
  // Predicated region
  $region14: #{encoder_forward.25} parent=0 // pred_check
    _
  $region15: #{encoder_forward.25} parent=0 // pred_check_branch
    %83 = sbr.rel (0) target = $region17
  $region16: #{encoder_forward.25} parent=0 // pred_region
    _
  $region17: #{encoder_forward.25} parent=0 // pred_fallthru
    _
  // Predicated region
  $region18: #{encoder_forward.25} parent=0 // pred_check
    _
  $region19: #{encoder_forward.25} parent=0 // pred_check_branch
    %85 = sbr.rel (0) target = $region21
  $region20: #{encoder_forward.25} parent=0 // pred_region
    _
  $region21: #{encoder_forward.25} parent=0 // pred_fallthru
    _

// kernel: encoder_forward.24
$region0: #{encoder_forward.24}
  #allocation0 [shape = 'u32[]', space=smem, size = 0x4, offset = 0x4, fixed_abs, tag = 'smem constant byte address 0x4 - core index']
  #allocation1 [shape = 'u32[144,128]{1,0:T(1,128)}', space=vmem, size = 0x12000, scoped, tag = 'internal scratch']
  %s0 = inlined_call_operand.vmem [shape: bf16[32,256], index: 0, kind: input, shape index: {}, may-alias: {0,1}]
  %s1 = inlined_call_operand.vmem [shape: bf16[32,256], index: 1, kind: input, shape index: {}, may-alias: {0,1}]
  %s2 = inlined_call_operand.vmem [shape: bf16[288,32], index: 2, kind: input, shape index: {}]
  %s3 = inlined_call_operand.vmem [shape: f32[1,128], index: 3, kind: input, shape index: {}]
  %s4 = inlined_call_operand.vmem [shape: f32[32,128], index: 4, kind: output, shape index: {0}]
  %s5 = inlined_call_operand.vmem [shape: f32[1,32,2], index: 5, kind: output, shape index: {1}]
  %6 = xla_tuple %s4, %s5
  %s7 = sld [smem:[#allocation0]]
  $region116: #{encoder_forward.24} parent=0
    _
  %s9 = ssub.s32 1, %s7
  %s10 = scalar_select 0, %s9, %s7
  $region1: #{encoder_forward.24} parent=0
    #allocation2 [shape = 'u8[8192]{0}', space=vmem, size = 0x2000, scoped, tag = 'input window, operand 0, single buffered']
    #allocation3 [shape = 'u8[8192]{0}', space=vmem, size = 0x2000, scoped, tag = 'input window, operand 1, single buffered']
    // Predicated region
    $region2: #{encoder_forward.24} parent=1 // pred_check
      _
    $region3: #{encoder_forward.24} parent=1 // pred_check_branch
      %12 = sbr.rel (0) target = $region5
    $region4: #{encoder_forward.24} parent=1 // pred_region
      // Predicated region
      $region6: #{encoder_forward.24} parent=4 // pred_check
        _
      $region7: #{encoder_forward.24} parent=4 // pred_check_branch
        %14 = sbr.rel (0) target = $region9
      $region8: #{encoder_forward.24} parent=4 // pred_region
        // Predicated region
        $region10: #{encoder_forward.24} parent=8 // pred_check
          _
        $region11: #{encoder_forward.24} parent=8 // pred_check_branch
          %16 = sbr.rel target = $region13
        $region12: #{encoder_forward.24} parent=8 // pred_region
          // Predicated region
          $region25: #{encoder_forward.24} parent=12 // pred_check
            _
          $region26: #{encoder_forward.24} parent=12 // pred_check_branch
            %37 = sbr.rel (0) target = $region28
          $region27: #{encoder_forward.24} parent=12 // pred_region
            loop: start=0, step=1, limit=1
            $region29: #{encoder_forward.24} parent=27 // loop_pre_header
              _
            $region30: #{encoder_forward.24} parent=27 // loop_header
              %s39 = sphi 0, %s43
              %p40 = scmp.ge.s32.totalorder %s39, 1
              %s44 = sphi %s0, %s0
              %s45 = sphi [#allocation2], [#allocation2]
            $region31: #{encoder_forward.24} parent=27 // loop_header_branch
              %42 = sbr.rel (%p40) target = $region35
            $region32: #{encoder_forward.24} parent=27 // loop_body
              _
            $region33: #{encoder_forward.24} parent=27 // loop_footer
              %s43 = sadd.s32 1, %s39
            $region34: #{encoder_forward.24} parent=27 // loop_footer_branch
              %38 = sbr.rel target = $region30
            $region35: #{encoder_forward.24} parent=27 // loop_exit
              _
            loop: start=0, step=1, limit=1
            $region36: #{encoder_forward.24} parent=27 // loop_pre_header
              _
            $region37: #{encoder_forward.24} parent=27 // loop_header
              %s48 = sphi 0, %s52
              %p49 = scmp.ge.s32.totalorder %s48, 1
              %s53 = sphi %s0, %s0
              %s54 = sphi [#allocation2], [#allocation2]
            $region38: #{encoder_forward.24} parent=27 // loop_header_branch
              %51 = sbr.rel (%p49) target = $region42
            $region39: #{encoder_forward.24} parent=27 // loop_body
              %v55 = vld [vmem:[%s53] sm:$0xf]
              %56 = vst [vmem:[%s54] sm:$0xf] %v55
              %v57 = vld [vmem:[%s53 + $0x8] sm:$0xf]
              %58 = vst [vmem:[%s54 + $0x4] sm:$0xf] %v57
              %v59 = vld [vmem:[%s53 + $0x10] sm:$0xf]
              %60 = vst [vmem:[%s54 + $0x8] sm:$0xf] %v59
              %v61 = vld [vmem:[%s53 + $0x18] sm:$0xf]
              %62 = vst [vmem:[%s54 + $0xc] sm:$0xf] %v61
            $region40: #{encoder_forward.24} parent=27 // loop_footer
              %s52 = sadd.s32 1, %s48
            $region41: #{encoder_forward.24} parent=27 // loop_footer_branch
              %47 = sbr.rel target = $region37
            $region42: #{encoder_forward.24} parent=27 // loop_exit
              _
          $region28: #{encoder_forward.24} parent=12 // pred_fallthru
            _
        $region13: #{encoder_forward.24} parent=8 // pred_fallthru
          _
        // Predicated region
        $region14: #{encoder_forward.24} parent=8 // pred_check
          _
        $region15: #{encoder_forward.24} parent=8 // pred_check_branch
          %18 = sbr.rel (0) target = $region17
        $region16: #{encoder_forward.24} parent=8 // pred_region
          loop: start=0, step=1, limit=1
          $region18: #{encoder_forward.24} parent=16 // loop_pre_header
            _
          $region19: #{encoder_forward.24} parent=16 // loop_header
            %s21 = sphi 0, %s25
            %p22 = scmp.ge.s32.totalorder %s21, 1
            %s26 = sphi %s0, %s0
            %s27 = sphi [#allocation2], [#allocation2]
          $region20: #{encoder_forward.24} parent=16 // loop_header_branch
            %24 = sbr.rel (%p22) target = $region24
          $region21: #{encoder_forward.24} parent=16 // loop_body
            %v28 = vld [vmem:[%s26] sm:$0xf]
            %29 = vst [vmem:[%s27] sm:$0xf] %v28
            %v30 = vld [vmem:[%s26 + $0x8] sm:$0xf]
            %31 = vst [vmem:[%s27 + $0x4] sm:$0xf] %v30
            %v32 = vld [vmem:[%s26 + $0x10] sm:$0xf]
            %33 = vst [vmem:[%s27 + $0x8] sm:$0xf] %v32
            %v34 = vld [vmem:[%s26 + $0x18] sm:$0xf]
            %35 = vst [vmem:[%s27 + $0xc] sm:$0xf] %v34
          $region22: #{encoder_forward.24} parent=16 // loop_footer
            %s25 = sadd.s32 1, %s21
          $region23: #{encoder_forward.24} parent=16 // loop_footer_branch
            %20 = sbr.rel target = $region19
          $region24: #{encoder_forward.24} parent=16 // loop_exit
            _
        $region17: #{encoder_forward.24} parent=8 // pred_fallthru
          _
      $region9: #{encoder_forward.24} parent=4 // pred_fallthru
        _
      %63 = vnop
    $region5: #{encoder_forward.24} parent=1 // pred_fallthru
      _
    // Predicated region
    $region43: #{encoder_forward.24} parent=1 // pred_check
      _
    $region44: #{encoder_forward.24} parent=1 // pred_check_branch
      %65 = sbr.rel (0) target = $region46
    $region45: #{encoder_forward.24} parent=1 // pred_region
      %s66 = sadd.s32 0, 1
      %s67 = smul.addr %s66, 4
      %s68 = scalar_lea.vmem %s1, %s67
      // Predicated region
      $region47: #{encoder_forward.24} parent=45 // pred_check
        _
      $region48: #{encoder_forward.24} parent=45 // pred_check_branch
        %70 = sbr.rel (0) target = $region50
      $region49: #{encoder_forward.24} parent=45 // pred_region
        // Predicated region
        $region51: #{encoder_forward.24} parent=49 // pred_check
          _
        $region52: #{encoder_forward.24} parent=49 // pred_check_branch
          %72 = sbr.rel target = $region54
        $region53: #{encoder_forward.24} parent=49 // pred_region
          // Predicated region
          $region66: #{encoder_forward.24} parent=53 // pred_check
            _
          $region67: #{encoder_forward.24} parent=53 // pred_check_branch
            %93 = sbr.rel (0) target = $region69
          $region68: #{encoder_forward.24} parent=53 // pred_region
            loop: start=0, step=1, limit=1
            $region70: #{encoder_forward.24} parent=68 // loop_pre_header
              _
            $region71: #{encoder_forward.24} parent=68 // loop_header
              %s95 = sphi 0, %s99
              %p96 = scmp.ge.s32.totalorder %s95, 1
              %s100 = sphi %s68, %s68
              %s101 = sphi [#allocation3], [#allocation3]
            $region72: #{encoder_forward.24} parent=68 // loop_header_branch
              %98 = sbr.rel (%p96) target = $region76
            $region73: #{encoder_forward.24} parent=68 // loop_body
              _
            $region74: #{encoder_forward.24} parent=68 // loop_footer
              %s99 = sadd.s32 1, %s95
            $region75: #{encoder_forward.24} parent=68 // loop_footer_branch
              %94 = sbr.rel target = $region71
            $region76: #{encoder_forward.24} parent=68 // loop_exit
              _
            loop: start=0, step=1, limit=1
            $region77: #{encoder_forward.24} parent=68 // loop_pre_header
              _
            $region78: #{encoder_forward.24} parent=68 // loop_header
              %s104 = sphi 0, %s108
              %p105 = scmp.ge.s32.totalorder %s104, 1
              %s109 = sphi %s68, %s68
              %s110 = sphi [#allocation3], [#allocation3]
            $region79: #{encoder_forward.24} parent=68 // loop_header_branch
              %107 = sbr.rel (%p105) target = $region83
            $region80: #{encoder_forward.24} parent=68 // loop_body
              %v111 = vld [vmem:[%s109] sm:$0xf]
              %112 = vst [vmem:[%s110] sm:$0xf] %v111
              %v113 = vld [vmem:[%s109 + $0x8] sm:$0xf]
              %114 = vst [vmem:[%s110 + $0x4] sm:$0xf] %v113
              %v115 = vld [vmem:[%s109 + $0x10] sm:$0xf]
              %116 = vst [vmem:[%s110 + $0x8] sm:$0xf] %v115
              %v117 = vld [vmem:[%s109 + $0x18] sm:$0xf]
              %118 = vst [vmem:[%s110 + $0xc] sm:$0xf] %v117
            $region81: #{encoder_forward.24} parent=68 // loop_footer
              %s108 = sadd.s32 1, %s104
            $region82: #{encoder_forward.24} parent=68 // loop_footer_branch
              %103 = sbr.rel target = $region78
            $region83: #{encoder_forward.24} parent=68 // loop_exit
              _
          $region69: #{encoder_forward.24} parent=53 // pred_fallthru
            _
        $region54: #{encoder_forward.24} parent=49 // pred_fallthru
          _
        // Predicated region
        $region55: #{encoder_forward.24} parent=49 // pred_check
          _
        $region56: #{encoder_forward.24} parent=49 // pred_check_branch
          %74 = sbr.rel (0) target = $region58
        $region57: #{encoder_forward.24} parent=49 // pred_region
          loop: start=0, step=1, limit=1
          $region59: #{encoder_forward.24} parent=57 // loop_pre_header
            _
          $region60: #{encoder_forward.24} parent=57 // loop_header
            %s77 = sphi 0, %s81
            %p78 = scmp.ge.s32.totalorder %s77, 1
            %s82 = sphi %s68, %s68
            %s83 = sphi [#allocation3], [#allocation3]
          $region61: #{encoder_forward.24} parent=57 // loop_header_branch
            %80 = sbr.rel (%p78) target = $region65
          $region62: #{encoder_forward.24} parent=57 // loop_body
            %v84 = vld [vmem:[%s82] sm:$0xf]
            %85 = vst [vmem:[%s83] sm:$0xf] %v84
            %v86 = vld [vmem:[%s82 + $0x8] sm:$0xf]
            %87 = vst [vmem:[%s83 + $0x4] sm:$0xf] %v86
            %v88 = vld [vmem:[%s82 + $0x10] sm:$0xf]
            %89 = vst [vmem:[%s83 + $0x8] sm:$0xf] %v88
            %v90 = vld [vmem:[%s82 + $0x18] sm:$0xf]
            %91 = vst [vmem:[%s83 + $0xc] sm:$0xf] %v90
          $region63: #{encoder_forward.24} parent=57 // loop_footer
            %s81 = sadd.s32 1, %s77
          $region64: #{encoder_forward.24} parent=57 // loop_footer_branch
            %76 = sbr.rel target = $region60
          $region65: #{encoder_forward.24} parent=57 // loop_exit
            _
        $region58: #{encoder_forward.24} parent=49 // pred_fallthru
          _
      $region50: #{encoder_forward.24} parent=45 // pred_fallthru
        _
      %119 = vnop
    $region46: #{encoder_forward.24} parent=1 // pred_fallthru
      _
    // Predicated region
    $region84: #{encoder_forward.24} parent=1 // pred_check
      _
    $region85: #{encoder_forward.24} parent=1 // pred_check_branch
      %121 = sbr.rel (0) target = $region87
    $region86: #{encoder_forward.24} parent=1 // pred_region
      _
    $region87: #{encoder_forward.24} parent=1 // pred_fallthru
      _
    // Predicated region
    $region88: #{encoder_forward.24} parent=1 // pred_check
      _
    $region89: #{encoder_forward.24} parent=1 // pred_check_branch
      %123 = sbr.rel (0) target = $region91
    $region90: #{encoder_forward.24} parent=1 // pred_region
      _
    $region91: #{encoder_forward.24} parent=1 // pred_fallthru
      _
    // Predicated region
    $region92: #{encoder_forward.24} parent=1 // pred_check
      _
    $region93: #{encoder_forward.24} parent=1 // pred_check_branch
      %125 = sbr.rel (0) target = $region95
    $region94: #{encoder_forward.24} parent=1 // pred_region
      _
    $region95: #{encoder_forward.24} parent=1 // pred_fallthru
      _
    // Predicated region
    $region96: #{encoder_forward.24} parent=1 // pred_check
      _
    $region97: #{encoder_forward.24} parent=1 // pred_check_branch
      %127 = sbr.rel (0) target = $region99
    $region98: #{encoder_forward.24} parent=1 // pred_region
      _
    $region99: #{encoder_forward.24} parent=1 // pred_fallthru
      _
    %s128 = sadd.s32 0, 1
    %v130 = vld [vmem:[#allocation2] sm:$0xf]
    %v131 = vld [vmem:[#allocation2 + $0x4] sm:$0xf]
    %v132 = vld [vmem:[#allocation2 + $0x8] sm:$0xf]
    %v133 = vld [vmem:[#allocation2 + $0xc] sm:$0xf]
    %v134 = vld [vmem:[#allocation3] sm:$0xf]
    %v135 = vld [vmem:[#allocation3 + $0x4] sm:$0xf]
    %v136 = vld [vmem:[#allocation3 + $0x8] sm:$0xf]
    %v137 = vld [vmem:[#allocation3 + $0xc] sm:$0xf]
    %v142 = vunpack.c.l.b16 %v130
    %v143 = vunpack.c.l.b16 %v131
    %v144 = vunpack.c.l.b16 %v132
    %v145 = vunpack.c.l.b16 %v133
    %v146 = vpack.c.b16 %v143, %v142
    %v147 = vpack.c.b16 %v145, %v144
    %v154 = vunpack.c.l.b16 %v134
    %v155 = vunpack.c.l.b16 %v135
    %v156 = vunpack.c.l.b16 %v136
    %v157 = vunpack.c.l.b16 %v137
    %v158 = vpack.c.b16 %v155, %v154
    %v159 = vpack.c.b16 %v157, %v156
    %v160 = vld [vmem:[%s2] sm:$0xf]
    %v161 = vld [vmem:[%s2 + $0x4] sm:$0xf]
    %v162 = vld [vmem:[%s2 + $0x8] sm:$0xf]
    %v163 = vld [vmem:[%s2 + $0xc] sm:$0xf]
    %v164 = vld [vmem:[%s2 + $0x10] sm:$0xf]
    %v165 = vld [vmem:[%s2 + $0x14] sm:$0xf]
    %v166 = vld [vmem:[%s2 + $0x18] sm:$0xf]
    %v167 = vld [vmem:[%s2 + $0x1c] sm:$0xf]
    %v172 = vunpack.c.l.b16 %v164
    %v173 = vunpack.c.l.b16 %v165
    %v174 = vunpack.c.l.b16 %v166
    %v175 = vunpack.c.l.b16 %v167
    %v176 = vpack.c.b16 %v173, %v172
    %v177 = vpack.c.b16 %v175, %v174
    %178 = vrot.lane.b32.xlu0 %v146, 127
    %v179 = vpop.permute.xlu0 %178
    %180 = vrot.lane.b32.xlu0 %v158, 127
    %v181 = vpop.permute.xlu0 %180
    %182 = vrot.lane.b32.xlu0 %v147, 127
    %v183 = vpop.permute.xlu0 %182
    %184 = vrot.lane.b32.xlu0 %v159, 127
    %v185 = vpop.permute.xlu0 %184
    %vm186 = vcmask 1039360
    %v187 = vsel %vm186, %v179, %v181
    %v188 = vsel %vm186, %v183, %v185
    %vm191 = vcmask 261120
    %v193 = vsel %vm191, %v176, 0
    %v196 = vsel %vm191, %v177, 0
    %198 = vmatprep.subr.bf16.mxu0 0
    %199 = vmatpush1.bf16.msra.mxu0 %v187
    %200 = vmatprep.subr.bf16.mxu0 0
    %201 = vmatpush1.bf16.msra.mxu0 %v188
    %202 = vmatprep.subr.bf16.mxu0 0
    %203 = vmatpush1.bf16.msra.mxu0 0
    %204 = vmatprep.subr.bf16.mxu0 0
    %205 = vmatpush1.bf16.msra.mxu0 0
    %206 = vmatprep.subr.bf16.mxu0 0
    %207 = vmatpush1.bf16.msra.mxu0 0
    %208 = vmatprep.subr.bf16.mxu0 0
    %209 = vmatpush1.bf16.msra.mxu0 0
    %210 = vmatprep.subr.bf16.mxu0 0
    %211 = vmatpush1.bf16.msra.mxu0 0
    %212 = vmatprep.subr.bf16.mxu0 0
    %213 = vmatpush1.bf16.msra.mxu0 0
    %214 = vmatprep.subr.bf16.mxu0 0
    %215 = vmatpush1.bf16.msra.mxu0 0
    %216 = vmatprep.subr.bf16.mxu0 0
    %217 = vmatpush1.bf16.msra.mxu0 0
    %218 = vmatprep.subr.bf16.mxu0 0
    %219 = vmatpush1.bf16.msra.mxu0 0
    %220 = vmatprep.subr.bf16.mxu0 0
    %221 = vmatpush1.bf16.msra.mxu0 0
    %222 = vmatprep.subr.bf16.mxu0 0
    %223 = vmatpush1.bf16.msra.mxu0 0
    %224 = vmatprep.subr.bf16.mxu0 0
    %225 = vmatpush1.bf16.msra.mxu0 0
    %226 = vmatprep.subr.bf16.mxu0 0
    %227 = vmatpush1.bf16.msra.mxu0 0
    %228 = vmatprep.subr.bf16.mxu0 0
    %229 = vmatpush1.bf16.msra.mxu0 0
    %230 = vmatprep.mubr.bf16.mxu0 0
    %231 = vmatmul.mubr.bf16.gmra.mrb[0].mxu0 %v193
    %v232 = vpop.f32.mrb[0].mxu0
    %v233 = vadd.f32 0.0, %v232
    %v234 = vpop.f32.mrb[0].mxu0
    %v235 = vpop.f32.mrb[0].mxu0
    %v236 = vadd.f32 0.0, %v235
    %v237 = vpop.f32.mrb[0].mxu0
    %238 = vmatprep.mubr.bf16.mxu0 0
    %239 = vmatmul.mubr.bf16.gmra.mrb[0].mxu0 %v196
    %v240 = vpop.f32.mrb[0].mxu0
    %v241 = vadd.f32 0.0, %v240
    %v242 = vpop.f32.mrb[0].mxu0
    %v243 = vpop.f32.mrb[0].mxu0
    %v244 = vadd.f32 0.0, %v243
    %v245 = vpop.f32.mrb[0].mxu0
    %246 = vdwg.mxu0
    %v251 = vunpack.c.l.b16 %v160
    %v252 = vunpack.c.l.b16 %v161
    %v253 = vunpack.c.l.b16 %v162
    %v254 = vunpack.c.l.b16 %v163
    %v255 = vpack.c.b16 %v252, %v251
    %v256 = vpack.c.b16 %v254, %v253
    %v258 = vsel %vm191, %v255, 0
    %v261 = vsel %vm191, %v256, 0
    %263 = vmatprep.subr.bf16.mxu0 0
    %264 = vmatpush1.bf16.msra.mxu0 %v146
    %265 = vmatprep.subr.bf16.mxu0 0
    %266 = vmatpush1.bf16.msra.mxu0 %v147
    %267 = vmatprep.subr.bf16.mxu0 0
    %268 = vmatpush1.bf16.msra.mxu0 0
    %269 = vmatprep.subr.bf16.mxu0 0
    %270 = vmatpush1.bf16.msra.mxu0 0
    %271 = vmatprep.subr.bf16.mxu0 0
    %272 = vmatpush1.bf16.msra.mxu0 0
    %273 = vmatprep.subr.bf16.mxu0 0
    %274 = vmatpush1.bf16.msra.mxu0 0
    %275 = vmatprep.subr.bf16.mxu0 0
    %276 = vmatpush1.bf16.msra.mxu0 0
    %277 = vmatprep.subr.bf16.mxu0 0
    %278 = vmatpush1.bf16.msra.mxu0 0
    %279 = vmatprep.subr.bf16.mxu0 0
    %280 = vmatpush1.bf16.msra.mxu0 0
    %281 = vmatprep.subr.bf16.mxu0 0
    %282 = vmatpush1.bf16.msra.mxu0 0
    %283 = vmatprep.subr.bf16.mxu0 0
    %284 = vmatpush1.bf16.msra.mxu0 0
    %285 = vmatprep.subr.bf16.mxu0 0
    %286 = vmatpush1.bf16.msra.mxu0 0
    %287 = vmatprep.subr.bf16.mxu0 0
    %288 = vmatpush1.bf16.msra.mxu0 0
    %289 = vmatprep.subr.bf16.mxu0 0
    %290 = vmatpush1.bf16.msra.mxu0 0
    %291 = vmatprep.subr.bf16.mxu0 0
    %292 = vmatpush1.bf16.msra.mxu0 0
    %293 = vmatprep.subr.bf16.mxu0 0
    %294 = vmatpush1.bf16.msra.mxu0 0
    %295 = vmatprep.mubr.bf16.mxu0 0
    %296 = vmatmul.mubr.bf16.gmra.mrb[0].mxu0 %v258
    %v297 = vpop.f32.mrb[0].mxu0
    %v298 = vadd.f32 %v233, %v297
    %v299 = vpop.f32.mrb[0].mxu0
    %v300 = vpop.f32.mrb[0].mxu0
    %v301 = vadd.f32 %v236, %v300
    %v302 = vpop.f32.mrb[0].mxu0
    %303 = vmatprep.mubr.bf16.mxu0 0
    %304 = vmatmul.mubr.bf16.gmra.mrb[0].mxu0 %v261
    %v305 = vpop.f32.mrb[0].mxu0
    %v306 = vadd.f32 %v241, %v305
    %v307 = vpop.f32.mrb[0].mxu0
    %v308 = vpop.f32.mrb[0].mxu0
    %v309 = vadd.f32 %v244, %v308
    %v310 = vpop.f32.mrb[0].mxu0
    %311 = vdwg.mxu0
    %v312 = vld [vmem:[%s2 + $0x20] sm:$0xf]
    %v313 = vld [vmem:[%s2 + $0x24] sm:$0xf]
    %v314 = vld [vmem:[%s2 + $0x28] sm:$0xf]
    %v315 = vld [vmem:[%s2 + $0x2c] sm:$0xf]
    %v320 = vunpack.c.l.b16 %v312
    %v321 = vunpack.c.l.b16 %v313
    %v322 = vunpack.c.l.b16 %v314
    %v323 = vunpack.c.l.b16 %v315
    %v324 = vpack.c.b16 %v321, %v320
    %v325 = vpack.c.b16 %v323, %v322
    %326 = vrot.lane.b32.xlu0 %v146, 126
    %v327 = vpop.permute.xlu0 %326
    %328 = vrot.lane.b32.xlu0 %v158, 126
    %v329 = vpop.permute.xlu0 %328
    %330 = vrot.lane.b32.xlu0 %v147, 126
    %v331 = vpop.permute.xlu0 %330
    %332 = vrot.lane.b32.xlu0 %v159, 126
    %v333 = vpop.permute.xlu0 %332
    %vm334 = vcmask 1031168
    %v335 = vsel %vm334, %v327, %v329
    %v336 = vsel %vm334, %v331, %v333
    %v340 = vsel %vm191, %v324, 0
    %v343 = vsel %vm191, %v325, 0
    %345 = vmatprep.subr.bf16.mxu0 0
    %346 = vmatpush1.bf16.msra.mxu0 %v335
    %347 = vmatprep.subr.bf16.mxu0 0
    %348 = vmatpush1.bf16.msra.mxu0 %v336
    %349 = vmatprep.subr.bf16.mxu0 0
    %350 = vmatpush1.bf16.msra.mxu0 0
    %351 = vmatprep.subr.bf16.mxu0 0
    %352 = vmatpush1.bf16.msra.mxu0 0
    %353 = vmatprep.subr.bf16.mxu0 0
    %354 = vmatpush1.bf16.msra.mxu0 0
    %355 = vmatprep.subr.bf16.mxu0 0
    %356 = vmatpush1.bf16.msra.mxu0 0
    %357 = vmatprep.subr.bf16.mxu0 0
    %358 = vmatpush1.bf16.msra.mxu0 0
    %359 = vmatprep.subr.bf16.mxu0 0
    %360 = vmatpush1.bf16.msra.mxu0 0
    %361 = vmatprep.subr.bf16.mxu0 0
    %362 = vmatpush1.bf16.msra.mxu0 0
    %363 = vmatprep.subr.bf16.mxu0 0
    %364 = vmatpush1.bf16.msra.mxu0 0
    %365 = vmatprep.subr.bf16.mxu0 0
    %366 = vmatpush1.bf16.msra.mxu0 0
    %367 = vmatprep.subr.bf16.mxu0 0
    %368 = vmatpush1.bf16.msra.mxu0 0
    %369 = vmatprep.subr.bf16.mxu0 0
    %370 = vmatpush1.bf16.msra.mxu0 0
    %371 = vmatprep.subr.bf16.mxu0 0
    %372 = vmatpush1.bf16.msra.mxu0 0
    %373 = vmatprep.subr.bf16.mxu0 0
    %374 = vmatpush1.bf16.msra.mxu0 0
    %375 = vmatprep.subr.bf16.mxu0 0
    %376 = vmatpush1.bf16.msra.mxu0 0
    %377 = vmatprep.mubr.bf16.mxu0 0
    %378 = vmatmul.mubr.bf16.gmra.mrb[0].mxu0 %v340
    %v379 = vpop.f32.mrb[0].mxu0
    %v380 = vadd.f32 0.0, %v379
    %v381 = vpop.f32.mrb[0].mxu0
    %v382 = vpop.f32.mrb[0].mxu0
    %v383 = vadd.f32 0.0, %v382
    %v384 = vpop.f32.mrb[0].mxu0
    %385 = vmatprep.mubr.bf16.mxu0 0
    %386 = vmatmul.mubr.bf16.gmra.mrb[0].mxu0 %v343
    %v387 = vpop.f32.mrb[0].mxu0
    %v388 = vadd.f32 0.0, %v387
    %v389 = vpop.f32.mrb[0].mxu0
    %v390 = vpop.f32.mrb[0].mxu0
    %v391 = vadd.f32 0.0, %v390
    %v392 = vpop.f32.mrb[0].mxu0
    %393 = vdwg.mxu0
    %v394 = vadd.f32 %v298, %v380
    %v395 = vadd.f32 %v301, %v383
    %v396 = vadd.f32 %v306, %v388
    %v397 = vadd.f32 %v309, %v391
    %v398 = vld [vmem:[%s2 + $0x30] sm:$0xf]
    %v399 = vld [vmem:[%s2 + $0x34] sm:$0xf]
    %v400 = vld [vmem:[%s2 + $0x38] sm:$0xf]
    %v401 = vld [vmem:[%s2 + $0x3c] sm:$0xf]
    %v406 = vunpack.c.l.b16 %v398
    %v407 = vunpack.c.l.b16 %v399
    %v408 = vunpack.c.l.b16 %v400
    %v409 = vunpack.c.l.b16 %v401
    %v410 = vpack.c.b16 %v407, %v406
    %v411 = vpack.c.b16 %v409, %v408
    %412 = vrot.lane.b32.xlu0 %v146, 122
    %v413 = vpop.permute.xlu0 %412
    %414 = vrot.lane.b32.xlu0 %v158, 122
    %v415 = vpop.permute.xlu0 %414
    %416 = vrot.lane.b32.xlu0 %v147, 122
    %v417 = vpop.permute.xlu0 %416
    %418 = vrot.lane.b32.xlu0 %v159, 122
    %v419 = vpop.permute.xlu0 %418
    %vm420 = vcmask 998400
    %v421 = vsel %vm420, %v413, %v415
    %v422 = vsel %vm420, %v417, %v419
    %v426 = vsel %vm191, %v410, 0
    %v429 = vsel %vm191, %v411, 0
    %431 = vmatprep.subr.bf16.mxu0 0
    %432 = vmatpush1.bf16.msra.mxu0 %v421
    %433 = vmatprep.subr.bf16.mxu0 0
    %434 = vmatpush1.bf16.msra.mxu0 %v422
    %435 = vmatprep.subr.bf16.mxu0 0
    %436 = vmatpush1.bf16.msra.mxu0 0
    %437 = vmatprep.subr.bf16.mxu0 0
    %438 = vmatpush1.bf16.msra.mxu0 0
    %439 = vmatprep.subr.bf16.mxu0 0
    %440 = vmatpush1.bf16.msra.mxu0 0
    %441 = vmatprep.subr.bf16.mxu0 0
    %442 = vmatpush1.bf16.msra.mxu0 0
    %443 = vmatprep.subr.bf16.mxu0 0
    %444 = vmatpush1.bf16.msra.mxu0 0
    %445 = vmatprep.subr.bf16.mxu0 0
    %446 = vmatpush1.bf16.msra.mxu0 0
    %447 = vmatprep.subr.bf16.mxu0 0
    %448 = vmatpush1.bf16.msra.mxu0 0
    %449 = vmatprep.subr.bf16.mxu0 0
    %450 = vmatpush1.bf16.msra.mxu0 0
    %451 = vmatprep.subr.bf16.mxu0 0
    %452 = vmatpush1.bf16.msra.mxu0 0
    %453 = vmatprep.subr.bf16.mxu0 0
    %454 = vmatpush1.bf16.msra.mxu0 0
    %455 = vmatprep.subr.bf16.mxu0 0
    %456 = vmatpush1.bf16.msra.mxu0 0
    %457 = vmatprep.subr.bf16.mxu0 0
    %458 = vmatpush1.bf16.msra.mxu0 0
    %459 = vmatprep.subr.bf16.mxu0 0
    %460 = vmatpush1.bf16.msra.mxu0 0
    %461 = vmatprep.subr.bf16.mxu0 0
    %462 = vmatpush1.bf16.msra.mxu0 0
    %463 = vmatprep.mubr.bf16.mxu0 0
    %464 = vmatmul.mubr.bf16.gmra.mrb[0].mxu0 %v426
    %v465 = vpop.f32.mrb[0].mxu0
    %v466 = vadd.f32 0.0, %v465
    %v467 = vpop.f32.mrb[0].mxu0
    %v468 = vpop.f32.mrb[0].mxu0
    %v469 = vadd.f32 0.0, %v468
    %v470 = vpop.f32.mrb[0].mxu0
    %471 = vmatprep.mubr.bf16.mxu0 0
    %472 = vmatmul.mubr.bf16.gmra.mrb[0].mxu0 %v429
    %v473 = vpop.f32.mrb[0].mxu0
    %v474 = vadd.f32 0.0, %v473
    %v475 = vpop.f32.mrb[0].mxu0
    %v476 = vpop.f32.mrb[0].mxu0
    %v477 = vadd.f32 0.0, %v476
    %v478 = vpop.f32.mrb[0].mxu0
    %479 = vdwg.mxu0
    %v480 = vadd.f32 %v394, %v466
    %v481 = vadd.f32 %v395, %v469
    %v482 = vadd.f32 %v396, %v474
    %v483 = vadd.f32 %v397, %v477
    %v484 = vld [vmem:[%s2 + $0x40] sm:$0xf]
    %v485 = vld [vmem:[%s2 + $0x44] sm:$0xf]
    %v486 = vld [vmem:[%s2 + $0x48] sm:$0xf]
    %v487 = vld [vmem:[%s2 + $0x4c] sm:$0xf]
    %v492 = vunpack.c.l.b16 %v484
    %v493 = vunpack.c.l.b16 %v485
    %v494 = vunpack.c.l.b16 %v486
    %v495 = vunpack.c.l.b16 %v487
    %v496 = vpack.c.b16 %v493, %v492
    %v497 = vpack.c.b16 %v495, %v494
    %498 = vrot.lane.b32.xlu0 %v146, 121
    %v499 = vpop.permute.xlu0 %498
    %500 = vrot.lane.b32.xlu0 %v158, 121
    %v501 = vpop.permute.xlu0 %500
    %502 = vrot.lane.b32.xlu0 %v147, 121
    %v503 = vpop.permute.xlu0 %502
    %504 = vrot.lane.b32.xlu0 %v159, 121
    %v505 = vpop.permute.xlu0 %504
    %vm506 = vcmask 990208
    %v507 = vsel %vm506, %v499, %v501
    %v508 = vsel %vm506, %v503, %v505
    %v512 = vsel %vm191, %v496, 0
    %v515 = vsel %vm191, %v497, 0
    %517 = vmatprep.subr.bf16.mxu0 0
    %518 = vmatpush1.bf16.msra.mxu0 %v507
    %519 = vmatprep.subr.bf16.mxu0 0
    %520 = vmatpush1.bf16.msra.mxu0 %v508
    %521 = vmatprep.subr.bf16.mxu0 0
    %522 = vmatpush1.bf16.msra.mxu0 0
    %523 = vmatprep.subr.bf16.mxu0 0
    %524 = vmatpush1.bf16.msra.mxu0 0
    %525 = vmatprep.subr.bf16.mxu0 0
    %526 = vmatpush1.bf16.msra.mxu0 0
    %527 = vmatprep.subr.bf16.mxu0 0
    %528 = vmatpush1.bf16.msra.mxu0 0
    %529 = vmatprep.subr.bf16.mxu0 0
    %530 = vmatpush1.bf16.msra.mxu0 0
    %531 = vmatprep.subr.bf16.mxu0 0
    %532 = vmatpush1.bf16.msra.mxu0 0
    %533 = vmatprep.subr.bf16.mxu0 0
    %534 = vmatpush1.bf16.msra.mxu0 0
    %535 = vmatprep.subr.bf16.mxu0 0
    %536 = vmatpush1.bf16.msra.mxu0 0
    %537 = vmatprep.subr.bf16.mxu0 0
    %538 = vmatpush1.bf16.msra.mxu0 0
    %539 = vmatprep.subr.bf16.mxu0 0
    %540 = vmatpush1.bf16.msra.mxu0 0
    %541 = vmatprep.subr.bf16.mxu0 0
    %542 = vmatpush1.bf16.msra.mxu0 0
    %543 = vmatprep.subr.bf16.mxu0 0
    %544 = vmatpush1.bf16.msra.mxu0 0
    %545 = vmatprep.subr.bf16.mxu0 0
    %546 = vmatpush1.bf16.msra.mxu0 0
    %547 = vmatprep.subr.bf16.mxu0 0
    %548 = vmatpush1.bf16.msra.mxu0 0
    %549 = vmatprep.mubr.bf16.mxu0 0
    %550 = vmatmul.mubr.bf16.gmra.mrb[0].mxu0 %v512
    %v551 = vpop.f32.mrb[0].mxu0
    %v552 = vadd.f32 0.0, %v551
    %v553 = vpop.f32.mrb[0].mxu0
    %v554 = vpop.f32.mrb[0].mxu0
    %v555 = vadd.f32 0.0, %v554
    %v556 = vpop.f32.mrb[0].mxu0
    %557 = vmatprep.mubr.bf16.mxu0 0
    %558 = vmatmul.mubr.bf16.gmra.mrb[0].mxu0 %v515
    %v559 = vpop.f32.mrb[0].mxu0
    %v560 = vadd.f32 0.0, %v559
    %v561 = vpop.f32.mrb[0].mxu0
    %v562 = vpop.f32.mrb[0].mxu0
    %v563 = vadd.f32 0.0, %v562
    %v564 = vpop.f32.mrb[0].mxu0
    %565 = vdwg.mxu0
    %v566 = vadd.f32 %v480, %v552
    %v567 = vadd.f32 %v481, %v555
    %v568 = vadd.f32 %v482, %v560
    %v569 = vadd.f32 %v483, %v563
    %v570 = vld [vmem:[%s2 + $0x50] sm:$0xf]
    %v571 = vld [vmem:[%s2 + $0x54] sm:$0xf]
    %v572 = vld [vmem:[%s2 + $0x58] sm:$0xf]
    %v573 = vld [vmem:[%s2 + $0x5c] sm:$0xf]
    %v578 = vunpack.c.l.b16 %v570
    %v579 = vunpack.c.l.b16 %v571
    %v580 = vunpack.c.l.b16 %v572
    %v581 = vunpack.c.l.b16 %v573
    %v582 = vpack.c.b16 %v579, %v578
    %v583 = vpack.c.b16 %v581, %v580
    %584 = vrot.lane.b32.xlu0 %v146, 120
    %v585 = vpop.permute.xlu0 %584
    %586 = vrot.lane.b32.xlu0 %v158, 120
    %v587 = vpop.permute.xlu0 %586
    %588 = vrot.lane.b32.xlu0 %v147, 120
    %v589 = vpop.permute.xlu0 %588
    %590 = vrot.lane.b32.xlu0 %v159, 120
    %v591 = vpop.permute.xlu0 %590
    %vm592 = vcmask 982016
    %v593 = vsel %vm592, %v585, %v587
    %v594 = vsel %vm592, %v589, %v591
    %v598 = vsel %vm191, %v582, 0
    %v601 = vsel %vm191, %v583, 0
    %603 = vmatprep.subr.bf16.mxu0 0
    %604 = vmatpush1.bf16.msra.mxu0 %v593
    %605 = vmatprep.subr.bf16.mxu0 0
    %606 = vmatpush1.bf16.msra.mxu0 %v594
    %607 = vmatprep.subr.bf16.mxu0 0
    %608 = vmatpush1.bf16.msra.mxu0 0
    %609 = vmatprep.subr.bf16.mxu0 0
    %610 = vmatpush1.bf16.msra.mxu0 0
    %611 = vmatprep.subr.bf16.mxu0 0
    %612 = vmatpush1.bf16.msra.mxu0 0
    %613 = vmatprep.subr.bf16.mxu0 0
    %614 = vmatpush1.bf16.msra.mxu0 0
    %615 = vmatprep.subr.bf16.mxu0 0
    %616 = vmatpush1.bf16.msra.mxu0 0
    %617 = vmatprep.subr.bf16.mxu0 0
    %618 = vmatpush1.bf16.msra.mxu0 0
    %619 = vmatprep.subr.bf16.mxu0 0
    %620 = vmatpush1.bf16.msra.mxu0 0
    %621 = vmatprep.subr.bf16.mxu0 0
    %622 = vmatpush1.bf16.msra.mxu0 0
    %623 = vmatprep.subr.bf16.mxu0 0
    %624 = vmatpush1.bf16.msra.mxu0 0
    %625 = vmatprep.subr.bf16.mxu0 0
    %626 = vmatpush1.bf16.msra.mxu0 0
    %627 = vmatprep.subr.bf16.mxu0 0
    %628 = vmatpush1.bf16.msra.mxu0 0
    %629 = vmatprep.subr.bf16.mxu0 0
    %630 = vmatpush1.bf16.msra.mxu0 0
    %631 = vmatprep.subr.bf16.mxu0 0
    %632 = vmatpush1.bf16.msra.mxu0 0
    %633 = vmatprep.subr.bf16.mxu0 0
    %634 = vmatpush1.bf16.msra.mxu0 0
    %635 = vmatprep.mubr.bf16.mxu0 0
    %636 = vmatmul.mubr.bf16.gmra.mrb[0].mxu0 %v598
    %v637 = vpop.f32.mrb[0].mxu0
    %v638 = vadd.f32 0.0, %v637
    %v639 = vpop.f32.mrb[0].mxu0
    %v640 = vpop.f32.mrb[0].mxu0
    %v641 = vadd.f32 0.0, %v640
    %v642 = vpop.f32.mrb[0].mxu0
    %643 = vmatprep.mubr.bf16.mxu0 0
    %644 = vmatmul.mubr.bf16.gmra.mrb[0].mxu0 %v601
    %v645 = vpop.f32.mrb[0].mxu0
    %v646 = vadd.f32 0.0, %v645
    %v647 = vpop.f32.mrb[0].mxu0
    %v648 = vpop.f32.mrb[0].mxu0
    %v649 = vadd.f32 0.0, %v648
    %v650 = vpop.f32.mrb[0].mxu0
    %651 = vdwg.mxu0
    %v652 = vadd.f32 %v566, %v638
    %v653 = vadd.f32 %v567, %v641
    %v654 = vadd.f32 %v568, %v646
    %v655 = vadd.f32 %v569, %v649
    %v656 = vld [vmem:[%s2 + $0x60] sm:$0xf]
    %v657 = vld [vmem:[%s2 + $0x64] sm:$0xf]
    %v658 = vld [vmem:[%s2 + $0x68] sm:$0xf]
    %v659 = vld [vmem:[%s2 + $0x6c] sm:$0xf]
    %v664 = vunpack.c.l.b16 %v656
    %v665 = vunpack.c.l.b16 %v657
    %v666 = vunpack.c.l.b16 %v658
    %v667 = vunpack.c.l.b16 %v659
    %v668 = vpack.c.b16 %v665, %v664
    %v669 = vpack.c.b16 %v667, %v666
    %670 = vrot.lane.b32.xlu0 %v146, 116
    %v671 = vpop.permute.xlu0 %670
    %672 = vrot.lane.b32.xlu0 %v158, 116
    %v673 = vpop.permute.xlu0 %672
    %674 = vrot.lane.b32.xlu0 %v147, 116
    %v675 = vpop.permute.xlu0 %674
    %676 = vrot.lane.b32.xlu0 %v159, 116
    %v677 = vpop.permute.xlu0 %676
    %vm678 = vcmask 949248
    %v679 = vsel %vm678, %v671, %v673
    %v680 = vsel %vm678, %v675, %v677
    %v684 = vsel %vm191, %v668, 0
    %v687 = vsel %vm191, %v669, 0
    %689 = vmatprep.subr.bf16.mxu0 0
    %690 = vmatpush1.bf16.msra.mxu0 %v679
    %691 = vmatprep.subr.bf16.mxu0 0
    %692 = vmatpush1.bf16.msra.mxu0 %v680
    %693 = vmatprep.subr.bf16.mxu0 0
    %694 = vmatpush1.bf16.msra.mxu0 0
    %695 = vmatprep.subr.bf16.mxu0 0
    %696 = vmatpush1.bf16.msra.mxu0 0
    %697 = vmatprep.subr.bf16.mxu0 0
    %698 = vmatpush1.bf16.msra.mxu0 0
    %699 = vmatprep.subr.bf16.mxu0 0
    %700 = vmatpush1.bf16.msra.mxu0 0
    %701 = vmatprep.subr.bf16.mxu0 0
    %702 = vmatpush1.bf16.msra.mxu0 0
    %703 = vmatprep.subr.bf16.mxu0 0
    %704 = vmatpush1.bf16.msra.mxu0 0
    %705 = vmatprep.subr.bf16.mxu0 0
    %706 = vmatpush1.bf16.msra.mxu0 0
    %707 = vmatprep.subr.bf16.mxu0 0
    %708 = vmatpush1.bf16.msra.mxu0 0
    %709 = vmatprep.subr.bf16.mxu0 0
    %710 = vmatpush1.bf16.msra.mxu0 0
    %711 = vmatprep.subr.bf16.mxu0 0
    %712 = vmatpush1.bf16.msra.mxu0 0
    %713 = vmatprep.subr.bf16.mxu0 0
    %714 = vmatpush1.bf16.msra.mxu0 0
    %715 = vmatprep.subr.bf16.mxu0 0
    %716 = vmatpush1.bf16.msra.mxu0 0
    %717 = vmatprep.subr.bf16.mxu0 0
    %718 = vmatpush1.bf16.msra.mxu0 0
    %719 = vmatprep.subr.bf16.mxu0 0
    %720 = vmatpush1.bf16.msra.mxu0 0
    %721 = vmatprep.mubr.bf16.mxu0 0
    %722 = vmatmul.mubr.bf16.gmra.mrb[0].mxu0 %v684
    %v723 = vpop.f32.mrb[0].mxu0
    %v724 = vadd.f32 0.0, %v723
    %v725 = vpop.f32.mrb[0].mxu0
    %v726 = vpop.f32.mrb[0].mxu0
    %v727 = vadd.f32 0.0, %v726
    %v728 = vpop.f32.mrb[0].mxu0
    %729 = vmatprep.mubr.bf16.mxu0 0
    %730 = vmatmul.mubr.bf16.gmra.mrb[0].mxu0 %v687
    %v731 = vpop.f32.mrb[0].mxu0
    %v732 = vadd.f32 0.0, %v731
    %v733 = vpop.f32.mrb[0].mxu0
    %v734 = vpop.f32.mrb[0].mxu0
    %v735 = vadd.f32 0.0, %v734
    %v736 = vpop.f32.mrb[0].mxu0
    %737 = vdwg.mxu0
    %v738 = vadd.f32 %v652, %v724
    %v739 = vadd.f32 %v653, %v727
    %v740 = vadd.f32 %v654, %v732
    %v741 = vadd.f32 %v655, %v735
    %v742 = vld [vmem:[%s2 + $0x70] sm:$0xf]
    %v743 = vld [vmem:[%s2 + $0x74] sm:$0xf]
    %v744 = vld [vmem:[%s2 + $0x78] sm:$0xf]
    %v745 = vld [vmem:[%s2 + $0x7c] sm:$0xf]
    %v750 = vunpack.c.l.b16 %v742
    %v751 = vunpack.c.l.b16 %v743
    %v752 = vunpack.c.l.b16 %v744
    %v753 = vunpack.c.l.b16 %v745
    %v754 = vpack.c.b16 %v751, %v750
    %v755 = vpack.c.b16 %v753, %v752
    %756 = vrot.lane.b32.xlu0 %v146, 115
    %v757 = vpop.permute.xlu0 %756
    %758 = vrot.lane.b32.xlu0 %v158, 115
    %v759 = vpop.permute.xlu0 %758
    %760 = vrot.lane.b32.xlu0 %v147, 115
    %v761 = vpop.permute.xlu0 %760
    %762 = vrot.lane.b32.xlu0 %v159, 115
    %v763 = vpop.permute.xlu0 %762
    %vm764 = vcmask 941056
    %v765 = vsel %vm764, %v757, %v759
    %v766 = vsel %vm764, %v761, %v763
    %v770 = vsel %vm191, %v754, 0
    %v773 = vsel %vm191, %v755, 0
    %775 = vmatprep.subr.bf16.mxu0 0
    %776 = vmatpush1.bf16.msra.mxu0 %v765
    %777 = vmatprep.subr.bf16.mxu0 0
    %778 = vmatpush1.bf16.msra.mxu0 %v766
    %779 = vmatprep.subr.bf16.mxu0 0
    %780 = vmatpush1.bf16.msra.mxu0 0
    %781 = vmatprep.subr.bf16.mxu0 0
    %782 = vmatpush1.bf16.msra.mxu0 0
    %783 = vmatprep.subr.bf16.mxu0 0
    %784 = vmatpush1.bf16.msra.mxu0 0
    %785 = vmatprep.subr.bf16.mxu0 0
    %786 = vmatpush1.bf16.msra.mxu0 0
    %787 = vmatprep.subr.bf16.mxu0 0
    %788 = vmatpush1.bf16.msra.mxu0 0
    %789 = vmatprep.subr.bf16.mxu0 0
    %790 = vmatpush1.bf16.msra.mxu0 0
    %791 = vmatprep.subr.bf16.mxu0 0
    %792 = vmatpush1.bf16.msra.mxu0 0
    %793 = vmatprep.subr.bf16.mxu0 0
    %794 = vmatpush1.bf16.msra.mxu0 0
    %795 = vmatprep.subr.bf16.mxu0 0
    %796 = vmatpush1.bf16.msra.mxu0 0
    %797 = vmatprep.subr.bf16.mxu0 0
    %798 = vmatpush1.bf16.msra.mxu0 0
    %799 = vmatprep.subr.bf16.mxu0 0
    %800 = vmatpush1.bf16.msra.mxu0 0
    %801 = vmatprep.subr.bf16.mxu0 0
    %802 = vmatpush1.bf16.msra.mxu0 0
    %803 = vmatprep.subr.bf16.mxu0 0
    %804 = vmatpush1.bf16.msra.mxu0 0
    %805 = vmatprep.subr.bf16.mxu0 0
    %806 = vmatpush1.bf16.msra.mxu0 0
    %807 = vmatprep.mubr.bf16.mxu0 0
    %808 = vmatmul.mubr.bf16.gmra.mrb[0].mxu0 %v770
    %v809 = vpop.f32.mrb[0].mxu0
    %v810 = vadd.f32 0.0, %v809
    %v811 = vpop.f32.mrb[0].mxu0
    %v812 = vpop.f32.mrb[0].mxu0
    %v813 = vadd.f32 0.0, %v812
    %v814 = vpop.f32.mrb[0].mxu0
    %815 = vmatprep.mubr.bf16.mxu0 0
    %816 = vmatmul.mubr.bf16.gmra.mrb[0].mxu0 %v773
    %v817 = vpop.f32.mrb[0].mxu0
    %v818 = vadd.f32 0.0, %v817
    %v819 = vpop.f32.mrb[0].mxu0
    %v820 = vpop.f32.mrb[0].mxu0
    %v821 = vadd.f32 0.0, %v820
    %v822 = vpop.f32.mrb[0].mxu0
    %823 = vdwg.mxu0
    %v824 = vadd.f32 %v738, %v810
    %v825 = vadd.f32 %v739, %v813
    %v826 = vadd.f32 %v740, %v818
    %v827 = vadd.f32 %v741, %v821
    %v828 = vld [vmem:[%s2 + $0x80] sm:$0xf]
    %v829 = vld [vmem:[%s2 + $0x84] sm:$0xf]
    %v830 = vld [vmem:[%s2 + $0x88] sm:$0xf]
    %v831 = vld [vmem:[%s2 + $0x8c] sm:$0xf]
    %v836 = vunpack.c.l.b16 %v828
    %v837 = vunpack.c.l.b16 %v829
    %v838 = vunpack.c.l.b16 %v830
    %v839 = vunpack.c.l.b16 %v831
    %v840 = vpack.c.b16 %v837, %v836
    %v841 = vpack.c.b16 %v839, %v838
    %842 = vrot.lane.b32.xlu0 %v146, 114
    %v843 = vpop.permute.xlu0 %842
    %844 = vrot.lane.b32.xlu0 %v158, 114
    %v845 = vpop.permute.xlu0 %844
    %846 = vrot.lane.b32.xlu0 %v147, 114
    %v847 = vpop.permute.xlu0 %846
    %848 = vrot.lane.b32.xlu0 %v159, 114
    %v849 = vpop.permute.xlu0 %848
    %vm850 = vcmask 932864
    %v851 = vsel %vm850, %v843, %v845
    %v852 = vsel %vm850, %v847, %v849
    %v856 = vsel %vm191, %v840, 0
    %v859 = vsel %vm191, %v841, 0
    %861 = vmatprep.subr.bf16.mxu0 0
    %862 = vmatpush1.bf16.msra.mxu0 %v851
    %863 = vmatprep.subr.bf16.mxu0 0
    %864 = vmatpush1.bf16.msra.mxu0 %v852
    %865 = vmatprep.subr.bf16.mxu0 0
    %866 = vmatpush1.bf16.msra.mxu0 0
    %867 = vmatprep.subr.bf16.mxu0 0
    %868 = vmatpush1.bf16.msra.mxu0 0
    %869 = vmatprep.subr.bf16.mxu0 0
    %870 = vmatpush1.bf16.msra.mxu0 0
    %871 = vmatprep.subr.bf16.mxu0 0
    %872 = vmatpush1.bf16.msra.mxu0 0
    %873 = vmatprep.subr.bf16.mxu0 0
    %874 = vmatpush1.bf16.msra.mxu0 0
    %875 = vmatprep.subr.bf16.mxu0 0
    %876 = vmatpush1.bf16.msra.mxu0 0
    %877 = vmatprep.subr.bf16.mxu0 0
    %878 = vmatpush1.bf16.msra.mxu0 0
    %879 = vmatprep.subr.bf16.mxu0 0
    %880 = vmatpush1.bf16.msra.mxu0 0
    %881 = vmatprep.subr.bf16.mxu0 0
    %882 = vmatpush1.bf16.msra.mxu0 0
    %883 = vmatprep.subr.bf16.mxu0 0
    %884 = vmatpush1.bf16.msra.mxu0 0
    %885 = vmatprep.subr.bf16.mxu0 0
    %886 = vmatpush1.bf16.msra.mxu0 0
    %887 = vmatprep.subr.bf16.mxu0 0
    %888 = vmatpush1.bf16.msra.mxu0 0
    %889 = vmatprep.subr.bf16.mxu0 0
    %890 = vmatpush1.bf16.msra.mxu0 0
    %891 = vmatprep.subr.bf16.mxu0 0
    %892 = vmatpush1.bf16.msra.mxu0 0
    %893 = vmatprep.mubr.bf16.mxu0 0
    %894 = vmatmul.mubr.bf16.gmra.mrb[0].mxu0 %v856
    %v895 = vpop.f32.mrb[0].mxu0
    %v896 = vadd.f32 0.0, %v895
    %v897 = vpop.f32.mrb[0].mxu0
    %v898 = vpop.f32.mrb[0].mxu0
    %v899 = vadd.f32 0.0, %v898
    %v900 = vpop.f32.mrb[0].mxu0
    %901 = vmatprep.mubr.bf16.mxu0 0
    %902 = vmatmul.mubr.bf16.gmra.mrb[0].mxu0 %v859
    %v903 = vpop.f32.mrb[0].mxu0
    %v904 = vadd.f32 0.0, %v903
    %v905 = vpop.f32.mrb[0].mxu0
    %v906 = vpop.f32.mrb[0].mxu0
    %v907 = vadd.f32 0.0, %v906
    %v908 = vpop.f32.mrb[0].mxu0
    %909 = vdwg.mxu0
    %v910 = vadd.f32 %v824, %v896
    %v911 = vadd.f32 %v825, %v899
    %v912 = vadd.f32 %v826, %v904
    %v913 = vadd.f32 %v827, %v907
    %914 = vst [vmem:[%s4] sm:$0xff] %v910
    %915 = vst [vmem:[%s4 + $0x8] sm:$0xff] %v911
    %916 = vst [vmem:[%s4 + $0x10] sm:$0xff] %v912
    %917 = vst [vmem:[%s4 + $0x18] sm:$0xff] %v913
    %v918 = vld [vmem:[%s3] sm:$0x1]
    %v920 = vlaneseq
    %v921 = vshrl.u32 %v920, 7
    %v922 = vsub.s32 0, %v921
    %v923 = vrot.slane %v918, %v922
    %v925 = vmul.f32 %v910, %v923
    %v926 = vmul.f32 %v911, %v923
    %v927 = vmul.f32 %v912, %v923
    %v928 = vmul.f32 %v913, %v923
    %929 = vadd.xlane.f32.xlu0 %v925
    %v930 = vpop.xlane.xlu0 %929
    %931 = vadd.xlane.f32.xlu0 %v926
    %v932 = vpop.xlane.xlu0 %931
    %933 = vadd.xlane.f32.xlu0 %v927
    %v934 = vpop.xlane.xlu0 %933
    %935 = vadd.xlane.f32.xlu0 %v928
    %v936 = vpop.xlane.xlu0 %935
    %v937 = vmul.f32 %v925, %v910
    %v938 = vmul.f32 %v926, %v911
    %v939 = vmul.f32 %v927, %v912
    %v940 = vmul.f32 %v928, %v913
    %941 = vadd.xlane.f32.xlu0 %v937
    %v942 = vpop.xlane.xlu0 %941
    %943 = vadd.xlane.f32.xlu0 %v938
    %v944 = vpop.xlane.xlu0 %943
    %945 = vadd.xlane.f32.xlu0 %v939
    %v946 = vpop.xlane.xlu0 %945
    %947 = vadd.xlane.f32.xlu0 %v940
    %v948 = vpop.xlane.xlu0 %947
    %vm949 = vcmask 7168
    %v950 = vsel %vm949, %v930, %v942
    %v951 = vsel %vm949, %v932, %v944
    %v952 = vsel %vm949, %v934, %v946
    %v953 = vsel %vm949, %v936, %v948
    %vm954 = vcmask 15360
    %955 = vst.msk [vmem:[%s5] sm:$0xff] %vm954, %v950
    %956 = vst.msk [vmem:[%s5 + $0x8] sm:$0xff] %vm954, %v951
    %957 = vst.msk [vmem:[%s5 + $0x10] sm:$0xff] %vm954, %v952
    %958 = vst.msk [vmem:[%s5 + $0x18] sm:$0xff] %vm954, %v953
    // Predicated region
    $region100: #{encoder_forward.24} parent=1 // pred_check
      _
    $region101: #{encoder_forward.24} parent=1 // pred_check_branch
      %960 = sbr.rel (0) target = $region103
    $region102: #{encoder_forward.24} parent=1 // pred_region
      _
    $region103: #{encoder_forward.24} parent=1 // pred_fallthru
      _
    // Predicated region
    $region104: #{encoder_forward.24} parent=1 // pred_check
      _
    $region105: #{encoder_forward.24} parent=1 // pred_check_branch
      %962 = sbr.rel (0) target = $region107
    $region106: #{encoder_forward.24} parent=1 // pred_region
      _
    $region107: #{encoder_forward.24} parent=1 // pred_fallthru
      _
    // Predicated region
    $region108: #{encoder_forward.24} parent=1 // pred_check
      _
    $region109: #{encoder_forward.24} parent=1 // pred_check_branch
      %964 = sbr.rel (0) target = $region111
    $region110: #{encoder_forward.24} parent=1 // pred_region
      _
    $region111: #{encoder_forward.24} parent=1 // pred_fallthru
      _
    // Predicated region
    $region112: #{encoder_forward.24} parent=1 // pred_check
      _
    $region113: #{encoder_forward.24} parent=1 // pred_check_branch
      %966 = sbr.rel (0) target = $region115
    $region114: #{encoder_forward.24} parent=1 // pred_region
      _
    $region115: #{encoder_forward.24} parent=1 // pred_fallthru
      _

</llo_original>
